<compile_context>
chip_gen: v7x
topology: tpu7x:2x2x1
jax: 0.10.0
libtpu: 0.0.40
codegen_flags: <defaults>
</compile_context>

<pallas_src>
import functools

import jax
import jax.numpy as jnp
from jax.experimental import pallas as pl
from jax.experimental.pallas import tpu as pltpu


# -----------------------------------------------------------------------------
# Fused kernel: embedding gather + 2x HyenaOperator + seq max-pool + MLP head.
# One grid step processes TB whole sequences as a flat (TB*L, C) slab
# (channels on the 128-lane axis).
# -----------------------------------------------------------------------------
def hyena_net_kernel(toks_ref, emb_ref,
                     in_w1_ref, in_b1_ref, sfw1_ref, sfb1_ref, k1_ref, d1_ref,
                     ow1_ref, ob1_ref,
                     in_w2_ref, in_b2_ref, sfw2_ref, sfb2_ref, k2_ref, d2_ref,
                     ow2_ref, ob2_ref,
                     fw1_ref, fb1_ref, fw2_ref, fb2_ref, fw3_ref, fb3_ref,
                     fwo_ref, fbo_ref,
                     out_ref, *, tb, seq_len, vocab):
    TB, L, V = tb, seq_len, vocab
    M = TB * L

    # Within-sequence positions; only the "pos >= 1" mask is needed because all
    # causal shifts are built incrementally from shift-by-1 steps.
    pos = jax.lax.broadcasted_iota(jnp.int32, (M, 1), 0) % L
    mask1 = pos >= 1

    def shift1(z):
        # z[t-1] with zero at the start of every sequence.  pltpu.roll keeps the
        # shift on the XLU slot, leaving the VALU slots for the multiply-adds.
        return jnp.where(mask1, pltpu.roll(z, 1, axis=0), 0.0)

    # ---- embedding gather fused in-kernel (exact one-hot matmul; V tiny) ----
    # TODO(synk): for large vocab switch to a DMA row-gather instead of one-hot.
    toks = toks_ref[...]                                          # (M, 1) int32
    onehot = (toks == jax.lax.broadcasted_iota(jnp.int32, (M, V), 1)
              ).astype(jnp.float32)
    x = jnp.dot(onehot, emb_ref[...], preferred_element_type=jnp.float32)

    def hyena_op(h, in_w_ref, in_b_ref, sfw_ref, sfb_ref, k_ref, d_ref,
                 ow_ref, ob_ref):
        d_model = in_w_ref.shape[0]
        # in_proj: bf16 operands on the MXU, f32 accumulation.
        z = (jnp.dot(h.astype(jnp.bfloat16), in_w_ref[...],
                     preferred_element_type=jnp.float32) + in_b_ref[...])
        # short_filter: depthwise causal conv, kernel=3, padding=2, first L.
        sfw = sfw_ref[...]                                        # (3, 3*d)
        z1 = shift1(z)
        z2 = shift1(z1)
        uc = (sfw[2:3, :] * z + sfw[1:2, :] * z1 + sfw[0:1, :] * z2
              + sfb_ref[...])
        x0 = uc[:, 0:d_model]
        x1 = uc[:, d_model:2 * d_model]
        v = uc[:, 2 * d_model:3 * d_model]
        # order=2: one gating pass + one long (implicit-filter) conv pass.
        v = v * x1                                                # dropout(0)=id
        # Long causal conv: incremental shift-by-1 carried through a fori_loop.
        num_taps = k_ref.shape[0]                                 # == L

        def tap(j, carry):
            acc, vs = carry
            vs = shift1(vs)
            acc = acc + k_ref[j] * vs                             # k_ref[j]:(1,d)
            return acc, vs

        acc, _ = jax.lax.fori_loop(1, num_taps, tap, (k_ref[0] * v, v),
                                   unroll=True if num_taps <= 16 else 8)
        v = acc + d_ref[...] * v                                  # fftconv "D"
        y = v * x0
        # out_proj: bf16 operands, f32 accumulation.
        return (jnp.dot(y.astype(jnp.bfloat16), ow_ref[...],
                        preferred_element_type=jnp.float32) + ob_ref[...])

    h = hyena_op(x, in_w1_ref, in_b1_ref, sfw1_ref, sfb1_ref, k1_ref, d1_ref,
                 ow1_ref, ob1_ref)                                # (M, 2E)
    h = hyena_op(h, in_w2_ref, in_b2_ref, sfw2_ref, sfb2_ref, k2_ref, d2_ref,
                 ow2_ref, ob2_ref)                                # (M, 2E)

    # x.max(dim=1): single reshaped reduction (L is a multiple of 8).
    pooled = jnp.max(h.reshape(TB, L, h.shape[1]), axis=1)        # (TB, 2E)

    # MLP head: bf16 weights, f32 accumulation.  Dropout = identity (inference).
    def dense(hh, w_ref, b_ref):
        return (jnp.dot(hh.astype(jnp.bfloat16), w_ref[...],
                        preferred_element_type=jnp.float32) + b_ref[...])

    hh = jnp.maximum(dense(pooled, fw1_ref, fb1_ref), 0.0)
    hh = jnp.maximum(dense(hh, fw2_ref, fb2_ref), 0.0)
    hh = jnp.maximum(dense(hh, fw3_ref, fb3_ref), 0.0)
    out_ref[:, 0, :] = dense(hh, fwo_ref, fbo_ref)                # (TB, 128)


# -----------------------------------------------------------------------------
# Wrapper.
# -----------------------------------------------------------------------------
def _row_map(i):
    return (i, 0)


def _out_map(i):
    return (i, 0, 0)


def _const_map(i, *, ndim):
    return (0,) * ndim


def _pick_batch_tile(batch):
    """Whole sequences per grid step; prefer >=2 grid steps (megacore on v7x)."""
    for cand in (8, 4, 2, 1):
        if batch % cand == 0 and batch // cand >= 2:
            return cand
    return batch


@functools.partial(jax.jit, static_argnames=("num_classes",))
def forward(tokens, params, *, num_classes):
    B, L = tokens.shape
    V, _ = params["emb"].shape
    TB = _pick_batch_tile(B)
    toks_flat = tokens.reshape(B * L, 1).astype(jnp.int32)

    op1, op2 = params["op1"], params["op2"]
    args = (
        toks_flat, params["emb"],
        op1["in_w"], op1["in_b"], op1["sf_w"], op1["sf_b"], op1["k"],
        op1["d_skip"], op1["out_w"], op1["out_b"],
        op2["in_w"], op2["in_b"], op2["sf_w"], op2["sf_b"], op2["k"],
        op2["d_skip"], op2["out_w"], op2["out_b"],
        params["fw1"], params["fb1"], params["fw2"], params["fb2"],
        params["fw3"], params["fb3"], params["fwo"], params["fbo"],
    )
    n_out_pad = params["fwo"].shape[1]                      # lane-dense (128)
    in_specs = (
        [pl.BlockSpec((TB * L, 1), _row_map),
         pl.BlockSpec(params["emb"].shape,
                      functools.partial(_const_map, ndim=2))]
        + [pl.BlockSpec(w.shape, functools.partial(_const_map, ndim=w.ndim))
           for w in args[2:]]
        # TODO(synk): if the MLP grows, single-buffer the weight specs via
        # pipeline_mode=pl.Buffered(1) instead of enlarging the VMEM budget.
    )
    kernel = functools.partial(hyena_net_kernel, tb=TB, seq_len=L, vocab=V)
    out = pl.pallas_call(
        kernel,
        out_shape=jax.ShapeDtypeStruct((B, 1, n_out_pad), jnp.float32),
        grid=(B // TB,),
        in_specs=in_specs,
        out_specs=pl.BlockSpec((TB, 1, n_out_pad), _out_map),
        compiler_params=pltpu.CompilerParams(
            dimension_semantics=("parallel",),              # megacore-shardable
            vmem_limit_bytes=32 * 1024 * 1024),             # v7x-safe budget
    )(*args)
    return out[:, 0, :num_classes]


# -----------------------------------------------------------------------------
# Pure-JAX reference (same math / same precision choices) for a sanity check.
# -----------------------------------------------------------------------------
@functools.partial(jax.jit, static_argnames=("num_classes",))
def forward_ref(tokens, params, *, num_classes):
    emb = params["emb"][tokens]                             # (B, L, E)
    B, L, _ = emb.shape

    def shift(z, j):
        if j == 0:
            return z
        return jnp.concatenate(
            [jnp.zeros_like(z[:, :j, :]), z[:, :L - j, :]], axis=1)

    def hyena_op(h, p):
        d = p["in_w"].shape[0]
        z = jnp.einsum("ble,eo->blo", h.astype(jnp.bfloat16), p["in_w"],
                       preferred_element_type=jnp.float32) + p["in_b"]
        sfw = p["sf_w"]
        uc = (sfw[2] * z + sfw[1] * shift(z, 1) + sfw[0] * shift(z, 2)
              + p["sf_b"])
        x0, x1, v = uc[..., :d], uc[..., d:2 * d], uc[..., 2 * d:]
        v = v * x1
        acc = p["k"][0] * v
        for j in range(1, L):
            acc = acc + p["k"][j] * shift(v, j)
        v = acc + p["d_skip"] * v
        y = v * x0
        return jnp.einsum("ble,eo->blo", y.astype(jnp.bfloat16), p["out_w"],
                          preferred_element_type=jnp.float32) + p["out_b"]

    h = hyena_op(emb, params["op1"])
    h = hyena_op(h, params["op2"])
    h = jnp.max(h, axis=1)

    def dense(hh, w, b):
        return jnp.dot(hh.astype(jnp.bfloat16), w,
                       preferred_element_type=jnp.float32) + b

    h = jnp.maximum(dense(h, params["fw1"], params["fb1"]), 0.0)
    h = jnp.maximum(dense(h, params["fw2"], params["fb2"]), 0.0)
    h = jnp.maximum(dense(h, params["fw3"], params["fb3"]), 0.0)
    return dense(h, params["fwo"], params["fbo"])[:, :num_classes]


# -----------------------------------------------------------------------------
# Parameter construction.
# -----------------------------------------------------------------------------
def init_params(key, vocab_size, emb_dim, seq_len, num_classes):
    assert num_classes <= 128
    keys = iter(jax.random.split(key, 48))

    def unif(shape, fan_in, dtype=jnp.float32):
        bound = 1.0 / (fan_in ** 0.5)
        return jax.random.uniform(next(keys), shape, jnp.float32,
                                  -bound, bound).astype(dtype)

    def hyena_op_params(d_model, d_out, l_max):
        inner = 3 * d_model          # order=2 -> inner_width = d_model*(order+1)
        return {
            # in_proj / out_proj stored (in, out); matmul operands in bf16.
            "in_w": unif((d_model, inner), d_model, jnp.bfloat16),
            "in_b": unif((1, inner), d_model),
            # depthwise short filter (K=3, inner): tap m multiplies u[t-2+m]
            "sf_w": unif((3, inner), 3),
            "sf_b": unif((1, inner), 3),
            # materialized implicit long-conv filter, shaped (L, 1, d) so the
            # kernel's fori_loop indexes taps on the cheap leading axis.
            "k": 0.2 * jax.random.normal(next(keys), (l_max, 1, d_model),
                                         jnp.float32),
            # fftconv skip bias ("D" term)
            "d_skip": 0.5 * jax.random.normal(next(keys), (1, d_model),
                                              jnp.float32),
            "out_w": unif((d_model, d_out), d_model, jnp.bfloat16),
            "out_b": unif((1, d_out), d_model),
        }

    E = emb_dim
    # Classifier padded to a lane-dense 128 columns (zeros beyond num_classes);
    # the wrapper slices back to num_classes.
    fwo = jnp.pad(unif((512, num_classes), 512, jnp.bfloat16),
                  ((0, 0), (0, 128 - num_classes)))
    fbo = jnp.pad(unif((1, num_classes), 512), ((0, 0), (0, 128 - num_classes)))
    return {
        "emb": jax.random.normal(next(keys), (vocab_size, E), jnp.float32),
        "op1": hyena_op_params(E, 2 * E, seq_len),
        "op2": hyena_op_params(2 * E, 2 * E, seq_len),
        # MLP head: big weights in bf16 (f32 accumulation), biases f32 (1, out)
        "fw1": unif((2 * E, 1024), 2 * E, jnp.bfloat16),
        "fb1": unif((1, 1024), 2 * E),
        "fw2": unif((1024, 1024), 1024, jnp.bfloat16),
        "fb2": unif((1, 1024), 1024),
        "fw3": unif((1024, 512), 1024, jnp.bfloat16),
        "fb3": unif((1, 512), 1024),
        "fwo": fwo,
        "fbo": fbo,
    }


if __name__ == "__main__":
    VOCAB, EMB, SEQ, NUM_CLASSES, BATCH = 20, 16, 16, 8, 2

    key = jax.random.PRNGKey(0)
    pkey, tkey = jax.random.split(key)
    params = init_params(pkey, VOCAB, EMB, SEQ, NUM_CLASSES)
    tokens = jax.random.randint(tkey, (BATCH, SEQ), 0, VOCAB, jnp.int32)

    out = jax.block_until_ready(forward(tokens, params, num_classes=NUM_CLASSES))
    ref = jax.block_until_ready(
        forward_ref(tokens, params, num_classes=NUM_CLASSES))

    assert out.shape == (BATCH, NUM_CLASSES), out.shape
    assert jnp.allclose(out, ref, atol=2e-2, rtol=2e-2), (out, ref)
    print("KERNEL_OK")
</pallas_src>

<mosaic_0001>
module attributes {stable_mosaic.version = 11 : i64} {
  func.func @hyena_net_kernel(%arg0: i32, %arg1: memref<16x1xi32, #tpu.memory_space<vmem>>, %arg2: memref<20x16xf32, #tpu.memory_space<vmem>>, %arg3: memref<16x48xbf16, #tpu.memory_space<vmem>>, %arg4: memref<1x48xf32, #tpu.memory_space<vmem>>, %arg5: memref<3x48xf32, #tpu.memory_space<vmem>>, %arg6: memref<1x48xf32, #tpu.memory_space<vmem>>, %arg7: memref<16x1x16xf32, #tpu.memory_space<vmem>>, %arg8: memref<1x16xf32, #tpu.memory_space<vmem>>, %arg9: memref<16x32xbf16, #tpu.memory_space<vmem>>, %arg10: memref<1x32xf32, #tpu.memory_space<vmem>>, %arg11: memref<32x96xbf16, #tpu.memory_space<vmem>>, %arg12: memref<1x96xf32, #tpu.memory_space<vmem>>, %arg13: memref<3x96xf32, #tpu.memory_space<vmem>>, %arg14: memref<1x96xf32, #tpu.memory_space<vmem>>, %arg15: memref<16x1x32xf32, #tpu.memory_space<vmem>>, %arg16: memref<1x32xf32, #tpu.memory_space<vmem>>, %arg17: memref<32x32xbf16, #tpu.memory_space<vmem>>, %arg18: memref<1x32xf32, #tpu.memory_space<vmem>>, %arg19: memref<32x1024xbf16, #tpu.memory_space<vmem>>, %arg20: memref<1x1024xf32, #tpu.memory_space<vmem>>, %arg21: memref<1024x1024xbf16, #tpu.memory_space<vmem>>, %arg22: memref<1x1024xf32, #tpu.memory_space<vmem>>, %arg23: memref<1024x512xbf16, #tpu.memory_space<vmem>>, %arg24: memref<1x512xf32, #tpu.memory_space<vmem>>, %arg25: memref<512x128xbf16, #tpu.memory_space<vmem>>, %arg26: memref<1x128xf32, #tpu.memory_space<vmem>>, %arg27: memref<1x1x128xf32, #tpu.memory_space<vmem>>) attributes {dimension_semantics = [#tpu.dimension_semantics<parallel>], iteration_bounds = array<i64: 2>, scalar_prefetch = 0 : i64, scratch_operands = 0 : i64, tpu.core_type = #tpu.core_type<tc>, window_params = [{transform_indices = @transform_0, window_bounds = array<i64: 16, 1>}, {pipeline_mode = #tpu.pipeline_mode<synchronous>, transform_indices = @transform_1, window_bounds = array<i64: 20, 16>}, {pipeline_mode = #tpu.pipeline_mode<synchronous>, transform_indices = @transform_2, window_bounds = array<i64: 16, 48>}, {pipeline_mode = #tpu.pipeline_mode<synchronous>, transform_indices = @transform_3, window_bounds = array<i64: 1, 48>}, {pipeline_mode = #tpu.pipeline_mode<synchronous>, transform_indices = @transform_4, window_bounds = array<i64: 3, 48>}, {pipeline_mode = #tpu.pipeline_mode<synchronous>, transform_indices = @transform_5, window_bounds = array<i64: 1, 48>}, {pipeline_mode = #tpu.pipeline_mode<synchronous>, transform_indices = @transform_6, window_bounds = array<i64: 16, 1, 16>}, {pipeline_mode = #tpu.pipeline_mode<synchronous>, transform_indices = @transform_7, window_bounds = array<i64: 1, 16>}, {pipeline_mode = #tpu.pipeline_mode<synchronous>, transform_indices = @transform_8, window_bounds = array<i64: 16, 32>}, {pipeline_mode = #tpu.pipeline_mode<synchronous>, transform_indices = @transform_9, window_bounds = array<i64: 1, 32>}, {pipeline_mode = #tpu.pipeline_mode<synchronous>, transform_indices = @transform_10, window_bounds = array<i64: 32, 96>}, {pipeline_mode = #tpu.pipeline_mode<synchronous>, transform_indices = @transform_11, window_bounds = array<i64: 1, 96>}, {pipeline_mode = #tpu.pipeline_mode<synchronous>, transform_indices = @transform_12, window_bounds = array<i64: 3, 96>}, {pipeline_mode = #tpu.pipeline_mode<synchronous>, transform_indices = @transform_13, window_bounds = array<i64: 1, 96>}, {pipeline_mode = #tpu.pipeline_mode<synchronous>, transform_indices = @transform_14, window_bounds = array<i64: 16, 1, 32>}, {pipeline_mode = #tpu.pipeline_mode<synchronous>, transform_indices = @transform_15, window_bounds = array<i64: 1, 32>}, {pipeline_mode = #tpu.pipeline_mode<synchronous>, transform_indices = @transform_16, window_bounds = array<i64: 32, 32>}, {pipeline_mode = #tpu.pipeline_mode<synchronous>, transform_indices = @transform_17, window_bounds = array<i64: 1, 32>}, {pipeline_mode = #tpu.pipeline_mode<synchronous>, transform_indices = @transform_18, window_bounds = array<i64: 32, 1024>}, {pipeline_mode = #tpu.pipeline_mode<synchronous>, transform_indices = @transform_19, window_bounds = array<i64: 1, 1024>}, {pipeline_mode = #tpu.pipeline_mode<synchronous>, transform_indices = @transform_20, window_bounds = array<i64: 1024, 1024>}, {pipeline_mode = #tpu.pipeline_mode<synchronous>, transform_indices = @transform_21, window_bounds = array<i64: 1, 1024>}, {pipeline_mode = #tpu.pipeline_mode<synchronous>, transform_indices = @transform_22, window_bounds = array<i64: 1024, 512>}, {pipeline_mode = #tpu.pipeline_mode<synchronous>, transform_indices = @transform_23, window_bounds = array<i64: 1, 512>}, {pipeline_mode = #tpu.pipeline_mode<synchronous>, transform_indices = @transform_24, window_bounds = array<i64: 512, 128>}, {pipeline_mode = #tpu.pipeline_mode<synchronous>, transform_indices = @transform_25, window_bounds = array<i64: 1, 128>}, {transform_indices = @transform_26, window_bounds = array<i64: 1, 1, 128>}]} {
    %0 = tpu.iota {dimensions = array<i32: 0>} : vector<16x1xi32>
    %c16_i32 = arith.constant 16 : i32
    %c0_i32 = arith.constant 0 : i32
    %1 = arith.cmpi eq, %c16_i32, %c0_i32 : i32
    %c1_i32 = arith.constant 1 : i32
    %2 = arith.select %1, %c1_i32, %c16_i32 : i32
    %3 = vector.broadcast %2 : i32 to vector<16x1xi32>
    %4 = arith.remsi %0, %3 : vector<16x1xi32>
    %c0_i32_0 = arith.constant 0 : i32
    %5 = vector.broadcast %c0_i32_0 : i32 to vector<16x1xi32>
    %6 = arith.cmpi ne, %4, %5 : vector<16x1xi32>
    %c0_i32_1 = arith.constant 0 : i32
    %7 = vector.broadcast %c0_i32_1 : i32 to vector<16x1xi32>
    %8 = arith.cmpi slt, %4, %7 : vector<16x1xi32>
    %c0_i32_2 = arith.constant 0 : i32
    %9 = arith.cmpi slt, %2, %c0_i32_2 : i32
    %10 = vector.broadcast %9 : i1 to vector<16x1xi1>
    %11 = vector.broadcast %10 : vector<16x1xi1> to vector<16x1xi1>
    %12 = arith.xori %8, %11 : vector<16x1xi1>
    %13 = arith.andi %12, %6 : vector<16x1xi1>
    %14 = vector.broadcast %2 : i32 to vector<16x1xi32>
    %15 = arith.addi %4, %14 : vector<16x1xi32>
    %16 = arith.select %13, %15, %4 : vector<16x1xi1>, vector<16x1xi32>
    %c1_i32_3 = arith.constant 1 : i32
    %17 = vector.broadcast %c1_i32_3 : i32 to vector<16x1xi32>
    %18 = arith.cmpi sge, %16, %17 : vector<16x1xi32>
    %c0 = arith.constant 0 : index
    %c0_4 = arith.constant 0 : index
    %19 = vector.load %arg1[%c0, %c0_4] : memref<16x1xi32, #tpu.memory_space<vmem>>, vector<16x1xi32>
    %20 = tpu.iota {dimensions = array<i32: 1>} : vector<16x20xi32>
    %21 = vector.broadcast %19 : vector<16x1xi32> to vector<16x20xi32>
    %22 = arith.cmpi eq, %21, %20 : vector<16x20xi32>
    %23 = arith.extui %22 : vector<16x20xi1> to vector<16x20xi32>
    %24 = arith.sitofp %23 : vector<16x20xi32> to vector<16x20xf32>
    %c0_5 = arith.constant 0 : index
    %c0_6 = arith.constant 0 : index
    %25 = vector.load %arg2[%c0_5, %c0_6] : memref<20x16xf32, #tpu.memory_space<vmem>>, vector<20x16xf32>
    %cst = arith.constant dense<0.000000e+00> : vector<16x16xf32>
    %26 = tpu.matmul %24, %25, %cst {dimension_numbers = #tpu.dot_dimension_numbers<[1], [0], [0], [1], [0, 0, 1, 1], [], []>} : vector<16x20xf32>, vector<20x16xf32>, vector<16x16xf32> -> vector<16x16xf32>
    %27 = arith.truncf %26 : vector<16x16xf32> to vector<16x16xbf16>
    %c0_7 = arith.constant 0 : index
    %c0_8 = arith.constant 0 : index
    %28 = vector.load %arg3[%c0_7, %c0_8] : memref<16x48xbf16, #tpu.memory_space<vmem>>, vector<16x48xbf16>
    %cst_9 = arith.constant dense<0.000000e+00> : vector<16x48xf32>
    %29 = tpu.matmul %27, %28, %cst_9 {dimension_numbers = #tpu.dot_dimension_numbers<[1], [0], [0], [1], [0, 0, 1, 1], [], []>} : vector<16x16xbf16>, vector<16x48xbf16>, vector<16x48xf32> -> vector<16x48xf32>
    %c0_10 = arith.constant 0 : index
    %c0_11 = arith.constant 0 : index
    %30 = vector.load %arg4[%c0_10, %c0_11] : memref<1x48xf32, #tpu.memory_space<vmem>>, vector<1x48xf32>
    %31 = vector.broadcast %30 : vector<1x48xf32> to vector<16x48xf32>
    %32 = arith.addf %29, %31 : vector<16x48xf32>
    %c0_12 = arith.constant 0 : index
    %c0_13 = arith.constant 0 : index
    %33 = vector.load %arg5[%c0_12, %c0_13] : memref<3x48xf32, #tpu.memory_space<vmem>>, vector<3x48xf32>
    %c1_i32_14 = arith.constant 1 : i32
    %34 = tpu.dynamic_rotate %32 by %c1_i32_14 dim 0 : vector<16x48xf32>, i32 -> vector<16x48xf32>
    %cst_15 = arith.constant 0.000000e+00 : f32
    %35 = vector.shape_cast %18 : vector<16x1xi1> to vector<16x1xi1>
    %36 = vector.broadcast %35 : vector<16x1xi1> to vector<16x48xi1>
    %37 = vector.broadcast %cst_15 : f32 to vector<16x48xf32>
    %38 = arith.select %36, %34, %37 : vector<16x48xi1>, vector<16x48xf32>
    %c1_i32_16 = arith.constant 1 : i32
    %39 = tpu.dynamic_rotate %38 by %c1_i32_16 dim 0 : vector<16x48xf32>, i32 -> vector<16x48xf32>
    %cst_17 = arith.constant 0.000000e+00 : f32
    %40 = vector.shape_cast %18 : vector<16x1xi1> to vector<16x1xi1>
    %41 = vector.broadcast %40 : vector<16x1xi1> to vector<16x48xi1>
    %42 = vector.broadcast %cst_17 : f32 to vector<16x48xf32>
    %43 = arith.select %41, %39, %42 : vector<16x48xi1>, vector<16x48xf32>
    %44 = vector.extract_strided_slice %33 {offsets = [2, 0], sizes = [1, 48], strides = [1, 1]} : vector<3x48xf32> to vector<1x48xf32>
    %45 = vector.broadcast %44 : vector<1x48xf32> to vector<16x48xf32>
    %46 = arith.mulf %45, %32 : vector<16x48xf32>
    %47 = vector.extract_strided_slice %33 {offsets = [1, 0], sizes = [1, 48], strides = [1, 1]} : vector<3x48xf32> to vector<1x48xf32>
    %48 = vector.broadcast %47 : vector<1x48xf32> to vector<16x48xf32>
    %49 = arith.mulf %48, %38 : vector<16x48xf32>
    %50 = arith.addf %46, %49 : vector<16x48xf32>
    %51 = vector.extract_strided_slice %33 {offsets = [0, 0], sizes = [1, 48], strides = [1, 1]} : vector<3x48xf32> to vector<1x48xf32>
    %52 = vector.broadcast %51 : vector<1x48xf32> to vector<16x48xf32>
    %53 = arith.mulf %52, %43 : vector<16x48xf32>
    %54 = arith.addf %50, %53 : vector<16x48xf32>
    %c0_18 = arith.constant 0 : index
    %c0_19 = arith.constant 0 : index
    %55 = vector.load %arg6[%c0_18, %c0_19] : memref<1x48xf32, #tpu.memory_space<vmem>>, vector<1x48xf32>
    %56 = vector.broadcast %55 : vector<1x48xf32> to vector<16x48xf32>
    %57 = arith.addf %54, %56 : vector<16x48xf32>
    %58 = vector.extract_strided_slice %57 {offsets = [0, 0], sizes = [16, 16], strides = [1, 1]} : vector<16x48xf32> to vector<16x16xf32>
    %59 = vector.extract_strided_slice %57 {offsets = [0, 16], sizes = [16, 16], strides = [1, 1]} : vector<16x48xf32> to vector<16x16xf32>
    %60 = vector.extract_strided_slice %57 {offsets = [0, 32], sizes = [16, 16], strides = [1, 1]} : vector<16x48xf32> to vector<16x16xf32>
    %61 = arith.mulf %60, %59 : vector<16x16xf32>
    %c0_20 = arith.constant 0 : index
    %c0_21 = arith.constant 0 : index
    %c0_22 = arith.constant 0 : index
    %62 = vector.load %arg7[%c0_20, %c0_21, %c0_22] : memref<16x1x16xf32, #tpu.memory_space<vmem>>, vector<1x1x16xf32>
    %63 = vector.shape_cast %62 : vector<1x1x16xf32> to vector<1x16xf32>
    %64 = vector.broadcast %63 : vector<1x16xf32> to vector<16x16xf32>
    %65 = arith.mulf %64, %61 : vector<16x16xf32>
    %c1_i32_23 = arith.constant 1 : i32
    %c1_i32_24 = arith.constant 1 : i32
    %66 = tpu.dynamic_rotate %61 by %c1_i32_24 dim 0 : vector<16x16xf32>, i32 -> vector<16x16xf32>
    %cst_25 = arith.constant 0.000000e+00 : f32
    %67 = vector.shape_cast %18 : vector<16x1xi1> to vector<16x1xi1>
    %68 = vector.broadcast %67 : vector<16x1xi1> to vector<16x16xi1>
    %69 = vector.broadcast %cst_25 : f32 to vector<16x16xf32>
    %70 = arith.select %68, %66, %69 : vector<16x16xi1>, vector<16x16xf32>
    %71 = arith.index_cast %c1_i32_23 : i32 to index
    %c0_26 = arith.constant 0 : index
    %c0_27 = arith.constant 0 : index
    %72 = vector.load %arg7[%71, %c0_26, %c0_27] : memref<16x1x16xf32, #tpu.memory_space<vmem>>, vector<1x1x16xf32>
    %73 = vector.shape_cast %72 : vector<1x1x16xf32> to vector<1x16xf32>
    %74 = vector.broadcast %73 : vector<1x16xf32> to vector<16x16xf32>
    %75 = arith.mulf %74, %70 : vector<16x16xf32>
    %76 = arith.addf %65, %75 : vector<16x16xf32>
    %c2_i32 = arith.constant 2 : i32
    %c1_i32_28 = arith.constant 1 : i32
    %77 = tpu.dynamic_rotate %70 by %c1_i32_28 dim 0 : vector<16x16xf32>, i32 -> vector<16x16xf32>
    %cst_29 = arith.constant 0.000000e+00 : f32
    %78 = vector.shape_cast %18 : vector<16x1xi1> to vector<16x1xi1>
    %79 = vector.broadcast %78 : vector<16x1xi1> to vector<16x16xi1>
    %80 = vector.broadcast %cst_29 : f32 to vector<16x16xf32>
    %81 = arith.select %79, %77, %80 : vector<16x16xi1>, vector<16x16xf32>
    %82 = arith.index_cast %c2_i32 : i32 to index
    %c0_30 = arith.constant 0 : index
    %c0_31 = arith.constant 0 : index
    %83 = vector.load %arg7[%82, %c0_30, %c0_31] : memref<16x1x16xf32, #tpu.memory_space<vmem>>, vector<1x1x16xf32>
    %84 = vector.shape_cast %83 : vector<1x1x16xf32> to vector<1x16xf32>
    %85 = vector.broadcast %84 : vector<1x16xf32> to vector<16x16xf32>
    %86 = arith.mulf %85, %81 : vector<16x16xf32>
    %87 = arith.addf %76, %86 : vector<16x16xf32>
    %c3_i32 = arith.constant 3 : i32
    %c1_i32_32 = arith.constant 1 : i32
    %88 = tpu.dynamic_rotate %81 by %c1_i32_32 dim 0 : vector<16x16xf32>, i32 -> vector<16x16xf32>
    %cst_33 = arith.constant 0.000000e+00 : f32
    %89 = vector.shape_cast %18 : vector<16x1xi1> to vector<16x1xi1>
    %90 = vector.broadcast %89 : vector<16x1xi1> to vector<16x16xi1>
    %91 = vector.broadcast %cst_33 : f32 to vector<16x16xf32>
    %92 = arith.select %90, %88, %91 : vector<16x16xi1>, vector<16x16xf32>
    %93 = arith.index_cast %c3_i32 : i32 to index
    %c0_34 = arith.constant 0 : index
    %c0_35 = arith.constant 0 : index
    %94 = vector.load %arg7[%93, %c0_34, %c0_35] : memref<16x1x16xf32, #tpu.memory_space<vmem>>, vector<1x1x16xf32>
    %95 = vector.shape_cast %94 : vector<1x1x16xf32> to vector<1x16xf32>
    %96 = vector.broadcast %95 : vector<1x16xf32> to vector<16x16xf32>
    %97 = arith.mulf %96, %92 : vector<16x16xf32>
    %98 = arith.addf %87, %97 : vector<16x16xf32>
    %c4_i32 = arith.constant 4 : i32
    %c1_i32_36 = arith.constant 1 : i32
    %99 = tpu.dynamic_rotate %92 by %c1_i32_36 dim 0 : vector<16x16xf32>, i32 -> vector<16x16xf32>
    %cst_37 = arith.constant 0.000000e+00 : f32
    %100 = vector.shape_cast %18 : vector<16x1xi1> to vector<16x1xi1>
    %101 = vector.broadcast %100 : vector<16x1xi1> to vector<16x16xi1>
    %102 = vector.broadcast %cst_37 : f32 to vector<16x16xf32>
    %103 = arith.select %101, %99, %102 : vector<16x16xi1>, vector<16x16xf32>
    %104 = arith.index_cast %c4_i32 : i32 to index
    %c0_38 = arith.constant 0 : index
    %c0_39 = arith.constant 0 : index
    %105 = vector.load %arg7[%104, %c0_38, %c0_39] : memref<16x1x16xf32, #tpu.memory_space<vmem>>, vector<1x1x16xf32>
    %106 = vector.shape_cast %105 : vector<1x1x16xf32> to vector<1x16xf32>
    %107 = vector.broadcast %106 : vector<1x16xf32> to vector<16x16xf32>
    %108 = arith.mulf %107, %103 : vector<16x16xf32>
    %109 = arith.addf %98, %108 : vector<16x16xf32>
    %c5_i32 = arith.constant 5 : i32
    %c1_i32_40 = arith.constant 1 : i32
    %110 = tpu.dynamic_rotate %103 by %c1_i32_40 dim 0 : vector<16x16xf32>, i32 -> vector<16x16xf32>
    %cst_41 = arith.constant 0.000000e+00 : f32
    %111 = vector.shape_cast %18 : vector<16x1xi1> to vector<16x1xi1>
    %112 = vector.broadcast %111 : vector<16x1xi1> to vector<16x16xi1>
    %113 = vector.broadcast %cst_41 : f32 to vector<16x16xf32>
    %114 = arith.select %112, %110, %113 : vector<16x16xi1>, vector<16x16xf32>
    %115 = arith.index_cast %c5_i32 : i32 to index
    %c0_42 = arith.constant 0 : index
    %c0_43 = arith.constant 0 : index
    %116 = vector.load %arg7[%115, %c0_42, %c0_43] : memref<16x1x16xf32, #tpu.memory_space<vmem>>, vector<1x1x16xf32>
    %117 = vector.shape_cast %116 : vector<1x1x16xf32> to vector<1x16xf32>
    %118 = vector.broadcast %117 : vector<1x16xf32> to vector<16x16xf32>
    %119 = arith.mulf %118, %114 : vector<16x16xf32>
    %120 = arith.addf %109, %119 : vector<16x16xf32>
    %c6_i32 = arith.constant 6 : i32
    %c1_i32_44 = arith.constant 1 : i32
    %121 = tpu.dynamic_rotate %114 by %c1_i32_44 dim 0 : vector<16x16xf32>, i32 -> vector<16x16xf32>
    %cst_45 = arith.constant 0.000000e+00 : f32
    %122 = vector.shape_cast %18 : vector<16x1xi1> to vector<16x1xi1>
    %123 = vector.broadcast %122 : vector<16x1xi1> to vector<16x16xi1>
    %124 = vector.broadcast %cst_45 : f32 to vector<16x16xf32>
    %125 = arith.select %123, %121, %124 : vector<16x16xi1>, vector<16x16xf32>
    %126 = arith.index_cast %c6_i32 : i32 to index
    %c0_46 = arith.constant 0 : index
    %c0_47 = arith.constant 0 : index
    %127 = vector.load %arg7[%126, %c0_46, %c0_47] : memref<16x1x16xf32, #tpu.memory_space<vmem>>, vector<1x1x16xf32>
    %128 = vector.shape_cast %127 : vector<1x1x16xf32> to vector<1x16xf32>
    %129 = vector.broadcast %128 : vector<1x16xf32> to vector<16x16xf32>
    %130 = arith.mulf %129, %125 : vector<16x16xf32>
    %131 = arith.addf %120, %130 : vector<16x16xf32>
    %c7_i32 = arith.constant 7 : i32
    %c1_i32_48 = arith.constant 1 : i32
    %132 = tpu.dynamic_rotate %125 by %c1_i32_48 dim 0 : vector<16x16xf32>, i32 -> vector<16x16xf32>
    %cst_49 = arith.constant 0.000000e+00 : f32
    %133 = vector.shape_cast %18 : vector<16x1xi1> to vector<16x1xi1>
    %134 = vector.broadcast %133 : vector<16x1xi1> to vector<16x16xi1>
    %135 = vector.broadcast %cst_49 : f32 to vector<16x16xf32>
    %136 = arith.select %134, %132, %135 : vector<16x16xi1>, vector<16x16xf32>
    %137 = arith.index_cast %c7_i32 : i32 to index
    %c0_50 = arith.constant 0 : index
    %c0_51 = arith.constant 0 : index
    %138 = vector.load %arg7[%137, %c0_50, %c0_51] : memref<16x1x16xf32, #tpu.memory_space<vmem>>, vector<1x1x16xf32>
    %139 = vector.shape_cast %138 : vector<1x1x16xf32> to vector<1x16xf32>
    %140 = vector.broadcast %139 : vector<1x16xf32> to vector<16x16xf32>
    %141 = arith.mulf %140, %136 : vector<16x16xf32>
    %142 = arith.addf %131, %141 : vector<16x16xf32>
    %c8_i32 = arith.constant 8 : i32
    %c1_i32_52 = arith.constant 1 : i32
    %143 = tpu.dynamic_rotate %136 by %c1_i32_52 dim 0 : vector<16x16xf32>, i32 -> vector<16x16xf32>
    %cst_53 = arith.constant 0.000000e+00 : f32
    %144 = vector.shape_cast %18 : vector<16x1xi1> to vector<16x1xi1>
    %145 = vector.broadcast %144 : vector<16x1xi1> to vector<16x16xi1>
    %146 = vector.broadcast %cst_53 : f32 to vector<16x16xf32>
    %147 = arith.select %145, %143, %146 : vector<16x16xi1>, vector<16x16xf32>
    %148 = arith.index_cast %c8_i32 : i32 to index
    %c0_54 = arith.constant 0 : index
    %c0_55 = arith.constant 0 : index
    %149 = vector.load %arg7[%148, %c0_54, %c0_55] : memref<16x1x16xf32, #tpu.memory_space<vmem>>, vector<1x1x16xf32>
    %150 = vector.shape_cast %149 : vector<1x1x16xf32> to vector<1x16xf32>
    %151 = vector.broadcast %150 : vector<1x16xf32> to vector<16x16xf32>
    %152 = arith.mulf %151, %147 : vector<16x16xf32>
    %153 = arith.addf %142, %152 : vector<16x16xf32>
    %c9_i32 = arith.constant 9 : i32
    %c1_i32_56 = arith.constant 1 : i32
    %154 = tpu.dynamic_rotate %147 by %c1_i32_56 dim 0 : vector<16x16xf32>, i32 -> vector<16x16xf32>
    %cst_57 = arith.constant 0.000000e+00 : f32
    %155 = vector.shape_cast %18 : vector<16x1xi1> to vector<16x1xi1>
    %156 = vector.broadcast %155 : vector<16x1xi1> to vector<16x16xi1>
    %157 = vector.broadcast %cst_57 : f32 to vector<16x16xf32>
    %158 = arith.select %156, %154, %157 : vector<16x16xi1>, vector<16x16xf32>
    %159 = arith.index_cast %c9_i32 : i32 to index
    %c0_58 = arith.constant 0 : index
    %c0_59 = arith.constant 0 : index
    %160 = vector.load %arg7[%159, %c0_58, %c0_59] : memref<16x1x16xf32, #tpu.memory_space<vmem>>, vector<1x1x16xf32>
    %161 = vector.shape_cast %160 : vector<1x1x16xf32> to vector<1x16xf32>
    %162 = vector.broadcast %161 : vector<1x16xf32> to vector<16x16xf32>
    %163 = arith.mulf %162, %158 : vector<16x16xf32>
    %164 = arith.addf %153, %163 : vector<16x16xf32>
    %c10_i32 = arith.constant 10 : i32
    %c1_i32_60 = arith.constant 1 : i32
    %165 = tpu.dynamic_rotate %158 by %c1_i32_60 dim 0 : vector<16x16xf32>, i32 -> vector<16x16xf32>
    %cst_61 = arith.constant 0.000000e+00 : f32
    %166 = vector.shape_cast %18 : vector<16x1xi1> to vector<16x1xi1>
    %167 = vector.broadcast %166 : vector<16x1xi1> to vector<16x16xi1>
    %168 = vector.broadcast %cst_61 : f32 to vector<16x16xf32>
    %169 = arith.select %167, %165, %168 : vector<16x16xi1>, vector<16x16xf32>
    %170 = arith.index_cast %c10_i32 : i32 to index
    %c0_62 = arith.constant 0 : index
    %c0_63 = arith.constant 0 : index
    %171 = vector.load %arg7[%170, %c0_62, %c0_63] : memref<16x1x16xf32, #tpu.memory_space<vmem>>, vector<1x1x16xf32>
    %172 = vector.shape_cast %171 : vector<1x1x16xf32> to vector<1x16xf32>
    %173 = vector.broadcast %172 : vector<1x16xf32> to vector<16x16xf32>
    %174 = arith.mulf %173, %169 : vector<16x16xf32>
    %175 = arith.addf %164, %174 : vector<16x16xf32>
    %c11_i32 = arith.constant 11 : i32
    %c1_i32_64 = arith.constant 1 : i32
    %176 = tpu.dynamic_rotate %169 by %c1_i32_64 dim 0 : vector<16x16xf32>, i32 -> vector<16x16xf32>
    %cst_65 = arith.constant 0.000000e+00 : f32
    %177 = vector.shape_cast %18 : vector<16x1xi1> to vector<16x1xi1>
    %178 = vector.broadcast %177 : vector<16x1xi1> to vector<16x16xi1>
    %179 = vector.broadcast %cst_65 : f32 to vector<16x16xf32>
    %180 = arith.select %178, %176, %179 : vector<16x16xi1>, vector<16x16xf32>
    %181 = arith.index_cast %c11_i32 : i32 to index
    %c0_66 = arith.constant 0 : index
    %c0_67 = arith.constant 0 : index
    %182 = vector.load %arg7[%181, %c0_66, %c0_67] : memref<16x1x16xf32, #tpu.memory_space<vmem>>, vector<1x1x16xf32>
    %183 = vector.shape_cast %182 : vector<1x1x16xf32> to vector<1x16xf32>
    %184 = vector.broadcast %183 : vector<1x16xf32> to vector<16x16xf32>
    %185 = arith.mulf %184, %180 : vector<16x16xf32>
    %186 = arith.addf %175, %185 : vector<16x16xf32>
    %c12_i32 = arith.constant 12 : i32
    %c1_i32_68 = arith.constant 1 : i32
    %187 = tpu.dynamic_rotate %180 by %c1_i32_68 dim 0 : vector<16x16xf32>, i32 -> vector<16x16xf32>
    %cst_69 = arith.constant 0.000000e+00 : f32
    %188 = vector.shape_cast %18 : vector<16x1xi1> to vector<16x1xi1>
    %189 = vector.broadcast %188 : vector<16x1xi1> to vector<16x16xi1>
    %190 = vector.broadcast %cst_69 : f32 to vector<16x16xf32>
    %191 = arith.select %189, %187, %190 : vector<16x16xi1>, vector<16x16xf32>
    %192 = arith.index_cast %c12_i32 : i32 to index
    %c0_70 = arith.constant 0 : index
    %c0_71 = arith.constant 0 : index
    %193 = vector.load %arg7[%192, %c0_70, %c0_71] : memref<16x1x16xf32, #tpu.memory_space<vmem>>, vector<1x1x16xf32>
    %194 = vector.shape_cast %193 : vector<1x1x16xf32> to vector<1x16xf32>
    %195 = vector.broadcast %194 : vector<1x16xf32> to vector<16x16xf32>
    %196 = arith.mulf %195, %191 : vector<16x16xf32>
    %197 = arith.addf %186, %196 : vector<16x16xf32>
    %c13_i32 = arith.constant 13 : i32
    %c1_i32_72 = arith.constant 1 : i32
    %198 = tpu.dynamic_rotate %191 by %c1_i32_72 dim 0 : vector<16x16xf32>, i32 -> vector<16x16xf32>
    %cst_73 = arith.constant 0.000000e+00 : f32
    %199 = vector.shape_cast %18 : vector<16x1xi1> to vector<16x1xi1>
    %200 = vector.broadcast %199 : vector<16x1xi1> to vector<16x16xi1>
    %201 = vector.broadcast %cst_73 : f32 to vector<16x16xf32>
    %202 = arith.select %200, %198, %201 : vector<16x16xi1>, vector<16x16xf32>
    %203 = arith.index_cast %c13_i32 : i32 to index
    %c0_74 = arith.constant 0 : index
    %c0_75 = arith.constant 0 : index
    %204 = vector.load %arg7[%203, %c0_74, %c0_75] : memref<16x1x16xf32, #tpu.memory_space<vmem>>, vector<1x1x16xf32>
    %205 = vector.shape_cast %204 : vector<1x1x16xf32> to vector<1x16xf32>
    %206 = vector.broadcast %205 : vector<1x16xf32> to vector<16x16xf32>
    %207 = arith.mulf %206, %202 : vector<16x16xf32>
    %208 = arith.addf %197, %207 : vector<16x16xf32>
    %c14_i32 = arith.constant 14 : i32
    %c1_i32_76 = arith.constant 1 : i32
    %209 = tpu.dynamic_rotate %202 by %c1_i32_76 dim 0 : vector<16x16xf32>, i32 -> vector<16x16xf32>
    %cst_77 = arith.constant 0.000000e+00 : f32
    %210 = vector.shape_cast %18 : vector<16x1xi1> to vector<16x1xi1>
    %211 = vector.broadcast %210 : vector<16x1xi1> to vector<16x16xi1>
    %212 = vector.broadcast %cst_77 : f32 to vector<16x16xf32>
    %213 = arith.select %211, %209, %212 : vector<16x16xi1>, vector<16x16xf32>
    %214 = arith.index_cast %c14_i32 : i32 to index
    %c0_78 = arith.constant 0 : index
    %c0_79 = arith.constant 0 : index
    %215 = vector.load %arg7[%214, %c0_78, %c0_79] : memref<16x1x16xf32, #tpu.memory_space<vmem>>, vector<1x1x16xf32>
    %216 = vector.shape_cast %215 : vector<1x1x16xf32> to vector<1x16xf32>
    %217 = vector.broadcast %216 : vector<1x16xf32> to vector<16x16xf32>
    %218 = arith.mulf %217, %213 : vector<16x16xf32>
    %219 = arith.addf %208, %218 : vector<16x16xf32>
    %c15_i32 = arith.constant 15 : i32
    %c1_i32_80 = arith.constant 1 : i32
    %220 = tpu.dynamic_rotate %213 by %c1_i32_80 dim 0 : vector<16x16xf32>, i32 -> vector<16x16xf32>
    %cst_81 = arith.constant 0.000000e+00 : f32
    %221 = vector.shape_cast %18 : vector<16x1xi1> to vector<16x1xi1>
    %222 = vector.broadcast %221 : vector<16x1xi1> to vector<16x16xi1>
    %223 = vector.broadcast %cst_81 : f32 to vector<16x16xf32>
    %224 = arith.select %222, %220, %223 : vector<16x16xi1>, vector<16x16xf32>
    %225 = arith.index_cast %c15_i32 : i32 to index
    %c0_82 = arith.constant 0 : index
    %c0_83 = arith.constant 0 : index
    %226 = vector.load %arg7[%225, %c0_82, %c0_83] : memref<16x1x16xf32, #tpu.memory_space<vmem>>, vector<1x1x16xf32>
    %227 = vector.shape_cast %226 : vector<1x1x16xf32> to vector<1x16xf32>
    %228 = vector.broadcast %227 : vector<1x16xf32> to vector<16x16xf32>
    %229 = arith.mulf %228, %224 : vector<16x16xf32>
    %230 = arith.addf %219, %229 : vector<16x16xf32>
    %c15_i32_84 = arith.constant 15 : i32
    %c0_85 = arith.constant 0 : index
    %c0_86 = arith.constant 0 : index
    %231 = vector.load %arg8[%c0_85, %c0_86] : memref<1x16xf32, #tpu.memory_space<vmem>>, vector<1x16xf32>
    %232 = vector.broadcast %231 : vector<1x16xf32> to vector<16x16xf32>
    %233 = arith.mulf %232, %61 : vector<16x16xf32>
    %234 = arith.addf %230, %233 : vector<16x16xf32>
    %235 = arith.mulf %234, %58 : vector<16x16xf32>
    %236 = arith.truncf %235 : vector<16x16xf32> to vector<16x16xbf16>
    %c0_87 = arith.constant 0 : index
    %c0_88 = arith.constant 0 : index
    %237 = vector.load %arg9[%c0_87, %c0_88] : memref<16x32xbf16, #tpu.memory_space<vmem>>, vector<16x32xbf16>
    %cst_89 = arith.constant dense<0.000000e+00> : vector<16x32xf32>
    %238 = tpu.matmul %236, %237, %cst_89 {dimension_numbers = #tpu.dot_dimension_numbers<[1], [0], [0], [1], [0, 0, 1, 1], [], []>} : vector<16x16xbf16>, vector<16x32xbf16>, vector<16x32xf32> -> vector<16x32xf32>
    %c0_90 = arith.constant 0 : index
    %c0_91 = arith.constant 0 : index
    %239 = vector.load %arg10[%c0_90, %c0_91] : memref<1x32xf32, #tpu.memory_space<vmem>>, vector<1x32xf32>
    %240 = vector.broadcast %239 : vector<1x32xf32> to vector<16x32xf32>
    %241 = arith.addf %238, %240 : vector<16x32xf32>
    %242 = arith.truncf %241 : vector<16x32xf32> to vector<16x32xbf16>
    %c0_92 = arith.constant 0 : index
    %c0_93 = arith.constant 0 : index
    %243 = vector.load %arg11[%c0_92, %c0_93] : memref<32x96xbf16, #tpu.memory_space<vmem>>, vector<32x96xbf16>
    %cst_94 = arith.constant dense<0.000000e+00> : vector<16x96xf32>
    %244 = tpu.matmul %242, %243, %cst_94 {dimension_numbers = #tpu.dot_dimension_numbers<[1], [0], [0], [1], [0, 0, 1, 1], [], []>} : vector<16x32xbf16>, vector<32x96xbf16>, vector<16x96xf32> -> vector<16x96xf32>
    %c0_95 = arith.constant 0 : index
    %c0_96 = arith.constant 0 : index
    %245 = vector.load %arg12[%c0_95, %c0_96] : memref<1x96xf32, #tpu.memory_space<vmem>>, vector<1x96xf32>
    %246 = vector.broadcast %245 : vector<1x96xf32> to vector<16x96xf32>
    %247 = arith.addf %244, %246 : vector<16x96xf32>
    %c0_97 = arith.constant 0 : index
    %c0_98 = arith.constant 0 : index
    %248 = vector.load %arg13[%c0_97, %c0_98] : memref<3x96xf32, #tpu.memory_space<vmem>>, vector<3x96xf32>
    %c1_i32_99 = arith.constant 1 : i32
    %249 = tpu.dynamic_rotate %247 by %c1_i32_99 dim 0 : vector<16x96xf32>, i32 -> vector<16x96xf32>
    %cst_100 = arith.constant 0.000000e+00 : f32
    %250 = vector.shape_cast %18 : vector<16x1xi1> to vector<16x1xi1>
    %251 = vector.broadcast %250 : vector<16x1xi1> to vector<16x96xi1>
    %252 = vector.broadcast %cst_100 : f32 to vector<16x96xf32>
    %253 = arith.select %251, %249, %252 : vector<16x96xi1>, vector<16x96xf32>
    %c1_i32_101 = arith.constant 1 : i32
    %254 = tpu.dynamic_rotate %253 by %c1_i32_101 dim 0 : vector<16x96xf32>, i32 -> vector<16x96xf32>
    %cst_102 = arith.constant 0.000000e+00 : f32
    %255 = vector.shape_cast %18 : vector<16x1xi1> to vector<16x1xi1>
    %256 = vector.broadcast %255 : vector<16x1xi1> to vector<16x96xi1>
    %257 = vector.broadcast %cst_102 : f32 to vector<16x96xf32>
    %258 = arith.select %256, %254, %257 : vector<16x96xi1>, vector<16x96xf32>
    %259 = vector.extract_strided_slice %248 {offsets = [2, 0], sizes = [1, 96], strides = [1, 1]} : vector<3x96xf32> to vector<1x96xf32>
    %260 = vector.broadcast %259 : vector<1x96xf32> to vector<16x96xf32>
    %261 = arith.mulf %260, %247 : vector<16x96xf32>
    %262 = vector.extract_strided_slice %248 {offsets = [1, 0], sizes = [1, 96], strides = [1, 1]} : vector<3x96xf32> to vector<1x96xf32>
    %263 = vector.broadcast %262 : vector<1x96xf32> to vector<16x96xf32>
    %264 = arith.mulf %263, %253 : vector<16x96xf32>
    %265 = arith.addf %261, %264 : vector<16x96xf32>
    %266 = vector.extract_strided_slice %248 {offsets = [0, 0], sizes = [1, 96], strides = [1, 1]} : vector<3x96xf32> to vector<1x96xf32>
    %267 = vector.broadcast %266 : vector<1x96xf32> to vector<16x96xf32>
    %268 = arith.mulf %267, %258 : vector<16x96xf32>
    %269 = arith.addf %265, %268 : vector<16x96xf32>
    %c0_103 = arith.constant 0 : index
    %c0_104 = arith.constant 0 : index
    %270 = vector.load %arg14[%c0_103, %c0_104] : memref<1x96xf32, #tpu.memory_space<vmem>>, vector<1x96xf32>
    %271 = vector.broadcast %270 : vector<1x96xf32> to vector<16x96xf32>
    %272 = arith.addf %269, %271 : vector<16x96xf32>
    %273 = vector.extract_strided_slice %272 {offsets = [0, 0], sizes = [16, 32], strides = [1, 1]} : vector<16x96xf32> to vector<16x32xf32>
    %274 = vector.extract_strided_slice %272 {offsets = [0, 32], sizes = [16, 32], strides = [1, 1]} : vector<16x96xf32> to vector<16x32xf32>
    %275 = vector.extract_strided_slice %272 {offsets = [0, 64], sizes = [16, 32], strides = [1, 1]} : vector<16x96xf32> to vector<16x32xf32>
    %276 = arith.mulf %275, %274 : vector<16x32xf32>
    %c0_105 = arith.constant 0 : index
    %c0_106 = arith.constant 0 : index
    %c0_107 = arith.constant 0 : index
    %277 = vector.load %arg15[%c0_105, %c0_106, %c0_107] : memref<16x1x32xf32, #tpu.memory_space<vmem>>, vector<1x1x32xf32>
    %278 = vector.shape_cast %277 : vector<1x1x32xf32> to vector<1x32xf32>
    %279 = vector.broadcast %278 : vector<1x32xf32> to vector<16x32xf32>
    %280 = arith.mulf %279, %276 : vector<16x32xf32>
    %c1_i32_108 = arith.constant 1 : i32
    %c1_i32_109 = arith.constant 1 : i32
    %281 = tpu.dynamic_rotate %276 by %c1_i32_109 dim 0 : vector<16x32xf32>, i32 -> vector<16x32xf32>
    %cst_110 = arith.constant 0.000000e+00 : f32
    %282 = vector.shape_cast %18 : vector<16x1xi1> to vector<16x1xi1>
    %283 = vector.broadcast %282 : vector<16x1xi1> to vector<16x32xi1>
    %284 = vector.broadcast %cst_110 : f32 to vector<16x32xf32>
    %285 = arith.select %283, %281, %284 : vector<16x32xi1>, vector<16x32xf32>
    %286 = arith.index_cast %c1_i32_108 : i32 to index
    %c0_111 = arith.constant 0 : index
    %c0_112 = arith.constant 0 : index
    %287 = vector.load %arg15[%286, %c0_111, %c0_112] : memref<16x1x32xf32, #tpu.memory_space<vmem>>, vector<1x1x32xf32>
    %288 = vector.shape_cast %287 : vector<1x1x32xf32> to vector<1x32xf32>
    %289 = vector.broadcast %288 : vector<1x32xf32> to vector<16x32xf32>
    %290 = arith.mulf %289, %285 : vector<16x32xf32>
    %291 = arith.addf %280, %290 : vector<16x32xf32>
    %c2_i32_113 = arith.constant 2 : i32
    %c1_i32_114 = arith.constant 1 : i32
    %292 = tpu.dynamic_rotate %285 by %c1_i32_114 dim 0 : vector<16x32xf32>, i32 -> vector<16x32xf32>
    %cst_115 = arith.constant 0.000000e+00 : f32
    %293 = vector.shape_cast %18 : vector<16x1xi1> to vector<16x1xi1>
    %294 = vector.broadcast %293 : vector<16x1xi1> to vector<16x32xi1>
    %295 = vector.broadcast %cst_115 : f32 to vector<16x32xf32>
    %296 = arith.select %294, %292, %295 : vector<16x32xi1>, vector<16x32xf32>
    %297 = arith.index_cast %c2_i32_113 : i32 to index
    %c0_116 = arith.constant 0 : index
    %c0_117 = arith.constant 0 : index
    %298 = vector.load %arg15[%297, %c0_116, %c0_117] : memref<16x1x32xf32, #tpu.memory_space<vmem>>, vector<1x1x32xf32>
    %299 = vector.shape_cast %298 : vector<1x1x32xf32> to vector<1x32xf32>
    %300 = vector.broadcast %299 : vector<1x32xf32> to vector<16x32xf32>
    %301 = arith.mulf %300, %296 : vector<16x32xf32>
    %302 = arith.addf %291, %301 : vector<16x32xf32>
    %c3_i32_118 = arith.constant 3 : i32
    %c1_i32_119 = arith.constant 1 : i32
    %303 = tpu.dynamic_rotate %296 by %c1_i32_119 dim 0 : vector<16x32xf32>, i32 -> vector<16x32xf32>
    %cst_120 = arith.constant 0.000000e+00 : f32
    %304 = vector.shape_cast %18 : vector<16x1xi1> to vector<16x1xi1>
    %305 = vector.broadcast %304 : vector<16x1xi1> to vector<16x32xi1>
    %306 = vector.broadcast %cst_120 : f32 to vector<16x32xf32>
    %307 = arith.select %305, %303, %306 : vector<16x32xi1>, vector<16x32xf32>
    %308 = arith.index_cast %c3_i32_118 : i32 to index
    %c0_121 = arith.constant 0 : index
    %c0_122 = arith.constant 0 : index
    %309 = vector.load %arg15[%308, %c0_121, %c0_122] : memref<16x1x32xf32, #tpu.memory_space<vmem>>, vector<1x1x32xf32>
    %310 = vector.shape_cast %309 : vector<1x1x32xf32> to vector<1x32xf32>
    %311 = vector.broadcast %310 : vector<1x32xf32> to vector<16x32xf32>
    %312 = arith.mulf %311, %307 : vector<16x32xf32>
    %313 = arith.addf %302, %312 : vector<16x32xf32>
    %c4_i32_123 = arith.constant 4 : i32
    %c1_i32_124 = arith.constant 1 : i32
    %314 = tpu.dynamic_rotate %307 by %c1_i32_124 dim 0 : vector<16x32xf32>, i32 -> vector<16x32xf32>
    %cst_125 = arith.constant 0.000000e+00 : f32
    %315 = vector.shape_cast %18 : vector<16x1xi1> to vector<16x1xi1>
    %316 = vector.broadcast %315 : vector<16x1xi1> to vector<16x32xi1>
    %317 = vector.broadcast %cst_125 : f32 to vector<16x32xf32>
    %318 = arith.select %316, %314, %317 : vector<16x32xi1>, vector<16x32xf32>
    %319 = arith.index_cast %c4_i32_123 : i32 to index
    %c0_126 = arith.constant 0 : index
    %c0_127 = arith.constant 0 : index
    %320 = vector.load %arg15[%319, %c0_126, %c0_127] : memref<16x1x32xf32, #tpu.memory_space<vmem>>, vector<1x1x32xf32>
    %321 = vector.shape_cast %320 : vector<1x1x32xf32> to vector<1x32xf32>
    %322 = vector.broadcast %321 : vector<1x32xf32> to vector<16x32xf32>
    %323 = arith.mulf %322, %318 : vector<16x32xf32>
    %324 = arith.addf %313, %323 : vector<16x32xf32>
    %c5_i32_128 = arith.constant 5 : i32
    %c1_i32_129 = arith.constant 1 : i32
    %325 = tpu.dynamic_rotate %318 by %c1_i32_129 dim 0 : vector<16x32xf32>, i32 -> vector<16x32xf32>
    %cst_130 = arith.constant 0.000000e+00 : f32
    %326 = vector.shape_cast %18 : vector<16x1xi1> to vector<16x1xi1>
    %327 = vector.broadcast %326 : vector<16x1xi1> to vector<16x32xi1>
    %328 = vector.broadcast %cst_130 : f32 to vector<16x32xf32>
    %329 = arith.select %327, %325, %328 : vector<16x32xi1>, vector<16x32xf32>
    %330 = arith.index_cast %c5_i32_128 : i32 to index
    %c0_131 = arith.constant 0 : index
    %c0_132 = arith.constant 0 : index
    %331 = vector.load %arg15[%330, %c0_131, %c0_132] : memref<16x1x32xf32, #tpu.memory_space<vmem>>, vector<1x1x32xf32>
    %332 = vector.shape_cast %331 : vector<1x1x32xf32> to vector<1x32xf32>
    %333 = vector.broadcast %332 : vector<1x32xf32> to vector<16x32xf32>
    %334 = arith.mulf %333, %329 : vector<16x32xf32>
    %335 = arith.addf %324, %334 : vector<16x32xf32>
    %c6_i32_133 = arith.constant 6 : i32
    %c1_i32_134 = arith.constant 1 : i32
    %336 = tpu.dynamic_rotate %329 by %c1_i32_134 dim 0 : vector<16x32xf32>, i32 -> vector<16x32xf32>
    %cst_135 = arith.constant 0.000000e+00 : f32
    %337 = vector.shape_cast %18 : vector<16x1xi1> to vector<16x1xi1>
    %338 = vector.broadcast %337 : vector<16x1xi1> to vector<16x32xi1>
    %339 = vector.broadcast %cst_135 : f32 to vector<16x32xf32>
    %340 = arith.select %338, %336, %339 : vector<16x32xi1>, vector<16x32xf32>
    %341 = arith.index_cast %c6_i32_133 : i32 to index
    %c0_136 = arith.constant 0 : index
    %c0_137 = arith.constant 0 : index
    %342 = vector.load %arg15[%341, %c0_136, %c0_137] : memref<16x1x32xf32, #tpu.memory_space<vmem>>, vector<1x1x32xf32>
    %343 = vector.shape_cast %342 : vector<1x1x32xf32> to vector<1x32xf32>
    %344 = vector.broadcast %343 : vector<1x32xf32> to vector<16x32xf32>
    %345 = arith.mulf %344, %340 : vector<16x32xf32>
    %346 = arith.addf %335, %345 : vector<16x32xf32>
    %c7_i32_138 = arith.constant 7 : i32
    %c1_i32_139 = arith.constant 1 : i32
    %347 = tpu.dynamic_rotate %340 by %c1_i32_139 dim 0 : vector<16x32xf32>, i32 -> vector<16x32xf32>
    %cst_140 = arith.constant 0.000000e+00 : f32
    %348 = vector.shape_cast %18 : vector<16x1xi1> to vector<16x1xi1>
    %349 = vector.broadcast %348 : vector<16x1xi1> to vector<16x32xi1>
    %350 = vector.broadcast %cst_140 : f32 to vector<16x32xf32>
    %351 = arith.select %349, %347, %350 : vector<16x32xi1>, vector<16x32xf32>
    %352 = arith.index_cast %c7_i32_138 : i32 to index
    %c0_141 = arith.constant 0 : index
    %c0_142 = arith.constant 0 : index
    %353 = vector.load %arg15[%352, %c0_141, %c0_142] : memref<16x1x32xf32, #tpu.memory_space<vmem>>, vector<1x1x32xf32>
    %354 = vector.shape_cast %353 : vector<1x1x32xf32> to vector<1x32xf32>
    %355 = vector.broadcast %354 : vector<1x32xf32> to vector<16x32xf32>
    %356 = arith.mulf %355, %351 : vector<16x32xf32>
    %357 = arith.addf %346, %356 : vector<16x32xf32>
    %c8_i32_143 = arith.constant 8 : i32
    %c1_i32_144 = arith.constant 1 : i32
    %358 = tpu.dynamic_rotate %351 by %c1_i32_144 dim 0 : vector<16x32xf32>, i32 -> vector<16x32xf32>
    %cst_145 = arith.constant 0.000000e+00 : f32
    %359 = vector.shape_cast %18 : vector<16x1xi1> to vector<16x1xi1>
    %360 = vector.broadcast %359 : vector<16x1xi1> to vector<16x32xi1>
    %361 = vector.broadcast %cst_145 : f32 to vector<16x32xf32>
    %362 = arith.select %360, %358, %361 : vector<16x32xi1>, vector<16x32xf32>
    %363 = arith.index_cast %c8_i32_143 : i32 to index
    %c0_146 = arith.constant 0 : index
    %c0_147 = arith.constant 0 : index
    %364 = vector.load %arg15[%363, %c0_146, %c0_147] : memref<16x1x32xf32, #tpu.memory_space<vmem>>, vector<1x1x32xf32>
    %365 = vector.shape_cast %364 : vector<1x1x32xf32> to vector<1x32xf32>
    %366 = vector.broadcast %365 : vector<1x32xf32> to vector<16x32xf32>
    %367 = arith.mulf %366, %362 : vector<16x32xf32>
    %368 = arith.addf %357, %367 : vector<16x32xf32>
    %c9_i32_148 = arith.constant 9 : i32
    %c1_i32_149 = arith.constant 1 : i32
    %369 = tpu.dynamic_rotate %362 by %c1_i32_149 dim 0 : vector<16x32xf32>, i32 -> vector<16x32xf32>
    %cst_150 = arith.constant 0.000000e+00 : f32
    %370 = vector.shape_cast %18 : vector<16x1xi1> to vector<16x1xi1>
    %371 = vector.broadcast %370 : vector<16x1xi1> to vector<16x32xi1>
    %372 = vector.broadcast %cst_150 : f32 to vector<16x32xf32>
    %373 = arith.select %371, %369, %372 : vector<16x32xi1>, vector<16x32xf32>
    %374 = arith.index_cast %c9_i32_148 : i32 to index
    %c0_151 = arith.constant 0 : index
    %c0_152 = arith.constant 0 : index
    %375 = vector.load %arg15[%374, %c0_151, %c0_152] : memref<16x1x32xf32, #tpu.memory_space<vmem>>, vector<1x1x32xf32>
    %376 = vector.shape_cast %375 : vector<1x1x32xf32> to vector<1x32xf32>
    %377 = vector.broadcast %376 : vector<1x32xf32> to vector<16x32xf32>
    %378 = arith.mulf %377, %373 : vector<16x32xf32>
    %379 = arith.addf %368, %378 : vector<16x32xf32>
    %c10_i32_153 = arith.constant 10 : i32
    %c1_i32_154 = arith.constant 1 : i32
    %380 = tpu.dynamic_rotate %373 by %c1_i32_154 dim 0 : vector<16x32xf32>, i32 -> vector<16x32xf32>
    %cst_155 = arith.constant 0.000000e+00 : f32
    %381 = vector.shape_cast %18 : vector<16x1xi1> to vector<16x1xi1>
    %382 = vector.broadcast %381 : vector<16x1xi1> to vector<16x32xi1>
    %383 = vector.broadcast %cst_155 : f32 to vector<16x32xf32>
    %384 = arith.select %382, %380, %383 : vector<16x32xi1>, vector<16x32xf32>
    %385 = arith.index_cast %c10_i32_153 : i32 to index
    %c0_156 = arith.constant 0 : index
    %c0_157 = arith.constant 0 : index
    %386 = vector.load %arg15[%385, %c0_156, %c0_157] : memref<16x1x32xf32, #tpu.memory_space<vmem>>, vector<1x1x32xf32>
    %387 = vector.shape_cast %386 : vector<1x1x32xf32> to vector<1x32xf32>
    %388 = vector.broadcast %387 : vector<1x32xf32> to vector<16x32xf32>
    %389 = arith.mulf %388, %384 : vector<16x32xf32>
    %390 = arith.addf %379, %389 : vector<16x32xf32>
    %c11_i32_158 = arith.constant 11 : i32
    %c1_i32_159 = arith.constant 1 : i32
    %391 = tpu.dynamic_rotate %384 by %c1_i32_159 dim 0 : vector<16x32xf32>, i32 -> vector<16x32xf32>
    %cst_160 = arith.constant 0.000000e+00 : f32
    %392 = vector.shape_cast %18 : vector<16x1xi1> to vector<16x1xi1>
    %393 = vector.broadcast %392 : vector<16x1xi1> to vector<16x32xi1>
    %394 = vector.broadcast %cst_160 : f32 to vector<16x32xf32>
    %395 = arith.select %393, %391, %394 : vector<16x32xi1>, vector<16x32xf32>
    %396 = arith.index_cast %c11_i32_158 : i32 to index
    %c0_161 = arith.constant 0 : index
    %c0_162 = arith.constant 0 : index
    %397 = vector.load %arg15[%396, %c0_161, %c0_162] : memref<16x1x32xf32, #tpu.memory_space<vmem>>, vector<1x1x32xf32>
    %398 = vector.shape_cast %397 : vector<1x1x32xf32> to vector<1x32xf32>
    %399 = vector.broadcast %398 : vector<1x32xf32> to vector<16x32xf32>
    %400 = arith.mulf %399, %395 : vector<16x32xf32>
    %401 = arith.addf %390, %400 : vector<16x32xf32>
    %c12_i32_163 = arith.constant 12 : i32
    %c1_i32_164 = arith.constant 1 : i32
    %402 = tpu.dynamic_rotate %395 by %c1_i32_164 dim 0 : vector<16x32xf32>, i32 -> vector<16x32xf32>
    %cst_165 = arith.constant 0.000000e+00 : f32
    %403 = vector.shape_cast %18 : vector<16x1xi1> to vector<16x1xi1>
    %404 = vector.broadcast %403 : vector<16x1xi1> to vector<16x32xi1>
    %405 = vector.broadcast %cst_165 : f32 to vector<16x32xf32>
    %406 = arith.select %404, %402, %405 : vector<16x32xi1>, vector<16x32xf32>
    %407 = arith.index_cast %c12_i32_163 : i32 to index
    %c0_166 = arith.constant 0 : index
    %c0_167 = arith.constant 0 : index
    %408 = vector.load %arg15[%407, %c0_166, %c0_167] : memref<16x1x32xf32, #tpu.memory_space<vmem>>, vector<1x1x32xf32>
    %409 = vector.shape_cast %408 : vector<1x1x32xf32> to vector<1x32xf32>
    %410 = vector.broadcast %409 : vector<1x32xf32> to vector<16x32xf32>
    %411 = arith.mulf %410, %406 : vector<16x32xf32>
    %412 = arith.addf %401, %411 : vector<16x32xf32>
    %c13_i32_168 = arith.constant 13 : i32
    %c1_i32_169 = arith.constant 1 : i32
    %413 = tpu.dynamic_rotate %406 by %c1_i32_169 dim 0 : vector<16x32xf32>, i32 -> vector<16x32xf32>
    %cst_170 = arith.constant 0.000000e+00 : f32
    %414 = vector.shape_cast %18 : vector<16x1xi1> to vector<16x1xi1>
    %415 = vector.broadcast %414 : vector<16x1xi1> to vector<16x32xi1>
    %416 = vector.broadcast %cst_170 : f32 to vector<16x32xf32>
    %417 = arith.select %415, %413, %416 : vector<16x32xi1>, vector<16x32xf32>
    %418 = arith.index_cast %c13_i32_168 : i32 to index
    %c0_171 = arith.constant 0 : index
    %c0_172 = arith.constant 0 : index
    %419 = vector.load %arg15[%418, %c0_171, %c0_172] : memref<16x1x32xf32, #tpu.memory_space<vmem>>, vector<1x1x32xf32>
    %420 = vector.shape_cast %419 : vector<1x1x32xf32> to vector<1x32xf32>
    %421 = vector.broadcast %420 : vector<1x32xf32> to vector<16x32xf32>
    %422 = arith.mulf %421, %417 : vector<16x32xf32>
    %423 = arith.addf %412, %422 : vector<16x32xf32>
    %c14_i32_173 = arith.constant 14 : i32
    %c1_i32_174 = arith.constant 1 : i32
    %424 = tpu.dynamic_rotate %417 by %c1_i32_174 dim 0 : vector<16x32xf32>, i32 -> vector<16x32xf32>
    %cst_175 = arith.constant 0.000000e+00 : f32
    %425 = vector.shape_cast %18 : vector<16x1xi1> to vector<16x1xi1>
    %426 = vector.broadcast %425 : vector<16x1xi1> to vector<16x32xi1>
    %427 = vector.broadcast %cst_175 : f32 to vector<16x32xf32>
    %428 = arith.select %426, %424, %427 : vector<16x32xi1>, vector<16x32xf32>
    %429 = arith.index_cast %c14_i32_173 : i32 to index
    %c0_176 = arith.constant 0 : index
    %c0_177 = arith.constant 0 : index
    %430 = vector.load %arg15[%429, %c0_176, %c0_177] : memref<16x1x32xf32, #tpu.memory_space<vmem>>, vector<1x1x32xf32>
    %431 = vector.shape_cast %430 : vector<1x1x32xf32> to vector<1x32xf32>
    %432 = vector.broadcast %431 : vector<1x32xf32> to vector<16x32xf32>
    %433 = arith.mulf %432, %428 : vector<16x32xf32>
    %434 = arith.addf %423, %433 : vector<16x32xf32>
    %c15_i32_178 = arith.constant 15 : i32
    %c1_i32_179 = arith.constant 1 : i32
    %435 = tpu.dynamic_rotate %428 by %c1_i32_179 dim 0 : vector<16x32xf32>, i32 -> vector<16x32xf32>
    %cst_180 = arith.constant 0.000000e+00 : f32
    %436 = vector.shape_cast %18 : vector<16x1xi1> to vector<16x1xi1>
    %437 = vector.broadcast %436 : vector<16x1xi1> to vector<16x32xi1>
    %438 = vector.broadcast %cst_180 : f32 to vector<16x32xf32>
    %439 = arith.select %437, %435, %438 : vector<16x32xi1>, vector<16x32xf32>
    %440 = arith.index_cast %c15_i32_178 : i32 to index
    %c0_181 = arith.constant 0 : index
    %c0_182 = arith.constant 0 : index
    %441 = vector.load %arg15[%440, %c0_181, %c0_182] : memref<16x1x32xf32, #tpu.memory_space<vmem>>, vector<1x1x32xf32>
    %442 = vector.shape_cast %441 : vector<1x1x32xf32> to vector<1x32xf32>
    %443 = vector.broadcast %442 : vector<1x32xf32> to vector<16x32xf32>
    %444 = arith.mulf %443, %439 : vector<16x32xf32>
    %445 = arith.addf %434, %444 : vector<16x32xf32>
    %c15_i32_183 = arith.constant 15 : i32
    %c0_184 = arith.constant 0 : index
    %c0_185 = arith.constant 0 : index
    %446 = vector.load %arg16[%c0_184, %c0_185] : memref<1x32xf32, #tpu.memory_space<vmem>>, vector<1x32xf32>
    %447 = vector.broadcast %446 : vector<1x32xf32> to vector<16x32xf32>
    %448 = arith.mulf %447, %276 : vector<16x32xf32>
    %449 = arith.addf %445, %448 : vector<16x32xf32>
    %450 = arith.mulf %449, %273 : vector<16x32xf32>
    %451 = arith.truncf %450 : vector<16x32xf32> to vector<16x32xbf16>
    %c0_186 = arith.constant 0 : index
    %c0_187 = arith.constant 0 : index
    %452 = vector.load %arg17[%c0_186, %c0_187] : memref<32x32xbf16, #tpu.memory_space<vmem>>, vector<32x32xbf16>
    %cst_188 = arith.constant dense<0.000000e+00> : vector<16x32xf32>
    %453 = tpu.matmul %451, %452, %cst_188 {dimension_numbers = #tpu.dot_dimension_numbers<[1], [0], [0], [1], [0, 0, 1, 1], [], []>} : vector<16x32xbf16>, vector<32x32xbf16>, vector<16x32xf32> -> vector<16x32xf32>
    %c0_189 = arith.constant 0 : index
    %c0_190 = arith.constant 0 : index
    %454 = vector.load %arg18[%c0_189, %c0_190] : memref<1x32xf32, #tpu.memory_space<vmem>>, vector<1x32xf32>
    %455 = vector.broadcast %454 : vector<1x32xf32> to vector<16x32xf32>
    %456 = arith.addf %453, %455 : vector<16x32xf32>
    %457 = vector.shape_cast %456 : vector<16x32xf32> to vector<1x16x32xf32>
    %cst_191 = arith.constant dense<0xFF800000> : vector<1x32xf32>
    %458 = vector.multi_reduction <maximumf>, %457, %cst_191 [1] : vector<1x16x32xf32> to vector<1x32xf32>
    %459 = arith.truncf %458 : vector<1x32xf32> to vector<1x32xbf16>
    %c0_192 = arith.constant 0 : index
    %c0_193 = arith.constant 0 : index
    %460 = vector.load %arg19[%c0_192, %c0_193] : memref<32x1024xbf16, #tpu.memory_space<vmem>>, vector<32x1024xbf16>
    %cst_194 = arith.constant dense<0.000000e+00> : vector<1x1024xf32>
    %461 = tpu.matmul %459, %460, %cst_194 {dimension_numbers = #tpu.dot_dimension_numbers<[1], [0], [0], [1], [0, 0, 1, 1], [], []>} : vector<1x32xbf16>, vector<32x1024xbf16>, vector<1x1024xf32> -> vector<1x1024xf32>
    %c0_195 = arith.constant 0 : index
    %c0_196 = arith.constant 0 : index
    %462 = vector.load %arg20[%c0_195, %c0_196] : memref<1x1024xf32, #tpu.memory_space<vmem>>, vector<1x1024xf32>
    %463 = arith.addf %461, %462 : vector<1x1024xf32>
    %cst_197 = arith.constant 0.000000e+00 : f32
    %464 = vector.broadcast %cst_197 : f32 to vector<1x1024xf32>
    %465 = arith.maximumf %463, %464 : vector<1x1024xf32>
    %466 = arith.truncf %465 : vector<1x1024xf32> to vector<1x1024xbf16>
    %c0_198 = arith.constant 0 : index
    %c0_199 = arith.constant 0 : index
    %467 = vector.load %arg21[%c0_198, %c0_199] : memref<1024x1024xbf16, #tpu.memory_space<vmem>>, vector<1024x1024xbf16>
    %cst_200 = arith.constant dense<0.000000e+00> : vector<1x1024xf32>
    %468 = tpu.matmul %466, %467, %cst_200 {dimension_numbers = #tpu.dot_dimension_numbers<[1], [0], [0], [1], [0, 0, 1, 1], [], []>} : vector<1x1024xbf16>, vector<1024x1024xbf16>, vector<1x1024xf32> -> vector<1x1024xf32>
    %c0_201 = arith.constant 0 : index
    %c0_202 = arith.constant 0 : index
    %469 = vector.load %arg22[%c0_201, %c0_202] : memref<1x1024xf32, #tpu.memory_space<vmem>>, vector<1x1024xf32>
    %470 = arith.addf %468, %469 : vector<1x1024xf32>
    %cst_203 = arith.constant 0.000000e+00 : f32
    %471 = vector.broadcast %cst_203 : f32 to vector<1x1024xf32>
    %472 = arith.maximumf %470, %471 : vector<1x1024xf32>
    %473 = arith.truncf %472 : vector<1x1024xf32> to vector<1x1024xbf16>
    %c0_204 = arith.constant 0 : index
    %c0_205 = arith.constant 0 : index
    %474 = vector.load %arg23[%c0_204, %c0_205] : memref<1024x512xbf16, #tpu.memory_space<vmem>>, vector<1024x512xbf16>
    %cst_206 = arith.constant dense<0.000000e+00> : vector<1x512xf32>
    %475 = tpu.matmul %473, %474, %cst_206 {dimension_numbers = #tpu.dot_dimension_numbers<[1], [0], [0], [1], [0, 0, 1, 1], [], []>} : vector<1x1024xbf16>, vector<1024x512xbf16>, vector<1x512xf32> -> vector<1x512xf32>
    %c0_207 = arith.constant 0 : index
    %c0_208 = arith.constant 0 : index
    %476 = vector.load %arg24[%c0_207, %c0_208] : memref<1x512xf32, #tpu.memory_space<vmem>>, vector<1x512xf32>
    %477 = arith.addf %475, %476 : vector<1x512xf32>
    %cst_209 = arith.constant 0.000000e+00 : f32
    %478 = vector.broadcast %cst_209 : f32 to vector<1x512xf32>
    %479 = arith.maximumf %477, %478 : vector<1x512xf32>
    %480 = arith.truncf %479 : vector<1x512xf32> to vector<1x512xbf16>
    %c0_210 = arith.constant 0 : index
    %c0_211 = arith.constant 0 : index
    %481 = vector.load %arg25[%c0_210, %c0_211] : memref<512x128xbf16, #tpu.memory_space<vmem>>, vector<512x128xbf16>
    %cst_212 = arith.constant dense<0.000000e+00> : vector<1x128xf32>
    %482 = tpu.matmul %480, %481, %cst_212 {dimension_numbers = #tpu.dot_dimension_numbers<[1], [0], [0], [1], [0, 0, 1, 1], [], []>} : vector<1x512xbf16>, vector<512x128xbf16>, vector<1x128xf32> -> vector<1x128xf32>
    %c0_213 = arith.constant 0 : index
    %c0_214 = arith.constant 0 : index
    %483 = vector.load %arg26[%c0_213, %c0_214] : memref<1x128xf32, #tpu.memory_space<vmem>>, vector<1x128xf32>
    %484 = arith.addf %482, %483 : vector<1x128xf32>
    %c0_215 = arith.constant 0 : index
    %c0_216 = arith.constant 0 : index
    %c0_217 = arith.constant 0 : index
    %485 = vector.load %arg27[%c0_215, %c0_216, %c0_217] : memref<1x1x128xf32, #tpu.memory_space<vmem>>, vector<1x1x128xf32>
    %486 = vector.shape_cast %485 : vector<1x1x128xf32> to vector<1x128xf32>
    %487 = vector.shape_cast %484 : vector<1x128xf32> to vector<1x1x128xf32>
    tpu.vector_store %arg27[%c0_215, %c0_216, %c0_217], %487 {strides = array<i32>} : memref<1x1x128xf32, #tpu.memory_space<vmem>>, vector<1x1x128xf32>,
    return
  }
  func.func @transform_0(%arg0: i32) -> (i32, i32) {
    %c0_i32 = arith.constant 0 : i32
    %c0_i32_0 = arith.constant 0 : i32
    return %arg0, %c0_i32 : i32, i32
  }
  func.func @transform_1(%arg0: i32) -> (i32, i32) {
    %c0_i32 = arith.constant 0 : i32
    %c0_i32_0 = arith.constant 0 : i32
    %c0_i32_1 = arith.constant 0 : i32
    return %c0_i32, %c0_i32_0 : i32, i32
  }
  func.func @transform_2(%arg0: i32) -> (i32, i32) {
    %c0_i32 = arith.constant 0 : i32
    %c0_i32_0 = arith.constant 0 : i32
    %c0_i32_1 = arith.constant 0 : i32
    return %c0_i32, %c0_i32_0 : i32, i32
  }
  func.func @transform_3(%arg0: i32) -> (i32, i32) {
    %c0_i32 = arith.constant 0 : i32
    %c0_i32_0 = arith.constant 0 : i32
    %c0_i32_1 = arith.constant 0 : i32
    return %c0_i32, %c0_i32_0 : i32, i32
  }
  func.func @transform_4(%arg0: i32) -> (i32, i32) {
    %c0_i32 = arith.constant 0 : i32
    %c0_i32_0 = arith.constant 0 : i32
    %c0_i32_1 = arith.constant 0 : i32
    return %c0_i32, %c0_i32_0 : i32, i32
  }
  func.func @transform_5(%arg0: i32) -> (i32, i32) {
    %c0_i32 = arith.constant 0 : i32
    %c0_i32_0 = arith.constant 0 : i32
    %c0_i32_1 = arith.constant 0 : i32
    return %c0_i32, %c0_i32_0 : i32, i32
  }
  func.func @transform_6(%arg0: i32) -> (i32, i32, i32) {
    %c0_i32 = arith.constant 0 : i32
    %c0_i32_0 = arith.constant 0 : i32
    %c0_i32_1 = arith.constant 0 : i32
    %c0_i32_2 = arith.constant 0 : i32
    return %c0_i32, %c0_i32_0, %c0_i32_1 : i32, i32, i32
  }
  func.func @transform_7(%arg0: i32) -> (i32, i32) {
    %c0_i32 = arith.constant 0 : i32
    %c0_i32_0 = arith.constant 0 : i32
    %c0_i32_1 = arith.constant 0 : i32
    return %c0_i32, %c0_i32_0 : i32, i32
  }
  func.func @transform_8(%arg0: i32) -> (i32, i32) {
    %c0_i32 = arith.constant 0 : i32
    %c0_i32_0 = arith.constant 0 : i32
    %c0_i32_1 = arith.constant 0 : i32
    return %c0_i32, %c0_i32_0 : i32, i32
  }
  func.func @transform_9(%arg0: i32) -> (i32, i32) {
    %c0_i32 = arith.constant 0 : i32
    %c0_i32_0 = arith.constant 0 : i32
    %c0_i32_1 = arith.constant 0 : i32
    return %c0_i32, %c0_i32_0 : i32, i32
  }
  func.func @transform_10(%arg0: i32) -> (i32, i32) {
    %c0_i32 = arith.constant 0 : i32
    %c0_i32_0 = arith.constant 0 : i32
    %c0_i32_1 = arith.constant 0 : i32
    return %c0_i32, %c0_i32_0 : i32, i32
  }
  func.func @transform_11(%arg0: i32) -> (i32, i32) {
    %c0_i32 = arith.constant 0 : i32
    %c0_i32_0 = arith.constant 0 : i32
    %c0_i32_1 = arith.constant 0 : i32
    return %c0_i32, %c0_i32_0 : i32, i32
  }
  func.func @transform_12(%arg0: i32) -> (i32, i32) {
    %c0_i32 = arith.constant 0 : i32
    %c0_i32_0 = arith.constant 0 : i32
    %c0_i32_1 = arith.constant 0 : i32
    return %c0_i32, %c0_i32_0 : i32, i32
  }
  func.func @transform_13(%arg0: i32) -> (i32, i32) {
    %c0_i32 = arith.constant 0 : i32
    %c0_i32_0 = arith.constant 0 : i32
    %c0_i32_1 = arith.constant 0 : i32
    return %c0_i32, %c0_i32_0 : i32, i32
  }
  func.func @transform_14(%arg0: i32) -> (i32, i32, i32) {
    %c0_i32 = arith.constant 0 : i32
    %c0_i32_0 = arith.constant 0 : i32
    %c0_i32_1 = arith.constant 0 : i32
    %c0_i32_2 = arith.constant 0 : i32
    return %c0_i32, %c0_i32_0, %c0_i32_1 : i32, i32, i32
  }
  func.func @transform_15(%arg0: i32) -> (i32, i32) {
    %c0_i32 = arith.constant 0 : i32
    %c0_i32_0 = arith.constant 0 : i32
    %c0_i32_1 = arith.constant 0 : i32
    return %c0_i32, %c0_i32_0 : i32, i32
  }
  func.func @transform_16(%arg0: i32) -> (i32, i32) {
    %c0_i32 = arith.constant 0 : i32
    %c0_i32_0 = arith.constant 0 : i32
    %c0_i32_1 = arith.constant 0 : i32
    return %c0_i32, %c0_i32_0 : i32, i32
  }
  func.func @transform_17(%arg0: i32) -> (i32, i32) {
    %c0_i32 = arith.constant 0 : i32
    %c0_i32_0 = arith.constant 0 : i32
    %c0_i32_1 = arith.constant 0 : i32
    return %c0_i32, %c0_i32_0 : i32, i32
  }
  func.func @transform_18(%arg0: i32) -> (i32, i32) {
    %c0_i32 = arith.constant 0 : i32
    %c0_i32_0 = arith.constant 0 : i32
    %c0_i32_1 = arith.constant 0 : i32
    return %c0_i32, %c0_i32_0 : i32, i32
  }
  func.func @transform_19(%arg0: i32) -> (i32, i32) {
    %c0_i32 = arith.constant 0 : i32
    %c0_i32_0 = arith.constant 0 : i32
    %c0_i32_1 = arith.constant 0 : i32
    return %c0_i32, %c0_i32_0 : i32, i32
  }
  func.func @transform_20(%arg0: i32) -> (i32, i32) {
    %c0_i32 = arith.constant 0 : i32
    %c0_i32_0 = arith.constant 0 : i32
    %c0_i32_1 = arith.constant 0 : i32
    return %c0_i32, %c0_i32_0 : i32, i32
  }
  func.func @transform_21(%arg0: i32) -> (i32, i32) {
    %c0_i32 = arith.constant 0 : i32
    %c0_i32_0 = arith.constant 0 : i32
    %c0_i32_1 = arith.constant 0 : i32
    return %c0_i32, %c0_i32_0 : i32, i32
  }
  func.func @transform_22(%arg0: i32) -> (i32, i32) {
    %c0_i32 = arith.constant 0 : i32
    %c0_i32_0 = arith.constant 0 : i32
    %c0_i32_1 = arith.constant 0 : i32
    return %c0_i32, %c0_i32_0 : i32, i32
  }
  func.func @transform_23(%arg0: i32) -> (i32, i32) {
    %c0_i32 = arith.constant 0 : i32
    %c0_i32_0 = arith.constant 0 : i32
    %c0_i32_1 = arith.constant 0 : i32
    return %c0_i32, %c0_i32_0 : i32, i32
  }
  func.func @transform_24(%arg0: i32) -> (i32, i32) {
    %c0_i32 = arith.constant 0 : i32
    %c0_i32_0 = arith.constant 0 : i32
    %c0_i32_1 = arith.constant 0 : i32
    return %c0_i32, %c0_i32_0 : i32, i32
  }
  func.func @transform_25(%arg0: i32) -> (i32, i32) {
    %c0_i32 = arith.constant 0 : i32
    %c0_i32_0 = arith.constant 0 : i32
    %c0_i32_1 = arith.constant 0 : i32
    return %c0_i32, %c0_i32_0 : i32, i32
  }
  func.func @transform_26(%arg0: i32) -> (i32, i32, i32) {
    %c0_i32 = arith.constant 0 : i32
    %c0_i32_0 = arith.constant 0 : i32
    %c0_i32_1 = arith.constant 0 : i32
    return %arg0, %c0_i32, %c0_i32_0 : i32, i32, i32
  }
}

</mosaic_0001>

<llo_original>
// kernel: forward.1
$region0: #{forward.1}
  #allocation0 [shape = 'u32[]', space=smem, size = 0x4, offset = 0x4, fixed_abs, tag = 'smem constant byte address 0x4 - core index']
  #allocation1 [shape = 'u32[144,128]{1,0:T(1,128)}', space=vmem, size = 0x12000, scoped, tag = 'internal scratch']
  %s0 = inlined_call_operand.vmem [shape: s32[32,1], index: 0, kind: input, shape index: {}]
  %s1 = inlined_call_operand.vmem [shape: f32[20,16], index: 1, kind: input, shape index: {}]
  %s2 = inlined_call_operand.hbm [shape: bf16[16,48], index: 2, kind: input, shape index: {}]
  %s3 = inlined_call_operand.hbm [shape: f32[1,48], index: 3, kind: input, shape index: {}]
  %s4 = inlined_call_operand.hbm [shape: f32[3,48], index: 4, kind: input, shape index: {}]
  %s5 = inlined_call_operand.hbm [shape: f32[1,48], index: 5, kind: input, shape index: {}]
  %s6 = inlined_call_operand.hbm [shape: f32[16,1,16], index: 6, kind: input, shape index: {}]
  %s7 = inlined_call_operand.hbm [shape: f32[1,16], index: 7, kind: input, shape index: {}]
  %s8 = inlined_call_operand.hbm [shape: bf16[16,32], index: 8, kind: input, shape index: {}]
  %s9 = inlined_call_operand.hbm [shape: f32[1,32], index: 9, kind: input, shape index: {}]
  %s10 = inlined_call_operand.hbm [shape: bf16[32,96], index: 10, kind: input, shape index: {}]
  %s11 = inlined_call_operand.hbm [shape: f32[1,96], index: 11, kind: input, shape index: {}]
  %s12 = inlined_call_operand.hbm [shape: f32[3,96], index: 12, kind: input, shape index: {}]
  %s13 = inlined_call_operand.hbm [shape: f32[1,96], index: 13, kind: input, shape index: {}]
  %s14 = inlined_call_operand.hbm [shape: f32[16,1,32], index: 14, kind: input, shape index: {}]
  %s15 = inlined_call_operand.hbm [shape: f32[1,32], index: 15, kind: input, shape index: {}]
  %s16 = inlined_call_operand.hbm [shape: bf16[32,32], index: 16, kind: input, shape index: {}]
  %s17 = inlined_call_operand.hbm [shape: f32[1,32], index: 17, kind: input, shape index: {}]
  %s18 = inlined_call_operand.hbm [shape: bf16[32,1024], index: 18, kind: input, shape index: {}]
  %s19 = inlined_call_operand.hbm [shape: f32[1,1024], index: 19, kind: input, shape index: {}]
  %s20 = inlined_call_operand.hbm [shape: bf16[1024,1024], index: 20, kind: input, shape index: {}]
  %s21 = inlined_call_operand.hbm [shape: f32[1,1024], index: 21, kind: input, shape index: {}]
  %s22 = inlined_call_operand.hbm [shape: bf16[1024,512], index: 22, kind: input, shape index: {}]
  %s23 = inlined_call_operand.hbm [shape: f32[1,512], index: 23, kind: input, shape index: {}]
  %s24 = inlined_call_operand.hbm [shape: bf16[512,128], index: 24, kind: input, shape index: {}]
  %s25 = inlined_call_operand.hbm [shape: f32[1,128], index: 25, kind: input, shape index: {}]
  %s26 = inlined_call_operand.hbm [shape: f32[2,1,128], index: 26, kind: output, shape index: {}]
  %s27 = sld [smem:[#allocation0]]
  $region233: #{forward.1} parent=0
    _
  %s29 = ssub.s32 1, %s27
  %s30 = scalar_select 0, %s29, %s27
  $region1: #{forward.1} parent=0
    #allocation2 [shape = 'u8[4096]{0}', space=vmem, size = 0x1000, scoped, tag = 'input window, operand 2, single buffered']
    #allocation3 [shape = 's32[2]{0}', space=sflag, size = 0x8, scoped, tag = 'scoped memory for forward.1']
    #allocation4 [shape = 's32[2]{0}', space=sflag, size = 0x8, scoped, tag = 'scoped memory for forward.1']
    #allocation5 [shape = 'u8[512]{0}', space=vmem, size = 0x400, scoped, tag = 'input window, operand 3, single buffered']
    #allocation6 [shape = 's32[1]{0}', space=sflag, size = 0x4, scoped, tag = 'scoped memory for forward.1']
    #allocation7 [shape = 'u8[2048]{0}', space=vmem, size = 0x800, scoped, tag = 'input window, operand 4, single buffered']
    #allocation8 [shape = 'u8[512]{0}', space=vmem, size = 0x400, scoped, tag = 'input window, operand 5, single buffered']
    #allocation9 [shape = 's32[1]{0}', space=sflag, size = 0x4, scoped, tag = 'scoped memory for forward.1']
    #allocation10 [shape = 'u8[8192]{0}', space=vmem, size = 0x2000, scoped, tag = 'input window, operand 6, single buffered']
    #allocation11 [shape = 'u8[512]{0}', space=vmem, size = 0x400, scoped, tag = 'input window, operand 7, single buffered']
    #allocation12 [shape = 's32[1]{0}', space=sflag, size = 0x4, scoped, tag = 'scoped memory for forward.1']
    #allocation13 [shape = 'u8[4096]{0}', space=vmem, size = 0x1000, scoped, tag = 'input window, operand 8, single buffered']
    #allocation14 [shape = 'u8[512]{0}', space=vmem, size = 0x400, scoped, tag = 'input window, operand 9, single buffered']
    #allocation15 [shape = 's32[1]{0}', space=sflag, size = 0x4, scoped, tag = 'scoped memory for forward.1']
    #allocation16 [shape = 'u8[8192]{0}', space=vmem, size = 0x2000, scoped, tag = 'input window, operand 10, single buffered']
    #allocation17 [shape = 'u8[512]{0}', space=vmem, size = 0x400, scoped, tag = 'input window, operand 11, single buffered']
    #allocation18 [shape = 's32[1]{0}', space=sflag, size = 0x4, scoped, tag = 'scoped memory for forward.1']
    #allocation19 [shape = 'u8[2048]{0}', space=vmem, size = 0x800, scoped, tag = 'input window, operand 12, single buffered']
    #allocation20 [shape = 'u8[512]{0}', space=vmem, size = 0x400, scoped, tag = 'input window, operand 13, single buffered']
    #allocation21 [shape = 's32[1]{0}', space=sflag, size = 0x4, scoped, tag = 'scoped memory for forward.1']
    #allocation22 [shape = 'u8[8192]{0}', space=vmem, size = 0x2000, scoped, tag = 'input window, operand 14, single buffered']
    #allocation23 [shape = 'u8[512]{0}', space=vmem, size = 0x400, scoped, tag = 'input window, operand 15, single buffered']
    #allocation24 [shape = 's32[1]{0}', space=sflag, size = 0x4, scoped, tag = 'scoped memory for forward.1']
    #allocation25 [shape = 'u8[8192]{0}', space=vmem, size = 0x2000, scoped, tag = 'input window, operand 16, single buffered']
    #allocation26 [shape = 'u8[512]{0}', space=vmem, size = 0x400, scoped, tag = 'input window, operand 17, single buffered']
    #allocation27 [shape = 's32[1]{0}', space=sflag, size = 0x4, scoped, tag = 'scoped memory for forward.1']
    #allocation28 [shape = 'u8[65536]{0}', space=vmem, size = 0x10000, scoped, tag = 'input window, operand 18, single buffered']
    #allocation29 [shape = 'u8[4096]{0}', space=vmem, size = 0x1000, scoped, tag = 'input window, operand 19, single buffered']
    #allocation30 [shape = 's32[1]{0}', space=sflag, size = 0x4, scoped, tag = 'scoped memory for forward.1']
    #allocation31 [shape = 'u8[2097152]{0}', space=vmem, size = 0x200000, scoped, tag = 'input window, operand 20, single buffered']
    #allocation32 [shape = 'u8[4096]{0}', space=vmem, size = 0x1000, scoped, tag = 'input window, operand 21, single buffered']
    #allocation33 [shape = 's32[1]{0}', space=sflag, size = 0x4, scoped, tag = 'scoped memory for forward.1']
    #allocation34 [shape = 'u8[1048576]{0}', space=vmem, size = 0x100000, scoped, tag = 'input window, operand 22, single buffered']
    #allocation35 [shape = 'u8[2048]{0}', space=vmem, size = 0x800, scoped, tag = 'input window, operand 23, single buffered']
    #allocation36 [shape = 's32[1]{0}', space=sflag, size = 0x4, scoped, tag = 'scoped memory for forward.1']
    #allocation37 [shape = 'u8[131072]{0}', space=vmem, size = 0x20000, scoped, tag = 'input window, operand 24, single buffered']
    #allocation38 [shape = 'u8[512]{0}', space=vmem, size = 0x400, scoped, tag = 'input window, operand 25, single buffered']
    #allocation39 [shape = 's32[1]{0}', space=sflag, size = 0x4, scoped, tag = 'scoped memory for forward.1']
    #allocation40 [shape = 'u8[1024]{0}', space=vmem, size = 0x400, scoped, tag = 'output window, operand 0']
    %31 = vsyncpa [#allocation3], 0
    %32 = vsyncpa [#allocation6], 0
    %33 = vsyncpa [#allocation9], 0
    %34 = vsyncpa [#allocation12], 0
    %35 = vsyncpa [#allocation15], 0
    %36 = vsyncpa [#allocation18], 0
    %37 = vsyncpa [#allocation21], 0
    %38 = vsyncpa [#allocation24], 0
    %39 = vsyncpa [#allocation27], 0
    %40 = vsyncpa [#allocation30], 0
    %41 = vsyncpa [#allocation33], 0
    %42 = vsyncpa [#allocation36], 0
    %43 = vsyncpa [#allocation39], 0
    %44 = vsyncpa [#allocation4], 0
    %s45 = scalar_lea.sflag [#allocation4], 1
    %46 = vsyncpa %s45, 0
    loop: start=0, step=1, limit=4
    $region2: #{forward.1} parent=1 // loop_pre_header
      _
    $region3: #{forward.1} parent=1 // loop_header
      %s48 = sphi 0, %s52
      %p49 = scmp.ge.s32.totalorder %s48, 4
      %s58 = sphi 0, %s60
      %s61 = sphi 0, %s58
      %s62 = sphi 0, %s61
      %s78 = sphi 0, %s62
      %s82 = sphi 0, %s82
      %s84 = sphi 0, %s82
      %s85 = sphi 0, %s84
      %s99 = sphi 0, %s85
      %s103 = sphi 0, %s103
      %s105 = sphi 0, %s103
      %s106 = sphi 0, %s105
      %s120 = sphi 0, %s106
      %s124 = sphi 0, %s124
      %s126 = sphi 0, %s124
      %s127 = sphi 0, %s126
      %s141 = sphi 0, %s127
      %s145 = sphi 0, %s145
      %s147 = sphi 0, %s145
      %s148 = sphi 0, %s147
      %s162 = sphi 0, %s148
      %s166 = sphi 0, %s166
      %s168 = sphi 0, %s166
      %s169 = sphi 0, %s168
      %s183 = sphi 0, %s169
      %s187 = sphi 0, %s187
      %s189 = sphi 0, %s187
      %s190 = sphi 0, %s189
      %s204 = sphi 0, %s190
      %s208 = sphi 0, %s208
      %s210 = sphi 0, %s208
      %s211 = sphi 0, %s210
      %s225 = sphi 0, %s211
      %s229 = sphi 0, %s229
      %s231 = sphi 0, %s229
      %s232 = sphi 0, %s231
      %s246 = sphi 0, %s232
      %s250 = sphi 0, %s250
      %s252 = sphi 0, %s250
      %s253 = sphi 0, %s252
      %s267 = sphi 0, %s253
      %s271 = sphi 0, %s271
      %s273 = sphi 0, %s271
      %s274 = sphi 0, %s273
      %s288 = sphi 0, %s274
      %s292 = sphi 0, %s292
      %s294 = sphi 0, %s292
      %s295 = sphi 0, %s294
      %s309 = sphi 0, %s295
      %s313 = sphi 0, %s313
      %s315 = sphi 0, %s313
      %s316 = sphi 0, %s315
      %s330 = sphi 0, %s316
      %s334 = sphi 0, %s334
      %s336 = sphi 0, %s334
      %s337 = sphi 0, %s336
      %s351 = sphi 0, %s337
      %s355 = sphi 0, %s355
      %s357 = sphi 0, %s355
      %s358 = sphi 0, %s357
      %s372 = sphi 0, %s358
      %s376 = sphi 0, %s376
      %s378 = sphi 0, %s376
      %s379 = sphi 0, %s378
      %s393 = sphi 0, %s379
      %s397 = sphi 0, %s397
      %s399 = sphi 0, %s397
      %s400 = sphi 0, %s399
      %s414 = sphi 0, %s400
      %s418 = sphi 0, %s418
      %s420 = sphi 0, %s418
      %s421 = sphi 0, %s420
      %s435 = sphi 0, %s421
      %s439 = sphi 0, %s439
      %s441 = sphi 0, %s439
      %s442 = sphi 0, %s441
      %s456 = sphi 0, %s442
      %s460 = sphi 0, %s460
      %s462 = sphi 0, %s460
      %s463 = sphi 0, %s462
      %s477 = sphi 0, %s463
      %s481 = sphi 0, %s481
      %s483 = sphi 0, %s481
      %s484 = sphi 0, %s483
      %s498 = sphi 0, %s484
      %s502 = sphi 0, %s502
      %s504 = sphi 0, %s502
      %s505 = sphi 0, %s504
      %s519 = sphi 0, %s505
      %s523 = sphi 0, %s523
      %s525 = sphi 0, %s523
      %s526 = sphi 0, %s525
      %s540 = sphi 0, %s526
      %s544 = sphi 0, %s544
      %s546 = sphi 0, %s544
      %s547 = sphi 0, %s546
      %s561 = sphi 0, %s547
      %s565 = sphi 0, %s565
      %s567 = sphi 0, %s565
      %s568 = sphi 0, %s567
      %s582 = sphi 0, %s568
      %s586 = sphi 0, %s586
      %s588 = sphi 0, %s586
      %s589 = sphi 0, %s588
      %s603 = sphi 0, %s589
      %s609 = sphi 0, %s611
      %s612 = sphi 0, %s609
      %s613 = sphi 0, %s612
      %s629 = sphi 0, %s613
    $region4: #{forward.1} parent=1 // loop_header_branch
      %51 = sbr.rel (%p49) target = $region8
    $region5: #{forward.1} parent=1 // loop_body
      %s53 = ssub.s32 %s48, 1
      %s54 = ssub.s32 %s48, 2
      %s55 = sadd.s32 %s48, 1
      %s56 = ssub.s32 %s48, %s55
      %p57 = scmp.eq.s32.totalorder %s56, 0
      %s59 = sadd.s32 %s58, 1
      %s60 = scalar_select %p57, %s58, %s59
      %p63 = pneg %p57
      %p64 = scmp.eq.s32.totalorder %s48, 1
      %p65 = por %p63, %p64
      %p66 = scmp.ne.s32.totalorder %s58, %s61
      %p67 = scmp.eq.s32.totalorder %s48, 0
      %p68 = por %p66, %p67
      %p69 = scmp.ne.s32.totalorder %s58, %s61
      %p70 = scmp.eq.s32.totalorder %s53, 1
      %p71 = por %p69, %p70
      %p72 = scmp.ne.s32.totalorder %s61, %s62
      %p73 = scmp.eq.s32.totalorder %s53, 0
      %p74 = por %p72, %p73
      %p75 = scmp.ne.s32.totalorder %s61, %s62
      %p76 = scmp.eq.s32.totalorder %s54, 1
      %p77 = por %p75, %p76
      %p79 = scmp.ne.s32.totalorder %s62, %s78
      %p80 = scmp.eq.s32.totalorder %s54, 0
      %p81 = por %p79, %p80
      %s83 = sadd.s32 %s82, 1
      %p86 = scmp.eq.s32.totalorder %s48, 1
      %p87 = scmp.ne.s32.totalorder %s82, %s84
      %p88 = scmp.eq.s32.totalorder %s48, 0
      %p89 = por %p87, %p88
      %p90 = scmp.ne.s32.totalorder %s82, %s84
      %p91 = scmp.eq.s32.totalorder %s53, 1
      %p92 = por %p90, %p91
      %p93 = scmp.ne.s32.totalorder %s84, %s85
      %p94 = scmp.eq.s32.totalorder %s53, 0
      %p95 = por %p93, %p94
      %p96 = scmp.ne.s32.totalorder %s84, %s85
      %p97 = scmp.eq.s32.totalorder %s54, 1
      %p98 = por %p96, %p97
      %p100 = scmp.ne.s32.totalorder %s85, %s99
      %p101 = scmp.eq.s32.totalorder %s54, 0
      %p102 = por %p100, %p101
      %s104 = sadd.s32 %s103, 1
      %p107 = scmp.eq.s32.totalorder %s48, 1
      %p108 = scmp.ne.s32.totalorder %s103, %s105
      %p109 = scmp.eq.s32.totalorder %s48, 0
      %p110 = por %p108, %p109
      %p111 = scmp.ne.s32.totalorder %s103, %s105
      %p112 = scmp.eq.s32.totalorder %s53, 1
      %p113 = por %p111, %p112
      %p114 = scmp.ne.s32.totalorder %s105, %s106
      %p115 = scmp.eq.s32.totalorder %s53, 0
      %p116 = por %p114, %p115
      %p117 = scmp.ne.s32.totalorder %s105, %s106
      %p118 = scmp.eq.s32.totalorder %s54, 1
      %p119 = por %p117, %p118
      %p121 = scmp.ne.s32.totalorder %s106, %s120
      %p122 = scmp.eq.s32.totalorder %s54, 0
      %p123 = por %p121, %p122
      %s125 = sadd.s32 %s124, 1
      %p128 = scmp.eq.s32.totalorder %s48, 1
      %p129 = scmp.ne.s32.totalorder %s124, %s126
      %p130 = scmp.eq.s32.totalorder %s48, 0
      %p131 = por %p129, %p130
      %p132 = scmp.ne.s32.totalorder %s124, %s126
      %p133 = scmp.eq.s32.totalorder %s53, 1
      %p134 = por %p132, %p133
      %p135 = scmp.ne.s32.totalorder %s126, %s127
      %p136 = scmp.eq.s32.totalorder %s53, 0
      %p137 = por %p135, %p136
      %p138 = scmp.ne.s32.totalorder %s126, %s127
      %p139 = scmp.eq.s32.totalorder %s54, 1
      %p140 = por %p138, %p139
      %p142 = scmp.ne.s32.totalorder %s127, %s141
      %p143 = scmp.eq.s32.totalorder %s54, 0
      %p144 = por %p142, %p143
      %s146 = sadd.s32 %s145, 1
      %p149 = scmp.eq.s32.totalorder %s48, 1
      %p150 = scmp.ne.s32.totalorder %s145, %s147
      %p151 = scmp.eq.s32.totalorder %s48, 0
      %p152 = por %p150, %p151
      %p153 = scmp.ne.s32.totalorder %s145, %s147
      %p154 = scmp.eq.s32.totalorder %s53, 1
      %p155 = por %p153, %p154
      %p156 = scmp.ne.s32.totalorder %s147, %s148
      %p157 = scmp.eq.s32.totalorder %s53, 0
      %p158 = por %p156, %p157
      %p159 = scmp.ne.s32.totalorder %s147, %s148
      %p160 = scmp.eq.s32.totalorder %s54, 1
      %p161 = por %p159, %p160
      %p163 = scmp.ne.s32.totalorder %s148, %s162
      %p164 = scmp.eq.s32.totalorder %s54, 0
      %p165 = por %p163, %p164
      %s167 = sadd.s32 %s166, 1
      %p170 = scmp.eq.s32.totalorder %s48, 1
      %p171 = scmp.ne.s32.totalorder %s166, %s168
      %p172 = scmp.eq.s32.totalorder %s48, 0
      %p173 = por %p171, %p172
      %p174 = scmp.ne.s32.totalorder %s166, %s168
      %p175 = scmp.eq.s32.totalorder %s53, 1
      %p176 = por %p174, %p175
      %p177 = scmp.ne.s32.totalorder %s168, %s169
      %p178 = scmp.eq.s32.totalorder %s53, 0
      %p179 = por %p177, %p178
      %p180 = scmp.ne.s32.totalorder %s168, %s169
      %p181 = scmp.eq.s32.totalorder %s54, 1
      %p182 = por %p180, %p181
      %p184 = scmp.ne.s32.totalorder %s169, %s183
      %p185 = scmp.eq.s32.totalorder %s54, 0
      %p186 = por %p184, %p185
      %s188 = sadd.s32 %s187, 1
      %p191 = scmp.eq.s32.totalorder %s48, 1
      %p192 = scmp.ne.s32.totalorder %s187, %s189
      %p193 = scmp.eq.s32.totalorder %s48, 0
      %p194 = por %p192, %p193
      %p195 = scmp.ne.s32.totalorder %s187, %s189
      %p196 = scmp.eq.s32.totalorder %s53, 1
      %p197 = por %p195, %p196
      %p198 = scmp.ne.s32.totalorder %s189, %s190
      %p199 = scmp.eq.s32.totalorder %s53, 0
      %p200 = por %p198, %p199
      %p201 = scmp.ne.s32.totalorder %s189, %s190
      %p202 = scmp.eq.s32.totalorder %s54, 1
      %p203 = por %p201, %p202
      %p205 = scmp.ne.s32.totalorder %s190, %s204
      %p206 = scmp.eq.s32.totalorder %s54, 0
      %p207 = por %p205, %p206
      %s209 = sadd.s32 %s208, 1
      %p212 = scmp.eq.s32.totalorder %s48, 1
      %p213 = scmp.ne.s32.totalorder %s208, %s210
      %p214 = scmp.eq.s32.totalorder %s48, 0
      %p215 = por %p213, %p214
      %p216 = scmp.ne.s32.totalorder %s208, %s210
      %p217 = scmp.eq.s32.totalorder %s53, 1
      %p218 = por %p216, %p217
      %p219 = scmp.ne.s32.totalorder %s210, %s211
      %p220 = scmp.eq.s32.totalorder %s53, 0
      %p221 = por %p219, %p220
      %p222 = scmp.ne.s32.totalorder %s210, %s211
      %p223 = scmp.eq.s32.totalorder %s54, 1
      %p224 = por %p222, %p223
      %p226 = scmp.ne.s32.totalorder %s211, %s225
      %p227 = scmp.eq.s32.totalorder %s54, 0
      %p228 = por %p226, %p227
      %s230 = sadd.s32 %s229, 1
      %p233 = scmp.eq.s32.totalorder %s48, 1
      %p234 = scmp.ne.s32.totalorder %s229, %s231
      %p235 = scmp.eq.s32.totalorder %s48, 0
      %p236 = por %p234, %p235
      %p237 = scmp.ne.s32.totalorder %s229, %s231
      %p238 = scmp.eq.s32.totalorder %s53, 1
      %p239 = por %p237, %p238
      %p240 = scmp.ne.s32.totalorder %s231, %s232
      %p241 = scmp.eq.s32.totalorder %s53, 0
      %p242 = por %p240, %p241
      %p243 = scmp.ne.s32.totalorder %s231, %s232
      %p244 = scmp.eq.s32.totalorder %s54, 1
      %p245 = por %p243, %p244
      %p247 = scmp.ne.s32.totalorder %s232, %s246
      %p248 = scmp.eq.s32.totalorder %s54, 0
      %p249 = por %p247, %p248
      %s251 = sadd.s32 %s250, 1
      %p254 = scmp.eq.s32.totalorder %s48, 1
      %p255 = scmp.ne.s32.totalorder %s250, %s252
      %p256 = scmp.eq.s32.totalorder %s48, 0
      %p257 = por %p255, %p256
      %p258 = scmp.ne.s32.totalorder %s250, %s252
      %p259 = scmp.eq.s32.totalorder %s53, 1
      %p260 = por %p258, %p259
      %p261 = scmp.ne.s32.totalorder %s252, %s253
      %p262 = scmp.eq.s32.totalorder %s53, 0
      %p263 = por %p261, %p262
      %p264 = scmp.ne.s32.totalorder %s252, %s253
      %p265 = scmp.eq.s32.totalorder %s54, 1
      %p266 = por %p264, %p265
      %p268 = scmp.ne.s32.totalorder %s253, %s267
      %p269 = scmp.eq.s32.totalorder %s54, 0
      %p270 = por %p268, %p269
      %s272 = sadd.s32 %s271, 1
      %p275 = scmp.eq.s32.totalorder %s48, 1
      %p276 = scmp.ne.s32.totalorder %s271, %s273
      %p277 = scmp.eq.s32.totalorder %s48, 0
      %p278 = por %p276, %p277
      %p279 = scmp.ne.s32.totalorder %s271, %s273
      %p280 = scmp.eq.s32.totalorder %s53, 1
      %p281 = por %p279, %p280
      %p282 = scmp.ne.s32.totalorder %s273, %s274
      %p283 = scmp.eq.s32.totalorder %s53, 0
      %p284 = por %p282, %p283
      %p285 = scmp.ne.s32.totalorder %s273, %s274
      %p286 = scmp.eq.s32.totalorder %s54, 1
      %p287 = por %p285, %p286
      %p289 = scmp.ne.s32.totalorder %s274, %s288
      %p290 = scmp.eq.s32.totalorder %s54, 0
      %p291 = por %p289, %p290
      %s293 = sadd.s32 %s292, 1
      %p296 = scmp.eq.s32.totalorder %s48, 1
      %p297 = scmp.ne.s32.totalorder %s292, %s294
      %p298 = scmp.eq.s32.totalorder %s48, 0
      %p299 = por %p297, %p298
      %p300 = scmp.ne.s32.totalorder %s292, %s294
      %p301 = scmp.eq.s32.totalorder %s53, 1
      %p302 = por %p300, %p301
      %p303 = scmp.ne.s32.totalorder %s294, %s295
      %p304 = scmp.eq.s32.totalorder %s53, 0
      %p305 = por %p303, %p304
      %p306 = scmp.ne.s32.totalorder %s294, %s295
      %p307 = scmp.eq.s32.totalorder %s54, 1
      %p308 = por %p306, %p307
      %p310 = scmp.ne.s32.totalorder %s295, %s309
      %p311 = scmp.eq.s32.totalorder %s54, 0
      %p312 = por %p310, %p311
      %s314 = sadd.s32 %s313, 1
      %p317 = scmp.eq.s32.totalorder %s48, 1
      %p318 = scmp.ne.s32.totalorder %s313, %s315
      %p319 = scmp.eq.s32.totalorder %s48, 0
      %p320 = por %p318, %p319
      %p321 = scmp.ne.s32.totalorder %s313, %s315
      %p322 = scmp.eq.s32.totalorder %s53, 1
      %p323 = por %p321, %p322
      %p324 = scmp.ne.s32.totalorder %s315, %s316
      %p325 = scmp.eq.s32.totalorder %s53, 0
      %p326 = por %p324, %p325
      %p327 = scmp.ne.s32.totalorder %s315, %s316
      %p328 = scmp.eq.s32.totalorder %s54, 1
      %p329 = por %p327, %p328
      %p331 = scmp.ne.s32.totalorder %s316, %s330
      %p332 = scmp.eq.s32.totalorder %s54, 0
      %p333 = por %p331, %p332
      %s335 = sadd.s32 %s334, 1
      %p338 = scmp.eq.s32.totalorder %s48, 1
      %p339 = scmp.ne.s32.totalorder %s334, %s336
      %p340 = scmp.eq.s32.totalorder %s48, 0
      %p341 = por %p339, %p340
      %p342 = scmp.ne.s32.totalorder %s334, %s336
      %p343 = scmp.eq.s32.totalorder %s53, 1
      %p344 = por %p342, %p343
      %p345 = scmp.ne.s32.totalorder %s336, %s337
      %p346 = scmp.eq.s32.totalorder %s53, 0
      %p347 = por %p345, %p346
      %p348 = scmp.ne.s32.totalorder %s336, %s337
      %p349 = scmp.eq.s32.totalorder %s54, 1
      %p350 = por %p348, %p349
      %p352 = scmp.ne.s32.totalorder %s337, %s351
      %p353 = scmp.eq.s32.totalorder %s54, 0
      %p354 = por %p352, %p353
      %s356 = sadd.s32 %s355, 1
      %p359 = scmp.eq.s32.totalorder %s48, 1
      %p360 = scmp.ne.s32.totalorder %s355, %s357
      %p361 = scmp.eq.s32.totalorder %s48, 0
      %p362 = por %p360, %p361
      %p363 = scmp.ne.s32.totalorder %s355, %s357
      %p364 = scmp.eq.s32.totalorder %s53, 1
      %p365 = por %p363, %p364
      %p366 = scmp.ne.s32.totalorder %s357, %s358
      %p367 = scmp.eq.s32.totalorder %s53, 0
      %p368 = por %p366, %p367
      %p369 = scmp.ne.s32.totalorder %s357, %s358
      %p370 = scmp.eq.s32.totalorder %s54, 1
      %p371 = por %p369, %p370
      %p373 = scmp.ne.s32.totalorder %s358, %s372
      %p374 = scmp.eq.s32.totalorder %s54, 0
      %p375 = por %p373, %p374
      %s377 = sadd.s32 %s376, 1
      %p380 = scmp.eq.s32.totalorder %s48, 1
      %p381 = scmp.ne.s32.totalorder %s376, %s378
      %p382 = scmp.eq.s32.totalorder %s48, 0
      %p383 = por %p381, %p382
      %p384 = scmp.ne.s32.totalorder %s376, %s378
      %p385 = scmp.eq.s32.totalorder %s53, 1
      %p386 = por %p384, %p385
      %p387 = scmp.ne.s32.totalorder %s378, %s379
      %p388 = scmp.eq.s32.totalorder %s53, 0
      %p389 = por %p387, %p388
      %p390 = scmp.ne.s32.totalorder %s378, %s379
      %p391 = scmp.eq.s32.totalorder %s54, 1
      %p392 = por %p390, %p391
      %p394 = scmp.ne.s32.totalorder %s379, %s393
      %p395 = scmp.eq.s32.totalorder %s54, 0
      %p396 = por %p394, %p395
      %s398 = sadd.s32 %s397, 1
      %p401 = scmp.eq.s32.totalorder %s48, 1
      %p402 = scmp.ne.s32.totalorder %s397, %s399
      %p403 = scmp.eq.s32.totalorder %s48, 0
      %p404 = por %p402, %p403
      %p405 = scmp.ne.s32.totalorder %s397, %s399
      %p406 = scmp.eq.s32.totalorder %s53, 1
      %p407 = por %p405, %p406
      %p408 = scmp.ne.s32.totalorder %s399, %s400
      %p409 = scmp.eq.s32.totalorder %s53, 0
      %p410 = por %p408, %p409
      %p411 = scmp.ne.s32.totalorder %s399, %s400
      %p412 = scmp.eq.s32.totalorder %s54, 1
      %p413 = por %p411, %p412
      %p415 = scmp.ne.s32.totalorder %s400, %s414
      %p416 = scmp.eq.s32.totalorder %s54, 0
      %p417 = por %p415, %p416
      %s419 = sadd.s32 %s418, 1
      %p422 = scmp.eq.s32.totalorder %s48, 1
      %p423 = scmp.ne.s32.totalorder %s418, %s420
      %p424 = scmp.eq.s32.totalorder %s48, 0
      %p425 = por %p423, %p424
      %p426 = scmp.ne.s32.totalorder %s418, %s420
      %p427 = scmp.eq.s32.totalorder %s53, 1
      %p428 = por %p426, %p427
      %p429 = scmp.ne.s32.totalorder %s420, %s421
      %p430 = scmp.eq.s32.totalorder %s53, 0
      %p431 = por %p429, %p430
      %p432 = scmp.ne.s32.totalorder %s420, %s421
      %p433 = scmp.eq.s32.totalorder %s54, 1
      %p434 = por %p432, %p433
      %p436 = scmp.ne.s32.totalorder %s421, %s435
      %p437 = scmp.eq.s32.totalorder %s54, 0
      %p438 = por %p436, %p437
      %s440 = sadd.s32 %s439, 1
      %p443 = scmp.eq.s32.totalorder %s48, 1
      %p444 = scmp.ne.s32.totalorder %s439, %s441
      %p445 = scmp.eq.s32.totalorder %s48, 0
      %p446 = por %p444, %p445
      %p447 = scmp.ne.s32.totalorder %s439, %s441
      %p448 = scmp.eq.s32.totalorder %s53, 1
      %p449 = por %p447, %p448
      %p450 = scmp.ne.s32.totalorder %s441, %s442
      %p451 = scmp.eq.s32.totalorder %s53, 0
      %p452 = por %p450, %p451
      %p453 = scmp.ne.s32.totalorder %s441, %s442
      %p454 = scmp.eq.s32.totalorder %s54, 1
      %p455 = por %p453, %p454
      %p457 = scmp.ne.s32.totalorder %s442, %s456
      %p458 = scmp.eq.s32.totalorder %s54, 0
      %p459 = por %p457, %p458
      %s461 = sadd.s32 %s460, 1
      %p464 = scmp.eq.s32.totalorder %s48, 1
      %p465 = scmp.ne.s32.totalorder %s460, %s462
      %p466 = scmp.eq.s32.totalorder %s48, 0
      %p467 = por %p465, %p466
      %p468 = scmp.ne.s32.totalorder %s460, %s462
      %p469 = scmp.eq.s32.totalorder %s53, 1
      %p470 = por %p468, %p469
      %p471 = scmp.ne.s32.totalorder %s462, %s463
      %p472 = scmp.eq.s32.totalorder %s53, 0
      %p473 = por %p471, %p472
      %p474 = scmp.ne.s32.totalorder %s462, %s463
      %p475 = scmp.eq.s32.totalorder %s54, 1
      %p476 = por %p474, %p475
      %p478 = scmp.ne.s32.totalorder %s463, %s477
      %p479 = scmp.eq.s32.totalorder %s54, 0
      %p480 = por %p478, %p479
      %s482 = sadd.s32 %s481, 1
      %p485 = scmp.eq.s32.totalorder %s48, 1
      %p486 = scmp.ne.s32.totalorder %s481, %s483
      %p487 = scmp.eq.s32.totalorder %s48, 0
      %p488 = por %p486, %p487
      %p489 = scmp.ne.s32.totalorder %s481, %s483
      %p490 = scmp.eq.s32.totalorder %s53, 1
      %p491 = por %p489, %p490
      %p492 = scmp.ne.s32.totalorder %s483, %s484
      %p493 = scmp.eq.s32.totalorder %s53, 0
      %p494 = por %p492, %p493
      %p495 = scmp.ne.s32.totalorder %s483, %s484
      %p496 = scmp.eq.s32.totalorder %s54, 1
      %p497 = por %p495, %p496
      %p499 = scmp.ne.s32.totalorder %s484, %s498
      %p500 = scmp.eq.s32.totalorder %s54, 0
      %p501 = por %p499, %p500
      %s503 = sadd.s32 %s502, 1
      %p506 = scmp.eq.s32.totalorder %s48, 1
      %p507 = scmp.ne.s32.totalorder %s502, %s504
      %p508 = scmp.eq.s32.totalorder %s48, 0
      %p509 = por %p507, %p508
      %p510 = scmp.ne.s32.totalorder %s502, %s504
      %p511 = scmp.eq.s32.totalorder %s53, 1
      %p512 = por %p510, %p511
      %p513 = scmp.ne.s32.totalorder %s504, %s505
      %p514 = scmp.eq.s32.totalorder %s53, 0
      %p515 = por %p513, %p514
      %p516 = scmp.ne.s32.totalorder %s504, %s505
      %p517 = scmp.eq.s32.totalorder %s54, 1
      %p518 = por %p516, %p517
      %p520 = scmp.ne.s32.totalorder %s505, %s519
      %p521 = scmp.eq.s32.totalorder %s54, 0
      %p522 = por %p520, %p521
      %s524 = sadd.s32 %s523, 1
      %p527 = scmp.eq.s32.totalorder %s48, 1
      %p528 = scmp.ne.s32.totalorder %s523, %s525
      %p529 = scmp.eq.s32.totalorder %s48, 0
      %p530 = por %p528, %p529
      %p531 = scmp.ne.s32.totalorder %s523, %s525
      %p532 = scmp.eq.s32.totalorder %s53, 1
      %p533 = por %p531, %p532
      %p534 = scmp.ne.s32.totalorder %s525, %s526
      %p535 = scmp.eq.s32.totalorder %s53, 0
      %p536 = por %p534, %p535
      %p537 = scmp.ne.s32.totalorder %s525, %s526
      %p538 = scmp.eq.s32.totalorder %s54, 1
      %p539 = por %p537, %p538
      %p541 = scmp.ne.s32.totalorder %s526, %s540
      %p542 = scmp.eq.s32.totalorder %s54, 0
      %p543 = por %p541, %p542
      %s545 = sadd.s32 %s544, 1
      %p548 = scmp.eq.s32.totalorder %s48, 1
      %p549 = scmp.ne.s32.totalorder %s544, %s546
      %p550 = scmp.eq.s32.totalorder %s48, 0
      %p551 = por %p549, %p550
      %p552 = scmp.ne.s32.totalorder %s544, %s546
      %p553 = scmp.eq.s32.totalorder %s53, 1
      %p554 = por %p552, %p553
      %p555 = scmp.ne.s32.totalorder %s546, %s547
      %p556 = scmp.eq.s32.totalorder %s53, 0
      %p557 = por %p555, %p556
      %p558 = scmp.ne.s32.totalorder %s546, %s547
      %p559 = scmp.eq.s32.totalorder %s54, 1
      %p560 = por %p558, %p559
      %p562 = scmp.ne.s32.totalorder %s547, %s561
      %p563 = scmp.eq.s32.totalorder %s54, 0
      %p564 = por %p562, %p563
      %s566 = sadd.s32 %s565, 1
      %p569 = scmp.eq.s32.totalorder %s48, 1
      %p570 = scmp.ne.s32.totalorder %s565, %s567
      %p571 = scmp.eq.s32.totalorder %s48, 0
      %p572 = por %p570, %p571
      %p573 = scmp.ne.s32.totalorder %s565, %s567
      %p574 = scmp.eq.s32.totalorder %s53, 1
      %p575 = por %p573, %p574
      %p576 = scmp.ne.s32.totalorder %s567, %s568
      %p577 = scmp.eq.s32.totalorder %s53, 0
      %p578 = por %p576, %p577
      %p579 = scmp.ne.s32.totalorder %s567, %s568
      %p580 = scmp.eq.s32.totalorder %s54, 1
      %p581 = por %p579, %p580
      %p583 = scmp.ne.s32.totalorder %s568, %s582
      %p584 = scmp.eq.s32.totalorder %s54, 0
      %p585 = por %p583, %p584
      %s587 = sadd.s32 %s586, 1
      %p590 = scmp.eq.s32.totalorder %s48, 1
      %p591 = scmp.ne.s32.totalorder %s586, %s588
      %p592 = scmp.eq.s32.totalorder %s48, 0
      %p593 = por %p591, %p592
      %p594 = scmp.ne.s32.totalorder %s586, %s588
      %p595 = scmp.eq.s32.totalorder %s53, 1
      %p596 = por %p594, %p595
      %p597 = scmp.ne.s32.totalorder %s588, %s589
      %p598 = scmp.eq.s32.totalorder %s53, 0
      %p599 = por %p597, %p598
      %p600 = scmp.ne.s32.totalorder %s588, %s589
      %p601 = scmp.eq.s32.totalorder %s54, 1
      %p602 = por %p600, %p601
      %p604 = scmp.ne.s32.totalorder %s589, %s603
      %p605 = scmp.eq.s32.totalorder %s54, 0
      %p606 = por %p604, %p605
      %s607 = ssub.s32 %s48, %s55
      %p608 = scmp.eq.s32.totalorder %s607, 0
      %s610 = sadd.s32 %s609, 1
      %s611 = scalar_select %p608, %s609, %s610
      %p614 = pneg %p608
      %p615 = scmp.eq.s32.totalorder %s48, 1
      %p616 = por %p614, %p615
      %p617 = scmp.ne.s32.totalorder %s609, %s612
      %p618 = scmp.eq.s32.totalorder %s48, 0
      %p619 = por %p617, %p618
      %p620 = scmp.ne.s32.totalorder %s609, %s612
      %p621 = scmp.eq.s32.totalorder %s53, 1
      %p622 = por %p620, %p621
      %p623 = scmp.ne.s32.totalorder %s612, %s613
      %p624 = scmp.eq.s32.totalorder %s53, 0
      %p625 = por %p623, %p624
      %p626 = scmp.ne.s32.totalorder %s612, %s613
      %p627 = scmp.eq.s32.totalorder %s54, 1
      %p628 = por %p626, %p627
      %p630 = scmp.ne.s32.totalorder %s613, %s629
      %p631 = scmp.eq.s32.totalorder %s54, 0
      %p632 = por %p630, %p631
      %p633 = scmp.le.s32.totalorder 1, %s48
      %p634 = scmp.lt.s32.totalorder %s48, 3
      %p635 = pnand %p633, %p634
      %p636 = pneg %p635
      // Predicated region
      $region9: #{forward.1} parent=5 // pred_check
        _
      $region10: #{forward.1} parent=5 // pred_check_branch
        %638 = sbr.rel (%p635) target = $region12
      $region11: #{forward.1} parent=5 // pred_region
        %s639 = ssub.s32 %s48, 1
        // Predicated region
        $region13: #{forward.1} parent=11 // pred_check
          %p640 = pneg %p95
        $region14: #{forward.1} parent=11 // pred_check_branch
          %642 = sbr.rel (%p640) target = $region16
        $region15: #{forward.1} parent=11 // pred_region
          _
        $region16: #{forward.1} parent=11 // pred_fallthru
          _
        // Predicated region
        $region17: #{forward.1} parent=11 // pred_check
          %p643 = pneg %p116
        $region18: #{forward.1} parent=11 // pred_check_branch
          %645 = sbr.rel (%p643) target = $region20
        $region19: #{forward.1} parent=11 // pred_region
          %s647 = ssub.s32 128, 128
          %648 = vsyncadd [#allocation3], %s647
          %s649 = sshll.u32 [#allocation2], 4
          %s650 = int_to_ptr.vmem [resolvable:$true] %s649
          %655 = dma.hbm_to_vmem [thread:$0]  %s2, 128, %s650, [#allocation3], 64, 64, 4
        $region20: #{forward.1} parent=11 // pred_fallthru
          _
        // Predicated region
        $region21: #{forward.1} parent=11 // pred_check
          %p656 = pneg %p137
        $region22: #{forward.1} parent=11 // pred_check_branch
          %658 = sbr.rel (%p656) target = $region24
        $region23: #{forward.1} parent=11 // pred_region
          %s660 = ssub.s32 16, 16
          %661 = vsyncadd [#allocation6], %s660
          %s663 = sshll.u32 [#allocation5], 4
          %s664 = int_to_ptr.vmem [resolvable:$true] %s663
          %666 = dma.hbm_to_vmem [thread:$0]  %s3, 16, %s664, [#allocation6]
        $region24: #{forward.1} parent=11 // pred_fallthru
          _
        // Predicated region
        $region25: #{forward.1} parent=11 // pred_check
          %p667 = pneg %p158
        $region26: #{forward.1} parent=11 // pred_check_branch
          %669 = sbr.rel (%p667) target = $region28
        $region27: #{forward.1} parent=11 // pred_region
          %s671 = ssub.s32 64, 64
          %672 = vsyncadd [#allocation6], %s671
          %s674 = sshll.u32 [#allocation7], 4
          %s675 = int_to_ptr.vmem [resolvable:$true] %s674
          %677 = dma.hbm_to_vmem [thread:$0]  %s4, 64, %s675, [#allocation6]
        $region28: #{forward.1} parent=11 // pred_fallthru
          _
        // Predicated region
        $region29: #{forward.1} parent=11 // pred_check
          %p678 = pneg %p179
        $region30: #{forward.1} parent=11 // pred_check_branch
          %680 = sbr.rel (%p678) target = $region32
        $region31: #{forward.1} parent=11 // pred_region
          %s682 = ssub.s32 16, 16
          %683 = vsyncadd [#allocation9], %s682
          %s685 = sshll.u32 [#allocation8], 4
          %s686 = int_to_ptr.vmem [resolvable:$true] %s685
          %688 = dma.hbm_to_vmem [thread:$0]  %s5, 16, %s686, [#allocation9]
        $region32: #{forward.1} parent=11 // pred_fallthru
          _
        // Predicated region
        $region33: #{forward.1} parent=11 // pred_check
          %p689 = pneg %p200
        $region34: #{forward.1} parent=11 // pred_check_branch
          %691 = sbr.rel (%p689) target = $region36
        $region35: #{forward.1} parent=11 // pred_region
          %s693 = ssub.s32 256, 256
          %694 = vsyncadd [#allocation9], %s693
          %s695 = sshll.u32 [#allocation10], 4
          %s696 = int_to_ptr.vmem [resolvable:$true] %s695
          %701 = dma.hbm_to_vmem [thread:$0]  %s6, 256, %s696, [#allocation9], 16, 16, 1
        $region36: #{forward.1} parent=11 // pred_fallthru
          _
        // Predicated region
        $region37: #{forward.1} parent=11 // pred_check
          %p702 = pneg %p221
        $region38: #{forward.1} parent=11 // pred_check_branch
          %704 = sbr.rel (%p702) target = $region40
        $region39: #{forward.1} parent=11 // pred_region
          %s706 = ssub.s32 16, 16
          %707 = vsyncadd [#allocation12], %s706
          %s709 = sshll.u32 [#allocation11], 4
          %s710 = int_to_ptr.vmem [resolvable:$true] %s709
          %712 = dma.hbm_to_vmem [thread:$0]  %s7, 16, %s710, [#allocation12]
        $region40: #{forward.1} parent=11 // pred_fallthru
          _
        // Predicated region
        $region41: #{forward.1} parent=11 // pred_check
          %p713 = pneg %p242
        $region42: #{forward.1} parent=11 // pred_check_branch
          %715 = sbr.rel (%p713) target = $region44
        $region43: #{forward.1} parent=11 // pred_region
          %s717 = ssub.s32 128, 128
          %718 = vsyncadd [#allocation12], %s717
          %s719 = sshll.u32 [#allocation13], 4
          %s720 = int_to_ptr.vmem [resolvable:$true] %s719
          %725 = dma.hbm_to_vmem [thread:$0]  %s8, 128, %s720, [#allocation12], 64, 64, 4
        $region44: #{forward.1} parent=11 // pred_fallthru
          _
        // Predicated region
        $region45: #{forward.1} parent=11 // pred_check
          %p726 = pneg %p263
        $region46: #{forward.1} parent=11 // pred_check_branch
          %728 = sbr.rel (%p726) target = $region48
        $region47: #{forward.1} parent=11 // pred_region
          %s730 = ssub.s32 16, 16
          %731 = vsyncadd [#allocation15], %s730
          %s733 = sshll.u32 [#allocation14], 4
          %s734 = int_to_ptr.vmem [resolvable:$true] %s733
          %736 = dma.hbm_to_vmem [thread:$0]  %s9, 16, %s734, [#allocation15]
        $region48: #{forward.1} parent=11 // pred_fallthru
          _
        // Predicated region
        $region49: #{forward.1} parent=11 // pred_check
          %p737 = pneg %p284
        $region50: #{forward.1} parent=11 // pred_check_branch
          %739 = sbr.rel (%p737) target = $region52
        $region51: #{forward.1} parent=11 // pred_region
          %s741 = ssub.s32 256, 256
          %742 = vsyncadd [#allocation15], %s741
          %s743 = sshll.u32 [#allocation16], 4
          %s744 = int_to_ptr.vmem [resolvable:$true] %s743
          %749 = dma.hbm_to_vmem [thread:$0]  %s10, 256, %s744, [#allocation15], 64, 64, 4
        $region52: #{forward.1} parent=11 // pred_fallthru
          _
        // Predicated region
        $region53: #{forward.1} parent=11 // pred_check
          %p750 = pneg %p305
        $region54: #{forward.1} parent=11 // pred_check_branch
          %752 = sbr.rel (%p750) target = $region56
        $region55: #{forward.1} parent=11 // pred_region
          %s754 = ssub.s32 16, 16
          %755 = vsyncadd [#allocation18], %s754
          %s757 = sshll.u32 [#allocation17], 4
          %s758 = int_to_ptr.vmem [resolvable:$true] %s757
          %760 = dma.hbm_to_vmem [thread:$0]  %s11, 16, %s758, [#allocation18]
        $region56: #{forward.1} parent=11 // pred_fallthru
          _
        // Predicated region
        $region57: #{forward.1} parent=11 // pred_check
          %p761 = pneg %p326
        $region58: #{forward.1} parent=11 // pred_check_branch
          %763 = sbr.rel (%p761) target = $region60
        $region59: #{forward.1} parent=11 // pred_region
          %s765 = ssub.s32 64, 64
          %766 = vsyncadd [#allocation18], %s765
          %s768 = sshll.u32 [#allocation19], 4
          %s769 = int_to_ptr.vmem [resolvable:$true] %s768
          %771 = dma.hbm_to_vmem [thread:$0]  %s12, 64, %s769, [#allocation18]
        $region60: #{forward.1} parent=11 // pred_fallthru
          _
        // Predicated region
        $region61: #{forward.1} parent=11 // pred_check
          %p772 = pneg %p347
        $region62: #{forward.1} parent=11 // pred_check_branch
          %774 = sbr.rel (%p772) target = $region64
        $region63: #{forward.1} parent=11 // pred_region
          %s776 = ssub.s32 16, 16
          %777 = vsyncadd [#allocation21], %s776
          %s779 = sshll.u32 [#allocation20], 4
          %s780 = int_to_ptr.vmem [resolvable:$true] %s779
          %782 = dma.hbm_to_vmem [thread:$0]  %s13, 16, %s780, [#allocation21]
        $region64: #{forward.1} parent=11 // pred_fallthru
          _
        // Predicated region
        $region65: #{forward.1} parent=11 // pred_check
          %p783 = pneg %p368
        $region66: #{forward.1} parent=11 // pred_check_branch
          %785 = sbr.rel (%p783) target = $region68
        $region67: #{forward.1} parent=11 // pred_region
          %s787 = ssub.s32 256, 256
          %788 = vsyncadd [#allocation21], %s787
          %s789 = sshll.u32 [#allocation22], 4
          %s790 = int_to_ptr.vmem [resolvable:$true] %s789
          %795 = dma.hbm_to_vmem [thread:$0]  %s14, 256, %s790, [#allocation21], 16, 16, 1
        $region68: #{forward.1} parent=11 // pred_fallthru
          _
        // Predicated region
        $region69: #{forward.1} parent=11 // pred_check
          %p796 = pneg %p389
        $region70: #{forward.1} parent=11 // pred_check_branch
          %798 = sbr.rel (%p796) target = $region72
        $region71: #{forward.1} parent=11 // pred_region
          %s800 = ssub.s32 16, 16
          %801 = vsyncadd [#allocation24], %s800
          %s803 = sshll.u32 [#allocation23], 4
          %s804 = int_to_ptr.vmem [resolvable:$true] %s803
          %806 = dma.hbm_to_vmem [thread:$0]  %s15, 16, %s804, [#allocation24]
        $region72: #{forward.1} parent=11 // pred_fallthru
          _
        // Predicated region
        $region73: #{forward.1} parent=11 // pred_check
          %p807 = pneg %p410
        $region74: #{forward.1} parent=11 // pred_check_branch
          %809 = sbr.rel (%p807) target = $region76
        $region75: #{forward.1} parent=11 // pred_region
          %s811 = ssub.s32 256, 256
          %812 = vsyncadd [#allocation24], %s811
          %s813 = sshll.u32 [#allocation25], 4
          %s814 = int_to_ptr.vmem [resolvable:$true] %s813
          %819 = dma.hbm_to_vmem [thread:$0]  %s16, 256, %s814, [#allocation24], 64, 64, 4
        $region76: #{forward.1} parent=11 // pred_fallthru
          _
        // Predicated region
        $region77: #{forward.1} parent=11 // pred_check
          %p820 = pneg %p431
        $region78: #{forward.1} parent=11 // pred_check_branch
          %822 = sbr.rel (%p820) target = $region80
        $region79: #{forward.1} parent=11 // pred_region
          %s824 = ssub.s32 16, 16
          %825 = vsyncadd [#allocation27], %s824
          %s827 = sshll.u32 [#allocation26], 4
          %s828 = int_to_ptr.vmem [resolvable:$true] %s827
          %830 = dma.hbm_to_vmem [thread:$0]  %s17, 16, %s828, [#allocation27]
        $region80: #{forward.1} parent=11 // pred_fallthru
          _
        // Predicated region
        $region81: #{forward.1} parent=11 // pred_check
          %p831 = pneg %p452
        $region82: #{forward.1} parent=11 // pred_check_branch
          %833 = sbr.rel (%p831) target = $region84
        $region83: #{forward.1} parent=11 // pred_region
          %s835 = ssub.s32 2048, 2048
          %836 = vsyncadd [#allocation27], %s835
          %s837 = sshll.u32 [#allocation28], 4
          %s838 = int_to_ptr.vmem [resolvable:$true] %s837
          %843 = dma.hbm_to_vmem [thread:$0]  %s18, 2048, %s838, [#allocation27], 512, 512, 32
        $region84: #{forward.1} parent=11 // pred_fallthru
          _
        // Predicated region
        $region85: #{forward.1} parent=11 // pred_check
          %p844 = pneg %p473
        $region86: #{forward.1} parent=11 // pred_check_branch
          %846 = sbr.rel (%p844) target = $region88
        $region87: #{forward.1} parent=11 // pred_region
          %s848 = ssub.s32 128, 128
          %849 = vsyncadd [#allocation30], %s848
          %s851 = sshll.u32 [#allocation29], 4
          %s852 = int_to_ptr.vmem [resolvable:$true] %s851
          %854 = dma.hbm_to_vmem [thread:$0]  %s19, 128, %s852, [#allocation30]
        $region88: #{forward.1} parent=11 // pred_fallthru
          _
        // Predicated region
        $region89: #{forward.1} parent=11 // pred_check
          %p855 = pneg %p494
        $region90: #{forward.1} parent=11 // pred_check_branch
          %857 = sbr.rel (%p855) target = $region92
        $region91: #{forward.1} parent=11 // pred_region
          %s859 = ssub.s32 65536, 65536
          %860 = vsyncadd [#allocation30], %s859
          %s861 = sshll.u32 [#allocation31], 4
          %s862 = int_to_ptr.vmem [resolvable:$true] %s861
          %867 = dma.hbm_to_vmem [thread:$0]  %s20, 65536, %s862, [#allocation30], 512, 512, 32
        $region92: #{forward.1} parent=11 // pred_fallthru
          _
        // Predicated region
        $region93: #{forward.1} parent=11 // pred_check
          %p868 = pneg %p515
        $region94: #{forward.1} parent=11 // pred_check_branch
          %870 = sbr.rel (%p868) target = $region96
        $region95: #{forward.1} parent=11 // pred_region
          %s872 = ssub.s32 128, 128
          %873 = vsyncadd [#allocation33], %s872
          %s875 = sshll.u32 [#allocation32], 4
          %s876 = int_to_ptr.vmem [resolvable:$true] %s875
          %878 = dma.hbm_to_vmem [thread:$0]  %s21, 128, %s876, [#allocation33]
        $region96: #{forward.1} parent=11 // pred_fallthru
          _
        // Predicated region
        $region97: #{forward.1} parent=11 // pred_check
          %p879 = pneg %p536
        $region98: #{forward.1} parent=11 // pred_check_branch
          %881 = sbr.rel (%p879) target = $region100
        $region99: #{forward.1} parent=11 // pred_region
          %s883 = ssub.s32 32768, 32768
          %884 = vsyncadd [#allocation33], %s883
          %s885 = sshll.u32 [#allocation34], 4
          %s886 = int_to_ptr.vmem [resolvable:$true] %s885
          %891 = dma.hbm_to_vmem [thread:$0]  %s22, 32768, %s886, [#allocation33], 256, 256, 16
        $region100: #{forward.1} parent=11 // pred_fallthru
          _
        // Predicated region
        $region101: #{forward.1} parent=11 // pred_check
          %p892 = pneg %p557
        $region102: #{forward.1} parent=11 // pred_check_branch
          %894 = sbr.rel (%p892) target = $region104
        $region103: #{forward.1} parent=11 // pred_region
          %s896 = ssub.s32 64, 64
          %897 = vsyncadd [#allocation36], %s896
          %s899 = sshll.u32 [#allocation35], 4
          %s900 = int_to_ptr.vmem [resolvable:$true] %s899
          %902 = dma.hbm_to_vmem [thread:$0]  %s23, 64, %s900, [#allocation36]
        $region104: #{forward.1} parent=11 // pred_fallthru
          _
        // Predicated region
        $region105: #{forward.1} parent=11 // pred_check
          %p903 = pneg %p578
        $region106: #{forward.1} parent=11 // pred_check_branch
          %905 = sbr.rel (%p903) target = $region108
        $region107: #{forward.1} parent=11 // pred_region
          %s907 = ssub.s32 4096, 4096
          %908 = vsyncadd [#allocation36], %s907
          %s909 = sshll.u32 [#allocation37], 4
          %s910 = int_to_ptr.vmem [resolvable:$true] %s909
          %915 = dma.hbm_to_vmem [thread:$0]  %s24, 4096, %s910, [#allocation36], 64, 64, 4
        $region108: #{forward.1} parent=11 // pred_fallthru
          _
        // Predicated region
        $region109: #{forward.1} parent=11 // pred_check
          %p916 = pneg %p599
        $region110: #{forward.1} parent=11 // pred_check_branch
          %918 = sbr.rel (%p916) target = $region112
        $region111: #{forward.1} parent=11 // pred_region
          %s920 = ssub.s32 16, 16
          %921 = vsyncadd [#allocation39], %s920
          %s923 = sshll.u32 [#allocation38], 4
          %s924 = int_to_ptr.vmem [resolvable:$true] %s923
          %926 = dma.hbm_to_vmem [thread:$0]  %s25, 16, %s924, [#allocation39]
        $region112: #{forward.1} parent=11 // pred_fallthru
          _
      $region12: #{forward.1} parent=5 // pred_fallthru
        _
      %p927 = scmp.lt.s32.totalorder %s48, 2
      // Predicated region
      $region113: #{forward.1} parent=5 // pred_check
        %p928 = pneg %p927
      $region114: #{forward.1} parent=5 // pred_check_branch
        %930 = sbr.rel (%p928) target = $region116
      $region115: #{forward.1} parent=5 // pred_region
        // Predicated region
        $region117: #{forward.1} parent=115 // pred_check
          %p931 = pneg %p68
        $region118: #{forward.1} parent=115 // pred_check_branch
          %933 = sbr.rel (%p931) target = $region120
        $region119: #{forward.1} parent=115 // pred_region
          %s934 = smul.u32 2, %s48
          %p935 = scmp.lt.s32.totalorder %s934, 3
          %s936 = scalar_select %p935, %s934, 3
          %s937 = smul.addr %s936, 8
          %s938 = scalar_lea.vmem %s0, %s937
          %s939 = smul.u32 2, %s48
        $region120: #{forward.1} parent=115 // pred_fallthru
          _
      $region116: #{forward.1} parent=5 // pred_fallthru
        _
      %p940 = scmp.le.s32.totalorder 1, %s48
      %p941 = scmp.lt.s32.totalorder %s48, 3
      %p942 = pnand %p940, %p941
      %p943 = pneg %p942
      // Predicated region
      $region121: #{forward.1} parent=5 // pred_check
        _
      $region122: #{forward.1} parent=5 // pred_check_branch
        %945 = sbr.rel (%p942) target = $region124
      $region123: #{forward.1} parent=5 // pred_region
        %s946 = ssub.s32 %s48, 1
        // Predicated region
        $region125: #{forward.1} parent=123 // pred_check
          %p947 = pneg %p116
        $region126: #{forward.1} parent=123 // pred_check_branch
          %949 = sbr.rel (%p947) target = $region128
        $region127: #{forward.1} parent=123 // pred_region
          %950 = dma.done [#allocation3], 128
        $region128: #{forward.1} parent=123 // pred_fallthru
          _
        // Predicated region
        $region129: #{forward.1} parent=123 // pred_check
          %p951 = pneg %p137
        $region130: #{forward.1} parent=123 // pred_check_branch
          %953 = sbr.rel (%p951) target = $region132
        $region131: #{forward.1} parent=123 // pred_region
          %954 = dma.done [#allocation6], 16
        $region132: #{forward.1} parent=123 // pred_fallthru
          _
        // Predicated region
        $region133: #{forward.1} parent=123 // pred_check
          %p955 = pneg %p158
        $region134: #{forward.1} parent=123 // pred_check_branch
          %957 = sbr.rel (%p955) target = $region136
        $region135: #{forward.1} parent=123 // pred_region
          %958 = dma.done [#allocation6], 64
        $region136: #{forward.1} parent=123 // pred_fallthru
          _
        // Predicated region
        $region137: #{forward.1} parent=123 // pred_check
          %p959 = pneg %p179
        $region138: #{forward.1} parent=123 // pred_check_branch
          %961 = sbr.rel (%p959) target = $region140
        $region139: #{forward.1} parent=123 // pred_region
          %962 = dma.done [#allocation9], 16
        $region140: #{forward.1} parent=123 // pred_fallthru
          _
        // Predicated region
        $region141: #{forward.1} parent=123 // pred_check
          %p963 = pneg %p200
        $region142: #{forward.1} parent=123 // pred_check_branch
          %965 = sbr.rel (%p963) target = $region144
        $region143: #{forward.1} parent=123 // pred_region
          %966 = dma.done [#allocation9], 256
        $region144: #{forward.1} parent=123 // pred_fallthru
          _
        // Predicated region
        $region145: #{forward.1} parent=123 // pred_check
          %p967 = pneg %p221
        $region146: #{forward.1} parent=123 // pred_check_branch
          %969 = sbr.rel (%p967) target = $region148
        $region147: #{forward.1} parent=123 // pred_region
          %970 = dma.done [#allocation12], 16
        $region148: #{forward.1} parent=123 // pred_fallthru
          _
        // Predicated region
        $region149: #{forward.1} parent=123 // pred_check
          %p971 = pneg %p242
        $region150: #{forward.1} parent=123 // pred_check_branch
          %973 = sbr.rel (%p971) target = $region152
        $region151: #{forward.1} parent=123 // pred_region
          %974 = dma.done [#allocation12], 128
        $region152: #{forward.1} parent=123 // pred_fallthru
          _
        // Predicated region
        $region153: #{forward.1} parent=123 // pred_check
          %p975 = pneg %p263
        $region154: #{forward.1} parent=123 // pred_check_branch
          %977 = sbr.rel (%p975) target = $region156
        $region155: #{forward.1} parent=123 // pred_region
          %978 = dma.done [#allocation15], 16
        $region156: #{forward.1} parent=123 // pred_fallthru
          _
        // Predicated region
        $region157: #{forward.1} parent=123 // pred_check
          %p979 = pneg %p284
        $region158: #{forward.1} parent=123 // pred_check_branch
          %981 = sbr.rel (%p979) target = $region160
        $region159: #{forward.1} parent=123 // pred_region
          %982 = dma.done [#allocation15], 256
        $region160: #{forward.1} parent=123 // pred_fallthru
          _
        // Predicated region
        $region161: #{forward.1} parent=123 // pred_check
          %p983 = pneg %p305
        $region162: #{forward.1} parent=123 // pred_check_branch
          %985 = sbr.rel (%p983) target = $region164
        $region163: #{forward.1} parent=123 // pred_region
          %986 = dma.done [#allocation18], 16
        $region164: #{forward.1} parent=123 // pred_fallthru
          _
        // Predicated region
        $region165: #{forward.1} parent=123 // pred_check
          %p987 = pneg %p326
        $region166: #{forward.1} parent=123 // pred_check_branch
          %989 = sbr.rel (%p987) target = $region168
        $region167: #{forward.1} parent=123 // pred_region
          %990 = dma.done [#allocation18], 64
        $region168: #{forward.1} parent=123 // pred_fallthru
          _
        // Predicated region
        $region169: #{forward.1} parent=123 // pred_check
          %p991 = pneg %p347
        $region170: #{forward.1} parent=123 // pred_check_branch
          %993 = sbr.rel (%p991) target = $region172
        $region171: #{forward.1} parent=123 // pred_region
          %994 = dma.done [#allocation21], 16
        $region172: #{forward.1} parent=123 // pred_fallthru
          _
        // Predicated region
        $region173: #{forward.1} parent=123 // pred_check
          %p995 = pneg %p368
        $region174: #{forward.1} parent=123 // pred_check_branch
          %997 = sbr.rel (%p995) target = $region176
        $region175: #{forward.1} parent=123 // pred_region
          %998 = dma.done [#allocation21], 256
        $region176: #{forward.1} parent=123 // pred_fallthru
          _
        // Predicated region
        $region177: #{forward.1} parent=123 // pred_check
          %p999 = pneg %p389
        $region178: #{forward.1} parent=123 // pred_check_branch
          %1001 = sbr.rel (%p999) target = $region180
        $region179: #{forward.1} parent=123 // pred_region
          %1002 = dma.done [#allocation24], 16
        $region180: #{forward.1} parent=123 // pred_fallthru
          _
        // Predicated region
        $region181: #{forward.1} parent=123 // pred_check
          %p1003 = pneg %p410
        $region182: #{forward.1} parent=123 // pred_check_branch
          %1005 = sbr.rel (%p1003) target = $region184
        $region183: #{forward.1} parent=123 // pred_region
          %1006 = dma.done [#allocation24], 256
        $region184: #{forward.1} parent=123 // pred_fallthru
          _
        // Predicated region
        $region185: #{forward.1} parent=123 // pred_check
          %p1007 = pneg %p431
        $region186: #{forward.1} parent=123 // pred_check_branch
          %1009 = sbr.rel (%p1007) target = $region188
        $region187: #{forward.1} parent=123 // pred_region
          %1010 = dma.done [#allocation27], 16
        $region188: #{forward.1} parent=123 // pred_fallthru
          _
        // Predicated region
        $region189: #{forward.1} parent=123 // pred_check
          %p1011 = pneg %p452
        $region190: #{forward.1} parent=123 // pred_check_branch
          %1013 = sbr.rel (%p1011) target = $region192
        $region191: #{forward.1} parent=123 // pred_region
          %1014 = dma.done [#allocation27], 2048
        $region192: #{forward.1} parent=123 // pred_fallthru
          _
        // Predicated region
        $region193: #{forward.1} parent=123 // pred_check
          %p1015 = pneg %p473
        $region194: #{forward.1} parent=123 // pred_check_branch
          %1017 = sbr.rel (%p1015) target = $region196
        $region195: #{forward.1} parent=123 // pred_region
          %1018 = dma.done [#allocation30], 128
        $region196: #{forward.1} parent=123 // pred_fallthru
          _
        // Predicated region
        $region197: #{forward.1} parent=123 // pred_check
          %p1019 = pneg %p494
        $region198: #{forward.1} parent=123 // pred_check_branch
          %1021 = sbr.rel (%p1019) target = $region200
        $region199: #{forward.1} parent=123 // pred_region
          %1022 = dma.done [#allocation30], 65536
        $region200: #{forward.1} parent=123 // pred_fallthru
          _
        // Predicated region
        $region201: #{forward.1} parent=123 // pred_check
          %p1023 = pneg %p515
        $region202: #{forward.1} parent=123 // pred_check_branch
          %1025 = sbr.rel (%p1023) target = $region204
        $region203: #{forward.1} parent=123 // pred_region
          %1026 = dma.done [#allocation33], 128
        $region204: #{forward.1} parent=123 // pred_fallthru
          _
        // Predicated region
        $region205: #{forward.1} parent=123 // pred_check
          %p1027 = pneg %p536
        $region206: #{forward.1} parent=123 // pred_check_branch
          %1029 = sbr.rel (%p1027) target = $region208
        $region207: #{forward.1} parent=123 // pred_region
          %1030 = dma.done [#allocation33], 32768
        $region208: #{forward.1} parent=123 // pred_fallthru
          _
        // Predicated region
        $region209: #{forward.1} parent=123 // pred_check
          %p1031 = pneg %p557
        $region210: #{forward.1} parent=123 // pred_check_branch
          %1033 = sbr.rel (%p1031) target = $region212
        $region211: #{forward.1} parent=123 // pred_region
          %1034 = dma.done [#allocation36], 64
        $region212: #{forward.1} parent=123 // pred_fallthru
          _
        // Predicated region
        $region213: #{forward.1} parent=123 // pred_check
          %p1035 = pneg %p578
        $region214: #{forward.1} parent=123 // pred_check_branch
          %1037 = sbr.rel (%p1035) target = $region216
        $region215: #{forward.1} parent=123 // pred_region
          %1038 = dma.done [#allocation36], 4096
        $region216: #{forward.1} parent=123 // pred_fallthru
          _
        // Predicated region
        $region217: #{forward.1} parent=123 // pred_check
          %p1039 = pneg %p599
        $region218: #{forward.1} parent=123 // pred_check_branch
          %1041 = sbr.rel (%p1039) target = $region220
        $region219: #{forward.1} parent=123 // pred_region
          %1042 = dma.done [#allocation39], 16
        $region220: #{forward.1} parent=123 // pred_fallthru
          _
        %s1043 = smul.u32 2, %s53
        %p1044 = scmp.lt.s32.totalorder %s1043, 3
        %s1045 = scalar_select %p1044, %s1043, 3
        %s1046 = smul.addr %s1045, 8
        %s1047 = scalar_lea.vmem %s0, %s1046
        %p1048 = pneg %p74
        %p1049 = pneg %p71
        %p1050 = pneg %p95
        %p1051 = pneg %p92
        %p1052 = pneg %p116
        %p1053 = pneg %p113
        %p1054 = pneg %p137
        %p1055 = pneg %p134
        %p1056 = pneg %p158
        %p1057 = pneg %p155
        %p1058 = pneg %p179
        %p1059 = pneg %p176
        %p1060 = pneg %p200
        %p1061 = pneg %p197
        %p1062 = pneg %p221
        %p1063 = pneg %p218
        %p1064 = pneg %p242
        %p1065 = pneg %p239
        %p1066 = pneg %p263
        %p1067 = pneg %p260
        %p1068 = pneg %p284
        %p1069 = pneg %p281
        %p1070 = pneg %p305
        %p1071 = pneg %p302
        %p1072 = pneg %p326
        %p1073 = pneg %p323
        %p1074 = pneg %p347
        %p1075 = pneg %p344
        %p1076 = pneg %p368
        %p1077 = pneg %p365
        %p1078 = pneg %p389
        %p1079 = pneg %p386
        %p1080 = pneg %p410
        %p1081 = pneg %p407
        %p1082 = pneg %p431
        %p1083 = pneg %p428
        %p1084 = pneg %p452
        %p1085 = pneg %p449
        %p1086 = pneg %p473
        %p1087 = pneg %p470
        %p1088 = pneg %p494
        %p1089 = pneg %p491
        %p1090 = pneg %p515
        %p1091 = pneg %p512
        %p1092 = pneg %p536
        %p1093 = pneg %p533
        %p1094 = pneg %p557
        %p1095 = pneg %p554
        %p1096 = pneg %p578
        %p1097 = pneg %p575
        %p1098 = pneg %p599
        %p1099 = pneg %p596
        %p1100 = pneg %p625
        %p1101 = pneg %p622
        %s1102 = sand.u32 %s612, 1
        %s1103 = scalar_lea.sflag [#allocation4], %s1102
        %s1104 = sand.u32 %s612, 1
        %s1105 = scalar_lea.vmem [#allocation40], %s1104
        %s1106 = smul.u32 2, %s53
        %p1107 = scmp.lt.s32.totalorder %s1106, 3
        %s1108 = scalar_select %p1107, %s1106, 3
        %s1109 = smul.addr %s1108, 8
        %s1110 = scalar_lea.vmem %s0, %s1109
        %s1111 = smul.u32 2, %s53
        %v1113 = vlaneseq
        %v1114 = vshrl.u32 %v1113, 7
        %v1115 = vadd.s32 %v1114, 8
        %vm1116 = vcmp.lt.s32.totalorder %v1114, 0
        %v1117 = vsub.s32 0, %v1114
        %v1118 = vsel %vm1116, %v1117, %v1114
        %v1119 = vshrl.u32 %v1118, 4
        %v1120 = vand.u32 %v1118, 15
        %v1121 = vsub.s32 0, %v1120
        %v1122 = vsel %vm1116, %v1121, %v1120
        %vm1123 = vcmp.lt.s32.totalorder %v1115, 0
        %v1124 = vsub.s32 0, %v1115
        %v1125 = vsel %vm1123, %v1124, %v1115
        %v1126 = vshrl.u32 %v1125, 4
        %v1127 = vand.u32 %v1125, 15
        %v1128 = vsub.s32 0, %v1127
        %v1129 = vsel %vm1123, %v1128, %v1127
        %vm1130 = vcmp.ne.s32.totalorder %v1122, 0
        %vm1131 = vcmp.ne.s32.totalorder %v1129, 0
        %vm1132 = vcmp.lt.s32.totalorder %v1122, 0
        %vm1133 = vcmp.lt.s32.totalorder %v1129, 0
        %vm1134 = vmand %vm1132, %vm1130
        %vm1135 = vmand %vm1133, %vm1131
        %v1136 = vadd.s32 %v1122, 16
        %v1137 = vadd.s32 %v1129, 16
        %v1138 = vsel %vm1134, %v1136, %v1122
        %v1139 = vsel %vm1135, %v1137, %v1129
        %vm1140 = vcmp.ge.s32.totalorder %v1138, 1
        %vm1141 = vcmp.ge.s32.totalorder %v1139, 1
        %v1142 = vld [vmem:[%s1110] sm:$0xff]
        %v1143 = vld [vmem:[%s1110 + $0x8] sm:$0xff]
        %v1144 = vlaneseq
        %v1145 = vand.u32 %v1144, 127
        %1146 = vset.pattern.permute.xlu0 0
        %1147 = vperm.xlu0 %1146, %v1142
        %v1148 = vpop.permute.xlu0 %1147
        %1149 = vset.pattern.permute.xlu0 0
        %1150 = vperm.xlu0 %1149, %v1143
        %v1151 = vpop.permute.xlu0 %1150
        %vm1152 = vcmp.eq.s32.totalorder %v1148, %v1145
        %vm1153 = vcmp.eq.s32.totalorder %v1151, %v1145
        %v1154 = vsel %vm1152, 1, 0
        %v1155 = vsel %vm1153, 1, 0
        %v1156 = vcvt.s32.f32 %v1154
        %v1157 = vcvt.s32.f32 %v1155
        %v1158 = vld [vmem:[%s1] sm:$0xff]
        %v1159 = vld [vmem:[%s1 + $0x8] sm:$0xff]
        %v1160 = vld [vmem:[%s1 + $0x10] sm:$0xf]
        %vm1161 = vcmask 162816
        %v1163 = vsel %vm1161, %v1156, 0
        %v1166 = vsel %vm1161, %v1157, 0
        %vm1168 = vcmask 1043456
        %v1170 = vsel %vm1168, %v1160, 0
        %1172 = vmatprep.subr.mxu0 0.0
        %1173 = vmatpush1.msra.mxu0 %v1158
        %1174 = vmatprep.subr.mxu0 0.0
        %1175 = vmatpush1.msra.mxu0 %v1159
        %1176 = vmatprep.subr.mxu0 0.0
        %1177 = vmatpush1.msra.mxu0 %v1170
        %1178 = vmatprep.subr.mxu0 0.0
        %1179 = vmatpush1.msra.mxu0 0.0
        %1180 = vmatprep.subr.mxu0 0.0
        %1181 = vmatpush1.msra.mxu0 0.0
        %1182 = vmatprep.subr.mxu0 0.0
        %1183 = vmatpush1.msra.mxu0 0.0
        %1184 = vmatprep.subr.mxu0 0.0
        %1185 = vmatpush1.msra.mxu0 0.0
        %1186 = vmatprep.subr.mxu0 0.0
        %1187 = vmatpush1.msra.mxu0 0.0
        %1188 = vmatprep.subr.mxu0 0.0
        %1189 = vmatpush1.msra.mxu0 0.0
        %1190 = vmatprep.subr.mxu0 0.0
        %1191 = vmatpush1.msra.mxu0 0.0
        %1192 = vmatprep.subr.mxu0 0.0
        %1193 = vmatpush1.msra.mxu0 0.0
        %1194 = vmatprep.subr.mxu0 0.0
        %1195 = vmatpush1.msra.mxu0 0.0
        %1196 = vmatprep.subr.mxu0 0.0
        %1197 = vmatpush1.msra.mxu0 0.0
        %1198 = vmatprep.subr.mxu0 0.0
        %1199 = vmatpush1.msra.mxu0 0.0
        %1200 = vmatprep.subr.mxu0 0.0
        %1201 = vmatpush1.msra.mxu0 0.0
        %1202 = vmatprep.subr.mxu0 0.0
        %1203 = vmatpush1.msra.mxu0 0.0
        %1204 = vmatprep.subr.mxu0 0.0
        %1205 = vmatpush1.msra.mxu0 0.0
        %1206 = vmatprep.subr.mxu0 0.0
        %1207 = vmatpush1.msra.mxu0 0.0
        %1208 = vmatprep.subr.mxu0 0.0
        %1209 = vmatpush1.msra.mxu0 0.0
        %1210 = vmatprep.subr.mxu0 0.0
        %1211 = vmatpush1.msra.mxu0 0.0
        %1212 = vmatprep.subr.mxu0 0.0
        %1213 = vmatpush1.msra.mxu0 0.0
        %1214 = vmatprep.subr.mxu0 0.0
        %1215 = vmatpush1.msra.mxu0 0.0
        %1216 = vmatprep.subr.mxu0 0.0
        %1217 = vmatpush1.msra.mxu0 0.0
        %1218 = vmatprep.subr.mxu0 0.0
        %1219 = vmatpush1.msra.mxu0 0.0
        %1220 = vmatprep.subr.mxu0 0.0
        %1221 = vmatpush1.msra.mxu0 0.0
        %1222 = vmatprep.subr.mxu0 0.0
        %1223 = vmatpush1.msra.mxu0 0.0
        %1224 = vmatprep.subr.mxu0 0.0
        %1225 = vmatpush1.msra.mxu0 0.0
        %1226 = vmatprep.subr.mxu0 0.0
        %1227 = vmatpush1.msra.mxu0 0.0
        %1228 = vmatprep.subr.mxu0 0.0
        %1229 = vmatpush1.msra.mxu0 0.0
        %1230 = vmatprep.subr.mxu0 0.0
        %1231 = vmatpush1.msra.mxu0 0.0
        %1232 = vmatprep.subr.mxu0 0.0
        %1233 = vmatpush1.msra.mxu0 0.0
        %1234 = vmatprep.subr.mxu0 0.0
        %1235 = vmatpush1.msra.mxu0 0.0
        %1236 = vmatprep.mubr.f32.mxu0 0.0
        %1237 = vmatmul.mubr.f32.gmra.mrb[0].mxu0 %v1163
        %v1238 = vpop.f32.mrb[0].mxu0
        %v1239 = vadd.f32 0.0, %v1238
        %v1240 = vpop.f32.mrb[0].mxu0
        %1241 = vmatprep.mubr.f32.mxu0 0.0
        %1242 = vmatmul.mubr.f32.gmra.mrb[0].mxu0 %v1166
        %v1243 = vpop.f32.mrb[0].mxu0
        %v1244 = vadd.f32 0.0, %v1243
        %v1245 = vpop.f32.mrb[0].mxu0
        %1246 = vdwg.mxu0
        %v1247 = vpack.c.bf16 %v1244, %v1239
        %v1248 = vld [vmem:[#allocation2] sm:$0xf]
        %v1249 = vld [vmem:[#allocation2 + $0x4] sm:$0xf]
        %v1250 = vld [vmem:[#allocation5] sm:$0x1]
        %v1252 = vlaneseq
        %v1253 = vshrl.u32 %v1252, 7
        %v1254 = vsub.s32 0, %v1253
        %v1255 = vrot.slane %v1250, %v1254
        %v1259 = vunpack.c.l.b16 %v1248
        %v1260 = vunpack.c.l.b16 %v1249
        %v1261 = vpack.c.b16 %v1260, %v1259
        %vm1263 = vcmask 130048
        %v1265 = vsel %vm1263, %v1247, 0
        %1267 = vmatprep.subr.bf16.mxu0 0
        %1268 = vmatpush1.bf16.msra.mxu0 %v1261
        %1269 = vmatprep.subr.bf16.mxu0 0
        %1270 = vmatpush1.bf16.msra.mxu0 0
        %1271 = vmatprep.subr.bf16.mxu0 0
        %1272 = vmatpush1.bf16.msra.mxu0 0
        %1273 = vmatprep.subr.bf16.mxu0 0
        %1274 = vmatpush1.bf16.msra.mxu0 0
        %1275 = vmatprep.subr.bf16.mxu0 0
        %1276 = vmatpush1.bf16.msra.mxu0 0
        %1277 = vmatprep.subr.bf16.mxu0 0
        %1278 = vmatpush1.bf16.msra.mxu0 0
        %1279 = vmatprep.subr.bf16.mxu0 0
        %1280 = vmatpush1.bf16.msra.mxu0 0
        %1281 = vmatprep.subr.bf16.mxu0 0
        %1282 = vmatpush1.bf16.msra.mxu0 0
        %1283 = vmatprep.subr.bf16.mxu0 0
        %1284 = vmatpush1.bf16.msra.mxu0 0
        %1285 = vmatprep.subr.bf16.mxu0 0
        %1286 = vmatpush1.bf16.msra.mxu0 0
        %1287 = vmatprep.subr.bf16.mxu0 0
        %1288 = vmatpush1.bf16.msra.mxu0 0
        %1289 = vmatprep.subr.bf16.mxu0 0
        %1290 = vmatpush1.bf16.msra.mxu0 0
        %1291 = vmatprep.subr.bf16.mxu0 0
        %1292 = vmatpush1.bf16.msra.mxu0 0
        %1293 = vmatprep.subr.bf16.mxu0 0
        %1294 = vmatpush1.bf16.msra.mxu0 0
        %1295 = vmatprep.subr.bf16.mxu0 0
        %1296 = vmatpush1.bf16.msra.mxu0 0
        %1297 = vmatprep.subr.bf16.mxu0 0
        %1298 = vmatpush1.bf16.msra.mxu0 0
        %1299 = vmatprep.mubr.bf16.mxu0 0
        %1300 = vmatmul.mubr.bf16.gmra.mrb[0].mxu0 %v1265
        %v1301 = vpop.f32.mrb[0].mxu0
        %v1302 = vadd.f32 %v1255, %v1301
        %v1303 = vpop.f32.mrb[0].mxu0
        %v1304 = vpop.f32.mrb[0].mxu0
        %v1305 = vadd.f32 %v1255, %v1304
        %v1306 = vpop.f32.mrb[0].mxu0
        %1307 = vdwg.mxu0
        %v1308 = vld [vmem:[#allocation7] sm:$0x7]
        %v1309 = vrot.slane %v1302, 7
        %v1310 = vrot.slane %v1305, 7
        %vm1311 = vcmp.lt.s32.totalorder %v1114, 1
        %v1312 = vsel %vm1311, %v1309, %v1310
        %v1313 = vsel %vm1311, %v1310, %v1309
        %v1314 = vsel %vm1140, 1, 0
        %v1315 = vsel %vm1141, 1, 0
        %vm1316 = vcmp.eq.s32.totalorder %v1314, 1
        %vm1317 = vcmp.eq.s32.totalorder %v1315, 1
        %v1318 = vsel %vm1316, %v1313, 0.0
        %v1319 = vsel %vm1317, %v1312, 0.0
        %v1320 = vrot.slane %v1318, 7
        %v1321 = vrot.slane %v1319, 7
        %v1322 = vsel %vm1311, %v1320, %v1321
        %v1323 = vsel %vm1311, %v1321, %v1320
        %v1324 = vsel %vm1316, %v1323, 0.0
        %v1325 = vsel %vm1317, %v1322, 0.0
        %v1326 = vlaneseq
        %v1327 = vshrl.u32 %v1326, 7
        %v1328 = vsub.s32 2, %v1327
        %v1329 = vrot.slane %v1308, %v1328
        %v1330 = vmul.f32 %v1329, %v1302
        %v1331 = vmul.f32 %v1329, %v1305
        %v1332 = vlaneseq
        %v1333 = vshrl.u32 %v1332, 7
        %v1334 = vsub.s32 1, %v1333
        %v1335 = vrot.slane %v1308, %v1334
        %v1336 = vmul.f32 %v1335, %v1318
        %v1337 = vmul.f32 %v1335, %v1319
        %v1338 = vadd.f32 %v1330, %v1336
        %v1339 = vadd.f32 %v1331, %v1337
        %v1340 = vlaneseq
        %v1341 = vshrl.u32 %v1340, 7
        %v1342 = vsub.s32 0, %v1341
        %v1343 = vrot.slane %v1308, %v1342
        %v1344 = vmul.f32 %v1343, %v1324
        %v1345 = vmul.f32 %v1343, %v1325
        %v1346 = vadd.f32 %v1338, %v1344
        %v1347 = vadd.f32 %v1339, %v1345
        %v1348 = vld [vmem:[#allocation8] sm:$0x1]
        %v1350 = vlaneseq
        %v1351 = vshrl.u32 %v1350, 7
        %v1352 = vsub.s32 0, %v1351
        %v1353 = vrot.slane %v1348, %v1352
        %v1355 = vadd.f32 %v1346, %v1353
        %v1356 = vadd.f32 %v1347, %v1353
        %1359 = vrot.lane.b32.xlu0 %v1355, 16
        %v1360 = vpop.permute.xlu0 %1359
        %1361 = vrot.lane.b32.xlu0 %v1356, 16
        %v1362 = vpop.permute.xlu0 %1361
        %v1365 = vmul.f32 %v1355, %v1360
        %v1366 = vmul.f32 %v1356, %v1362
        %v1367 = vld [vmem:[#allocation10] sm:$0x1]
        %v1369 = vlaneseq
        %v1370 = vshrl.u32 %v1369, 7
        %v1371 = vsub.s32 0, %v1370
        %v1372 = vrot.slane %v1367, %v1371
        %1376 = vrot.lane.b32.xlu0 %v1365, 96
        %v1377 = vpop.permute.xlu0 %1376
        %1378 = vrot.lane.b32.xlu0 %v1366, 96
        %v1379 = vpop.permute.xlu0 %1378
        %v1382 = vmul.f32 %v1372, %v1377
        %v1383 = vmul.f32 %v1372, %v1379
        %v1384 = vrot.slane %v1377, 7
        %v1385 = vrot.slane %v1379, 7
        %v1386 = vsel %vm1311, %v1384, %v1385
        %v1387 = vsel %vm1311, %v1385, %v1384
        %v1388 = vsel %vm1316, %v1387, 0.0
        %v1389 = vsel %vm1317, %v1386, 0.0
        %s1390 = scalar_lea.vmem [#allocation10], 1
        %v1391 = vld [vmem:[%s1390] sm:$0x1]
        %v1393 = vlaneseq
        %v1394 = vshrl.u32 %v1393, 7
        %v1395 = vsub.s32 0, %v1394
        %v1396 = vrot.slane %v1391, %v1395
        %v1398 = vmul.f32 %v1396, %v1388
        %v1399 = vmul.f32 %v1396, %v1389
        %v1400 = vadd.f32 %v1382, %v1398
        %v1401 = vadd.f32 %v1383, %v1399
        %v1402 = vrot.slane %v1388, 7
        %v1403 = vrot.slane %v1389, 7
        %v1404 = vsel %vm1311, %v1402, %v1403
        %v1405 = vsel %vm1311, %v1403, %v1402
        %v1406 = vsel %vm1316, %v1405, 0.0
        %v1407 = vsel %vm1317, %v1404, 0.0
        %s1408 = scalar_lea.vmem [#allocation10], 2
        %v1409 = vld [vmem:[%s1408] sm:$0x1]
        %v1411 = vlaneseq
        %v1412 = vshrl.u32 %v1411, 7
        %v1413 = vsub.s32 0, %v1412
        %v1414 = vrot.slane %v1409, %v1413
        %v1416 = vmul.f32 %v1414, %v1406
        %v1417 = vmul.f32 %v1414, %v1407
        %v1418 = vadd.f32 %v1400, %v1416
        %v1419 = vadd.f32 %v1401, %v1417
        %v1420 = vrot.slane %v1406, 7
        %v1421 = vrot.slane %v1407, 7
        %v1422 = vsel %vm1311, %v1420, %v1421
        %v1423 = vsel %vm1311, %v1421, %v1420
        %v1424 = vsel %vm1316, %v1423, 0.0
        %v1425 = vsel %vm1317, %v1422, 0.0
        %s1426 = scalar_lea.vmem [#allocation10], 3
        %v1427 = vld [vmem:[%s1426] sm:$0x1]
        %v1429 = vlaneseq
        %v1430 = vshrl.u32 %v1429, 7
        %v1431 = vsub.s32 0, %v1430
        %v1432 = vrot.slane %v1427, %v1431
        %v1434 = vmul.f32 %v1432, %v1424
        %v1435 = vmul.f32 %v1432, %v1425
        %v1436 = vadd.f32 %v1418, %v1434
        %v1437 = vadd.f32 %v1419, %v1435
        %v1438 = vrot.slane %v1424, 7
        %v1439 = vrot.slane %v1425, 7
        %v1440 = vsel %vm1311, %v1438, %v1439
        %v1441 = vsel %vm1311, %v1439, %v1438
        %v1442 = vsel %vm1316, %v1441, 0.0
        %v1443 = vsel %vm1317, %v1440, 0.0
        %s1444 = scalar_lea.vmem [#allocation10], 4
        %v1445 = vld [vmem:[%s1444] sm:$0x1]
        %v1447 = vlaneseq
        %v1448 = vshrl.u32 %v1447, 7
        %v1449 = vsub.s32 0, %v1448
        %v1450 = vrot.slane %v1445, %v1449
        %v1452 = vmul.f32 %v1450, %v1442
        %v1453 = vmul.f32 %v1450, %v1443
        %v1454 = vadd.f32 %v1436, %v1452
        %v1455 = vadd.f32 %v1437, %v1453
        %v1456 = vrot.slane %v1442, 7
        %v1457 = vrot.slane %v1443, 7
        %v1458 = vsel %vm1311, %v1456, %v1457
        %v1459 = vsel %vm1311, %v1457, %v1456
        %v1460 = vsel %vm1316, %v1459, 0.0
        %v1461 = vsel %vm1317, %v1458, 0.0
        %s1462 = scalar_lea.vmem [#allocation10], 5
        %v1463 = vld [vmem:[%s1462] sm:$0x1]
        %v1465 = vlaneseq
        %v1466 = vshrl.u32 %v1465, 7
        %v1467 = vsub.s32 0, %v1466
        %v1468 = vrot.slane %v1463, %v1467
        %v1470 = vmul.f32 %v1468, %v1460
        %v1471 = vmul.f32 %v1468, %v1461
        %v1472 = vadd.f32 %v1454, %v1470
        %v1473 = vadd.f32 %v1455, %v1471
        %v1474 = vrot.slane %v1460, 7
        %v1475 = vrot.slane %v1461, 7
        %v1476 = vsel %vm1311, %v1474, %v1475
        %v1477 = vsel %vm1311, %v1475, %v1474
        %v1478 = vsel %vm1316, %v1477, 0.0
        %v1479 = vsel %vm1317, %v1476, 0.0
        %s1480 = scalar_lea.vmem [#allocation10], 6
        %v1481 = vld [vmem:[%s1480] sm:$0x1]
        %v1483 = vlaneseq
        %v1484 = vshrl.u32 %v1483, 7
        %v1485 = vsub.s32 0, %v1484
        %v1486 = vrot.slane %v1481, %v1485
        %v1488 = vmul.f32 %v1486, %v1478
        %v1489 = vmul.f32 %v1486, %v1479
        %v1490 = vadd.f32 %v1472, %v1488
        %v1491 = vadd.f32 %v1473, %v1489
        %v1492 = vrot.slane %v1478, 7
        %v1493 = vrot.slane %v1479, 7
        %v1494 = vsel %vm1311, %v1492, %v1493
        %v1495 = vsel %vm1311, %v1493, %v1492
        %v1496 = vsel %vm1316, %v1495, 0.0
        %v1497 = vsel %vm1317, %v1494, 0.0
        %s1498 = scalar_lea.vmem [#allocation10], 7
        %v1499 = vld [vmem:[%s1498] sm:$0x1]
        %v1501 = vlaneseq
        %v1502 = vshrl.u32 %v1501, 7
        %v1503 = vsub.s32 0, %v1502
        %v1504 = vrot.slane %v1499, %v1503
        %v1506 = vmul.f32 %v1504, %v1496
        %v1507 = vmul.f32 %v1504, %v1497
        %v1508 = vadd.f32 %v1490, %v1506
        %v1509 = vadd.f32 %v1491, %v1507
        %v1510 = vrot.slane %v1496, 7
        %v1511 = vrot.slane %v1497, 7
        %v1512 = vsel %vm1311, %v1510, %v1511
        %v1513 = vsel %vm1311, %v1511, %v1510
        %v1514 = vsel %vm1316, %v1513, 0.0
        %v1515 = vsel %vm1317, %v1512, 0.0
        %s1516 = scalar_lea.vmem [#allocation10], 8
        %v1517 = vld [vmem:[%s1516] sm:$0x1]
        %v1519 = vlaneseq
        %v1520 = vshrl.u32 %v1519, 7
        %v1521 = vsub.s32 0, %v1520
        %v1522 = vrot.slane %v1517, %v1521
        %v1524 = vmul.f32 %v1522, %v1514
        %v1525 = vmul.f32 %v1522, %v1515
        %v1526 = vadd.f32 %v1508, %v1524
        %v1527 = vadd.f32 %v1509, %v1525
        %v1528 = vrot.slane %v1514, 7
        %v1529 = vrot.slane %v1515, 7
        %v1530 = vsel %vm1311, %v1528, %v1529
        %v1531 = vsel %vm1311, %v1529, %v1528
        %v1532 = vsel %vm1316, %v1531, 0.0
        %v1533 = vsel %vm1317, %v1530, 0.0
        %s1534 = scalar_lea.vmem [#allocation10], 9
        %v1535 = vld [vmem:[%s1534] sm:$0x1]
        %v1537 = vlaneseq
        %v1538 = vshrl.u32 %v1537, 7
        %v1539 = vsub.s32 0, %v1538
        %v1540 = vrot.slane %v1535, %v1539
        %v1542 = vmul.f32 %v1540, %v1532
        %v1543 = vmul.f32 %v1540, %v1533
        %v1544 = vadd.f32 %v1526, %v1542
        %v1545 = vadd.f32 %v1527, %v1543
        %v1546 = vrot.slane %v1532, 7
        %v1547 = vrot.slane %v1533, 7
        %v1548 = vsel %vm1311, %v1546, %v1547
        %v1549 = vsel %vm1311, %v1547, %v1546
        %v1550 = vsel %vm1316, %v1549, 0.0
        %v1551 = vsel %vm1317, %v1548, 0.0
        %s1552 = scalar_lea.vmem [#allocation10], 10
        %v1553 = vld [vmem:[%s1552] sm:$0x1]
        %v1555 = vlaneseq
        %v1556 = vshrl.u32 %v1555, 7
        %v1557 = vsub.s32 0, %v1556
        %v1558 = vrot.slane %v1553, %v1557
        %v1560 = vmul.f32 %v1558, %v1550
        %v1561 = vmul.f32 %v1558, %v1551
        %v1562 = vadd.f32 %v1544, %v1560
        %v1563 = vadd.f32 %v1545, %v1561
        %v1564 = vrot.slane %v1550, 7
        %v1565 = vrot.slane %v1551, 7
        %v1566 = vsel %vm1311, %v1564, %v1565
        %v1567 = vsel %vm1311, %v1565, %v1564
        %v1568 = vsel %vm1316, %v1567, 0.0
        %v1569 = vsel %vm1317, %v1566, 0.0
        %s1570 = scalar_lea.vmem [#allocation10], 11
        %v1571 = vld [vmem:[%s1570] sm:$0x1]
        %v1573 = vlaneseq
        %v1574 = vshrl.u32 %v1573, 7
        %v1575 = vsub.s32 0, %v1574
        %v1576 = vrot.slane %v1571, %v1575
        %v1578 = vmul.f32 %v1576, %v1568
        %v1579 = vmul.f32 %v1576, %v1569
        %v1580 = vadd.f32 %v1562, %v1578
        %v1581 = vadd.f32 %v1563, %v1579
        %v1582 = vrot.slane %v1568, 7
        %v1583 = vrot.slane %v1569, 7
        %v1584 = vsel %vm1311, %v1582, %v1583
        %v1585 = vsel %vm1311, %v1583, %v1582
        %v1586 = vsel %vm1316, %v1585, 0.0
        %v1587 = vsel %vm1317, %v1584, 0.0
        %s1588 = scalar_lea.vmem [#allocation10], 12
        %v1589 = vld [vmem:[%s1588] sm:$0x1]
        %v1591 = vlaneseq
        %v1592 = vshrl.u32 %v1591, 7
        %v1593 = vsub.s32 0, %v1592
        %v1594 = vrot.slane %v1589, %v1593
        %v1596 = vmul.f32 %v1594, %v1586
        %v1597 = vmul.f32 %v1594, %v1587
        %v1598 = vadd.f32 %v1580, %v1596
        %v1599 = vadd.f32 %v1581, %v1597
        %v1600 = vrot.slane %v1586, 7
        %v1601 = vrot.slane %v1587, 7
        %v1602 = vsel %vm1311, %v1600, %v1601
        %v1603 = vsel %vm1311, %v1601, %v1600
        %v1604 = vsel %vm1316, %v1603, 0.0
        %v1605 = vsel %vm1317, %v1602, 0.0
        %s1606 = scalar_lea.vmem [#allocation10], 13
        %v1607 = vld [vmem:[%s1606] sm:$0x1]
        %v1609 = vlaneseq
        %v1610 = vshrl.u32 %v1609, 7
        %v1611 = vsub.s32 0, %v1610
        %v1612 = vrot.slane %v1607, %v1611
        %v1614 = vmul.f32 %v1612, %v1604
        %v1615 = vmul.f32 %v1612, %v1605
        %v1616 = vadd.f32 %v1598, %v1614
        %v1617 = vadd.f32 %v1599, %v1615
        %v1618 = vrot.slane %v1604, 7
        %v1619 = vrot.slane %v1605, 7
        %v1620 = vsel %vm1311, %v1618, %v1619
        %v1621 = vsel %vm1311, %v1619, %v1618
        %v1622 = vsel %vm1316, %v1621, 0.0
        %v1623 = vsel %vm1317, %v1620, 0.0
        %s1624 = scalar_lea.vmem [#allocation10], 14
        %v1625 = vld [vmem:[%s1624] sm:$0x1]
        %v1627 = vlaneseq
        %v1628 = vshrl.u32 %v1627, 7
        %v1629 = vsub.s32 0, %v1628
        %v1630 = vrot.slane %v1625, %v1629
        %v1632 = vmul.f32 %v1630, %v1622
        %v1633 = vmul.f32 %v1630, %v1623
        %v1634 = vadd.f32 %v1616, %v1632
        %v1635 = vadd.f32 %v1617, %v1633
        %v1636 = vrot.slane %v1622, 7
        %v1637 = vrot.slane %v1623, 7
        %v1638 = vsel %vm1311, %v1636, %v1637
        %v1639 = vsel %vm1311, %v1637, %v1636
        %v1640 = vsel %vm1316, %v1639, 0.0
        %v1641 = vsel %vm1317, %v1638, 0.0
        %s1642 = scalar_lea.vmem [#allocation10], 15
        %v1643 = vld [vmem:[%s1642] sm:$0x1]
        %v1645 = vlaneseq
        %v1646 = vshrl.u32 %v1645, 7
        %v1647 = vsub.s32 0, %v1646
        %v1648 = vrot.slane %v1643, %v1647
        %v1650 = vmul.f32 %v1648, %v1640
        %v1651 = vmul.f32 %v1648, %v1641
        %v1652 = vadd.f32 %v1634, %v1650
        %v1653 = vadd.f32 %v1635, %v1651
        %v1654 = vld [vmem:[#allocation11] sm:$0x1]
        %v1656 = vlaneseq
        %v1657 = vshrl.u32 %v1656, 7
        %v1658 = vsub.s32 0, %v1657
        %v1659 = vrot.slane %v1654, %v1658
        %v1661 = vmul.f32 %v1659, %v1377
        %v1662 = vmul.f32 %v1659, %v1379
        %v1663 = vadd.f32 %v1652, %v1661
        %v1664 = vadd.f32 %v1653, %v1662
        %v1665 = vmul.f32 %v1663, %v1355
        %v1666 = vmul.f32 %v1664, %v1356
        %v1667 = vpack.c.bf16 %v1666, %v1665
        %v1668 = vld [vmem:[#allocation13] sm:$0xf]
        %v1669 = vld [vmem:[#allocation13 + $0x4] sm:$0xf]
        %v1670 = vld [vmem:[#allocation14] sm:$0x1]
        %v1672 = vlaneseq
        %v1673 = vshrl.u32 %v1672, 7
        %v1674 = vsub.s32 0, %v1673
        %v1675 = vrot.slane %v1670, %v1674
        %v1679 = vunpack.c.l.b16 %v1668
        %v1680 = vunpack.c.l.b16 %v1669
        %v1681 = vpack.c.b16 %v1680, %v1679
        %v1684 = vsel %vm1263, %v1667, 0
        %1686 = vmatprep.subr.bf16.mxu0 0
        %1687 = vmatpush1.bf16.msra.mxu0 %v1681
        %1688 = vmatprep.subr.bf16.mxu0 0
        %1689 = vmatpush1.bf16.msra.mxu0 0
        %1690 = vmatprep.subr.bf16.mxu0 0
        %1691 = vmatpush1.bf16.msra.mxu0 0
        %1692 = vmatprep.subr.bf16.mxu0 0
        %1693 = vmatpush1.bf16.msra.mxu0 0
        %1694 = vmatprep.subr.bf16.mxu0 0
        %1695 = vmatpush1.bf16.msra.mxu0 0
        %1696 = vmatprep.subr.bf16.mxu0 0
        %1697 = vmatpush1.bf16.msra.mxu0 0
        %1698 = vmatprep.subr.bf16.mxu0 0
        %1699 = vmatpush1.bf16.msra.mxu0 0
        %1700 = vmatprep.subr.bf16.mxu0 0
        %1701 = vmatpush1.bf16.msra.mxu0 0
        %1702 = vmatprep.subr.bf16.mxu0 0
        %1703 = vmatpush1.bf16.msra.mxu0 0
        %1704 = vmatprep.subr.bf16.mxu0 0
        %1705 = vmatpush1.bf16.msra.mxu0 0
        %1706 = vmatprep.subr.bf16.mxu0 0
        %1707 = vmatpush1.bf16.msra.mxu0 0
        %1708 = vmatprep.subr.bf16.mxu0 0
        %1709 = vmatpush1.bf16.msra.mxu0 0
        %1710 = vmatprep.subr.bf16.mxu0 0
        %1711 = vmatpush1.bf16.msra.mxu0 0
        %1712 = vmatprep.subr.bf16.mxu0 0
        %1713 = vmatpush1.bf16.msra.mxu0 0
        %1714 = vmatprep.subr.bf16.mxu0 0
        %1715 = vmatpush1.bf16.msra.mxu0 0
        %1716 = vmatprep.subr.bf16.mxu0 0
        %1717 = vmatpush1.bf16.msra.mxu0 0
        %1718 = vmatprep.mubr.bf16.mxu0 0
        %1719 = vmatmul.mubr.bf16.gmra.mrb[0].mxu0 %v1684
        %v1720 = vpop.f32.mrb[0].mxu0
        %v1721 = vadd.f32 %v1675, %v1720
        %v1722 = vpop.f32.mrb[0].mxu0
        %v1723 = vpop.f32.mrb[0].mxu0
        %v1724 = vadd.f32 %v1675, %v1723
        %v1725 = vpop.f32.mrb[0].mxu0
        %1726 = vdwg.mxu0
        %v1727 = vpack.c.bf16 %v1724, %v1721
        %v1728 = vld [vmem:[#allocation16] sm:$0xf]
        %v1729 = vld [vmem:[#allocation16 + $0x4] sm:$0xf]
        %v1730 = vld [vmem:[#allocation16 + $0x8] sm:$0xf]
        %v1731 = vld [vmem:[#allocation16 + $0xc] sm:$0xf]
        %v1732 = vld [vmem:[#allocation17] sm:$0x1]
        %v1734 = vlaneseq
        %v1735 = vshrl.u32 %v1734, 7
        %v1736 = vsub.s32 0, %v1735
        %v1737 = vrot.slane %v1732, %v1736
        %v1743 = vunpack.c.l.b16 %v1728
        %v1744 = vunpack.c.l.b16 %v1729
        %v1745 = vunpack.c.l.b16 %v1730
        %v1746 = vunpack.c.l.b16 %v1731
        %v1747 = vpack.c.b16 %v1744, %v1743
        %v1748 = vpack.c.b16 %v1746, %v1745
        %vm1751 = vcmask 261120
        %v1753 = vsel %vm1751, %v1727, 0
        %1755 = vmatprep.subr.bf16.mxu0 0
        %1756 = vmatpush1.bf16.msra.mxu0 %v1747
        %1757 = vmatprep.subr.bf16.mxu0 0
        %1758 = vmatpush1.bf16.msra.mxu0 %v1748
        %1759 = vmatprep.subr.bf16.mxu0 0
        %1760 = vmatpush1.bf16.msra.mxu0 0
        %1761 = vmatprep.subr.bf16.mxu0 0
        %1762 = vmatpush1.bf16.msra.mxu0 0
        %1763 = vmatprep.subr.bf16.mxu0 0
        %1764 = vmatpush1.bf16.msra.mxu0 0
        %1765 = vmatprep.subr.bf16.mxu0 0
        %1766 = vmatpush1.bf16.msra.mxu0 0
        %1767 = vmatprep.subr.bf16.mxu0 0
        %1768 = vmatpush1.bf16.msra.mxu0 0
        %1769 = vmatprep.subr.bf16.mxu0 0
        %1770 = vmatpush1.bf16.msra.mxu0 0
        %1771 = vmatprep.subr.bf16.mxu0 0
        %1772 = vmatpush1.bf16.msra.mxu0 0
        %1773 = vmatprep.subr.bf16.mxu0 0
        %1774 = vmatpush1.bf16.msra.mxu0 0
        %1775 = vmatprep.subr.bf16.mxu0 0
        %1776 = vmatpush1.bf16.msra.mxu0 0
        %1777 = vmatprep.subr.bf16.mxu0 0
        %1778 = vmatpush1.bf16.msra.mxu0 0
        %1779 = vmatprep.subr.bf16.mxu0 0
        %1780 = vmatpush1.bf16.msra.mxu0 0
        %1781 = vmatprep.subr.bf16.mxu0 0
        %1782 = vmatpush1.bf16.msra.mxu0 0
        %1783 = vmatprep.subr.bf16.mxu0 0
        %1784 = vmatpush1.bf16.msra.mxu0 0
        %1785 = vmatprep.subr.bf16.mxu0 0
        %1786 = vmatpush1.bf16.msra.mxu0 0
        %1787 = vmatprep.mubr.bf16.mxu0 0
        %1788 = vmatmul.mubr.bf16.gmra.mrb[0].mxu0 %v1753
        %v1789 = vpop.f32.mrb[0].mxu0
        %v1790 = vadd.f32 %v1737, %v1789
        %v1791 = vpop.f32.mrb[0].mxu0
        %v1792 = vpop.f32.mrb[0].mxu0
        %v1793 = vadd.f32 %v1737, %v1792
        %v1794 = vpop.f32.mrb[0].mxu0
        %1795 = vdwg.mxu0
        %v1796 = vld [vmem:[#allocation19] sm:$0x7]
        %v1797 = vrot.slane %v1790, 7
        %v1798 = vrot.slane %v1793, 7
        %v1799 = vsel %vm1311, %v1797, %v1798
        %v1800 = vsel %vm1311, %v1798, %v1797
        %v1801 = vsel %vm1316, %v1800, 0.0
        %v1802 = vsel %vm1317, %v1799, 0.0
        %v1803 = vrot.slane %v1801, 7
        %v1804 = vrot.slane %v1802, 7
        %v1805 = vsel %vm1311, %v1803, %v1804
        %v1806 = vsel %vm1311, %v1804, %v1803
        %v1807 = vsel %vm1316, %v1806, 0.0
        %v1808 = vsel %vm1317, %v1805, 0.0
        %v1809 = vlaneseq
        %v1810 = vshrl.u32 %v1809, 7
        %v1811 = vsub.s32 2, %v1810
        %v1812 = vrot.slane %v1796, %v1811
        %v1813 = vmul.f32 %v1812, %v1790
        %v1814 = vmul.f32 %v1812, %v1793
        %v1815 = vlaneseq
        %v1816 = vshrl.u32 %v1815, 7
        %v1817 = vsub.s32 1, %v1816
        %v1818 = vrot.slane %v1796, %v1817
        %v1819 = vmul.f32 %v1818, %v1801
        %v1820 = vmul.f32 %v1818, %v1802
        %v1821 = vadd.f32 %v1813, %v1819
        %v1822 = vadd.f32 %v1814, %v1820
        %v1823 = vlaneseq
        %v1824 = vshrl.u32 %v1823, 7
        %v1825 = vsub.s32 0, %v1824
        %v1826 = vrot.slane %v1796, %v1825
        %v1827 = vmul.f32 %v1826, %v1807
        %v1828 = vmul.f32 %v1826, %v1808
        %v1829 = vadd.f32 %v1821, %v1827
        %v1830 = vadd.f32 %v1822, %v1828
        %v1831 = vld [vmem:[#allocation20] sm:$0x1]
        %v1833 = vlaneseq
        %v1834 = vshrl.u32 %v1833, 7
        %v1835 = vsub.s32 0, %v1834
        %v1836 = vrot.slane %v1831, %v1835
        %v1838 = vadd.f32 %v1829, %v1836
        %v1839 = vadd.f32 %v1830, %v1836
        %1842 = vrot.lane.b32.xlu0 %v1838, 32
        %v1843 = vpop.permute.xlu0 %1842
        %1844 = vrot.lane.b32.xlu0 %v1839, 32
        %v1845 = vpop.permute.xlu0 %1844
        %v1848 = vmul.f32 %v1838, %v1843
        %v1849 = vmul.f32 %v1839, %v1845
        %v1850 = vld [vmem:[#allocation22] sm:$0x1]
        %v1852 = vlaneseq
        %v1853 = vshrl.u32 %v1852, 7
        %v1854 = vsub.s32 0, %v1853
        %v1855 = vrot.slane %v1850, %v1854
        %1859 = vrot.lane.b32.xlu0 %v1848, 64
        %v1860 = vpop.permute.xlu0 %1859
        %1861 = vrot.lane.b32.xlu0 %v1849, 64
        %v1862 = vpop.permute.xlu0 %1861
        %v1865 = vmul.f32 %v1855, %v1860
        %v1866 = vmul.f32 %v1855, %v1862
        %v1867 = vrot.slane %v1860, 7
        %v1868 = vrot.slane %v1862, 7
        %v1869 = vsel %vm1311, %v1867, %v1868
        %v1870 = vsel %vm1311, %v1868, %v1867
        %v1871 = vsel %vm1316, %v1870, 0.0
        %v1872 = vsel %vm1317, %v1869, 0.0
        %s1873 = scalar_lea.vmem [#allocation22], 1
        %v1874 = vld [vmem:[%s1873] sm:$0x1]
        %v1876 = vlaneseq
        %v1877 = vshrl.u32 %v1876, 7
        %v1878 = vsub.s32 0, %v1877
        %v1879 = vrot.slane %v1874, %v1878
        %v1881 = vmul.f32 %v1879, %v1871
        %v1882 = vmul.f32 %v1879, %v1872
        %v1883 = vadd.f32 %v1865, %v1881
        %v1884 = vadd.f32 %v1866, %v1882
        %v1885 = vrot.slane %v1871, 7
        %v1886 = vrot.slane %v1872, 7
        %v1887 = vsel %vm1311, %v1885, %v1886
        %v1888 = vsel %vm1311, %v1886, %v1885
        %v1889 = vsel %vm1316, %v1888, 0.0
        %v1890 = vsel %vm1317, %v1887, 0.0
        %s1891 = scalar_lea.vmem [#allocation22], 2
        %v1892 = vld [vmem:[%s1891] sm:$0x1]
        %v1894 = vlaneseq
        %v1895 = vshrl.u32 %v1894, 7
        %v1896 = vsub.s32 0, %v1895
        %v1897 = vrot.slane %v1892, %v1896
        %v1899 = vmul.f32 %v1897, %v1889
        %v1900 = vmul.f32 %v1897, %v1890
        %v1901 = vadd.f32 %v1883, %v1899
        %v1902 = vadd.f32 %v1884, %v1900
        %v1903 = vrot.slane %v1889, 7
        %v1904 = vrot.slane %v1890, 7
        %v1905 = vsel %vm1311, %v1903, %v1904
        %v1906 = vsel %vm1311, %v1904, %v1903
        %v1907 = vsel %vm1316, %v1906, 0.0
        %v1908 = vsel %vm1317, %v1905, 0.0
        %s1909 = scalar_lea.vmem [#allocation22], 3
        %v1910 = vld [vmem:[%s1909] sm:$0x1]
        %v1912 = vlaneseq
        %v1913 = vshrl.u32 %v1912, 7
        %v1914 = vsub.s32 0, %v1913
        %v1915 = vrot.slane %v1910, %v1914
        %v1917 = vmul.f32 %v1915, %v1907
        %v1918 = vmul.f32 %v1915, %v1908
        %v1919 = vadd.f32 %v1901, %v1917
        %v1920 = vadd.f32 %v1902, %v1918
        %v1921 = vrot.slane %v1907, 7
        %v1922 = vrot.slane %v1908, 7
        %v1923 = vsel %vm1311, %v1921, %v1922
        %v1924 = vsel %vm1311, %v1922, %v1921
        %v1925 = vsel %vm1316, %v1924, 0.0
        %v1926 = vsel %vm1317, %v1923, 0.0
        %s1927 = scalar_lea.vmem [#allocation22], 4
        %v1928 = vld [vmem:[%s1927] sm:$0x1]
        %v1930 = vlaneseq
        %v1931 = vshrl.u32 %v1930, 7
        %v1932 = vsub.s32 0, %v1931
        %v1933 = vrot.slane %v1928, %v1932
        %v1935 = vmul.f32 %v1933, %v1925
        %v1936 = vmul.f32 %v1933, %v1926
        %v1937 = vadd.f32 %v1919, %v1935
        %v1938 = vadd.f32 %v1920, %v1936
        %v1939 = vrot.slane %v1925, 7
        %v1940 = vrot.slane %v1926, 7
        %v1941 = vsel %vm1311, %v1939, %v1940
        %v1942 = vsel %vm1311, %v1940, %v1939
        %v1943 = vsel %vm1316, %v1942, 0.0
        %v1944 = vsel %vm1317, %v1941, 0.0
        %s1945 = scalar_lea.vmem [#allocation22], 5
        %v1946 = vld [vmem:[%s1945] sm:$0x1]
        %v1948 = vlaneseq
        %v1949 = vshrl.u32 %v1948, 7
        %v1950 = vsub.s32 0, %v1949
        %v1951 = vrot.slane %v1946, %v1950
        %v1953 = vmul.f32 %v1951, %v1943
        %v1954 = vmul.f32 %v1951, %v1944
        %v1955 = vadd.f32 %v1937, %v1953
        %v1956 = vadd.f32 %v1938, %v1954
        %v1957 = vrot.slane %v1943, 7
        %v1958 = vrot.slane %v1944, 7
        %v1959 = vsel %vm1311, %v1957, %v1958
        %v1960 = vsel %vm1311, %v1958, %v1957
        %v1961 = vsel %vm1316, %v1960, 0.0
        %v1962 = vsel %vm1317, %v1959, 0.0
        %s1963 = scalar_lea.vmem [#allocation22], 6
        %v1964 = vld [vmem:[%s1963] sm:$0x1]
        %v1966 = vlaneseq
        %v1967 = vshrl.u32 %v1966, 7
        %v1968 = vsub.s32 0, %v1967
        %v1969 = vrot.slane %v1964, %v1968
        %v1971 = vmul.f32 %v1969, %v1961
        %v1972 = vmul.f32 %v1969, %v1962
        %v1973 = vadd.f32 %v1955, %v1971
        %v1974 = vadd.f32 %v1956, %v1972
        %v1975 = vrot.slane %v1961, 7
        %v1976 = vrot.slane %v1962, 7
        %v1977 = vsel %vm1311, %v1975, %v1976
        %v1978 = vsel %vm1311, %v1976, %v1975
        %v1979 = vsel %vm1316, %v1978, 0.0
        %v1980 = vsel %vm1317, %v1977, 0.0
        %s1981 = scalar_lea.vmem [#allocation22], 7
        %v1982 = vld [vmem:[%s1981] sm:$0x1]
        %v1984 = vlaneseq
        %v1985 = vshrl.u32 %v1984, 7
        %v1986 = vsub.s32 0, %v1985
        %v1987 = vrot.slane %v1982, %v1986
        %v1989 = vmul.f32 %v1987, %v1979
        %v1990 = vmul.f32 %v1987, %v1980
        %v1991 = vadd.f32 %v1973, %v1989
        %v1992 = vadd.f32 %v1974, %v1990
        %v1993 = vrot.slane %v1979, 7
        %v1994 = vrot.slane %v1980, 7
        %v1995 = vsel %vm1311, %v1993, %v1994
        %v1996 = vsel %vm1311, %v1994, %v1993
        %v1997 = vsel %vm1316, %v1996, 0.0
        %v1998 = vsel %vm1317, %v1995, 0.0
        %s1999 = scalar_lea.vmem [#allocation22], 8
        %v2000 = vld [vmem:[%s1999] sm:$0x1]
        %v2002 = vlaneseq
        %v2003 = vshrl.u32 %v2002, 7
        %v2004 = vsub.s32 0, %v2003
        %v2005 = vrot.slane %v2000, %v2004
        %v2007 = vmul.f32 %v2005, %v1997
        %v2008 = vmul.f32 %v2005, %v1998
        %v2009 = vadd.f32 %v1991, %v2007
        %v2010 = vadd.f32 %v1992, %v2008
        %v2011 = vrot.slane %v1997, 7
        %v2012 = vrot.slane %v1998, 7
        %v2013 = vsel %vm1311, %v2011, %v2012
        %v2014 = vsel %vm1311, %v2012, %v2011
        %v2015 = vsel %vm1316, %v2014, 0.0
        %v2016 = vsel %vm1317, %v2013, 0.0
        %s2017 = scalar_lea.vmem [#allocation22], 9
        %v2018 = vld [vmem:[%s2017] sm:$0x1]
        %v2020 = vlaneseq
        %v2021 = vshrl.u32 %v2020, 7
        %v2022 = vsub.s32 0, %v2021
        %v2023 = vrot.slane %v2018, %v2022
        %v2025 = vmul.f32 %v2023, %v2015
        %v2026 = vmul.f32 %v2023, %v2016
        %v2027 = vadd.f32 %v2009, %v2025
        %v2028 = vadd.f32 %v2010, %v2026
        %v2029 = vrot.slane %v2015, 7
        %v2030 = vrot.slane %v2016, 7
        %v2031 = vsel %vm1311, %v2029, %v2030
        %v2032 = vsel %vm1311, %v2030, %v2029
        %v2033 = vsel %vm1316, %v2032, 0.0
        %v2034 = vsel %vm1317, %v2031, 0.0
        %s2035 = scalar_lea.vmem [#allocation22], 10
        %v2036 = vld [vmem:[%s2035] sm:$0x1]
        %v2038 = vlaneseq
        %v2039 = vshrl.u32 %v2038, 7
        %v2040 = vsub.s32 0, %v2039
        %v2041 = vrot.slane %v2036, %v2040
        %v2043 = vmul.f32 %v2041, %v2033
        %v2044 = vmul.f32 %v2041, %v2034
        %v2045 = vadd.f32 %v2027, %v2043
        %v2046 = vadd.f32 %v2028, %v2044
        %v2047 = vrot.slane %v2033, 7
        %v2048 = vrot.slane %v2034, 7
        %v2049 = vsel %vm1311, %v2047, %v2048
        %v2050 = vsel %vm1311, %v2048, %v2047
        %v2051 = vsel %vm1316, %v2050, 0.0
        %v2052 = vsel %vm1317, %v2049, 0.0
        %s2053 = scalar_lea.vmem [#allocation22], 11
        %v2054 = vld [vmem:[%s2053] sm:$0x1]
        %v2056 = vlaneseq
        %v2057 = vshrl.u32 %v2056, 7
        %v2058 = vsub.s32 0, %v2057
        %v2059 = vrot.slane %v2054, %v2058
        %v2061 = vmul.f32 %v2059, %v2051
        %v2062 = vmul.f32 %v2059, %v2052
        %v2063 = vadd.f32 %v2045, %v2061
        %v2064 = vadd.f32 %v2046, %v2062
        %v2065 = vrot.slane %v2051, 7
        %v2066 = vrot.slane %v2052, 7
        %v2067 = vsel %vm1311, %v2065, %v2066
        %v2068 = vsel %vm1311, %v2066, %v2065
        %v2069 = vsel %vm1316, %v2068, 0.0
        %v2070 = vsel %vm1317, %v2067, 0.0
        %s2071 = scalar_lea.vmem [#allocation22], 12
        %v2072 = vld [vmem:[%s2071] sm:$0x1]
        %v2074 = vlaneseq
        %v2075 = vshrl.u32 %v2074, 7
        %v2076 = vsub.s32 0, %v2075
        %v2077 = vrot.slane %v2072, %v2076
        %v2079 = vmul.f32 %v2077, %v2069
        %v2080 = vmul.f32 %v2077, %v2070
        %v2081 = vadd.f32 %v2063, %v2079
        %v2082 = vadd.f32 %v2064, %v2080
        %v2083 = vrot.slane %v2069, 7
        %v2084 = vrot.slane %v2070, 7
        %v2085 = vsel %vm1311, %v2083, %v2084
        %v2086 = vsel %vm1311, %v2084, %v2083
        %v2087 = vsel %vm1316, %v2086, 0.0
        %v2088 = vsel %vm1317, %v2085, 0.0
        %s2089 = scalar_lea.vmem [#allocation22], 13
        %v2090 = vld [vmem:[%s2089] sm:$0x1]
        %v2092 = vlaneseq
        %v2093 = vshrl.u32 %v2092, 7
        %v2094 = vsub.s32 0, %v2093
        %v2095 = vrot.slane %v2090, %v2094
        %v2097 = vmul.f32 %v2095, %v2087
        %v2098 = vmul.f32 %v2095, %v2088
        %v2099 = vadd.f32 %v2081, %v2097
        %v2100 = vadd.f32 %v2082, %v2098
        %v2101 = vrot.slane %v2087, 7
        %v2102 = vrot.slane %v2088, 7
        %v2103 = vsel %vm1311, %v2101, %v2102
        %v2104 = vsel %vm1311, %v2102, %v2101
        %v2105 = vsel %vm1316, %v2104, 0.0
        %v2106 = vsel %vm1317, %v2103, 0.0
        %s2107 = scalar_lea.vmem [#allocation22], 14
        %v2108 = vld [vmem:[%s2107] sm:$0x1]
        %v2110 = vlaneseq
        %v2111 = vshrl.u32 %v2110, 7
        %v2112 = vsub.s32 0, %v2111
        %v2113 = vrot.slane %v2108, %v2112
        %v2115 = vmul.f32 %v2113, %v2105
        %v2116 = vmul.f32 %v2113, %v2106
        %v2117 = vadd.f32 %v2099, %v2115
        %v2118 = vadd.f32 %v2100, %v2116
        %v2119 = vrot.slane %v2105, 7
        %v2120 = vrot.slane %v2106, 7
        %v2121 = vsel %vm1311, %v2119, %v2120
        %v2122 = vsel %vm1311, %v2120, %v2119
        %v2123 = vsel %vm1316, %v2122, 0.0
        %v2124 = vsel %vm1317, %v2121, 0.0
        %s2125 = scalar_lea.vmem [#allocation22], 15
        %v2126 = vld [vmem:[%s2125] sm:$0x1]
        %v2128 = vlaneseq
        %v2129 = vshrl.u32 %v2128, 7
        %v2130 = vsub.s32 0, %v2129
        %v2131 = vrot.slane %v2126, %v2130
        %v2133 = vmul.f32 %v2131, %v2123
        %v2134 = vmul.f32 %v2131, %v2124
        %v2135 = vadd.f32 %v2117, %v2133
        %v2136 = vadd.f32 %v2118, %v2134
        %v2137 = vld [vmem:[#allocation23] sm:$0x1]
        %v2139 = vlaneseq
        %v2140 = vshrl.u32 %v2139, 7
        %v2141 = vsub.s32 0, %v2140
        %v2142 = vrot.slane %v2137, %v2141
        %v2144 = vmul.f32 %v2142, %v1860
        %v2145 = vmul.f32 %v2142, %v1862
        %v2146 = vadd.f32 %v2135, %v2144
        %v2147 = vadd.f32 %v2136, %v2145
        %v2148 = vmul.f32 %v2146, %v1838
        %v2149 = vmul.f32 %v2147, %v1839
        %v2150 = vpack.c.bf16 %v2149, %v2148
        %v2151 = vld [vmem:[#allocation25] sm:$0xf]
        %v2152 = vld [vmem:[#allocation25 + $0x4] sm:$0xf]
        %v2153 = vld [vmem:[#allocation25 + $0x8] sm:$0xf]
        %v2154 = vld [vmem:[#allocation25 + $0xc] sm:$0xf]
        %v2155 = vld [vmem:[#allocation26] sm:$0x1]
        %v2157 = vlaneseq
        %v2158 = vshrl.u32 %v2157, 7
        %v2159 = vsub.s32 0, %v2158
        %v2160 = vrot.slane %v2155, %v2159
        %v2166 = vunpack.c.l.b16 %v2151
        %v2167 = vunpack.c.l.b16 %v2152
        %v2168 = vunpack.c.l.b16 %v2153
        %v2169 = vunpack.c.l.b16 %v2154
        %v2170 = vpack.c.b16 %v2167, %v2166
        %v2171 = vpack.c.b16 %v2169, %v2168
        %v2175 = vsel %vm1751, %v2150, 0
        %2177 = vmatprep.subr.bf16.mxu0 0
        %2178 = vmatpush1.bf16.msra.mxu0 %v2170
        %2179 = vmatprep.subr.bf16.mxu0 0
        %2180 = vmatpush1.bf16.msra.mxu0 %v2171
        %2181 = vmatprep.subr.bf16.mxu0 0
        %2182 = vmatpush1.bf16.msra.mxu0 0
        %2183 = vmatprep.subr.bf16.mxu0 0
        %2184 = vmatpush1.bf16.msra.mxu0 0
        %2185 = vmatprep.subr.bf16.mxu0 0
        %2186 = vmatpush1.bf16.msra.mxu0 0
        %2187 = vmatprep.subr.bf16.mxu0 0
        %2188 = vmatpush1.bf16.msra.mxu0 0
        %2189 = vmatprep.subr.bf16.mxu0 0
        %2190 = vmatpush1.bf16.msra.mxu0 0
        %2191 = vmatprep.subr.bf16.mxu0 0
        %2192 = vmatpush1.bf16.msra.mxu0 0
        %2193 = vmatprep.subr.bf16.mxu0 0
        %2194 = vmatpush1.bf16.msra.mxu0 0
        %2195 = vmatprep.subr.bf16.mxu0 0
        %2196 = vmatpush1.bf16.msra.mxu0 0
        %2197 = vmatprep.subr.bf16.mxu0 0
        %2198 = vmatpush1.bf16.msra.mxu0 0
        %2199 = vmatprep.subr.bf16.mxu0 0
        %2200 = vmatpush1.bf16.msra.mxu0 0
        %2201 = vmatprep.subr.bf16.mxu0 0
        %2202 = vmatpush1.bf16.msra.mxu0 0
        %2203 = vmatprep.subr.bf16.mxu0 0
        %2204 = vmatpush1.bf16.msra.mxu0 0
        %2205 = vmatprep.subr.bf16.mxu0 0
        %2206 = vmatpush1.bf16.msra.mxu0 0
        %2207 = vmatprep.subr.bf16.mxu0 0
        %2208 = vmatpush1.bf16.msra.mxu0 0
        %2209 = vmatprep.mubr.bf16.mxu0 0
        %2210 = vmatmul.mubr.bf16.gmra.mrb[0].mxu0 %v2175
        %v2211 = vpop.f32.mrb[0].mxu0
        %v2212 = vadd.f32 %v2160, %v2211
        %v2213 = vpop.f32.mrb[0].mxu0
        %v2214 = vpop.f32.mrb[0].mxu0
        %v2215 = vadd.f32 %v2160, %v2214
        %v2216 = vpop.f32.mrb[0].mxu0
        %2217 = vdwg.mxu0
        %v2218 = vsel %vm1751, %v2212, -inf
        %v2219 = vsel %vm1751, %v2215, -inf
        %v2220 = vmax.f32 %v2218, %v2219
        %v2221 = vrot.slane %v2220, 4
        %v2222 = vmax.f32 %v2220, %v2221
        %v2223 = vrot.slane %v2222, 2
        %v2224 = vmax.f32 %v2222, %v2223
        %v2225 = vrot.slane %v2224, 1
        %v2226 = vmax.f32 %v2224, %v2225
        %v2227 = vpack.c.bf16 %v2226, %v2226
        %v2228 = vld [vmem:[#allocation28] sm:$0xff]
        %v2229 = vld [vmem:[#allocation28 + $0x8] sm:$0xff]
        %v2230 = vld [vmem:[#allocation28 + $0x10] sm:$0xff]
        %v2231 = vld [vmem:[#allocation28 + $0x18] sm:$0xff]
        %v2232 = vld [vmem:[#allocation28 + $0x20] sm:$0xff]
        %v2233 = vld [vmem:[#allocation28 + $0x28] sm:$0xff]
        %v2234 = vld [vmem:[#allocation28 + $0x30] sm:$0xff]
        %v2235 = vld [vmem:[#allocation28 + $0x38] sm:$0xff]
        %v2236 = vld [vmem:[#allocation28 + $0x40] sm:$0xff]
        %v2237 = vld [vmem:[#allocation28 + $0x48] sm:$0xff]
        %v2238 = vld [vmem:[#allocation28 + $0x50] sm:$0xff]
        %v2239 = vld [vmem:[#allocation28 + $0x58] sm:$0xff]
        %v2240 = vld [vmem:[#allocation28 + $0x60] sm:$0xff]
        %v2241 = vld [vmem:[#allocation28 + $0x68] sm:$0xff]
        %v2242 = vld [vmem:[#allocation28 + $0x70] sm:$0xff]
        %v2243 = vld [vmem:[#allocation28 + $0x78] sm:$0xff]
        %v2244 = vld [vmem:[#allocation29] sm:$0xff]
        %v2261 = vunpack.c.l.b16 %v2228
        %v2262 = vunpack.c.h.b16 %v2228
        %v2263 = vunpack.c.l.b16 %v2229
        %v2264 = vunpack.c.h.b16 %v2229
        %v2265 = vunpack.c.l.b16 %v2230
        %v2266 = vunpack.c.h.b16 %v2230
        %v2267 = vunpack.c.l.b16 %v2231
        %v2268 = vunpack.c.h.b16 %v2231
        %v2269 = vunpack.c.l.b16 %v2232
        %v2270 = vunpack.c.h.b16 %v2232
        %v2271 = vunpack.c.l.b16 %v2233
        %v2272 = vunpack.c.h.b16 %v2233
        %v2273 = vunpack.c.l.b16 %v2234
        %v2274 = vunpack.c.h.b16 %v2234
        %v2275 = vunpack.c.l.b16 %v2235
        %v2276 = vunpack.c.h.b16 %v2235
        %v2277 = vunpack.c.l.b16 %v2236
        %v2278 = vunpack.c.h.b16 %v2236
        %v2279 = vunpack.c.l.b16 %v2237
        %v2280 = vunpack.c.h.b16 %v2237
        %v2281 = vunpack.c.l.b16 %v2238
        %v2282 = vunpack.c.h.b16 %v2238
        %v2283 = vunpack.c.l.b16 %v2239
        %v2284 = vunpack.c.h.b16 %v2239
        %v2285 = vunpack.c.l.b16 %v2240
        %v2286 = vunpack.c.h.b16 %v2240
        %v2287 = vunpack.c.l.b16 %v2241
        %v2288 = vunpack.c.h.b16 %v2241
        %v2289 = vunpack.c.l.b16 %v2242
        %v2290 = vunpack.c.h.b16 %v2242
        %v2291 = vunpack.c.l.b16 %v2243
        %v2292 = vunpack.c.h.b16 %v2243
        %v2293 = vpack.c.b16 %v2269, %v2261
        %v2294 = vpack.c.b16 %v2270, %v2262
        %v2295 = vpack.c.b16 %v2271, %v2263
        %v2296 = vpack.c.b16 %v2272, %v2264
        %v2297 = vpack.c.b16 %v2273, %v2265
        %v2298 = vpack.c.b16 %v2274, %v2266
        %v2299 = vpack.c.b16 %v2275, %v2267
        %v2300 = vpack.c.b16 %v2276, %v2268
        %v2301 = vpack.c.b16 %v2285, %v2277
        %v2302 = vpack.c.b16 %v2286, %v2278
        %v2303 = vpack.c.b16 %v2287, %v2279
        %v2304 = vpack.c.b16 %v2288, %v2280
        %v2305 = vpack.c.b16 %v2289, %v2281
        %v2306 = vpack.c.b16 %v2290, %v2282
        %v2307 = vpack.c.b16 %v2291, %v2283
        %v2308 = vpack.c.b16 %v2292, %v2284
        %v2326 = vlaneseq
        %v2327 = vshrl.u32 %v2326, 7
        %v2328 = vsub.s32 0, %v2327
        %v2329 = vrot.slane %v2244, %v2328
        %v2330 = vlaneseq
        %v2331 = vshrl.u32 %v2330, 7
        %v2332 = vsub.s32 1, %v2331
        %v2333 = vrot.slane %v2244, %v2332
        %v2334 = vlaneseq
        %v2335 = vshrl.u32 %v2334, 7
        %v2336 = vsub.s32 2, %v2335
        %v2337 = vrot.slane %v2244, %v2336
        %v2338 = vlaneseq
        %v2339 = vshrl.u32 %v2338, 7
        %v2340 = vsub.s32 3, %v2339
        %v2341 = vrot.slane %v2244, %v2340
        %v2342 = vlaneseq
        %v2343 = vshrl.u32 %v2342, 7
        %v2344 = vsub.s32 4, %v2343
        %v2345 = vrot.slane %v2244, %v2344
        %v2346 = vlaneseq
        %v2347 = vshrl.u32 %v2346, 7
        %v2348 = vsub.s32 5, %v2347
        %v2349 = vrot.slane %v2244, %v2348
        %v2350 = vlaneseq
        %v2351 = vshrl.u32 %v2350, 7
        %v2352 = vsub.s32 6, %v2351
        %v2353 = vrot.slane %v2244, %v2352
        %v2354 = vlaneseq
        %v2355 = vshrl.u32 %v2354, 7
        %v2356 = vsub.s32 7, %v2355
        %v2357 = vrot.slane %v2244, %v2356
        %v2367 = vsel %vm1751, %v2227, 0
        %2369 = vmatprep.subr.bf16.mxu0 %v2294
        %2370 = vmatpush1.bf16.msra.mxu0 %v2293
        %2371 = vmatprep.subr.bf16.mxu0 %v2302
        %2372 = vmatpush1.bf16.msra.mxu0 %v2301
        %2373 = vmatprep.subr.bf16.mxu0 0
        %2374 = vmatpush1.bf16.msra.mxu0 0
        %2375 = vmatprep.subr.bf16.mxu0 0
        %2376 = vmatpush1.bf16.msra.mxu0 0
        %2377 = vmatprep.subr.bf16.mxu0 0
        %2378 = vmatpush1.bf16.msra.mxu0 0
        %2379 = vmatprep.subr.bf16.mxu0 0
        %2380 = vmatpush1.bf16.msra.mxu0 0
        %2381 = vmatprep.subr.bf16.mxu0 0
        %2382 = vmatpush1.bf16.msra.mxu0 0
        %2383 = vmatprep.subr.bf16.mxu0 0
        %2384 = vmatpush1.bf16.msra.mxu0 0
        %2385 = vmatprep.subr.bf16.mxu0 0
        %2386 = vmatpush1.bf16.msra.mxu0 0
        %2387 = vmatprep.subr.bf16.mxu0 0
        %2388 = vmatpush1.bf16.msra.mxu0 0
        %2389 = vmatprep.subr.bf16.mxu0 0
        %2390 = vmatpush1.bf16.msra.mxu0 0
        %2391 = vmatprep.subr.bf16.mxu0 0
        %2392 = vmatpush1.bf16.msra.mxu0 0
        %2393 = vmatprep.subr.bf16.mxu0 0
        %2394 = vmatpush1.bf16.msra.mxu0 0
        %2395 = vmatprep.subr.bf16.mxu0 0
        %2396 = vmatpush1.bf16.msra.mxu0 0
        %2397 = vmatprep.subr.bf16.mxu0 0
        %2398 = vmatpush1.bf16.msra.mxu0 0
        %2399 = vmatprep.subr.bf16.mxu0 0
        %2400 = vmatpush1.bf16.msra.mxu0 0
        %2401 = vmatprep.mubr.bf16.mxu0 0
        %2402 = vmatmul.mubr.bf16.gmra.mrb[0].mxu0 %v2367
        %v2403 = vpop.f32.mrb[0].mxu0
        %v2404 = vadd.f32 %v2329, %v2403
        %v2405 = vpop.f32.mrb[0].mxu0
        %v2406 = vadd.f32 %v2333, %v2405
        %v2407 = vpop.f32.mrb[0].mxu0
        %v2408 = vpop.f32.mrb[0].mxu0
        %2409 = vdwg.mxu0
        %2410 = vmatprep.subr.bf16.mxu0 %v2296
        %2411 = vmatpush1.bf16.msra.mxu0 %v2295
        %2412 = vmatprep.subr.bf16.mxu0 %v2304
        %2413 = vmatpush1.bf16.msra.mxu0 %v2303
        %2414 = vmatprep.subr.bf16.mxu0 0
        %2415 = vmatpush1.bf16.msra.mxu0 0
        %2416 = vmatprep.subr.bf16.mxu0 0
        %2417 = vmatpush1.bf16.msra.mxu0 0
        %2418 = vmatprep.subr.bf16.mxu0 0
        %2419 = vmatpush1.bf16.msra.mxu0 0
        %2420 = vmatprep.subr.bf16.mxu0 0
        %2421 = vmatpush1.bf16.msra.mxu0 0
        %2422 = vmatprep.subr.bf16.mxu0 0
        %2423 = vmatpush1.bf16.msra.mxu0 0
        %2424 = vmatprep.subr.bf16.mxu0 0
        %2425 = vmatpush1.bf16.msra.mxu0 0
        %2426 = vmatprep.subr.bf16.mxu0 0
        %2427 = vmatpush1.bf16.msra.mxu0 0
        %2428 = vmatprep.subr.bf16.mxu0 0
        %2429 = vmatpush1.bf16.msra.mxu0 0
        %2430 = vmatprep.subr.bf16.mxu0 0
        %2431 = vmatpush1.bf16.msra.mxu0 0
        %2432 = vmatprep.subr.bf16.mxu0 0
        %2433 = vmatpush1.bf16.msra.mxu0 0
        %2434 = vmatprep.subr.bf16.mxu0 0
        %2435 = vmatpush1.bf16.msra.mxu0 0
        %2436 = vmatprep.subr.bf16.mxu0 0
        %2437 = vmatpush1.bf16.msra.mxu0 0
        %2438 = vmatprep.subr.bf16.mxu0 0
        %2439 = vmatpush1.bf16.msra.mxu0 0
        %2440 = vmatprep.subr.bf16.mxu0 0
        %2441 = vmatpush1.bf16.msra.mxu0 0
        %2442 = vmatprep.mubr.bf16.mxu0 0
        %2443 = vmatmul.mubr.bf16.gmra.mrb[0].mxu0 %v2367
        %v2444 = vpop.f32.mrb[0].mxu0
        %v2445 = vadd.f32 %v2337, %v2444
        %v2446 = vpop.f32.mrb[0].mxu0
        %v2447 = vadd.f32 %v2341, %v2446
        %v2448 = vpop.f32.mrb[0].mxu0
        %v2449 = vpop.f32.mrb[0].mxu0
        %2450 = vdwg.mxu0
        %2451 = vmatprep.subr.bf16.mxu0 %v2298
        %2452 = vmatpush1.bf16.msra.mxu0 %v2297
        %2453 = vmatprep.subr.bf16.mxu0 %v2306
        %2454 = vmatpush1.bf16.msra.mxu0 %v2305
        %2455 = vmatprep.subr.bf16.mxu0 0
        %2456 = vmatpush1.bf16.msra.mxu0 0
        %2457 = vmatprep.subr.bf16.mxu0 0
        %2458 = vmatpush1.bf16.msra.mxu0 0
        %2459 = vmatprep.subr.bf16.mxu0 0
        %2460 = vmatpush1.bf16.msra.mxu0 0
        %2461 = vmatprep.subr.bf16.mxu0 0
        %2462 = vmatpush1.bf16.msra.mxu0 0
        %2463 = vmatprep.subr.bf16.mxu0 0
        %2464 = vmatpush1.bf16.msra.mxu0 0
        %2465 = vmatprep.subr.bf16.mxu0 0
        %2466 = vmatpush1.bf16.msra.mxu0 0
        %2467 = vmatprep.subr.bf16.mxu0 0
        %2468 = vmatpush1.bf16.msra.mxu0 0
        %2469 = vmatprep.subr.bf16.mxu0 0
        %2470 = vmatpush1.bf16.msra.mxu0 0
        %2471 = vmatprep.subr.bf16.mxu0 0
        %2472 = vmatpush1.bf16.msra.mxu0 0
        %2473 = vmatprep.subr.bf16.mxu0 0
        %2474 = vmatpush1.bf16.msra.mxu0 0
        %2475 = vmatprep.subr.bf16.mxu0 0
        %2476 = vmatpush1.bf16.msra.mxu0 0
        %2477 = vmatprep.subr.bf16.mxu0 0
        %2478 = vmatpush1.bf16.msra.mxu0 0
        %2479 = vmatprep.subr.bf16.mxu0 0
        %2480 = vmatpush1.bf16.msra.mxu0 0
        %2481 = vmatprep.subr.bf16.mxu0 0
        %2482 = vmatpush1.bf16.msra.mxu0 0
        %2483 = vmatprep.mubr.bf16.mxu0 0
        %2484 = vmatmul.mubr.bf16.gmra.mrb[0].mxu0 %v2367
        %v2485 = vpop.f32.mrb[0].mxu0
        %v2486 = vadd.f32 %v2345, %v2485
        %v2487 = vpop.f32.mrb[0].mxu0
        %v2488 = vadd.f32 %v2349, %v2487
        %v2489 = vpop.f32.mrb[0].mxu0
        %v2490 = vpop.f32.mrb[0].mxu0
        %2491 = vdwg.mxu0
        %2492 = vmatprep.subr.bf16.mxu0 %v2300
        %2493 = vmatpush1.bf16.msra.mxu0 %v2299
        %2494 = vmatprep.subr.bf16.mxu0 %v2308
        %2495 = vmatpush1.bf16.msra.mxu0 %v2307
        %2496 = vmatprep.subr.bf16.mxu0 0
        %2497 = vmatpush1.bf16.msra.mxu0 0
        %2498 = vmatprep.subr.bf16.mxu0 0
        %2499 = vmatpush1.bf16.msra.mxu0 0
        %2500 = vmatprep.subr.bf16.mxu0 0
        %2501 = vmatpush1.bf16.msra.mxu0 0
        %2502 = vmatprep.subr.bf16.mxu0 0
        %2503 = vmatpush1.bf16.msra.mxu0 0
        %2504 = vmatprep.subr.bf16.mxu0 0
        %2505 = vmatpush1.bf16.msra.mxu0 0
        %2506 = vmatprep.subr.bf16.mxu0 0
        %2507 = vmatpush1.bf16.msra.mxu0 0
        %2508 = vmatprep.subr.bf16.mxu0 0
        %2509 = vmatpush1.bf16.msra.mxu0 0
        %2510 = vmatprep.subr.bf16.mxu0 0
        %2511 = vmatpush1.bf16.msra.mxu0 0
        %2512 = vmatprep.subr.bf16.mxu0 0
        %2513 = vmatpush1.bf16.msra.mxu0 0
        %2514 = vmatprep.subr.bf16.mxu0 0
        %2515 = vmatpush1.bf16.msra.mxu0 0
        %2516 = vmatprep.subr.bf16.mxu0 0
        %2517 = vmatpush1.bf16.msra.mxu0 0
        %2518 = vmatprep.subr.bf16.mxu0 0
        %2519 = vmatpush1.bf16.msra.mxu0 0
        %2520 = vmatprep.subr.bf16.mxu0 0
        %2521 = vmatpush1.bf16.msra.mxu0 0
        %2522 = vmatprep.subr.bf16.mxu0 0
        %2523 = vmatpush1.bf16.msra.mxu0 0
        %2524 = vmatprep.mubr.bf16.mxu0 0
        %2525 = vmatmul.mubr.bf16.gmra.mrb[0].mxu0 %v2367
        %v2526 = vpop.f32.mrb[0].mxu0
        %v2527 = vadd.f32 %v2353, %v2526
        %v2528 = vpop.f32.mrb[0].mxu0
        %v2529 = vadd.f32 %v2357, %v2528
        %v2530 = vpop.f32.mrb[0].mxu0
        %v2531 = vpop.f32.mrb[0].mxu0
        %2532 = vdwg.mxu0
        %v2533 = vmax.f32 %v2404, 0.0
        %v2534 = vmax.f32 %v2406, 0.0
        %v2535 = vmax.f32 %v2445, 0.0
        %v2536 = vmax.f32 %v2447, 0.0
        %v2537 = vmax.f32 %v2486, 0.0
        %v2538 = vmax.f32 %v2488, 0.0
        %v2539 = vmax.f32 %v2527, 0.0
        %v2540 = vmax.f32 %v2529, 0.0
        %v2541 = vpack.c.bf16 %v2533, %v2533
        %v2542 = vpack.c.bf16 %v2534, %v2534
        %v2543 = vpack.c.bf16 %v2535, %v2535
        %v2544 = vpack.c.bf16 %v2536, %v2536
        %v2545 = vpack.c.bf16 %v2537, %v2537
        %v2546 = vpack.c.bf16 %v2538, %v2538
        %v2547 = vpack.c.bf16 %v2539, %v2539
        %v2548 = vpack.c.bf16 %v2540, %v2540
        %v2549 = vld [vmem:[#allocation31] sm:$0xff]
        %v2550 = vld [vmem:[#allocation31 + $0x8] sm:$0xff]
        %v2551 = vld [vmem:[#allocation31 + $0x10] sm:$0xff]
        %v2552 = vld [vmem:[#allocation31 + $0x18] sm:$0xff]
        %v2553 = vld [vmem:[#allocation31 + $0x20] sm:$0xff]
        %v2554 = vld [vmem:[#allocation31 + $0x28] sm:$0xff]
        %v2555 = vld [vmem:[#allocation31 + $0x30] sm:$0xff]
        %v2556 = vld [vmem:[#allocation31 + $0x38] sm:$0xff]
        %v2557 = vld [vmem:[#allocation31 + $0x40] sm:$0xff]
        %v2558 = vld [vmem:[#allocation31 + $0x48] sm:$0xff]
        %v2559 = vld [vmem:[#allocation31 + $0x50] sm:$0xff]
        %v2560 = vld [vmem:[#allocation31 + $0x58] sm:$0xff]
        %v2561 = vld [vmem:[#allocation31 + $0x60] sm:$0xff]
        %v2562 = vld [vmem:[#allocation31 + $0x68] sm:$0xff]
        %v2563 = vld [vmem:[#allocation31 + $0x70] sm:$0xff]
        %v2564 = vld [vmem:[#allocation31 + $0x78] sm:$0xff]
        %v2565 = vld [vmem:[#allocation31 + $0x80] sm:$0xff]
        %v2566 = vld [vmem:[#allocation31 + $0x88] sm:$0xff]
        %v2567 = vld [vmem:[#allocation31 + $0x90] sm:$0xff]
        %v2568 = vld [vmem:[#allocation31 + $0x98] sm:$0xff]
        %v2569 = vld [vmem:[#allocation31 + $0xa0] sm:$0xff]
        %v2570 = vld [vmem:[#allocation31 + $0xa8] sm:$0xff]
        %v2571 = vld [vmem:[#allocation31 + $0xb0] sm:$0xff]
        %v2572 = vld [vmem:[#allocation31 + $0xb8] sm:$0xff]
        %v2573 = vld [vmem:[#allocation31 + $0xc0] sm:$0xff]
        %v2574 = vld [vmem:[#allocation31 + $0xc8] sm:$0xff]
        %v2575 = vld [vmem:[#allocation31 + $0xd0] sm:$0xff]
        %v2576 = vld [vmem:[#allocation31 + $0xd8] sm:$0xff]
        %v2577 = vld [vmem:[#allocation31 + $0xe0] sm:$0xff]
        %v2578 = vld [vmem:[#allocation31 + $0xe8] sm:$0xff]
        %v2579 = vld [vmem:[#allocation31 + $0xf0] sm:$0xff]
        %v2580 = vld [vmem:[#allocation31 + $0xf8] sm:$0xff]
        %v2581 = vld [vmem:[#allocation31 + $0x100] sm:$0xff]
        %v2582 = vld [vmem:[#allocation31 + $0x108] sm:$0xff]
        %v2583 = vld [vmem:[#allocation31 + $0x110] sm:$0xff]
        %v2584 = vld [vmem:[#allocation31 + $0x118] sm:$0xff]
        %v2585 = vld [vmem:[#allocation31 + $0x120] sm:$0xff]
        %v2586 = vld [vmem:[#allocation31 + $0x128] sm:$0xff]
        %v2587 = vld [vmem:[#allocation31 + $0x130] sm:$0xff]
        %v2588 = vld [vmem:[#allocation31 + $0x138] sm:$0xff]
        %v2589 = vld [vmem:[#allocation31 + $0x140] sm:$0xff]
        %v2590 = vld [vmem:[#allocation31 + $0x148] sm:$0xff]
        %v2591 = vld [vmem:[#allocation31 + $0x150] sm:$0xff]
        %v2592 = vld [vmem:[#allocation31 + $0x158] sm:$0xff]
        %v2593 = vld [vmem:[#allocation31 + $0x160] sm:$0xff]
        %v2594 = vld [vmem:[#allocation31 + $0x168] sm:$0xff]
        %v2595 = vld [vmem:[#allocation31 + $0x170] sm:$0xff]
        %v2596 = vld [vmem:[#allocation31 + $0x178] sm:$0xff]
        %v2597 = vld [vmem:[#allocation31 + $0x180] sm:$0xff]
        %v2598 = vld [vmem:[#allocation31 + $0x188] sm:$0xff]
        %v2599 = vld [vmem:[#allocation31 + $0x190] sm:$0xff]
        %v2600 = vld [vmem:[#allocation31 + $0x198] sm:$0xff]
        %v2601 = vld [vmem:[#allocation31 + $0x1a0] sm:$0xff]
        %v2602 = vld [vmem:[#allocation31 + $0x1a8] sm:$0xff]
        %v2603 = vld [vmem:[#allocation31 + $0x1b0] sm:$0xff]
        %v2604 = vld [vmem:[#allocation31 + $0x1b8] sm:$0xff]
        %v2605 = vld [vmem:[#allocation31 + $0x1c0] sm:$0xff]
        %v2606 = vld [vmem:[#allocation31 + $0x1c8] sm:$0xff]
        %v2607 = vld [vmem:[#allocation31 + $0x1d0] sm:$0xff]
        %v2608 = vld [vmem:[#allocation31 + $0x1d8] sm:$0xff]
        %v2609 = vld [vmem:[#allocation31 + $0x1e0] sm:$0xff]
        %v2610 = vld [vmem:[#allocation31 + $0x1e8] sm:$0xff]
        %v2611 = vld [vmem:[#allocation31 + $0x1f0] sm:$0xff]
        %v2612 = vld [vmem:[#allocation31 + $0x1f8] sm:$0xff]
        %v2613 = vld [vmem:[#allocation31 + $0x200] sm:$0xff]
        %v2614 = vld [vmem:[#allocation31 + $0x208] sm:$0xff]
        %v2615 = vld [vmem:[#allocation31 + $0x210] sm:$0xff]
        %v2616 = vld [vmem:[#allocation31 + $0x218] sm:$0xff]
        %v2617 = vld [vmem:[#allocation31 + $0x220] sm:$0xff]
        %v2618 = vld [vmem:[#allocation31 + $0x228] sm:$0xff]
        %v2619 = vld [vmem:[#allocation31 + $0x230] sm:$0xff]
        %v2620 = vld [vmem:[#allocation31 + $0x238] sm:$0xff]
        %v2621 = vld [vmem:[#allocation31 + $0x240] sm:$0xff]
        %v2622 = vld [vmem:[#allocation31 + $0x248] sm:$0xff]
        %v2623 = vld [vmem:[#allocation31 + $0x250] sm:$0xff]
        %v2624 = vld [vmem:[#allocation31 + $0x258] sm:$0xff]
        %v2625 = vld [vmem:[#allocation31 + $0x260] sm:$0xff]
        %v2626 = vld [vmem:[#allocation31 + $0x268] sm:$0xff]
        %v2627 = vld [vmem:[#allocation31 + $0x270] sm:$0xff]
        %v2628 = vld [vmem:[#allocation31 + $0x278] sm:$0xff]
        %v2629 = vld [vmem:[#allocation31 + $0x280] sm:$0xff]
        %v2630 = vld [vmem:[#allocation31 + $0x288] sm:$0xff]
        %v2631 = vld [vmem:[#allocation31 + $0x290] sm:$0xff]
        %v2632 = vld [vmem:[#allocation31 + $0x298] sm:$0xff]
        %v2633 = vld [vmem:[#allocation31 + $0x2a0] sm:$0xff]
        %v2634 = vld [vmem:[#allocation31 + $0x2a8] sm:$0xff]
        %v2635 = vld [vmem:[#allocation31 + $0x2b0] sm:$0xff]
        %v2636 = vld [vmem:[#allocation31 + $0x2b8] sm:$0xff]
        %v2637 = vld [vmem:[#allocation31 + $0x2c0] sm:$0xff]
        %v2638 = vld [vmem:[#allocation31 + $0x2c8] sm:$0xff]
        %v2639 = vld [vmem:[#allocation31 + $0x2d0] sm:$0xff]
        %v2640 = vld [vmem:[#allocation31 + $0x2d8] sm:$0xff]
        %v2641 = vld [vmem:[#allocation31 + $0x2e0] sm:$0xff]
        %v2642 = vld [vmem:[#allocation31 + $0x2e8] sm:$0xff]
        %v2643 = vld [vmem:[#allocation31 + $0x2f0] sm:$0xff]
        %v2644 = vld [vmem:[#allocation31 + $0x2f8] sm:$0xff]
        %v2645 = vld [vmem:[#allocation31 + $0x300] sm:$0xff]
        %v2646 = vld [vmem:[#allocation31 + $0x308] sm:$0xff]
        %v2647 = vld [vmem:[#allocation31 + $0x310] sm:$0xff]
        %v2648 = vld [vmem:[#allocation31 + $0x318] sm:$0xff]
        %v2649 = vld [vmem:[#allocation31 + $0x320] sm:$0xff]
        %v2650 = vld [vmem:[#allocation31 + $0x328] sm:$0xff]
        %v2651 = vld [vmem:[#allocation31 + $0x330] sm:$0xff]
        %v2652 = vld [vmem:[#allocation31 + $0x338] sm:$0xff]
        %v2653 = vld [vmem:[#allocation31 + $0x340] sm:$0xff]
        %v2654 = vld [vmem:[#allocation31 + $0x348] sm:$0xff]
        %v2655 = vld [vmem:[#allocation31 + $0x350] sm:$0xff]
        %v2656 = vld [vmem:[#allocation31 + $0x358] sm:$0xff]
        %v2657 = vld [vmem:[#allocation31 + $0x360] sm:$0xff]
        %v2658 = vld [vmem:[#allocation31 + $0x368] sm:$0xff]
        %v2659 = vld [vmem:[#allocation31 + $0x370] sm:$0xff]
        %v2660 = vld [vmem:[#allocation31 + $0x378] sm:$0xff]
        %v2661 = vld [vmem:[#allocation31 + $0x380] sm:$0xff]
        %v2662 = vld [vmem:[#allocation31 + $0x388] sm:$0xff]
        %v2663 = vld [vmem:[#allocation31 + $0x390] sm:$0xff]
        %v2664 = vld [vmem:[#allocation31 + $0x398] sm:$0xff]
        %v2665 = vld [vmem:[#allocation31 + $0x3a0] sm:$0xff]
        %v2666 = vld [vmem:[#allocation31 + $0x3a8] sm:$0xff]
        %v2667 = vld [vmem:[#allocation31 + $0x3b0] sm:$0xff]
        %v2668 = vld [vmem:[#allocation31 + $0x3b8] sm:$0xff]
        %v2669 = vld [vmem:[#allocation31 + $0x3c0] sm:$0xff]
        %v2670 = vld [vmem:[#allocation31 + $0x3c8] sm:$0xff]
        %v2671 = vld [vmem:[#allocation31 + $0x3d0] sm:$0xff]
        %v2672 = vld [vmem:[#allocation31 + $0x3d8] sm:$0xff]
        %v2673 = vld [vmem:[#allocation31 + $0x3e0] sm:$0xff]
        %v2674 = vld [vmem:[#allocation31 + $0x3e8] sm:$0xff]
        %v2675 = vld [vmem:[#allocation31 + $0x3f0] sm:$0xff]
        %v2676 = vld [vmem:[#allocation31 + $0x3f8] sm:$0xff]
        %v2677 = vld [vmem:[#allocation31 + $0x400] sm:$0xff]
        %v2678 = vld [vmem:[#allocation31 + $0x408] sm:$0xff]
        %v2679 = vld [vmem:[#allocation31 + $0x410] sm:$0xff]
        %v2680 = vld [vmem:[#allocation31 + $0x418] sm:$0xff]
        %v2681 = vld [vmem:[#allocation31 + $0x420] sm:$0xff]
        %v2682 = vld [vmem:[#allocation31 + $0x428] sm:$0xff]
        %v2683 = vld [vmem:[#allocation31 + $0x430] sm:$0xff]
        %v2684 = vld [vmem:[#allocation31 + $0x438] sm:$0xff]
        %v2685 = vld [vmem:[#allocation31 + $0x440] sm:$0xff]
        %v2686 = vld [vmem:[#allocation31 + $0x448] sm:$0xff]
        %v2687 = vld [vmem:[#allocation31 + $0x450] sm:$0xff]
        %v2688 = vld [vmem:[#allocation31 + $0x458] sm:$0xff]
        %v2689 = vld [vmem:[#allocation31 + $0x460] sm:$0xff]
        %v2690 = vld [vmem:[#allocation31 + $0x468] sm:$0xff]
        %v2691 = vld [vmem:[#allocation31 + $0x470] sm:$0xff]
        %v2692 = vld [vmem:[#allocation31 + $0x478] sm:$0xff]
        %v2693 = vld [vmem:[#allocation31 + $0x480] sm:$0xff]
        %v2694 = vld [vmem:[#allocation31 + $0x488] sm:$0xff]
        %v2695 = vld [vmem:[#allocation31 + $0x490] sm:$0xff]
        %v2696 = vld [vmem:[#allocation31 + $0x498] sm:$0xff]
        %v2697 = vld [vmem:[#allocation31 + $0x4a0] sm:$0xff]
        %v2698 = vld [vmem:[#allocation31 + $0x4a8] sm:$0xff]
        %v2699 = vld [vmem:[#allocation31 + $0x4b0] sm:$0xff]
        %v2700 = vld [vmem:[#allocation31 + $0x4b8] sm:$0xff]
        %v2701 = vld [vmem:[#allocation31 + $0x4c0] sm:$0xff]
        %v2702 = vld [vmem:[#allocation31 + $0x4c8] sm:$0xff]
        %v2703 = vld [vmem:[#allocation31 + $0x4d0] sm:$0xff]
        %v2704 = vld [vmem:[#allocation31 + $0x4d8] sm:$0xff]
        %v2705 = vld [vmem:[#allocation31 + $0x4e0] sm:$0xff]
        %v2706 = vld [vmem:[#allocation31 + $0x4e8] sm:$0xff]
        %v2707 = vld [vmem:[#allocation31 + $0x4f0] sm:$0xff]
        %v2708 = vld [vmem:[#allocation31 + $0x4f8] sm:$0xff]
        %v2709 = vld [vmem:[#allocation31 + $0x500] sm:$0xff]
        %v2710 = vld [vmem:[#allocation31 + $0x508] sm:$0xff]
        %v2711 = vld [vmem:[#allocation31 + $0x510] sm:$0xff]
        %v2712 = vld [vmem:[#allocation31 + $0x518] sm:$0xff]
        %v2713 = vld [vmem:[#allocation31 + $0x520] sm:$0xff]
        %v2714 = vld [vmem:[#allocation31 + $0x528] sm:$0xff]
        %v2715 = vld [vmem:[#allocation31 + $0x530] sm:$0xff]
        %v2716 = vld [vmem:[#allocation31 + $0x538] sm:$0xff]
        %v2717 = vld [vmem:[#allocation31 + $0x540] sm:$0xff]
        %v2718 = vld [vmem:[#allocation31 + $0x548] sm:$0xff]
        %v2719 = vld [vmem:[#allocation31 + $0x550] sm:$0xff]
        %v2720 = vld [vmem:[#allocation31 + $0x558] sm:$0xff]
        %v2721 = vld [vmem:[#allocation31 + $0x560] sm:$0xff]
        %v2722 = vld [vmem:[#allocation31 + $0x568] sm:$0xff]
        %v2723 = vld [vmem:[#allocation31 + $0x570] sm:$0xff]
        %v2724 = vld [vmem:[#allocation31 + $0x578] sm:$0xff]
        %v2725 = vld [vmem:[#allocation31 + $0x580] sm:$0xff]
        %v2726 = vld [vmem:[#allocation31 + $0x588] sm:$0xff]
        %v2727 = vld [vmem:[#allocation31 + $0x590] sm:$0xff]
        %v2728 = vld [vmem:[#allocation31 + $0x598] sm:$0xff]
        %v2729 = vld [vmem:[#allocation31 + $0x5a0] sm:$0xff]
        %v2730 = vld [vmem:[#allocation31 + $0x5a8] sm:$0xff]
        %v2731 = vld [vmem:[#allocation31 + $0x5b0] sm:$0xff]
        %v2732 = vld [vmem:[#allocation31 + $0x5b8] sm:$0xff]
        %v2733 = vld [vmem:[#allocation31 + $0x5c0] sm:$0xff]
        %v2734 = vld [vmem:[#allocation31 + $0x5c8] sm:$0xff]
        %v2735 = vld [vmem:[#allocation31 + $0x5d0] sm:$0xff]
        %v2736 = vld [vmem:[#allocation31 + $0x5d8] sm:$0xff]
        %v2737 = vld [vmem:[#allocation31 + $0x5e0] sm:$0xff]
        %v2738 = vld [vmem:[#allocation31 + $0x5e8] sm:$0xff]
        %v2739 = vld [vmem:[#allocation31 + $0x5f0] sm:$0xff]
        %v2740 = vld [vmem:[#allocation31 + $0x5f8] sm:$0xff]
        %v2741 = vld [vmem:[#allocation31 + $0x600] sm:$0xff]
        %v2742 = vld [vmem:[#allocation31 + $0x608] sm:$0xff]
        %v2743 = vld [vmem:[#allocation31 + $0x610] sm:$0xff]
        %v2744 = vld [vmem:[#allocation31 + $0x618] sm:$0xff]
        %v2745 = vld [vmem:[#allocation31 + $0x620] sm:$0xff]
        %v2746 = vld [vmem:[#allocation31 + $0x628] sm:$0xff]
        %v2747 = vld [vmem:[#allocation31 + $0x630] sm:$0xff]
        %v2748 = vld [vmem:[#allocation31 + $0x638] sm:$0xff]
        %v2749 = vld [vmem:[#allocation31 + $0x640] sm:$0xff]
        %v2750 = vld [vmem:[#allocation31 + $0x648] sm:$0xff]
        %v2751 = vld [vmem:[#allocation31 + $0x650] sm:$0xff]
        %v2752 = vld [vmem:[#allocation31 + $0x658] sm:$0xff]
        %v2753 = vld [vmem:[#allocation31 + $0x660] sm:$0xff]
        %v2754 = vld [vmem:[#allocation31 + $0x668] sm:$0xff]
        %v2755 = vld [vmem:[#allocation31 + $0x670] sm:$0xff]
        %v2756 = vld [vmem:[#allocation31 + $0x678] sm:$0xff]
        %v2757 = vld [vmem:[#allocation31 + $0x680] sm:$0xff]
        %v2758 = vld [vmem:[#allocation31 + $0x688] sm:$0xff]
        %v2759 = vld [vmem:[#allocation31 + $0x690] sm:$0xff]
        %v2760 = vld [vmem:[#allocation31 + $0x698] sm:$0xff]
        %v2761 = vld [vmem:[#allocation31 + $0x6a0] sm:$0xff]
        %v2762 = vld [vmem:[#allocation31 + $0x6a8] sm:$0xff]
        %v2763 = vld [vmem:[#allocation31 + $0x6b0] sm:$0xff]
        %v2764 = vld [vmem:[#allocation31 + $0x6b8] sm:$0xff]
        %v2765 = vld [vmem:[#allocation31 + $0x6c0] sm:$0xff]
        %v2766 = vld [vmem:[#allocation31 + $0x6c8] sm:$0xff]
        %v2767 = vld [vmem:[#allocation31 + $0x6d0] sm:$0xff]
        %v2768 = vld [vmem:[#allocation31 + $0x6d8] sm:$0xff]
        %v2769 = vld [vmem:[#allocation31 + $0x6e0] sm:$0xff]
        %v2770 = vld [vmem:[#allocation31 + $0x6e8] sm:$0xff]
        %v2771 = vld [vmem:[#allocation31 + $0x6f0] sm:$0xff]
        %v2772 = vld [vmem:[#allocation31 + $0x6f8] sm:$0xff]
        %v2773 = vld [vmem:[#allocation31 + $0x700] sm:$0xff]
        %v2774 = vld [vmem:[#allocation31 + $0x708] sm:$0xff]
        %v2775 = vld [vmem:[#allocation31 + $0x710] sm:$0xff]
        %v2776 = vld [vmem:[#allocation31 + $0x718] sm:$0xff]
        %v2777 = vld [vmem:[#allocation31 + $0x720] sm:$0xff]
        %v2778 = vld [vmem:[#allocation31 + $0x728] sm:$0xff]
        %v2779 = vld [vmem:[#allocation31 + $0x730] sm:$0xff]
        %v2780 = vld [vmem:[#allocation31 + $0x738] sm:$0xff]
        %v2781 = vld [vmem:[#allocation31 + $0x740] sm:$0xff]
        %v2782 = vld [vmem:[#allocation31 + $0x748] sm:$0xff]
        %v2783 = vld [vmem:[#allocation31 + $0x750] sm:$0xff]
        %v2784 = vld [vmem:[#allocation31 + $0x758] sm:$0xff]
        %v2785 = vld [vmem:[#allocation31 + $0x760] sm:$0xff]
        %v2786 = vld [vmem:[#allocation31 + $0x768] sm:$0xff]
        %v2787 = vld [vmem:[#allocation31 + $0x770] sm:$0xff]
        %v2788 = vld [vmem:[#allocation31 + $0x778] sm:$0xff]
        %v2789 = vld [vmem:[#allocation31 + $0x780] sm:$0xff]
        %v2790 = vld [vmem:[#allocation31 + $0x788] sm:$0xff]
        %v2791 = vld [vmem:[#allocation31 + $0x790] sm:$0xff]
        %v2792 = vld [vmem:[#allocation31 + $0x798] sm:$0xff]
        %v2793 = vld [vmem:[#allocation31 + $0x7a0] sm:$0xff]
        %v2794 = vld [vmem:[#allocation31 + $0x7a8] sm:$0xff]
        %v2795 = vld [vmem:[#allocation31 + $0x7b0] sm:$0xff]
        %v2796 = vld [vmem:[#allocation31 + $0x7b8] sm:$0xff]
        %v2797 = vld [vmem:[#allocation31 + $0x7c0] sm:$0xff]
        %v2798 = vld [vmem:[#allocation31 + $0x7c8] sm:$0xff]
        %v2799 = vld [vmem:[#allocation31 + $0x7d0] sm:$0xff]
        %v2800 = vld [vmem:[#allocation31 + $0x7d8] sm:$0xff]
        %v2801 = vld [vmem:[#allocation31 + $0x7e0] sm:$0xff]
        %v2802 = vld [vmem:[#allocation31 + $0x7e8] sm:$0xff]
        %v2803 = vld [vmem:[#allocation31 + $0x7f0] sm:$0xff]
        %v2804 = vld [vmem:[#allocation31 + $0x7f8] sm:$0xff]
        %v2805 = vld [vmem:[#allocation31 + $0x800] sm:$0xff]
        %v2806 = vld [vmem:[#allocation31 + $0x808] sm:$0xff]
        %v2807 = vld [vmem:[#allocation31 + $0x810] sm:$0xff]
        %v2808 = vld [vmem:[#allocation31 + $0x818] sm:$0xff]
        %v2809 = vld [vmem:[#allocation31 + $0x820] sm:$0xff]
        %v2810 = vld [vmem:[#allocation31 + $0x828] sm:$0xff]
        %v2811 = vld [vmem:[#allocation31 + $0x830] sm:$0xff]
        %v2812 = vld [vmem:[#allocation31 + $0x838] sm:$0xff]
        %v2813 = vld [vmem:[#allocation31 + $0x840] sm:$0xff]
        %v2814 = vld [vmem:[#allocation31 + $0x848] sm:$0xff]
        %v2815 = vld [vmem:[#allocation31 + $0x850] sm:$0xff]
        %v2816 = vld [vmem:[#allocation31 + $0x858] sm:$0xff]
        %v2817 = vld [vmem:[#allocation31 + $0x860] sm:$0xff]
        %v2818 = vld [vmem:[#allocation31 + $0x868] sm:$0xff]
        %v2819 = vld [vmem:[#allocation31 + $0x870] sm:$0xff]
        %v2820 = vld [vmem:[#allocation31 + $0x878] sm:$0xff]
        %v2821 = vld [vmem:[#allocation31 + $0x880] sm:$0xff]
        %v2822 = vld [vmem:[#allocation31 + $0x888] sm:$0xff]
        %v2823 = vld [vmem:[#allocation31 + $0x890] sm:$0xff]
        %v2824 = vld [vmem:[#allocation31 + $0x898] sm:$0xff]
        %v2825 = vld [vmem:[#allocation31 + $0x8a0] sm:$0xff]
        %v2826 = vld [vmem:[#allocation31 + $0x8a8] sm:$0xff]
        %v2827 = vld [vmem:[#allocation31 + $0x8b0] sm:$0xff]
        %v2828 = vld [vmem:[#allocation31 + $0x8b8] sm:$0xff]
        %v2829 = vld [vmem:[#allocation31 + $0x8c0] sm:$0xff]
        %v2830 = vld [vmem:[#allocation31 + $0x8c8] sm:$0xff]
        %v2831 = vld [vmem:[#allocation31 + $0x8d0] sm:$0xff]
        %v2832 = vld [vmem:[#allocation31 + $0x8d8] sm:$0xff]
        %v2833 = vld [vmem:[#allocation31 + $0x8e0] sm:$0xff]
        %v2834 = vld [vmem:[#allocation31 + $0x8e8] sm:$0xff]
        %v2835 = vld [vmem:[#allocation31 + $0x8f0] sm:$0xff]
        %v2836 = vld [vmem:[#allocation31 + $0x8f8] sm:$0xff]
        %v2837 = vld [vmem:[#allocation31 + $0x900] sm:$0xff]
        %v2838 = vld [vmem:[#allocation31 + $0x908] sm:$0xff]
        %v2839 = vld [vmem:[#allocation31 + $0x910] sm:$0xff]
        %v2840 = vld [vmem:[#allocation31 + $0x918] sm:$0xff]
        %v2841 = vld [vmem:[#allocation31 + $0x920] sm:$0xff]
        %v2842 = vld [vmem:[#allocation31 + $0x928] sm:$0xff]
        %v2843 = vld [vmem:[#allocation31 + $0x930] sm:$0xff]
        %v2844 = vld [vmem:[#allocation31 + $0x938] sm:$0xff]
        %v2845 = vld [vmem:[#allocation31 + $0x940] sm:$0xff]
        %v2846 = vld [vmem:[#allocation31 + $0x948] sm:$0xff]
        %v2847 = vld [vmem:[#allocation31 + $0x950] sm:$0xff]
        %v2848 = vld [vmem:[#allocation31 + $0x958] sm:$0xff]
        %v2849 = vld [vmem:[#allocation31 + $0x960] sm:$0xff]
        %v2850 = vld [vmem:[#allocation31 + $0x968] sm:$0xff]
        %v2851 = vld [vmem:[#allocation31 + $0x970] sm:$0xff]
        %v2852 = vld [vmem:[#allocation31 + $0x978] sm:$0xff]
        %v2853 = vld [vmem:[#allocation31 + $0x980] sm:$0xff]
        %v2854 = vld [vmem:[#allocation31 + $0x988] sm:$0xff]
        %v2855 = vld [vmem:[#allocation31 + $0x990] sm:$0xff]
        %v2856 = vld [vmem:[#allocation31 + $0x998] sm:$0xff]
        %v2857 = vld [vmem:[#allocation31 + $0x9a0] sm:$0xff]
        %v2858 = vld [vmem:[#allocation31 + $0x9a8] sm:$0xff]
        %v2859 = vld [vmem:[#allocation31 + $0x9b0] sm:$0xff]
        %v2860 = vld [vmem:[#allocation31 + $0x9b8] sm:$0xff]
        %v2861 = vld [vmem:[#allocation31 + $0x9c0] sm:$0xff]
        %v2862 = vld [vmem:[#allocation31 + $0x9c8] sm:$0xff]
        %v2863 = vld [vmem:[#allocation31 + $0x9d0] sm:$0xff]
        %v2864 = vld [vmem:[#allocation31 + $0x9d8] sm:$0xff]
        %v2865 = vld [vmem:[#allocation31 + $0x9e0] sm:$0xff]
        %v2866 = vld [vmem:[#allocation31 + $0x9e8] sm:$0xff]
        %v2867 = vld [vmem:[#allocation31 + $0x9f0] sm:$0xff]
        %v2868 = vld [vmem:[#allocation31 + $0x9f8] sm:$0xff]
        %v2869 = vld [vmem:[#allocation31 + $0xa00] sm:$0xff]
        %v2870 = vld [vmem:[#allocation31 + $0xa08] sm:$0xff]
        %v2871 = vld [vmem:[#allocation31 + $0xa10] sm:$0xff]
        %v2872 = vld [vmem:[#allocation31 + $0xa18] sm:$0xff]
        %v2873 = vld [vmem:[#allocation31 + $0xa20] sm:$0xff]
        %v2874 = vld [vmem:[#allocation31 + $0xa28] sm:$0xff]
        %v2875 = vld [vmem:[#allocation31 + $0xa30] sm:$0xff]
        %v2876 = vld [vmem:[#allocation31 + $0xa38] sm:$0xff]
        %v2877 = vld [vmem:[#allocation31 + $0xa40] sm:$0xff]
        %v2878 = vld [vmem:[#allocation31 + $0xa48] sm:$0xff]
        %v2879 = vld [vmem:[#allocation31 + $0xa50] sm:$0xff]
        %v2880 = vld [vmem:[#allocation31 + $0xa58] sm:$0xff]
        %v2881 = vld [vmem:[#allocation31 + $0xa60] sm:$0xff]
        %v2882 = vld [vmem:[#allocation31 + $0xa68] sm:$0xff]
        %v2883 = vld [vmem:[#allocation31 + $0xa70] sm:$0xff]
        %v2884 = vld [vmem:[#allocation31 + $0xa78] sm:$0xff]
        %v2885 = vld [vmem:[#allocation31 + $0xa80] sm:$0xff]
        %v2886 = vld [vmem:[#allocation31 + $0xa88] sm:$0xff]
        %v2887 = vld [vmem:[#allocation31 + $0xa90] sm:$0xff]
        %v2888 = vld [vmem:[#allocation31 + $0xa98] sm:$0xff]
        %v2889 = vld [vmem:[#allocation31 + $0xaa0] sm:$0xff]
        %v2890 = vld [vmem:[#allocation31 + $0xaa8] sm:$0xff]
        %v2891 = vld [vmem:[#allocation31 + $0xab0] sm:$0xff]
        %v2892 = vld [vmem:[#allocation31 + $0xab8] sm:$0xff]
        %v2893 = vld [vmem:[#allocation31 + $0xac0] sm:$0xff]
        %v2894 = vld [vmem:[#allocation31 + $0xac8] sm:$0xff]
        %v2895 = vld [vmem:[#allocation31 + $0xad0] sm:$0xff]
        %v2896 = vld [vmem:[#allocation31 + $0xad8] sm:$0xff]
        %v2897 = vld [vmem:[#allocation31 + $0xae0] sm:$0xff]
        %v2898 = vld [vmem:[#allocation31 + $0xae8] sm:$0xff]
        %v2899 = vld [vmem:[#allocation31 + $0xaf0] sm:$0xff]
        %v2900 = vld [vmem:[#allocation31 + $0xaf8] sm:$0xff]
        %v2901 = vld [vmem:[#allocation31 + $0xb00] sm:$0xff]
        %v2902 = vld [vmem:[#allocation31 + $0xb08] sm:$0xff]
        %v2903 = vld [vmem:[#allocation31 + $0xb10] sm:$0xff]
        %v2904 = vld [vmem:[#allocation31 + $0xb18] sm:$0xff]
        %v2905 = vld [vmem:[#allocation31 + $0xb20] sm:$0xff]
        %v2906 = vld [vmem:[#allocation31 + $0xb28] sm:$0xff]
        %v2907 = vld [vmem:[#allocation31 + $0xb30] sm:$0xff]
        %v2908 = vld [vmem:[#allocation31 + $0xb38] sm:$0xff]
        %v2909 = vld [vmem:[#allocation31 + $0xb40] sm:$0xff]
        %v2910 = vld [vmem:[#allocation31 + $0xb48] sm:$0xff]
        %v2911 = vld [vmem:[#allocation31 + $0xb50] sm:$0xff]
        %v2912 = vld [vmem:[#allocation31 + $0xb58] sm:$0xff]
        %v2913 = vld [vmem:[#allocation31 + $0xb60] sm:$0xff]
        %v2914 = vld [vmem:[#allocation31 + $0xb68] sm:$0xff]
        %v2915 = vld [vmem:[#allocation31 + $0xb70] sm:$0xff]
        %v2916 = vld [vmem:[#allocation31 + $0xb78] sm:$0xff]
        %v2917 = vld [vmem:[#allocation31 + $0xb80] sm:$0xff]
        %v2918 = vld [vmem:[#allocation31 + $0xb88] sm:$0xff]
        %v2919 = vld [vmem:[#allocation31 + $0xb90] sm:$0xff]
        %v2920 = vld [vmem:[#allocation31 + $0xb98] sm:$0xff]
        %v2921 = vld [vmem:[#allocation31 + $0xba0] sm:$0xff]
        %v2922 = vld [vmem:[#allocation31 + $0xba8] sm:$0xff]
        %v2923 = vld [vmem:[#allocation31 + $0xbb0] sm:$0xff]
        %v2924 = vld [vmem:[#allocation31 + $0xbb8] sm:$0xff]
        %v2925 = vld [vmem:[#allocation31 + $0xbc0] sm:$0xff]
        %v2926 = vld [vmem:[#allocation31 + $0xbc8] sm:$0xff]
        %v2927 = vld [vmem:[#allocation31 + $0xbd0] sm:$0xff]
        %v2928 = vld [vmem:[#allocation31 + $0xbd8] sm:$0xff]
        %v2929 = vld [vmem:[#allocation31 + $0xbe0] sm:$0xff]
        %v2930 = vld [vmem:[#allocation31 + $0xbe8] sm:$0xff]
        %v2931 = vld [vmem:[#allocation31 + $0xbf0] sm:$0xff]
        %v2932 = vld [vmem:[#allocation31 + $0xbf8] sm:$0xff]
        %v2933 = vld [vmem:[#allocation31 + $0xc00] sm:$0xff]
        %v2934 = vld [vmem:[#allocation31 + $0xc08] sm:$0xff]
        %v2935 = vld [vmem:[#allocation31 + $0xc10] sm:$0xff]
        %v2936 = vld [vmem:[#allocation31 + $0xc18] sm:$0xff]
        %v2937 = vld [vmem:[#allocation31 + $0xc20] sm:$0xff]
        %v2938 = vld [vmem:[#allocation31 + $0xc28] sm:$0xff]
        %v2939 = vld [vmem:[#allocation31 + $0xc30] sm:$0xff]
        %v2940 = vld [vmem:[#allocation31 + $0xc38] sm:$0xff]
        %v2941 = vld [vmem:[#allocation31 + $0xc40] sm:$0xff]
        %v2942 = vld [vmem:[#allocation31 + $0xc48] sm:$0xff]
        %v2943 = vld [vmem:[#allocation31 + $0xc50] sm:$0xff]
        %v2944 = vld [vmem:[#allocation31 + $0xc58] sm:$0xff]
        %v2945 = vld [vmem:[#allocation31 + $0xc60] sm:$0xff]
        %v2946 = vld [vmem:[#allocation31 + $0xc68] sm:$0xff]
        %v2947 = vld [vmem:[#allocation31 + $0xc70] sm:$0xff]
        %v2948 = vld [vmem:[#allocation31 + $0xc78] sm:$0xff]
        %v2949 = vld [vmem:[#allocation31 + $0xc80] sm:$0xff]
        %v2950 = vld [vmem:[#allocation31 + $0xc88] sm:$0xff]
        %v2951 = vld [vmem:[#allocation31 + $0xc90] sm:$0xff]
        %v2952 = vld [vmem:[#allocation31 + $0xc98] sm:$0xff]
        %v2953 = vld [vmem:[#allocation31 + $0xca0] sm:$0xff]
        %v2954 = vld [vmem:[#allocation31 + $0xca8] sm:$0xff]
        %v2955 = vld [vmem:[#allocation31 + $0xcb0] sm:$0xff]
        %v2956 = vld [vmem:[#allocation31 + $0xcb8] sm:$0xff]
        %v2957 = vld [vmem:[#allocation31 + $0xcc0] sm:$0xff]
        %v2958 = vld [vmem:[#allocation31 + $0xcc8] sm:$0xff]
        %v2959 = vld [vmem:[#allocation31 + $0xcd0] sm:$0xff]
        %v2960 = vld [vmem:[#allocation31 + $0xcd8] sm:$0xff]
        %v2961 = vld [vmem:[#allocation31 + $0xce0] sm:$0xff]
        %v2962 = vld [vmem:[#allocation31 + $0xce8] sm:$0xff]
        %v2963 = vld [vmem:[#allocation31 + $0xcf0] sm:$0xff]
        %v2964 = vld [vmem:[#allocation31 + $0xcf8] sm:$0xff]
        %v2965 = vld [vmem:[#allocation31 + $0xd00] sm:$0xff]
        %v2966 = vld [vmem:[#allocation31 + $0xd08] sm:$0xff]
        %v2967 = vld [vmem:[#allocation31 + $0xd10] sm:$0xff]
        %v2968 = vld [vmem:[#allocation31 + $0xd18] sm:$0xff]
        %v2969 = vld [vmem:[#allocation31 + $0xd20] sm:$0xff]
        %v2970 = vld [vmem:[#allocation31 + $0xd28] sm:$0xff]
        %v2971 = vld [vmem:[#allocation31 + $0xd30] sm:$0xff]
        %v2972 = vld [vmem:[#allocation31 + $0xd38] sm:$0xff]
        %v2973 = vld [vmem:[#allocation31 + $0xd40] sm:$0xff]
        %v2974 = vld [vmem:[#allocation31 + $0xd48] sm:$0xff]
        %v2975 = vld [vmem:[#allocation31 + $0xd50] sm:$0xff]
        %v2976 = vld [vmem:[#allocation31 + $0xd58] sm:$0xff]
        %v2977 = vld [vmem:[#allocation31 + $0xd60] sm:$0xff]
        %v2978 = vld [vmem:[#allocation31 + $0xd68] sm:$0xff]
        %v2979 = vld [vmem:[#allocation31 + $0xd70] sm:$0xff]
        %v2980 = vld [vmem:[#allocation31 + $0xd78] sm:$0xff]
        %v2981 = vld [vmem:[#allocation31 + $0xd80] sm:$0xff]
        %v2982 = vld [vmem:[#allocation31 + $0xd88] sm:$0xff]
        %v2983 = vld [vmem:[#allocation31 + $0xd90] sm:$0xff]
        %v2984 = vld [vmem:[#allocation31 + $0xd98] sm:$0xff]
        %v2985 = vld [vmem:[#allocation31 + $0xda0] sm:$0xff]
        %v2986 = vld [vmem:[#allocation31 + $0xda8] sm:$0xff]
        %v2987 = vld [vmem:[#allocation31 + $0xdb0] sm:$0xff]
        %v2988 = vld [vmem:[#allocation31 + $0xdb8] sm:$0xff]
        %v2989 = vld [vmem:[#allocation31 + $0xdc0] sm:$0xff]
        %v2990 = vld [vmem:[#allocation31 + $0xdc8] sm:$0xff]
        %v2991 = vld [vmem:[#allocation31 + $0xdd0] sm:$0xff]
        %v2992 = vld [vmem:[#allocation31 + $0xdd8] sm:$0xff]
        %v2993 = vld [vmem:[#allocation31 + $0xde0] sm:$0xff]
        %v2994 = vld [vmem:[#allocation31 + $0xde8] sm:$0xff]
        %v2995 = vld [vmem:[#allocation31 + $0xdf0] sm:$0xff]
        %v2996 = vld [vmem:[#allocation31 + $0xdf8] sm:$0xff]
        %v2997 = vld [vmem:[#allocation31 + $0xe00] sm:$0xff]
        %v2998 = vld [vmem:[#allocation31 + $0xe08] sm:$0xff]
        %v2999 = vld [vmem:[#allocation31 + $0xe10] sm:$0xff]
        %v3000 = vld [vmem:[#allocation31 + $0xe18] sm:$0xff]
        %v3001 = vld [vmem:[#allocation31 + $0xe20] sm:$0xff]
        %v3002 = vld [vmem:[#allocation31 + $0xe28] sm:$0xff]
        %v3003 = vld [vmem:[#allocation31 + $0xe30] sm:$0xff]
        %v3004 = vld [vmem:[#allocation31 + $0xe38] sm:$0xff]
        %v3005 = vld [vmem:[#allocation31 + $0xe40] sm:$0xff]
        %v3006 = vld [vmem:[#allocation31 + $0xe48] sm:$0xff]
        %v3007 = vld [vmem:[#allocation31 + $0xe50] sm:$0xff]
        %v3008 = vld [vmem:[#allocation31 + $0xe58] sm:$0xff]
        %v3009 = vld [vmem:[#allocation31 + $0xe60] sm:$0xff]
        %v3010 = vld [vmem:[#allocation31 + $0xe68] sm:$0xff]
        %v3011 = vld [vmem:[#allocation31 + $0xe70] sm:$0xff]
        %v3012 = vld [vmem:[#allocation31 + $0xe78] sm:$0xff]
        %v3013 = vld [vmem:[#allocation31 + $0xe80] sm:$0xff]
        %v3014 = vld [vmem:[#allocation31 + $0xe88] sm:$0xff]
        %v3015 = vld [vmem:[#allocation31 + $0xe90] sm:$0xff]
        %v3016 = vld [vmem:[#allocation31 + $0xe98] sm:$0xff]
        %v3017 = vld [vmem:[#allocation31 + $0xea0] sm:$0xff]
        %v3018 = vld [vmem:[#allocation31 + $0xea8] sm:$0xff]
        %v3019 = vld [vmem:[#allocation31 + $0xeb0] sm:$0xff]
        %v3020 = vld [vmem:[#allocation31 + $0xeb8] sm:$0xff]
        %v3021 = vld [vmem:[#allocation31 + $0xec0] sm:$0xff]
        %v3022 = vld [vmem:[#allocation31 + $0xec8] sm:$0xff]
        %v3023 = vld [vmem:[#allocation31 + $0xed0] sm:$0xff]
        %v3024 = vld [vmem:[#allocation31 + $0xed8] sm:$0xff]
        %v3025 = vld [vmem:[#allocation31 + $0xee0] sm:$0xff]
        %v3026 = vld [vmem:[#allocation31 + $0xee8] sm:$0xff]
        %v3027 = vld [vmem:[#allocation31 + $0xef0] sm:$0xff]
        %v3028 = vld [vmem:[#allocation31 + $0xef8] sm:$0xff]
        %v3029 = vld [vmem:[#allocation31 + $0xf00] sm:$0xff]
        %v3030 = vld [vmem:[#allocation31 + $0xf08] sm:$0xff]
        %v3031 = vld [vmem:[#allocation31 + $0xf10] sm:$0xff]
        %v3032 = vld [vmem:[#allocation31 + $0xf18] sm:$0xff]
        %v3033 = vld [vmem:[#allocation31 + $0xf20] sm:$0xff]
        %v3034 = vld [vmem:[#allocation31 + $0xf28] sm:$0xff]
        %v3035 = vld [vmem:[#allocation31 + $0xf30] sm:$0xff]
        %v3036 = vld [vmem:[#allocation31 + $0xf38] sm:$0xff]
        %v3037 = vld [vmem:[#allocation31 + $0xf40] sm:$0xff]
        %v3038 = vld [vmem:[#allocation31 + $0xf48] sm:$0xff]
        %v3039 = vld [vmem:[#allocation31 + $0xf50] sm:$0xff]
        %v3040 = vld [vmem:[#allocation31 + $0xf58] sm:$0xff]
        %v3041 = vld [vmem:[#allocation31 + $0xf60] sm:$0xff]
        %v3042 = vld [vmem:[#allocation31 + $0xf68] sm:$0xff]
        %v3043 = vld [vmem:[#allocation31 + $0xf70] sm:$0xff]
        %v3044 = vld [vmem:[#allocation31 + $0xf78] sm:$0xff]
        %v3045 = vld [vmem:[#allocation31 + $0xf80] sm:$0xff]
        %v3046 = vld [vmem:[#allocation31 + $0xf88] sm:$0xff]
        %v3047 = vld [vmem:[#allocation31 + $0xf90] sm:$0xff]
        %v3048 = vld [vmem:[#allocation31 + $0xf98] sm:$0xff]
        %v3049 = vld [vmem:[#allocation31 + $0xfa0] sm:$0xff]
        %v3050 = vld [vmem:[#allocation31 + $0xfa8] sm:$0xff]
        %v3051 = vld [vmem:[#allocation31 + $0xfb0] sm:$0xff]
        %v3052 = vld [vmem:[#allocation31 + $0xfb8] sm:$0xff]
        %v3053 = vld [vmem:[#allocation31 + $0xfc0] sm:$0xff]
        %v3054 = vld [vmem:[#allocation31 + $0xfc8] sm:$0xff]
        %v3055 = vld [vmem:[#allocation31 + $0xfd0] sm:$0xff]
        %v3056 = vld [vmem:[#allocation31 + $0xfd8] sm:$0xff]
        %v3057 = vld [vmem:[#allocation31 + $0xfe0] sm:$0xff]
        %v3058 = vld [vmem:[#allocation31 + $0xfe8] sm:$0xff]
        %v3059 = vld [vmem:[#allocation31 + $0xff0] sm:$0xff]
        %v3060 = vld [vmem:[#allocation31 + $0xff8] sm:$0xff]
        %v3061 = vld [vmem:[#allocation32] sm:$0xff]
        %v3574 = vunpack.c.l.b16 %v2549
        %v3575 = vunpack.c.h.b16 %v2549
        %v3576 = vunpack.c.l.b16 %v2550
        %v3577 = vunpack.c.h.b16 %v2550
        %v3578 = vunpack.c.l.b16 %v2551
        %v3579 = vunpack.c.h.b16 %v2551
        %v3580 = vunpack.c.l.b16 %v2552
        %v3581 = vunpack.c.h.b16 %v2552
        %v3582 = vunpack.c.l.b16 %v2553
        %v3583 = vunpack.c.h.b16 %v2553
        %v3584 = vunpack.c.l.b16 %v2554
        %v3585 = vunpack.c.h.b16 %v2554
        %v3586 = vunpack.c.l.b16 %v2555
        %v3587 = vunpack.c.h.b16 %v2555
        %v3588 = vunpack.c.l.b16 %v2556
        %v3589 = vunpack.c.h.b16 %v2556
        %v3590 = vunpack.c.l.b16 %v2557
        %v3591 = vunpack.c.h.b16 %v2557
        %v3592 = vunpack.c.l.b16 %v2558
        %v3593 = vunpack.c.h.b16 %v2558
        %v3594 = vunpack.c.l.b16 %v2559
        %v3595 = vunpack.c.h.b16 %v2559
        %v3596 = vunpack.c.l.b16 %v2560
        %v3597 = vunpack.c.h.b16 %v2560
        %v3598 = vunpack.c.l.b16 %v2561
        %v3599 = vunpack.c.h.b16 %v2561
        %v3600 = vunpack.c.l.b16 %v2562
        %v3601 = vunpack.c.h.b16 %v2562
        %v3602 = vunpack.c.l.b16 %v2563
        %v3603 = vunpack.c.h.b16 %v2563
        %v3604 = vunpack.c.l.b16 %v2564
        %v3605 = vunpack.c.h.b16 %v2564
        %v3606 = vunpack.c.l.b16 %v2565
        %v3607 = vunpack.c.h.b16 %v2565
        %v3608 = vunpack.c.l.b16 %v2566
        %v3609 = vunpack.c.h.b16 %v2566
        %v3610 = vunpack.c.l.b16 %v2567
        %v3611 = vunpack.c.h.b16 %v2567
        %v3612 = vunpack.c.l.b16 %v2568
        %v3613 = vunpack.c.h.b16 %v2568
        %v3614 = vunpack.c.l.b16 %v2569
        %v3615 = vunpack.c.h.b16 %v2569
        %v3616 = vunpack.c.l.b16 %v2570
        %v3617 = vunpack.c.h.b16 %v2570
        %v3618 = vunpack.c.l.b16 %v2571
        %v3619 = vunpack.c.h.b16 %v2571
        %v3620 = vunpack.c.l.b16 %v2572
        %v3621 = vunpack.c.h.b16 %v2572
        %v3622 = vunpack.c.l.b16 %v2573
        %v3623 = vunpack.c.h.b16 %v2573
        %v3624 = vunpack.c.l.b16 %v2574
        %v3625 = vunpack.c.h.b16 %v2574
        %v3626 = vunpack.c.l.b16 %v2575
        %v3627 = vunpack.c.h.b16 %v2575
        %v3628 = vunpack.c.l.b16 %v2576
        %v3629 = vunpack.c.h.b16 %v2576
        %v3630 = vunpack.c.l.b16 %v2577
        %v3631 = vunpack.c.h.b16 %v2577
        %v3632 = vunpack.c.l.b16 %v2578
        %v3633 = vunpack.c.h.b16 %v2578
        %v3634 = vunpack.c.l.b16 %v2579
        %v3635 = vunpack.c.h.b16 %v2579
        %v3636 = vunpack.c.l.b16 %v2580
        %v3637 = vunpack.c.h.b16 %v2580
        %v3638 = vunpack.c.l.b16 %v2581
        %v3639 = vunpack.c.h.b16 %v2581
        %v3640 = vunpack.c.l.b16 %v2582
        %v3641 = vunpack.c.h.b16 %v2582
        %v3642 = vunpack.c.l.b16 %v2583
        %v3643 = vunpack.c.h.b16 %v2583
        %v3644 = vunpack.c.l.b16 %v2584
        %v3645 = vunpack.c.h.b16 %v2584
        %v3646 = vunpack.c.l.b16 %v2585
        %v3647 = vunpack.c.h.b16 %v2585
        %v3648 = vunpack.c.l.b16 %v2586
        %v3649 = vunpack.c.h.b16 %v2586
        %v3650 = vunpack.c.l.b16 %v2587
        %v3651 = vunpack.c.h.b16 %v2587
        %v3652 = vunpack.c.l.b16 %v2588
        %v3653 = vunpack.c.h.b16 %v2588
        %v3654 = vunpack.c.l.b16 %v2589
        %v3655 = vunpack.c.h.b16 %v2589
        %v3656 = vunpack.c.l.b16 %v2590
        %v3657 = vunpack.c.h.b16 %v2590
        %v3658 = vunpack.c.l.b16 %v2591
        %v3659 = vunpack.c.h.b16 %v2591
        %v3660 = vunpack.c.l.b16 %v2592
        %v3661 = vunpack.c.h.b16 %v2592
        %v3662 = vunpack.c.l.b16 %v2593
        %v3663 = vunpack.c.h.b16 %v2593
        %v3664 = vunpack.c.l.b16 %v2594
        %v3665 = vunpack.c.h.b16 %v2594
        %v3666 = vunpack.c.l.b16 %v2595
        %v3667 = vunpack.c.h.b16 %v2595
        %v3668 = vunpack.c.l.b16 %v2596
        %v3669 = vunpack.c.h.b16 %v2596
        %v3670 = vunpack.c.l.b16 %v2597
        %v3671 = vunpack.c.h.b16 %v2597
        %v3672 = vunpack.c.l.b16 %v2598
        %v3673 = vunpack.c.h.b16 %v2598
        %v3674 = vunpack.c.l.b16 %v2599
        %v3675 = vunpack.c.h.b16 %v2599
        %v3676 = vunpack.c.l.b16 %v2600
        %v3677 = vunpack.c.h.b16 %v2600
        %v3678 = vunpack.c.l.b16 %v2601
        %v3679 = vunpack.c.h.b16 %v2601
        %v3680 = vunpack.c.l.b16 %v2602
        %v3681 = vunpack.c.h.b16 %v2602
        %v3682 = vunpack.c.l.b16 %v2603
        %v3683 = vunpack.c.h.b16 %v2603
        %v3684 = vunpack.c.l.b16 %v2604
        %v3685 = vunpack.c.h.b16 %v2604
        %v3686 = vunpack.c.l.b16 %v2605
        %v3687 = vunpack.c.h.b16 %v2605
        %v3688 = vunpack.c.l.b16 %v2606
        %v3689 = vunpack.c.h.b16 %v2606
        %v3690 = vunpack.c.l.b16 %v2607
        %v3691 = vunpack.c.h.b16 %v2607
        %v3692 = vunpack.c.l.b16 %v2608
        %v3693 = vunpack.c.h.b16 %v2608
        %v3694 = vunpack.c.l.b16 %v2609
        %v3695 = vunpack.c.h.b16 %v2609
        %v3696 = vunpack.c.l.b16 %v2610
        %v3697 = vunpack.c.h.b16 %v2610
        %v3698 = vunpack.c.l.b16 %v2611
        %v3699 = vunpack.c.h.b16 %v2611
        %v3700 = vunpack.c.l.b16 %v2612
        %v3701 = vunpack.c.h.b16 %v2612
        %v3702 = vunpack.c.l.b16 %v2613
        %v3703 = vunpack.c.h.b16 %v2613
        %v3704 = vunpack.c.l.b16 %v2614
        %v3705 = vunpack.c.h.b16 %v2614
        %v3706 = vunpack.c.l.b16 %v2615
        %v3707 = vunpack.c.h.b16 %v2615
        %v3708 = vunpack.c.l.b16 %v2616
        %v3709 = vunpack.c.h.b16 %v2616
        %v3710 = vunpack.c.l.b16 %v2617
        %v3711 = vunpack.c.h.b16 %v2617
        %v3712 = vunpack.c.l.b16 %v2618
        %v3713 = vunpack.c.h.b16 %v2618
        %v3714 = vunpack.c.l.b16 %v2619
        %v3715 = vunpack.c.h.b16 %v2619
        %v3716 = vunpack.c.l.b16 %v2620
        %v3717 = vunpack.c.h.b16 %v2620
        %v3718 = vunpack.c.l.b16 %v2621
        %v3719 = vunpack.c.h.b16 %v2621
        %v3720 = vunpack.c.l.b16 %v2622
        %v3721 = vunpack.c.h.b16 %v2622
        %v3722 = vunpack.c.l.b16 %v2623
        %v3723 = vunpack.c.h.b16 %v2623
        %v3724 = vunpack.c.l.b16 %v2624
        %v3725 = vunpack.c.h.b16 %v2624
        %v3726 = vunpack.c.l.b16 %v2625
        %v3727 = vunpack.c.h.b16 %v2625
        %v3728 = vunpack.c.l.b16 %v2626
        %v3729 = vunpack.c.h.b16 %v2626
        %v3730 = vunpack.c.l.b16 %v2627
        %v3731 = vunpack.c.h.b16 %v2627
        %v3732 = vunpack.c.l.b16 %v2628
        %v3733 = vunpack.c.h.b16 %v2628
        %v3734 = vunpack.c.l.b16 %v2629
        %v3735 = vunpack.c.h.b16 %v2629
        %v3736 = vunpack.c.l.b16 %v2630
        %v3737 = vunpack.c.h.b16 %v2630
        %v3738 = vunpack.c.l.b16 %v2631
        %v3739 = vunpack.c.h.b16 %v2631
        %v3740 = vunpack.c.l.b16 %v2632
        %v3741 = vunpack.c.h.b16 %v2632
        %v3742 = vunpack.c.l.b16 %v2633
        %v3743 = vunpack.c.h.b16 %v2633
        %v3744 = vunpack.c.l.b16 %v2634
        %v3745 = vunpack.c.h.b16 %v2634
        %v3746 = vunpack.c.l.b16 %v2635
        %v3747 = vunpack.c.h.b16 %v2635
        %v3748 = vunpack.c.l.b16 %v2636
        %v3749 = vunpack.c.h.b16 %v2636
        %v3750 = vunpack.c.l.b16 %v2637
        %v3751 = vunpack.c.h.b16 %v2637
        %v3752 = vunpack.c.l.b16 %v2638
        %v3753 = vunpack.c.h.b16 %v2638
        %v3754 = vunpack.c.l.b16 %v2639
        %v3755 = vunpack.c.h.b16 %v2639
        %v3756 = vunpack.c.l.b16 %v2640
        %v3757 = vunpack.c.h.b16 %v2640
        %v3758 = vunpack.c.l.b16 %v2641
        %v3759 = vunpack.c.h.b16 %v2641
        %v3760 = vunpack.c.l.b16 %v2642
        %v3761 = vunpack.c.h.b16 %v2642
        %v3762 = vunpack.c.l.b16 %v2643
        %v3763 = vunpack.c.h.b16 %v2643
        %v3764 = vunpack.c.l.b16 %v2644
        %v3765 = vunpack.c.h.b16 %v2644
        %v3766 = vunpack.c.l.b16 %v2645
        %v3767 = vunpack.c.h.b16 %v2645
        %v3768 = vunpack.c.l.b16 %v2646
        %v3769 = vunpack.c.h.b16 %v2646
        %v3770 = vunpack.c.l.b16 %v2647
        %v3771 = vunpack.c.h.b16 %v2647
        %v3772 = vunpack.c.l.b16 %v2648
        %v3773 = vunpack.c.h.b16 %v2648
        %v3774 = vunpack.c.l.b16 %v2649
        %v3775 = vunpack.c.h.b16 %v2649
        %v3776 = vunpack.c.l.b16 %v2650
        %v3777 = vunpack.c.h.b16 %v2650
        %v3778 = vunpack.c.l.b16 %v2651
        %v3779 = vunpack.c.h.b16 %v2651
        %v3780 = vunpack.c.l.b16 %v2652
        %v3781 = vunpack.c.h.b16 %v2652
        %v3782 = vunpack.c.l.b16 %v2653
        %v3783 = vunpack.c.h.b16 %v2653
        %v3784 = vunpack.c.l.b16 %v2654
        %v3785 = vunpack.c.h.b16 %v2654
        %v3786 = vunpack.c.l.b16 %v2655
        %v3787 = vunpack.c.h.b16 %v2655
        %v3788 = vunpack.c.l.b16 %v2656
        %v3789 = vunpack.c.h.b16 %v2656
        %v3790 = vunpack.c.l.b16 %v2657
        %v3791 = vunpack.c.h.b16 %v2657
        %v3792 = vunpack.c.l.b16 %v2658
        %v3793 = vunpack.c.h.b16 %v2658
        %v3794 = vunpack.c.l.b16 %v2659
        %v3795 = vunpack.c.h.b16 %v2659
        %v3796 = vunpack.c.l.b16 %v2660
        %v3797 = vunpack.c.h.b16 %v2660
        %v3798 = vunpack.c.l.b16 %v2661
        %v3799 = vunpack.c.h.b16 %v2661
        %v3800 = vunpack.c.l.b16 %v2662
        %v3801 = vunpack.c.h.b16 %v2662
        %v3802 = vunpack.c.l.b16 %v2663
        %v3803 = vunpack.c.h.b16 %v2663
        %v3804 = vunpack.c.l.b16 %v2664
        %v3805 = vunpack.c.h.b16 %v2664
        %v3806 = vunpack.c.l.b16 %v2665
        %v3807 = vunpack.c.h.b16 %v2665
        %v3808 = vunpack.c.l.b16 %v2666
        %v3809 = vunpack.c.h.b16 %v2666
        %v3810 = vunpack.c.l.b16 %v2667
        %v3811 = vunpack.c.h.b16 %v2667
        %v3812 = vunpack.c.l.b16 %v2668
        %v3813 = vunpack.c.h.b16 %v2668
        %v3814 = vunpack.c.l.b16 %v2669
        %v3815 = vunpack.c.h.b16 %v2669
        %v3816 = vunpack.c.l.b16 %v2670
        %v3817 = vunpack.c.h.b16 %v2670
        %v3818 = vunpack.c.l.b16 %v2671
        %v3819 = vunpack.c.h.b16 %v2671
        %v3820 = vunpack.c.l.b16 %v2672
        %v3821 = vunpack.c.h.b16 %v2672
        %v3822 = vunpack.c.l.b16 %v2673
        %v3823 = vunpack.c.h.b16 %v2673
        %v3824 = vunpack.c.l.b16 %v2674
        %v3825 = vunpack.c.h.b16 %v2674
        %v3826 = vunpack.c.l.b16 %v2675
        %v3827 = vunpack.c.h.b16 %v2675
        %v3828 = vunpack.c.l.b16 %v2676
        %v3829 = vunpack.c.h.b16 %v2676
        %v3830 = vunpack.c.l.b16 %v2677
        %v3831 = vunpack.c.h.b16 %v2677
        %v3832 = vunpack.c.l.b16 %v2678
        %v3833 = vunpack.c.h.b16 %v2678
        %v3834 = vunpack.c.l.b16 %v2679
        %v3835 = vunpack.c.h.b16 %v2679
        %v3836 = vunpack.c.l.b16 %v2680
        %v3837 = vunpack.c.h.b16 %v2680
        %v3838 = vunpack.c.l.b16 %v2681
        %v3839 = vunpack.c.h.b16 %v2681
        %v3840 = vunpack.c.l.b16 %v2682
        %v3841 = vunpack.c.h.b16 %v2682
        %v3842 = vunpack.c.l.b16 %v2683
        %v3843 = vunpack.c.h.b16 %v2683
        %v3844 = vunpack.c.l.b16 %v2684
        %v3845 = vunpack.c.h.b16 %v2684
        %v3846 = vunpack.c.l.b16 %v2685
        %v3847 = vunpack.c.h.b16 %v2685
        %v3848 = vunpack.c.l.b16 %v2686
        %v3849 = vunpack.c.h.b16 %v2686
        %v3850 = vunpack.c.l.b16 %v2687
        %v3851 = vunpack.c.h.b16 %v2687
        %v3852 = vunpack.c.l.b16 %v2688
        %v3853 = vunpack.c.h.b16 %v2688
        %v3854 = vunpack.c.l.b16 %v2689
        %v3855 = vunpack.c.h.b16 %v2689
        %v3856 = vunpack.c.l.b16 %v2690
        %v3857 = vunpack.c.h.b16 %v2690
        %v3858 = vunpack.c.l.b16 %v2691
        %v3859 = vunpack.c.h.b16 %v2691
        %v3860 = vunpack.c.l.b16 %v2692
        %v3861 = vunpack.c.h.b16 %v2692
        %v3862 = vunpack.c.l.b16 %v2693
        %v3863 = vunpack.c.h.b16 %v2693
        %v3864 = vunpack.c.l.b16 %v2694
        %v3865 = vunpack.c.h.b16 %v2694
        %v3866 = vunpack.c.l.b16 %v2695
        %v3867 = vunpack.c.h.b16 %v2695
        %v3868 = vunpack.c.l.b16 %v2696
        %v3869 = vunpack.c.h.b16 %v2696
        %v3870 = vunpack.c.l.b16 %v2697
        %v3871 = vunpack.c.h.b16 %v2697
        %v3872 = vunpack.c.l.b16 %v2698
        %v3873 = vunpack.c.h.b16 %v2698
        %v3874 = vunpack.c.l.b16 %v2699
        %v3875 = vunpack.c.h.b16 %v2699
        %v3876 = vunpack.c.l.b16 %v2700
        %v3877 = vunpack.c.h.b16 %v2700
        %v3878 = vunpack.c.l.b16 %v2701
        %v3879 = vunpack.c.h.b16 %v2701
        %v3880 = vunpack.c.l.b16 %v2702
        %v3881 = vunpack.c.h.b16 %v2702
        %v3882 = vunpack.c.l.b16 %v2703
        %v3883 = vunpack.c.h.b16 %v2703
        %v3884 = vunpack.c.l.b16 %v2704
        %v3885 = vunpack.c.h.b16 %v2704
        %v3886 = vunpack.c.l.b16 %v2705
        %v3887 = vunpack.c.h.b16 %v2705
        %v3888 = vunpack.c.l.b16 %v2706
        %v3889 = vunpack.c.h.b16 %v2706
        %v3890 = vunpack.c.l.b16 %v2707
        %v3891 = vunpack.c.h.b16 %v2707
        %v3892 = vunpack.c.l.b16 %v2708
        %v3893 = vunpack.c.h.b16 %v2708
        %v3894 = vunpack.c.l.b16 %v2709
        %v3895 = vunpack.c.h.b16 %v2709
        %v3896 = vunpack.c.l.b16 %v2710
        %v3897 = vunpack.c.h.b16 %v2710
        %v3898 = vunpack.c.l.b16 %v2711
        %v3899 = vunpack.c.h.b16 %v2711
        %v3900 = vunpack.c.l.b16 %v2712
        %v3901 = vunpack.c.h.b16 %v2712
        %v3902 = vunpack.c.l.b16 %v2713
        %v3903 = vunpack.c.h.b16 %v2713
        %v3904 = vunpack.c.l.b16 %v2714
        %v3905 = vunpack.c.h.b16 %v2714
        %v3906 = vunpack.c.l.b16 %v2715
        %v3907 = vunpack.c.h.b16 %v2715
        %v3908 = vunpack.c.l.b16 %v2716
        %v3909 = vunpack.c.h.b16 %v2716
        %v3910 = vunpack.c.l.b16 %v2717
        %v3911 = vunpack.c.h.b16 %v2717
        %v3912 = vunpack.c.l.b16 %v2718
        %v3913 = vunpack.c.h.b16 %v2718
        %v3914 = vunpack.c.l.b16 %v2719
        %v3915 = vunpack.c.h.b16 %v2719
        %v3916 = vunpack.c.l.b16 %v2720
        %v3917 = vunpack.c.h.b16 %v2720
        %v3918 = vunpack.c.l.b16 %v2721
        %v3919 = vunpack.c.h.b16 %v2721
        %v3920 = vunpack.c.l.b16 %v2722
        %v3921 = vunpack.c.h.b16 %v2722
        %v3922 = vunpack.c.l.b16 %v2723
        %v3923 = vunpack.c.h.b16 %v2723
        %v3924 = vunpack.c.l.b16 %v2724
        %v3925 = vunpack.c.h.b16 %v2724
        %v3926 = vunpack.c.l.b16 %v2725
        %v3927 = vunpack.c.h.b16 %v2725
        %v3928 = vunpack.c.l.b16 %v2726
        %v3929 = vunpack.c.h.b16 %v2726
        %v3930 = vunpack.c.l.b16 %v2727
        %v3931 = vunpack.c.h.b16 %v2727
        %v3932 = vunpack.c.l.b16 %v2728
        %v3933 = vunpack.c.h.b16 %v2728
        %v3934 = vunpack.c.l.b16 %v2729
        %v3935 = vunpack.c.h.b16 %v2729
        %v3936 = vunpack.c.l.b16 %v2730
        %v3937 = vunpack.c.h.b16 %v2730
        %v3938 = vunpack.c.l.b16 %v2731
        %v3939 = vunpack.c.h.b16 %v2731
        %v3940 = vunpack.c.l.b16 %v2732
        %v3941 = vunpack.c.h.b16 %v2732
        %v3942 = vunpack.c.l.b16 %v2733
        %v3943 = vunpack.c.h.b16 %v2733
        %v3944 = vunpack.c.l.b16 %v2734
        %v3945 = vunpack.c.h.b16 %v2734
        %v3946 = vunpack.c.l.b16 %v2735
        %v3947 = vunpack.c.h.b16 %v2735
        %v3948 = vunpack.c.l.b16 %v2736
        %v3949 = vunpack.c.h.b16 %v2736
        %v3950 = vunpack.c.l.b16 %v2737
        %v3951 = vunpack.c.h.b16 %v2737
        %v3952 = vunpack.c.l.b16 %v2738
        %v3953 = vunpack.c.h.b16 %v2738
        %v3954 = vunpack.c.l.b16 %v2739
        %v3955 = vunpack.c.h.b16 %v2739
        %v3956 = vunpack.c.l.b16 %v2740
        %v3957 = vunpack.c.h.b16 %v2740
        %v3958 = vunpack.c.l.b16 %v2741
        %v3959 = vunpack.c.h.b16 %v2741
        %v3960 = vunpack.c.l.b16 %v2742
        %v3961 = vunpack.c.h.b16 %v2742
        %v3962 = vunpack.c.l.b16 %v2743
        %v3963 = vunpack.c.h.b16 %v2743
        %v3964 = vunpack.c.l.b16 %v2744
        %v3965 = vunpack.c.h.b16 %v2744
        %v3966 = vunpack.c.l.b16 %v2745
        %v3967 = vunpack.c.h.b16 %v2745
        %v3968 = vunpack.c.l.b16 %v2746
        %v3969 = vunpack.c.h.b16 %v2746
        %v3970 = vunpack.c.l.b16 %v2747
        %v3971 = vunpack.c.h.b16 %v2747
        %v3972 = vunpack.c.l.b16 %v2748
        %v3973 = vunpack.c.h.b16 %v2748
        %v3974 = vunpack.c.l.b16 %v2749
        %v3975 = vunpack.c.h.b16 %v2749
        %v3976 = vunpack.c.l.b16 %v2750
        %v3977 = vunpack.c.h.b16 %v2750
        %v3978 = vunpack.c.l.b16 %v2751
        %v3979 = vunpack.c.h.b16 %v2751
        %v3980 = vunpack.c.l.b16 %v2752
        %v3981 = vunpack.c.h.b16 %v2752
        %v3982 = vunpack.c.l.b16 %v2753
        %v3983 = vunpack.c.h.b16 %v2753
        %v3984 = vunpack.c.l.b16 %v2754
        %v3985 = vunpack.c.h.b16 %v2754
        %v3986 = vunpack.c.l.b16 %v2755
        %v3987 = vunpack.c.h.b16 %v2755
        %v3988 = vunpack.c.l.b16 %v2756
        %v3989 = vunpack.c.h.b16 %v2756
        %v3990 = vunpack.c.l.b16 %v2757
        %v3991 = vunpack.c.h.b16 %v2757
        %v3992 = vunpack.c.l.b16 %v2758
        %v3993 = vunpack.c.h.b16 %v2758
        %v3994 = vunpack.c.l.b16 %v2759
        %v3995 = vunpack.c.h.b16 %v2759
        %v3996 = vunpack.c.l.b16 %v2760
        %v3997 = vunpack.c.h.b16 %v2760
        %v3998 = vunpack.c.l.b16 %v2761
        %v3999 = vunpack.c.h.b16 %v2761
        %v4000 = vunpack.c.l.b16 %v2762
        %v4001 = vunpack.c.h.b16 %v2762
        %v4002 = vunpack.c.l.b16 %v2763
        %v4003 = vunpack.c.h.b16 %v2763
        %v4004 = vunpack.c.l.b16 %v2764
        %v4005 = vunpack.c.h.b16 %v2764
        %v4006 = vunpack.c.l.b16 %v2765
        %v4007 = vunpack.c.h.b16 %v2765
        %v4008 = vunpack.c.l.b16 %v2766
        %v4009 = vunpack.c.h.b16 %v2766
        %v4010 = vunpack.c.l.b16 %v2767
        %v4011 = vunpack.c.h.b16 %v2767
        %v4012 = vunpack.c.l.b16 %v2768
        %v4013 = vunpack.c.h.b16 %v2768
        %v4014 = vunpack.c.l.b16 %v2769
        %v4015 = vunpack.c.h.b16 %v2769
        %v4016 = vunpack.c.l.b16 %v2770
        %v4017 = vunpack.c.h.b16 %v2770
        %v4018 = vunpack.c.l.b16 %v2771
        %v4019 = vunpack.c.h.b16 %v2771
        %v4020 = vunpack.c.l.b16 %v2772
        %v4021 = vunpack.c.h.b16 %v2772
        %v4022 = vunpack.c.l.b16 %v2773
        %v4023 = vunpack.c.h.b16 %v2773
        %v4024 = vunpack.c.l.b16 %v2774
        %v4025 = vunpack.c.h.b16 %v2774
        %v4026 = vunpack.c.l.b16 %v2775
        %v4027 = vunpack.c.h.b16 %v2775
        %v4028 = vunpack.c.l.b16 %v2776
        %v4029 = vunpack.c.h.b16 %v2776
        %v4030 = vunpack.c.l.b16 %v2777
        %v4031 = vunpack.c.h.b16 %v2777
        %v4032 = vunpack.c.l.b16 %v2778
        %v4033 = vunpack.c.h.b16 %v2778
        %v4034 = vunpack.c.l.b16 %v2779
        %v4035 = vunpack.c.h.b16 %v2779
        %v4036 = vunpack.c.l.b16 %v2780
        %v4037 = vunpack.c.h.b16 %v2780
        %v4038 = vunpack.c.l.b16 %v2781
        %v4039 = vunpack.c.h.b16 %v2781
        %v4040 = vunpack.c.l.b16 %v2782
        %v4041 = vunpack.c.h.b16 %v2782
        %v4042 = vunpack.c.l.b16 %v2783
        %v4043 = vunpack.c.h.b16 %v2783
        %v4044 = vunpack.c.l.b16 %v2784
        %v4045 = vunpack.c.h.b16 %v2784
        %v4046 = vunpack.c.l.b16 %v2785
        %v4047 = vunpack.c.h.b16 %v2785
        %v4048 = vunpack.c.l.b16 %v2786
        %v4049 = vunpack.c.h.b16 %v2786
        %v4050 = vunpack.c.l.b16 %v2787
        %v4051 = vunpack.c.h.b16 %v2787
        %v4052 = vunpack.c.l.b16 %v2788
        %v4053 = vunpack.c.h.b16 %v2788
        %v4054 = vunpack.c.l.b16 %v2789
        %v4055 = vunpack.c.h.b16 %v2789
        %v4056 = vunpack.c.l.b16 %v2790
        %v4057 = vunpack.c.h.b16 %v2790
        %v4058 = vunpack.c.l.b16 %v2791
        %v4059 = vunpack.c.h.b16 %v2791
        %v4060 = vunpack.c.l.b16 %v2792
        %v4061 = vunpack.c.h.b16 %v2792
        %v4062 = vunpack.c.l.b16 %v2793
        %v4063 = vunpack.c.h.b16 %v2793
        %v4064 = vunpack.c.l.b16 %v2794
        %v4065 = vunpack.c.h.b16 %v2794
        %v4066 = vunpack.c.l.b16 %v2795
        %v4067 = vunpack.c.h.b16 %v2795
        %v4068 = vunpack.c.l.b16 %v2796
        %v4069 = vunpack.c.h.b16 %v2796
        %v4070 = vunpack.c.l.b16 %v2797
        %v4071 = vunpack.c.h.b16 %v2797
        %v4072 = vunpack.c.l.b16 %v2798
        %v4073 = vunpack.c.h.b16 %v2798
        %v4074 = vunpack.c.l.b16 %v2799
        %v4075 = vunpack.c.h.b16 %v2799
        %v4076 = vunpack.c.l.b16 %v2800
        %v4077 = vunpack.c.h.b16 %v2800
        %v4078 = vunpack.c.l.b16 %v2801
        %v4079 = vunpack.c.h.b16 %v2801
        %v4080 = vunpack.c.l.b16 %v2802
        %v4081 = vunpack.c.h.b16 %v2802
        %v4082 = vunpack.c.l.b16 %v2803
        %v4083 = vunpack.c.h.b16 %v2803
        %v4084 = vunpack.c.l.b16 %v2804
        %v4085 = vunpack.c.h.b16 %v2804
        %v4086 = vunpack.c.l.b16 %v2805
        %v4087 = vunpack.c.h.b16 %v2805
        %v4088 = vunpack.c.l.b16 %v2806
        %v4089 = vunpack.c.h.b16 %v2806
        %v4090 = vunpack.c.l.b16 %v2807
        %v4091 = vunpack.c.h.b16 %v2807
        %v4092 = vunpack.c.l.b16 %v2808
        %v4093 = vunpack.c.h.b16 %v2808
        %v4094 = vunpack.c.l.b16 %v2809
        %v4095 = vunpack.c.h.b16 %v2809
        %v4096 = vunpack.c.l.b16 %v2810
        %v4097 = vunpack.c.h.b16 %v2810
        %v4098 = vunpack.c.l.b16 %v2811
        %v4099 = vunpack.c.h.b16 %v2811
        %v4100 = vunpack.c.l.b16 %v2812
        %v4101 = vunpack.c.h.b16 %v2812
        %v4102 = vunpack.c.l.b16 %v2813
        %v4103 = vunpack.c.h.b16 %v2813
        %v4104 = vunpack.c.l.b16 %v2814
        %v4105 = vunpack.c.h.b16 %v2814
        %v4106 = vunpack.c.l.b16 %v2815
        %v4107 = vunpack.c.h.b16 %v2815
        %v4108 = vunpack.c.l.b16 %v2816
        %v4109 = vunpack.c.h.b16 %v2816
        %v4110 = vunpack.c.l.b16 %v2817
        %v4111 = vunpack.c.h.b16 %v2817
        %v4112 = vunpack.c.l.b16 %v2818
        %v4113 = vunpack.c.h.b16 %v2818
        %v4114 = vunpack.c.l.b16 %v2819
        %v4115 = vunpack.c.h.b16 %v2819
        %v4116 = vunpack.c.l.b16 %v2820
        %v4117 = vunpack.c.h.b16 %v2820
        %v4118 = vunpack.c.l.b16 %v2821
        %v4119 = vunpack.c.h.b16 %v2821
        %v4120 = vunpack.c.l.b16 %v2822
        %v4121 = vunpack.c.h.b16 %v2822
        %v4122 = vunpack.c.l.b16 %v2823
        %v4123 = vunpack.c.h.b16 %v2823
        %v4124 = vunpack.c.l.b16 %v2824
        %v4125 = vunpack.c.h.b16 %v2824
        %v4126 = vunpack.c.l.b16 %v2825
        %v4127 = vunpack.c.h.b16 %v2825
        %v4128 = vunpack.c.l.b16 %v2826
        %v4129 = vunpack.c.h.b16 %v2826
        %v4130 = vunpack.c.l.b16 %v2827
        %v4131 = vunpack.c.h.b16 %v2827
        %v4132 = vunpack.c.l.b16 %v2828
        %v4133 = vunpack.c.h.b16 %v2828
        %v4134 = vunpack.c.l.b16 %v2829
        %v4135 = vunpack.c.h.b16 %v2829
        %v4136 = vunpack.c.l.b16 %v2830
        %v4137 = vunpack.c.h.b16 %v2830
        %v4138 = vunpack.c.l.b16 %v2831
        %v4139 = vunpack.c.h.b16 %v2831
        %v4140 = vunpack.c.l.b16 %v2832
        %v4141 = vunpack.c.h.b16 %v2832
        %v4142 = vunpack.c.l.b16 %v2833
        %v4143 = vunpack.c.h.b16 %v2833
        %v4144 = vunpack.c.l.b16 %v2834
        %v4145 = vunpack.c.h.b16 %v2834
        %v4146 = vunpack.c.l.b16 %v2835
        %v4147 = vunpack.c.h.b16 %v2835
        %v4148 = vunpack.c.l.b16 %v2836
        %v4149 = vunpack.c.h.b16 %v2836
        %v4150 = vunpack.c.l.b16 %v2837
        %v4151 = vunpack.c.h.b16 %v2837
        %v4152 = vunpack.c.l.b16 %v2838
        %v4153 = vunpack.c.h.b16 %v2838
        %v4154 = vunpack.c.l.b16 %v2839
        %v4155 = vunpack.c.h.b16 %v2839
        %v4156 = vunpack.c.l.b16 %v2840
        %v4157 = vunpack.c.h.b16 %v2840
        %v4158 = vunpack.c.l.b16 %v2841
        %v4159 = vunpack.c.h.b16 %v2841
        %v4160 = vunpack.c.l.b16 %v2842
        %v4161 = vunpack.c.h.b16 %v2842
        %v4162 = vunpack.c.l.b16 %v2843
        %v4163 = vunpack.c.h.b16 %v2843
        %v4164 = vunpack.c.l.b16 %v2844
        %v4165 = vunpack.c.h.b16 %v2844
        %v4166 = vunpack.c.l.b16 %v2845
        %v4167 = vunpack.c.h.b16 %v2845
        %v4168 = vunpack.c.l.b16 %v2846
        %v4169 = vunpack.c.h.b16 %v2846
        %v4170 = vunpack.c.l.b16 %v2847
        %v4171 = vunpack.c.h.b16 %v2847
        %v4172 = vunpack.c.l.b16 %v2848
        %v4173 = vunpack.c.h.b16 %v2848
        %v4174 = vunpack.c.l.b16 %v2849
        %v4175 = vunpack.c.h.b16 %v2849
        %v4176 = vunpack.c.l.b16 %v2850
        %v4177 = vunpack.c.h.b16 %v2850
        %v4178 = vunpack.c.l.b16 %v2851
        %v4179 = vunpack.c.h.b16 %v2851
        %v4180 = vunpack.c.l.b16 %v2852
        %v4181 = vunpack.c.h.b16 %v2852
        %v4182 = vunpack.c.l.b16 %v2853
        %v4183 = vunpack.c.h.b16 %v2853
        %v4184 = vunpack.c.l.b16 %v2854
        %v4185 = vunpack.c.h.b16 %v2854
        %v4186 = vunpack.c.l.b16 %v2855
        %v4187 = vunpack.c.h.b16 %v2855
        %v4188 = vunpack.c.l.b16 %v2856
        %v4189 = vunpack.c.h.b16 %v2856
        %v4190 = vunpack.c.l.b16 %v2857
        %v4191 = vunpack.c.h.b16 %v2857
        %v4192 = vunpack.c.l.b16 %v2858
        %v4193 = vunpack.c.h.b16 %v2858
        %v4194 = vunpack.c.l.b16 %v2859
        %v4195 = vunpack.c.h.b16 %v2859
        %v4196 = vunpack.c.l.b16 %v2860
        %v4197 = vunpack.c.h.b16 %v2860
        %v4198 = vunpack.c.l.b16 %v2861
        %v4199 = vunpack.c.h.b16 %v2861
        %v4200 = vunpack.c.l.b16 %v2862
        %v4201 = vunpack.c.h.b16 %v2862
        %v4202 = vunpack.c.l.b16 %v2863
        %v4203 = vunpack.c.h.b16 %v2863
        %v4204 = vunpack.c.l.b16 %v2864
        %v4205 = vunpack.c.h.b16 %v2864
        %v4206 = vunpack.c.l.b16 %v2865
        %v4207 = vunpack.c.h.b16 %v2865
        %v4208 = vunpack.c.l.b16 %v2866
        %v4209 = vunpack.c.h.b16 %v2866
        %v4210 = vunpack.c.l.b16 %v2867
        %v4211 = vunpack.c.h.b16 %v2867
        %v4212 = vunpack.c.l.b16 %v2868
        %v4213 = vunpack.c.h.b16 %v2868
        %v4214 = vunpack.c.l.b16 %v2869
        %v4215 = vunpack.c.h.b16 %v2869
        %v4216 = vunpack.c.l.b16 %v2870
        %v4217 = vunpack.c.h.b16 %v2870
        %v4218 = vunpack.c.l.b16 %v2871
        %v4219 = vunpack.c.h.b16 %v2871
        %v4220 = vunpack.c.l.b16 %v2872
        %v4221 = vunpack.c.h.b16 %v2872
        %v4222 = vunpack.c.l.b16 %v2873
        %v4223 = vunpack.c.h.b16 %v2873
        %v4224 = vunpack.c.l.b16 %v2874
        %v4225 = vunpack.c.h.b16 %v2874
        %v4226 = vunpack.c.l.b16 %v2875
        %v4227 = vunpack.c.h.b16 %v2875
        %v4228 = vunpack.c.l.b16 %v2876
        %v4229 = vunpack.c.h.b16 %v2876
        %v4230 = vunpack.c.l.b16 %v2877
        %v4231 = vunpack.c.h.b16 %v2877
        %v4232 = vunpack.c.l.b16 %v2878
        %v4233 = vunpack.c.h.b16 %v2878
        %v4234 = vunpack.c.l.b16 %v2879
        %v4235 = vunpack.c.h.b16 %v2879
        %v4236 = vunpack.c.l.b16 %v2880
        %v4237 = vunpack.c.h.b16 %v2880
        %v4238 = vunpack.c.l.b16 %v2881
        %v4239 = vunpack.c.h.b16 %v2881
        %v4240 = vunpack.c.l.b16 %v2882
        %v4241 = vunpack.c.h.b16 %v2882
        %v4242 = vunpack.c.l.b16 %v2883
        %v4243 = vunpack.c.h.b16 %v2883
        %v4244 = vunpack.c.l.b16 %v2884
        %v4245 = vunpack.c.h.b16 %v2884
        %v4246 = vunpack.c.l.b16 %v2885
        %v4247 = vunpack.c.h.b16 %v2885
        %v4248 = vunpack.c.l.b16 %v2886
        %v4249 = vunpack.c.h.b16 %v2886
        %v4250 = vunpack.c.l.b16 %v2887
        %v4251 = vunpack.c.h.b16 %v2887
        %v4252 = vunpack.c.l.b16 %v2888
        %v4253 = vunpack.c.h.b16 %v2888
        %v4254 = vunpack.c.l.b16 %v2889
        %v4255 = vunpack.c.h.b16 %v2889
        %v4256 = vunpack.c.l.b16 %v2890
        %v4257 = vunpack.c.h.b16 %v2890
        %v4258 = vunpack.c.l.b16 %v2891
        %v4259 = vunpack.c.h.b16 %v2891
        %v4260 = vunpack.c.l.b16 %v2892
        %v4261 = vunpack.c.h.b16 %v2892
        %v4262 = vunpack.c.l.b16 %v2893
        %v4263 = vunpack.c.h.b16 %v2893
        %v4264 = vunpack.c.l.b16 %v2894
        %v4265 = vunpack.c.h.b16 %v2894
        %v4266 = vunpack.c.l.b16 %v2895
        %v4267 = vunpack.c.h.b16 %v2895
        %v4268 = vunpack.c.l.b16 %v2896
        %v4269 = vunpack.c.h.b16 %v2896
        %v4270 = vunpack.c.l.b16 %v2897
        %v4271 = vunpack.c.h.b16 %v2897
        %v4272 = vunpack.c.l.b16 %v2898
        %v4273 = vunpack.c.h.b16 %v2898
        %v4274 = vunpack.c.l.b16 %v2899
        %v4275 = vunpack.c.h.b16 %v2899
        %v4276 = vunpack.c.l.b16 %v2900
        %v4277 = vunpack.c.h.b16 %v2900
        %v4278 = vunpack.c.l.b16 %v2901
        %v4279 = vunpack.c.h.b16 %v2901
        %v4280 = vunpack.c.l.b16 %v2902
        %v4281 = vunpack.c.h.b16 %v2902
        %v4282 = vunpack.c.l.b16 %v2903
        %v4283 = vunpack.c.h.b16 %v2903
        %v4284 = vunpack.c.l.b16 %v2904
        %v4285 = vunpack.c.h.b16 %v2904
        %v4286 = vunpack.c.l.b16 %v2905
        %v4287 = vunpack.c.h.b16 %v2905
        %v4288 = vunpack.c.l.b16 %v2906
        %v4289 = vunpack.c.h.b16 %v2906
        %v4290 = vunpack.c.l.b16 %v2907
        %v4291 = vunpack.c.h.b16 %v2907
        %v4292 = vunpack.c.l.b16 %v2908
        %v4293 = vunpack.c.h.b16 %v2908
        %v4294 = vunpack.c.l.b16 %v2909
        %v4295 = vunpack.c.h.b16 %v2909
        %v4296 = vunpack.c.l.b16 %v2910
        %v4297 = vunpack.c.h.b16 %v2910
        %v4298 = vunpack.c.l.b16 %v2911
        %v4299 = vunpack.c.h.b16 %v2911
        %v4300 = vunpack.c.l.b16 %v2912
        %v4301 = vunpack.c.h.b16 %v2912
        %v4302 = vunpack.c.l.b16 %v2913
        %v4303 = vunpack.c.h.b16 %v2913
        %v4304 = vunpack.c.l.b16 %v2914
        %v4305 = vunpack.c.h.b16 %v2914
        %v4306 = vunpack.c.l.b16 %v2915
        %v4307 = vunpack.c.h.b16 %v2915
        %v4308 = vunpack.c.l.b16 %v2916
        %v4309 = vunpack.c.h.b16 %v2916
        %v4310 = vunpack.c.l.b16 %v2917
        %v4311 = vunpack.c.h.b16 %v2917
        %v4312 = vunpack.c.l.b16 %v2918
        %v4313 = vunpack.c.h.b16 %v2918
        %v4314 = vunpack.c.l.b16 %v2919
        %v4315 = vunpack.c.h.b16 %v2919
        %v4316 = vunpack.c.l.b16 %v2920
        %v4317 = vunpack.c.h.b16 %v2920
        %v4318 = vunpack.c.l.b16 %v2921
        %v4319 = vunpack.c.h.b16 %v2921
        %v4320 = vunpack.c.l.b16 %v2922
        %v4321 = vunpack.c.h.b16 %v2922
        %v4322 = vunpack.c.l.b16 %v2923
        %v4323 = vunpack.c.h.b16 %v2923
        %v4324 = vunpack.c.l.b16 %v2924
        %v4325 = vunpack.c.h.b16 %v2924
        %v4326 = vunpack.c.l.b16 %v2925
        %v4327 = vunpack.c.h.b16 %v2925
        %v4328 = vunpack.c.l.b16 %v2926
        %v4329 = vunpack.c.h.b16 %v2926
        %v4330 = vunpack.c.l.b16 %v2927
        %v4331 = vunpack.c.h.b16 %v2927
        %v4332 = vunpack.c.l.b16 %v2928
        %v4333 = vunpack.c.h.b16 %v2928
        %v4334 = vunpack.c.l.b16 %v2929
        %v4335 = vunpack.c.h.b16 %v2929
        %v4336 = vunpack.c.l.b16 %v2930
        %v4337 = vunpack.c.h.b16 %v2930
        %v4338 = vunpack.c.l.b16 %v2931
        %v4339 = vunpack.c.h.b16 %v2931
        %v4340 = vunpack.c.l.b16 %v2932
        %v4341 = vunpack.c.h.b16 %v2932
        %v4342 = vunpack.c.l.b16 %v2933
        %v4343 = vunpack.c.h.b16 %v2933
        %v4344 = vunpack.c.l.b16 %v2934
        %v4345 = vunpack.c.h.b16 %v2934
        %v4346 = vunpack.c.l.b16 %v2935
        %v4347 = vunpack.c.h.b16 %v2935
        %v4348 = vunpack.c.l.b16 %v2936
        %v4349 = vunpack.c.h.b16 %v2936
        %v4350 = vunpack.c.l.b16 %v2937
        %v4351 = vunpack.c.h.b16 %v2937
        %v4352 = vunpack.c.l.b16 %v2938
        %v4353 = vunpack.c.h.b16 %v2938
        %v4354 = vunpack.c.l.b16 %v2939
        %v4355 = vunpack.c.h.b16 %v2939
        %v4356 = vunpack.c.l.b16 %v2940
        %v4357 = vunpack.c.h.b16 %v2940
        %v4358 = vunpack.c.l.b16 %v2941
        %v4359 = vunpack.c.h.b16 %v2941
        %v4360 = vunpack.c.l.b16 %v2942
        %v4361 = vunpack.c.h.b16 %v2942
        %v4362 = vunpack.c.l.b16 %v2943
        %v4363 = vunpack.c.h.b16 %v2943
        %v4364 = vunpack.c.l.b16 %v2944
        %v4365 = vunpack.c.h.b16 %v2944
        %v4366 = vunpack.c.l.b16 %v2945
        %v4367 = vunpack.c.h.b16 %v2945
        %v4368 = vunpack.c.l.b16 %v2946
        %v4369 = vunpack.c.h.b16 %v2946
        %v4370 = vunpack.c.l.b16 %v2947
        %v4371 = vunpack.c.h.b16 %v2947
        %v4372 = vunpack.c.l.b16 %v2948
        %v4373 = vunpack.c.h.b16 %v2948
        %v4374 = vunpack.c.l.b16 %v2949
        %v4375 = vunpack.c.h.b16 %v2949
        %v4376 = vunpack.c.l.b16 %v2950
        %v4377 = vunpack.c.h.b16 %v2950
        %v4378 = vunpack.c.l.b16 %v2951
        %v4379 = vunpack.c.h.b16 %v2951
        %v4380 = vunpack.c.l.b16 %v2952
        %v4381 = vunpack.c.h.b16 %v2952
        %v4382 = vunpack.c.l.b16 %v2953
        %v4383 = vunpack.c.h.b16 %v2953
        %v4384 = vunpack.c.l.b16 %v2954
        %v4385 = vunpack.c.h.b16 %v2954
        %v4386 = vunpack.c.l.b16 %v2955
        %v4387 = vunpack.c.h.b16 %v2955
        %v4388 = vunpack.c.l.b16 %v2956
        %v4389 = vunpack.c.h.b16 %v2956
        %v4390 = vunpack.c.l.b16 %v2957
        %v4391 = vunpack.c.h.b16 %v2957
        %v4392 = vunpack.c.l.b16 %v2958
        %v4393 = vunpack.c.h.b16 %v2958
        %v4394 = vunpack.c.l.b16 %v2959
        %v4395 = vunpack.c.h.b16 %v2959
        %v4396 = vunpack.c.l.b16 %v2960
        %v4397 = vunpack.c.h.b16 %v2960
        %v4398 = vunpack.c.l.b16 %v2961
        %v4399 = vunpack.c.h.b16 %v2961
        %v4400 = vunpack.c.l.b16 %v2962
        %v4401 = vunpack.c.h.b16 %v2962
        %v4402 = vunpack.c.l.b16 %v2963
        %v4403 = vunpack.c.h.b16 %v2963
        %v4404 = vunpack.c.l.b16 %v2964
        %v4405 = vunpack.c.h.b16 %v2964
        %v4406 = vunpack.c.l.b16 %v2965
        %v4407 = vunpack.c.h.b16 %v2965
        %v4408 = vunpack.c.l.b16 %v2966
        %v4409 = vunpack.c.h.b16 %v2966
        %v4410 = vunpack.c.l.b16 %v2967
        %v4411 = vunpack.c.h.b16 %v2967
        %v4412 = vunpack.c.l.b16 %v2968
        %v4413 = vunpack.c.h.b16 %v2968
        %v4414 = vunpack.c.l.b16 %v2969
        %v4415 = vunpack.c.h.b16 %v2969
        %v4416 = vunpack.c.l.b16 %v2970
        %v4417 = vunpack.c.h.b16 %v2970
        %v4418 = vunpack.c.l.b16 %v2971
        %v4419 = vunpack.c.h.b16 %v2971
        %v4420 = vunpack.c.l.b16 %v2972
        %v4421 = vunpack.c.h.b16 %v2972
        %v4422 = vunpack.c.l.b16 %v2973
        %v4423 = vunpack.c.h.b16 %v2973
        %v4424 = vunpack.c.l.b16 %v2974
        %v4425 = vunpack.c.h.b16 %v2974
        %v4426 = vunpack.c.l.b16 %v2975
        %v4427 = vunpack.c.h.b16 %v2975
        %v4428 = vunpack.c.l.b16 %v2976
        %v4429 = vunpack.c.h.b16 %v2976
        %v4430 = vunpack.c.l.b16 %v2977
        %v4431 = vunpack.c.h.b16 %v2977
        %v4432 = vunpack.c.l.b16 %v2978
        %v4433 = vunpack.c.h.b16 %v2978
        %v4434 = vunpack.c.l.b16 %v2979
        %v4435 = vunpack.c.h.b16 %v2979
        %v4436 = vunpack.c.l.b16 %v2980
        %v4437 = vunpack.c.h.b16 %v2980
        %v4438 = vunpack.c.l.b16 %v2981
        %v4439 = vunpack.c.h.b16 %v2981
        %v4440 = vunpack.c.l.b16 %v2982
        %v4441 = vunpack.c.h.b16 %v2982
        %v4442 = vunpack.c.l.b16 %v2983
        %v4443 = vunpack.c.h.b16 %v2983
        %v4444 = vunpack.c.l.b16 %v2984
        %v4445 = vunpack.c.h.b16 %v2984
        %v4446 = vunpack.c.l.b16 %v2985
        %v4447 = vunpack.c.h.b16 %v2985
        %v4448 = vunpack.c.l.b16 %v2986
        %v4449 = vunpack.c.h.b16 %v2986
        %v4450 = vunpack.c.l.b16 %v2987
        %v4451 = vunpack.c.h.b16 %v2987
        %v4452 = vunpack.c.l.b16 %v2988
        %v4453 = vunpack.c.h.b16 %v2988
        %v4454 = vunpack.c.l.b16 %v2989
        %v4455 = vunpack.c.h.b16 %v2989
        %v4456 = vunpack.c.l.b16 %v2990
        %v4457 = vunpack.c.h.b16 %v2990
        %v4458 = vunpack.c.l.b16 %v2991
        %v4459 = vunpack.c.h.b16 %v2991
        %v4460 = vunpack.c.l.b16 %v2992
        %v4461 = vunpack.c.h.b16 %v2992
        %v4462 = vunpack.c.l.b16 %v2993
        %v4463 = vunpack.c.h.b16 %v2993
        %v4464 = vunpack.c.l.b16 %v2994
        %v4465 = vunpack.c.h.b16 %v2994
        %v4466 = vunpack.c.l.b16 %v2995
        %v4467 = vunpack.c.h.b16 %v2995
        %v4468 = vunpack.c.l.b16 %v2996
        %v4469 = vunpack.c.h.b16 %v2996
        %v4470 = vunpack.c.l.b16 %v2997
        %v4471 = vunpack.c.h.b16 %v2997
        %v4472 = vunpack.c.l.b16 %v2998
        %v4473 = vunpack.c.h.b16 %v2998
        %v4474 = vunpack.c.l.b16 %v2999
        %v4475 = vunpack.c.h.b16 %v2999
        %v4476 = vunpack.c.l.b16 %v3000
        %v4477 = vunpack.c.h.b16 %v3000
        %v4478 = vunpack.c.l.b16 %v3001
        %v4479 = vunpack.c.h.b16 %v3001
        %v4480 = vunpack.c.l.b16 %v3002
        %v4481 = vunpack.c.h.b16 %v3002
        %v4482 = vunpack.c.l.b16 %v3003
        %v4483 = vunpack.c.h.b16 %v3003
        %v4484 = vunpack.c.l.b16 %v3004
        %v4485 = vunpack.c.h.b16 %v3004
        %v4486 = vunpack.c.l.b16 %v3005
        %v4487 = vunpack.c.h.b16 %v3005
        %v4488 = vunpack.c.l.b16 %v3006
        %v4489 = vunpack.c.h.b16 %v3006
        %v4490 = vunpack.c.l.b16 %v3007
        %v4491 = vunpack.c.h.b16 %v3007
        %v4492 = vunpack.c.l.b16 %v3008
        %v4493 = vunpack.c.h.b16 %v3008
        %v4494 = vunpack.c.l.b16 %v3009
        %v4495 = vunpack.c.h.b16 %v3009
        %v4496 = vunpack.c.l.b16 %v3010
        %v4497 = vunpack.c.h.b16 %v3010
        %v4498 = vunpack.c.l.b16 %v3011
        %v4499 = vunpack.c.h.b16 %v3011
        %v4500 = vunpack.c.l.b16 %v3012
        %v4501 = vunpack.c.h.b16 %v3012
        %v4502 = vunpack.c.l.b16 %v3013
        %v4503 = vunpack.c.h.b16 %v3013
        %v4504 = vunpack.c.l.b16 %v3014
        %v4505 = vunpack.c.h.b16 %v3014
        %v4506 = vunpack.c.l.b16 %v3015
        %v4507 = vunpack.c.h.b16 %v3015
        %v4508 = vunpack.c.l.b16 %v3016
        %v4509 = vunpack.c.h.b16 %v3016
        %v4510 = vunpack.c.l.b16 %v3017
        %v4511 = vunpack.c.h.b16 %v3017
        %v4512 = vunpack.c.l.b16 %v3018
        %v4513 = vunpack.c.h.b16 %v3018
        %v4514 = vunpack.c.l.b16 %v3019
        %v4515 = vunpack.c.h.b16 %v3019
        %v4516 = vunpack.c.l.b16 %v3020
        %v4517 = vunpack.c.h.b16 %v3020
        %v4518 = vunpack.c.l.b16 %v3021
        %v4519 = vunpack.c.h.b16 %v3021
        %v4520 = vunpack.c.l.b16 %v3022
        %v4521 = vunpack.c.h.b16 %v3022
        %v4522 = vunpack.c.l.b16 %v3023
        %v4523 = vunpack.c.h.b16 %v3023
        %v4524 = vunpack.c.l.b16 %v3024
        %v4525 = vunpack.c.h.b16 %v3024
        %v4526 = vunpack.c.l.b16 %v3025
        %v4527 = vunpack.c.h.b16 %v3025
        %v4528 = vunpack.c.l.b16 %v3026
        %v4529 = vunpack.c.h.b16 %v3026
        %v4530 = vunpack.c.l.b16 %v3027
        %v4531 = vunpack.c.h.b16 %v3027
        %v4532 = vunpack.c.l.b16 %v3028
        %v4533 = vunpack.c.h.b16 %v3028
        %v4534 = vunpack.c.l.b16 %v3029
        %v4535 = vunpack.c.h.b16 %v3029
        %v4536 = vunpack.c.l.b16 %v3030
        %v4537 = vunpack.c.h.b16 %v3030
        %v4538 = vunpack.c.l.b16 %v3031
        %v4539 = vunpack.c.h.b16 %v3031
        %v4540 = vunpack.c.l.b16 %v3032
        %v4541 = vunpack.c.h.b16 %v3032
        %v4542 = vunpack.c.l.b16 %v3033
        %v4543 = vunpack.c.h.b16 %v3033
        %v4544 = vunpack.c.l.b16 %v3034
        %v4545 = vunpack.c.h.b16 %v3034
        %v4546 = vunpack.c.l.b16 %v3035
        %v4547 = vunpack.c.h.b16 %v3035
        %v4548 = vunpack.c.l.b16 %v3036
        %v4549 = vunpack.c.h.b16 %v3036
        %v4550 = vunpack.c.l.b16 %v3037
        %v4551 = vunpack.c.h.b16 %v3037
        %v4552 = vunpack.c.l.b16 %v3038
        %v4553 = vunpack.c.h.b16 %v3038
        %v4554 = vunpack.c.l.b16 %v3039
        %v4555 = vunpack.c.h.b16 %v3039
        %v4556 = vunpack.c.l.b16 %v3040
        %v4557 = vunpack.c.h.b16 %v3040
        %v4558 = vunpack.c.l.b16 %v3041
        %v4559 = vunpack.c.h.b16 %v3041
        %v4560 = vunpack.c.l.b16 %v3042
        %v4561 = vunpack.c.h.b16 %v3042
        %v4562 = vunpack.c.l.b16 %v3043
        %v4563 = vunpack.c.h.b16 %v3043
        %v4564 = vunpack.c.l.b16 %v3044
        %v4565 = vunpack.c.h.b16 %v3044
        %v4566 = vunpack.c.l.b16 %v3045
        %v4567 = vunpack.c.h.b16 %v3045
        %v4568 = vunpack.c.l.b16 %v3046
        %v4569 = vunpack.c.h.b16 %v3046
        %v4570 = vunpack.c.l.b16 %v3047
        %v4571 = vunpack.c.h.b16 %v3047
        %v4572 = vunpack.c.l.b16 %v3048
        %v4573 = vunpack.c.h.b16 %v3048
        %v4574 = vunpack.c.l.b16 %v3049
        %v4575 = vunpack.c.h.b16 %v3049
        %v4576 = vunpack.c.l.b16 %v3050
        %v4577 = vunpack.c.h.b16 %v3050
        %v4578 = vunpack.c.l.b16 %v3051
        %v4579 = vunpack.c.h.b16 %v3051
        %v4580 = vunpack.c.l.b16 %v3052
        %v4581 = vunpack.c.h.b16 %v3052
        %v4582 = vunpack.c.l.b16 %v3053
        %v4583 = vunpack.c.h.b16 %v3053
        %v4584 = vunpack.c.l.b16 %v3054
        %v4585 = vunpack.c.h.b16 %v3054
        %v4586 = vunpack.c.l.b16 %v3055
        %v4587 = vunpack.c.h.b16 %v3055
        %v4588 = vunpack.c.l.b16 %v3056
        %v4589 = vunpack.c.h.b16 %v3056
        %v4590 = vunpack.c.l.b16 %v3057
        %v4591 = vunpack.c.h.b16 %v3057
        %v4592 = vunpack.c.l.b16 %v3058
        %v4593 = vunpack.c.h.b16 %v3058
        %v4594 = vunpack.c.l.b16 %v3059
        %v4595 = vunpack.c.h.b16 %v3059
        %v4596 = vunpack.c.l.b16 %v3060
        %v4597 = vunpack.c.h.b16 %v3060
        %v4598 = vpack.c.b16 %v3582, %v3574
        %v4599 = vpack.c.b16 %v3583, %v3575
        %v4600 = vpack.c.b16 %v3584, %v3576
        %v4601 = vpack.c.b16 %v3585, %v3577
        %v4602 = vpack.c.b16 %v3586, %v3578
        %v4603 = vpack.c.b16 %v3587, %v3579
        %v4604 = vpack.c.b16 %v3588, %v3580
        %v4605 = vpack.c.b16 %v3589, %v3581
        %v4606 = vpack.c.b16 %v3598, %v3590
        %v4607 = vpack.c.b16 %v3599, %v3591
        %v4608 = vpack.c.b16 %v3600, %v3592
        %v4609 = vpack.c.b16 %v3601, %v3593
        %v4610 = vpack.c.b16 %v3602, %v3594
        %v4611 = vpack.c.b16 %v3603, %v3595
        %v4612 = vpack.c.b16 %v3604, %v3596
        %v4613 = vpack.c.b16 %v3605, %v3597
        %v4614 = vpack.c.b16 %v3614, %v3606
        %v4615 = vpack.c.b16 %v3615, %v3607
        %v4616 = vpack.c.b16 %v3616, %v3608
        %v4617 = vpack.c.b16 %v3617, %v3609
        %v4618 = vpack.c.b16 %v3618, %v3610
        %v4619 = vpack.c.b16 %v3619, %v3611
        %v4620 = vpack.c.b16 %v3620, %v3612
        %v4621 = vpack.c.b16 %v3621, %v3613
        %v4622 = vpack.c.b16 %v3630, %v3622
        %v4623 = vpack.c.b16 %v3631, %v3623
        %v4624 = vpack.c.b16 %v3632, %v3624
        %v4625 = vpack.c.b16 %v3633, %v3625
        %v4626 = vpack.c.b16 %v3634, %v3626
        %v4627 = vpack.c.b16 %v3635, %v3627
        %v4628 = vpack.c.b16 %v3636, %v3628
        %v4629 = vpack.c.b16 %v3637, %v3629
        %v4630 = vpack.c.b16 %v3646, %v3638
        %v4631 = vpack.c.b16 %v3647, %v3639
        %v4632 = vpack.c.b16 %v3648, %v3640
        %v4633 = vpack.c.b16 %v3649, %v3641
        %v4634 = vpack.c.b16 %v3650, %v3642
        %v4635 = vpack.c.b16 %v3651, %v3643
        %v4636 = vpack.c.b16 %v3652, %v3644
        %v4637 = vpack.c.b16 %v3653, %v3645
        %v4638 = vpack.c.b16 %v3662, %v3654
        %v4639 = vpack.c.b16 %v3663, %v3655
        %v4640 = vpack.c.b16 %v3664, %v3656
        %v4641 = vpack.c.b16 %v3665, %v3657
        %v4642 = vpack.c.b16 %v3666, %v3658
        %v4643 = vpack.c.b16 %v3667, %v3659
        %v4644 = vpack.c.b16 %v3668, %v3660
        %v4645 = vpack.c.b16 %v3669, %v3661
        %v4646 = vpack.c.b16 %v3678, %v3670
        %v4647 = vpack.c.b16 %v3679, %v3671
        %v4648 = vpack.c.b16 %v3680, %v3672
        %v4649 = vpack.c.b16 %v3681, %v3673
        %v4650 = vpack.c.b16 %v3682, %v3674
        %v4651 = vpack.c.b16 %v3683, %v3675
        %v4652 = vpack.c.b16 %v3684, %v3676
        %v4653 = vpack.c.b16 %v3685, %v3677
        %v4654 = vpack.c.b16 %v3694, %v3686
        %v4655 = vpack.c.b16 %v3695, %v3687
        %v4656 = vpack.c.b16 %v3696, %v3688
        %v4657 = vpack.c.b16 %v3697, %v3689
        %v4658 = vpack.c.b16 %v3698, %v3690
        %v4659 = vpack.c.b16 %v3699, %v3691
        %v4660 = vpack.c.b16 %v3700, %v3692
        %v4661 = vpack.c.b16 %v3701, %v3693
        %v4662 = vpack.c.b16 %v3710, %v3702
        %v4663 = vpack.c.b16 %v3711, %v3703
        %v4664 = vpack.c.b16 %v3712, %v3704
        %v4665 = vpack.c.b16 %v3713, %v3705
        %v4666 = vpack.c.b16 %v3714, %v3706
        %v4667 = vpack.c.b16 %v3715, %v3707
        %v4668 = vpack.c.b16 %v3716, %v3708
        %v4669 = vpack.c.b16 %v3717, %v3709
        %v4670 = vpack.c.b16 %v3726, %v3718
        %v4671 = vpack.c.b16 %v3727, %v3719
        %v4672 = vpack.c.b16 %v3728, %v3720
        %v4673 = vpack.c.b16 %v3729, %v3721
        %v4674 = vpack.c.b16 %v3730, %v3722
        %v4675 = vpack.c.b16 %v3731, %v3723
        %v4676 = vpack.c.b16 %v3732, %v3724
        %v4677 = vpack.c.b16 %v3733, %v3725
        %v4678 = vpack.c.b16 %v3742, %v3734
        %v4679 = vpack.c.b16 %v3743, %v3735
        %v4680 = vpack.c.b16 %v3744, %v3736
        %v4681 = vpack.c.b16 %v3745, %v3737
        %v4682 = vpack.c.b16 %v3746, %v3738
        %v4683 = vpack.c.b16 %v3747, %v3739
        %v4684 = vpack.c.b16 %v3748, %v3740
        %v4685 = vpack.c.b16 %v3749, %v3741
        %v4686 = vpack.c.b16 %v3758, %v3750
        %v4687 = vpack.c.b16 %v3759, %v3751
        %v4688 = vpack.c.b16 %v3760, %v3752
        %v4689 = vpack.c.b16 %v3761, %v3753
        %v4690 = vpack.c.b16 %v3762, %v3754
        %v4691 = vpack.c.b16 %v3763, %v3755
        %v4692 = vpack.c.b16 %v3764, %v3756
        %v4693 = vpack.c.b16 %v3765, %v3757
        %v4694 = vpack.c.b16 %v3774, %v3766
        %v4695 = vpack.c.b16 %v3775, %v3767
        %v4696 = vpack.c.b16 %v3776, %v3768
        %v4697 = vpack.c.b16 %v3777, %v3769
        %v4698 = vpack.c.b16 %v3778, %v3770
        %v4699 = vpack.c.b16 %v3779, %v3771
        %v4700 = vpack.c.b16 %v3780, %v3772
        %v4701 = vpack.c.b16 %v3781, %v3773
        %v4702 = vpack.c.b16 %v3790, %v3782
        %v4703 = vpack.c.b16 %v3791, %v3783
        %v4704 = vpack.c.b16 %v3792, %v3784
        %v4705 = vpack.c.b16 %v3793, %v3785
        %v4706 = vpack.c.b16 %v3794, %v3786
        %v4707 = vpack.c.b16 %v3795, %v3787
        %v4708 = vpack.c.b16 %v3796, %v3788
        %v4709 = vpack.c.b16 %v3797, %v3789
        %v4710 = vpack.c.b16 %v3806, %v3798
        %v4711 = vpack.c.b16 %v3807, %v3799
        %v4712 = vpack.c.b16 %v3808, %v3800
        %v4713 = vpack.c.b16 %v3809, %v3801
        %v4714 = vpack.c.b16 %v3810, %v3802
        %v4715 = vpack.c.b16 %v3811, %v3803
        %v4716 = vpack.c.b16 %v3812, %v3804
        %v4717 = vpack.c.b16 %v3813, %v3805
        %v4718 = vpack.c.b16 %v3822, %v3814
        %v4719 = vpack.c.b16 %v3823, %v3815
        %v4720 = vpack.c.b16 %v3824, %v3816
        %v4721 = vpack.c.b16 %v3825, %v3817
        %v4722 = vpack.c.b16 %v3826, %v3818
        %v4723 = vpack.c.b16 %v3827, %v3819
        %v4724 = vpack.c.b16 %v3828, %v3820
        %v4725 = vpack.c.b16 %v3829, %v3821
        %v4726 = vpack.c.b16 %v3838, %v3830
        %v4727 = vpack.c.b16 %v3839, %v3831
        %v4728 = vpack.c.b16 %v3840, %v3832
        %v4729 = vpack.c.b16 %v3841, %v3833
        %v4730 = vpack.c.b16 %v3842, %v3834
        %v4731 = vpack.c.b16 %v3843, %v3835
        %v4732 = vpack.c.b16 %v3844, %v3836
        %v4733 = vpack.c.b16 %v3845, %v3837
        %v4734 = vpack.c.b16 %v3854, %v3846
        %v4735 = vpack.c.b16 %v3855, %v3847
        %v4736 = vpack.c.b16 %v3856, %v3848
        %v4737 = vpack.c.b16 %v3857, %v3849
        %v4738 = vpack.c.b16 %v3858, %v3850
        %v4739 = vpack.c.b16 %v3859, %v3851
        %v4740 = vpack.c.b16 %v3860, %v3852
        %v4741 = vpack.c.b16 %v3861, %v3853
        %v4742 = vpack.c.b16 %v3870, %v3862
        %v4743 = vpack.c.b16 %v3871, %v3863
        %v4744 = vpack.c.b16 %v3872, %v3864
        %v4745 = vpack.c.b16 %v3873, %v3865
        %v4746 = vpack.c.b16 %v3874, %v3866
        %v4747 = vpack.c.b16 %v3875, %v3867
        %v4748 = vpack.c.b16 %v3876, %v3868
        %v4749 = vpack.c.b16 %v3877, %v3869
        %v4750 = vpack.c.b16 %v3886, %v3878
        %v4751 = vpack.c.b16 %v3887, %v3879
        %v4752 = vpack.c.b16 %v3888, %v3880
        %v4753 = vpack.c.b16 %v3889, %v3881
        %v4754 = vpack.c.b16 %v3890, %v3882
        %v4755 = vpack.c.b16 %v3891, %v3883
        %v4756 = vpack.c.b16 %v3892, %v3884
        %v4757 = vpack.c.b16 %v3893, %v3885
        %v4758 = vpack.c.b16 %v3902, %v3894
        %v4759 = vpack.c.b16 %v3903, %v3895
        %v4760 = vpack.c.b16 %v3904, %v3896
        %v4761 = vpack.c.b16 %v3905, %v3897
        %v4762 = vpack.c.b16 %v3906, %v3898
        %v4763 = vpack.c.b16 %v3907, %v3899
        %v4764 = vpack.c.b16 %v3908, %v3900
        %v4765 = vpack.c.b16 %v3909, %v3901
        %v4766 = vpack.c.b16 %v3918, %v3910
        %v4767 = vpack.c.b16 %v3919, %v3911
        %v4768 = vpack.c.b16 %v3920, %v3912
        %v4769 = vpack.c.b16 %v3921, %v3913
        %v4770 = vpack.c.b16 %v3922, %v3914
        %v4771 = vpack.c.b16 %v3923, %v3915
        %v4772 = vpack.c.b16 %v3924, %v3916
        %v4773 = vpack.c.b16 %v3925, %v3917
        %v4774 = vpack.c.b16 %v3934, %v3926
        %v4775 = vpack.c.b16 %v3935, %v3927
        %v4776 = vpack.c.b16 %v3936, %v3928
        %v4777 = vpack.c.b16 %v3937, %v3929
        %v4778 = vpack.c.b16 %v3938, %v3930
        %v4779 = vpack.c.b16 %v3939, %v3931
        %v4780 = vpack.c.b16 %v3940, %v3932
        %v4781 = vpack.c.b16 %v3941, %v3933
        %v4782 = vpack.c.b16 %v3950, %v3942
        %v4783 = vpack.c.b16 %v3951, %v3943
        %v4784 = vpack.c.b16 %v3952, %v3944
        %v4785 = vpack.c.b16 %v3953, %v3945
        %v4786 = vpack.c.b16 %v3954, %v3946
        %v4787 = vpack.c.b16 %v3955, %v3947
        %v4788 = vpack.c.b16 %v3956, %v3948
        %v4789 = vpack.c.b16 %v3957, %v3949
        %v4790 = vpack.c.b16 %v3966, %v3958
        %v4791 = vpack.c.b16 %v3967, %v3959
        %v4792 = vpack.c.b16 %v3968, %v3960
        %v4793 = vpack.c.b16 %v3969, %v3961
        %v4794 = vpack.c.b16 %v3970, %v3962
        %v4795 = vpack.c.b16 %v3971, %v3963
        %v4796 = vpack.c.b16 %v3972, %v3964
        %v4797 = vpack.c.b16 %v3973, %v3965
        %v4798 = vpack.c.b16 %v3982, %v3974
        %v4799 = vpack.c.b16 %v3983, %v3975
        %v4800 = vpack.c.b16 %v3984, %v3976
        %v4801 = vpack.c.b16 %v3985, %v3977
        %v4802 = vpack.c.b16 %v3986, %v3978
        %v4803 = vpack.c.b16 %v3987, %v3979
        %v4804 = vpack.c.b16 %v3988, %v3980
        %v4805 = vpack.c.b16 %v3989, %v3981
        %v4806 = vpack.c.b16 %v3998, %v3990
        %v4807 = vpack.c.b16 %v3999, %v3991
        %v4808 = vpack.c.b16 %v4000, %v3992
        %v4809 = vpack.c.b16 %v4001, %v3993
        %v4810 = vpack.c.b16 %v4002, %v3994
        %v4811 = vpack.c.b16 %v4003, %v3995
        %v4812 = vpack.c.b16 %v4004, %v3996
        %v4813 = vpack.c.b16 %v4005, %v3997
        %v4814 = vpack.c.b16 %v4014, %v4006
        %v4815 = vpack.c.b16 %v4015, %v4007
        %v4816 = vpack.c.b16 %v4016, %v4008
        %v4817 = vpack.c.b16 %v4017, %v4009
        %v4818 = vpack.c.b16 %v4018, %v4010
        %v4819 = vpack.c.b16 %v4019, %v4011
        %v4820 = vpack.c.b16 %v4020, %v4012
        %v4821 = vpack.c.b16 %v4021, %v4013
        %v4822 = vpack.c.b16 %v4030, %v4022
        %v4823 = vpack.c.b16 %v4031, %v4023
        %v4824 = vpack.c.b16 %v4032, %v4024
        %v4825 = vpack.c.b16 %v4033, %v4025
        %v4826 = vpack.c.b16 %v4034, %v4026
        %v4827 = vpack.c.b16 %v4035, %v4027
        %v4828 = vpack.c.b16 %v4036, %v4028
        %v4829 = vpack.c.b16 %v4037, %v4029
        %v4830 = vpack.c.b16 %v4046, %v4038
        %v4831 = vpack.c.b16 %v4047, %v4039
        %v4832 = vpack.c.b16 %v4048, %v4040
        %v4833 = vpack.c.b16 %v4049, %v4041
        %v4834 = vpack.c.b16 %v4050, %v4042
        %v4835 = vpack.c.b16 %v4051, %v4043
        %v4836 = vpack.c.b16 %v4052, %v4044
        %v4837 = vpack.c.b16 %v4053, %v4045
        %v4838 = vpack.c.b16 %v4062, %v4054
        %v4839 = vpack.c.b16 %v4063, %v4055
        %v4840 = vpack.c.b16 %v4064, %v4056
        %v4841 = vpack.c.b16 %v4065, %v4057
        %v4842 = vpack.c.b16 %v4066, %v4058
        %v4843 = vpack.c.b16 %v4067, %v4059
        %v4844 = vpack.c.b16 %v4068, %v4060
        %v4845 = vpack.c.b16 %v4069, %v4061
        %v4846 = vpack.c.b16 %v4078, %v4070
        %v4847 = vpack.c.b16 %v4079, %v4071
        %v4848 = vpack.c.b16 %v4080, %v4072
        %v4849 = vpack.c.b16 %v4081, %v4073
        %v4850 = vpack.c.b16 %v4082, %v4074
        %v4851 = vpack.c.b16 %v4083, %v4075
        %v4852 = vpack.c.b16 %v4084, %v4076
        %v4853 = vpack.c.b16 %v4085, %v4077
        %v4854 = vpack.c.b16 %v4094, %v4086
        %v4855 = vpack.c.b16 %v4095, %v4087
        %v4856 = vpack.c.b16 %v4096, %v4088
        %v4857 = vpack.c.b16 %v4097, %v4089
        %v4858 = vpack.c.b16 %v4098, %v4090
        %v4859 = vpack.c.b16 %v4099, %v4091
        %v4860 = vpack.c.b16 %v4100, %v4092
        %v4861 = vpack.c.b16 %v4101, %v4093
        %v4862 = vpack.c.b16 %v4110, %v4102
        %v4863 = vpack.c.b16 %v4111, %v4103
        %v4864 = vpack.c.b16 %v4112, %v4104
        %v4865 = vpack.c.b16 %v4113, %v4105
        %v4866 = vpack.c.b16 %v4114, %v4106
        %v4867 = vpack.c.b16 %v4115, %v4107
        %v4868 = vpack.c.b16 %v4116, %v4108
        %v4869 = vpack.c.b16 %v4117, %v4109
        %v4870 = vpack.c.b16 %v4126, %v4118
        %v4871 = vpack.c.b16 %v4127, %v4119
        %v4872 = vpack.c.b16 %v4128, %v4120
        %v4873 = vpack.c.b16 %v4129, %v4121
        %v4874 = vpack.c.b16 %v4130, %v4122
        %v4875 = vpack.c.b16 %v4131, %v4123
        %v4876 = vpack.c.b16 %v4132, %v4124
        %v4877 = vpack.c.b16 %v4133, %v4125
        %v4878 = vpack.c.b16 %v4142, %v4134
        %v4879 = vpack.c.b16 %v4143, %v4135
        %v4880 = vpack.c.b16 %v4144, %v4136
        %v4881 = vpack.c.b16 %v4145, %v4137
        %v4882 = vpack.c.b16 %v4146, %v4138
        %v4883 = vpack.c.b16 %v4147, %v4139
        %v4884 = vpack.c.b16 %v4148, %v4140
        %v4885 = vpack.c.b16 %v4149, %v4141
        %v4886 = vpack.c.b16 %v4158, %v4150
        %v4887 = vpack.c.b16 %v4159, %v4151
        %v4888 = vpack.c.b16 %v4160, %v4152
        %v4889 = vpack.c.b16 %v4161, %v4153
        %v4890 = vpack.c.b16 %v4162, %v4154
        %v4891 = vpack.c.b16 %v4163, %v4155
        %v4892 = vpack.c.b16 %v4164, %v4156
        %v4893 = vpack.c.b16 %v4165, %v4157
        %v4894 = vpack.c.b16 %v4174, %v4166
        %v4895 = vpack.c.b16 %v4175, %v4167
        %v4896 = vpack.c.b16 %v4176, %v4168
        %v4897 = vpack.c.b16 %v4177, %v4169
        %v4898 = vpack.c.b16 %v4178, %v4170
        %v4899 = vpack.c.b16 %v4179, %v4171
        %v4900 = vpack.c.b16 %v4180, %v4172
        %v4901 = vpack.c.b16 %v4181, %v4173
        %v4902 = vpack.c.b16 %v4190, %v4182
        %v4903 = vpack.c.b16 %v4191, %v4183
        %v4904 = vpack.c.b16 %v4192, %v4184
        %v4905 = vpack.c.b16 %v4193, %v4185
        %v4906 = vpack.c.b16 %v4194, %v4186
        %v4907 = vpack.c.b16 %v4195, %v4187
        %v4908 = vpack.c.b16 %v4196, %v4188
        %v4909 = vpack.c.b16 %v4197, %v4189
        %v4910 = vpack.c.b16 %v4206, %v4198
        %v4911 = vpack.c.b16 %v4207, %v4199
        %v4912 = vpack.c.b16 %v4208, %v4200
        %v4913 = vpack.c.b16 %v4209, %v4201
        %v4914 = vpack.c.b16 %v4210, %v4202
        %v4915 = vpack.c.b16 %v4211, %v4203
        %v4916 = vpack.c.b16 %v4212, %v4204
        %v4917 = vpack.c.b16 %v4213, %v4205
        %v4918 = vpack.c.b16 %v4222, %v4214
        %v4919 = vpack.c.b16 %v4223, %v4215
        %v4920 = vpack.c.b16 %v4224, %v4216
        %v4921 = vpack.c.b16 %v4225, %v4217
        %v4922 = vpack.c.b16 %v4226, %v4218
        %v4923 = vpack.c.b16 %v4227, %v4219
        %v4924 = vpack.c.b16 %v4228, %v4220
        %v4925 = vpack.c.b16 %v4229, %v4221
        %v4926 = vpack.c.b16 %v4238, %v4230
        %v4927 = vpack.c.b16 %v4239, %v4231
        %v4928 = vpack.c.b16 %v4240, %v4232
        %v4929 = vpack.c.b16 %v4241, %v4233
        %v4930 = vpack.c.b16 %v4242, %v4234
        %v4931 = vpack.c.b16 %v4243, %v4235
        %v4932 = vpack.c.b16 %v4244, %v4236
        %v4933 = vpack.c.b16 %v4245, %v4237
        %v4934 = vpack.c.b16 %v4254, %v4246
        %v4935 = vpack.c.b16 %v4255, %v4247
        %v4936 = vpack.c.b16 %v4256, %v4248
        %v4937 = vpack.c.b16 %v4257, %v4249
        %v4938 = vpack.c.b16 %v4258, %v4250
        %v4939 = vpack.c.b16 %v4259, %v4251
        %v4940 = vpack.c.b16 %v4260, %v4252
        %v4941 = vpack.c.b16 %v4261, %v4253
        %v4942 = vpack.c.b16 %v4270, %v4262
        %v4943 = vpack.c.b16 %v4271, %v4263
        %v4944 = vpack.c.b16 %v4272, %v4264
        %v4945 = vpack.c.b16 %v4273, %v4265
        %v4946 = vpack.c.b16 %v4274, %v4266
        %v4947 = vpack.c.b16 %v4275, %v4267
        %v4948 = vpack.c.b16 %v4276, %v4268
        %v4949 = vpack.c.b16 %v4277, %v4269
        %v4950 = vpack.c.b16 %v4286, %v4278
        %v4951 = vpack.c.b16 %v4287, %v4279
        %v4952 = vpack.c.b16 %v4288, %v4280
        %v4953 = vpack.c.b16 %v4289, %v4281
        %v4954 = vpack.c.b16 %v4290, %v4282
        %v4955 = vpack.c.b16 %v4291, %v4283
        %v4956 = vpack.c.b16 %v4292, %v4284
        %v4957 = vpack.c.b16 %v4293, %v4285
        %v4958 = vpack.c.b16 %v4302, %v4294
        %v4959 = vpack.c.b16 %v4303, %v4295
        %v4960 = vpack.c.b16 %v4304, %v4296
        %v4961 = vpack.c.b16 %v4305, %v4297
        %v4962 = vpack.c.b16 %v4306, %v4298
        %v4963 = vpack.c.b16 %v4307, %v4299
        %v4964 = vpack.c.b16 %v4308, %v4300
        %v4965 = vpack.c.b16 %v4309, %v4301
        %v4966 = vpack.c.b16 %v4318, %v4310
        %v4967 = vpack.c.b16 %v4319, %v4311
        %v4968 = vpack.c.b16 %v4320, %v4312
        %v4969 = vpack.c.b16 %v4321, %v4313
        %v4970 = vpack.c.b16 %v4322, %v4314
        %v4971 = vpack.c.b16 %v4323, %v4315
        %v4972 = vpack.c.b16 %v4324, %v4316
        %v4973 = vpack.c.b16 %v4325, %v4317
        %v4974 = vpack.c.b16 %v4334, %v4326
        %v4975 = vpack.c.b16 %v4335, %v4327
        %v4976 = vpack.c.b16 %v4336, %v4328
        %v4977 = vpack.c.b16 %v4337, %v4329
        %v4978 = vpack.c.b16 %v4338, %v4330
        %v4979 = vpack.c.b16 %v4339, %v4331
        %v4980 = vpack.c.b16 %v4340, %v4332
        %v4981 = vpack.c.b16 %v4341, %v4333
        %v4982 = vpack.c.b16 %v4350, %v4342
        %v4983 = vpack.c.b16 %v4351, %v4343
        %v4984 = vpack.c.b16 %v4352, %v4344
        %v4985 = vpack.c.b16 %v4353, %v4345
        %v4986 = vpack.c.b16 %v4354, %v4346
        %v4987 = vpack.c.b16 %v4355, %v4347
        %v4988 = vpack.c.b16 %v4356, %v4348
        %v4989 = vpack.c.b16 %v4357, %v4349
        %v4990 = vpack.c.b16 %v4366, %v4358
        %v4991 = vpack.c.b16 %v4367, %v4359
        %v4992 = vpack.c.b16 %v4368, %v4360
        %v4993 = vpack.c.b16 %v4369, %v4361
        %v4994 = vpack.c.b16 %v4370, %v4362
        %v4995 = vpack.c.b16 %v4371, %v4363
        %v4996 = vpack.c.b16 %v4372, %v4364
        %v4997 = vpack.c.b16 %v4373, %v4365
        %v4998 = vpack.c.b16 %v4382, %v4374
        %v4999 = vpack.c.b16 %v4383, %v4375
        %v5000 = vpack.c.b16 %v4384, %v4376
        %v5001 = vpack.c.b16 %v4385, %v4377
        %v5002 = vpack.c.b16 %v4386, %v4378
        %v5003 = vpack.c.b16 %v4387, %v4379
        %v5004 = vpack.c.b16 %v4388, %v4380
        %v5005 = vpack.c.b16 %v4389, %v4381
        %v5006 = vpack.c.b16 %v4398, %v4390
        %v5007 = vpack.c.b16 %v4399, %v4391
        %v5008 = vpack.c.b16 %v4400, %v4392
        %v5009 = vpack.c.b16 %v4401, %v4393
        %v5010 = vpack.c.b16 %v4402, %v4394
        %v5011 = vpack.c.b16 %v4403, %v4395
        %v5012 = vpack.c.b16 %v4404, %v4396
        %v5013 = vpack.c.b16 %v4405, %v4397
        %v5014 = vpack.c.b16 %v4414, %v4406
        %v5015 = vpack.c.b16 %v4415, %v4407
        %v5016 = vpack.c.b16 %v4416, %v4408
        %v5017 = vpack.c.b16 %v4417, %v4409
        %v5018 = vpack.c.b16 %v4418, %v4410
        %v5019 = vpack.c.b16 %v4419, %v4411
        %v5020 = vpack.c.b16 %v4420, %v4412
        %v5021 = vpack.c.b16 %v4421, %v4413
        %v5022 = vpack.c.b16 %v4430, %v4422
        %v5023 = vpack.c.b16 %v4431, %v4423
        %v5024 = vpack.c.b16 %v4432, %v4424
        %v5025 = vpack.c.b16 %v4433, %v4425
        %v5026 = vpack.c.b16 %v4434, %v4426
        %v5027 = vpack.c.b16 %v4435, %v4427
        %v5028 = vpack.c.b16 %v4436, %v4428
        %v5029 = vpack.c.b16 %v4437, %v4429
        %v5030 = vpack.c.b16 %v4446, %v4438
        %v5031 = vpack.c.b16 %v4447, %v4439
        %v5032 = vpack.c.b16 %v4448, %v4440
        %v5033 = vpack.c.b16 %v4449, %v4441
        %v5034 = vpack.c.b16 %v4450, %v4442
        %v5035 = vpack.c.b16 %v4451, %v4443
        %v5036 = vpack.c.b16 %v4452, %v4444
        %v5037 = vpack.c.b16 %v4453, %v4445
        %v5038 = vpack.c.b16 %v4462, %v4454
        %v5039 = vpack.c.b16 %v4463, %v4455
        %v5040 = vpack.c.b16 %v4464, %v4456
        %v5041 = vpack.c.b16 %v4465, %v4457
        %v5042 = vpack.c.b16 %v4466, %v4458
        %v5043 = vpack.c.b16 %v4467, %v4459
        %v5044 = vpack.c.b16 %v4468, %v4460
        %v5045 = vpack.c.b16 %v4469, %v4461
        %v5046 = vpack.c.b16 %v4478, %v4470
        %v5047 = vpack.c.b16 %v4479, %v4471
        %v5048 = vpack.c.b16 %v4480, %v4472
        %v5049 = vpack.c.b16 %v4481, %v4473
        %v5050 = vpack.c.b16 %v4482, %v4474
        %v5051 = vpack.c.b16 %v4483, %v4475
        %v5052 = vpack.c.b16 %v4484, %v4476
        %v5053 = vpack.c.b16 %v4485, %v4477
        %v5054 = vpack.c.b16 %v4494, %v4486
        %v5055 = vpack.c.b16 %v4495, %v4487
        %v5056 = vpack.c.b16 %v4496, %v4488
        %v5057 = vpack.c.b16 %v4497, %v4489
        %v5058 = vpack.c.b16 %v4498, %v4490
        %v5059 = vpack.c.b16 %v4499, %v4491
        %v5060 = vpack.c.b16 %v4500, %v4492
        %v5061 = vpack.c.b16 %v4501, %v4493
        %v5062 = vpack.c.b16 %v4510, %v4502
        %v5063 = vpack.c.b16 %v4511, %v4503
        %v5064 = vpack.c.b16 %v4512, %v4504
        %v5065 = vpack.c.b16 %v4513, %v4505
        %v5066 = vpack.c.b16 %v4514, %v4506
        %v5067 = vpack.c.b16 %v4515, %v4507
        %v5068 = vpack.c.b16 %v4516, %v4508
        %v5069 = vpack.c.b16 %v4517, %v4509
        %v5070 = vpack.c.b16 %v4526, %v4518
        %v5071 = vpack.c.b16 %v4527, %v4519
        %v5072 = vpack.c.b16 %v4528, %v4520
        %v5073 = vpack.c.b16 %v4529, %v4521
        %v5074 = vpack.c.b16 %v4530, %v4522
        %v5075 = vpack.c.b16 %v4531, %v4523
        %v5076 = vpack.c.b16 %v4532, %v4524
        %v5077 = vpack.c.b16 %v4533, %v4525
        %v5078 = vpack.c.b16 %v4542, %v4534
        %v5079 = vpack.c.b16 %v4543, %v4535
        %v5080 = vpack.c.b16 %v4544, %v4536
        %v5081 = vpack.c.b16 %v4545, %v4537
        %v5082 = vpack.c.b16 %v4546, %v4538
        %v5083 = vpack.c.b16 %v4547, %v4539
        %v5084 = vpack.c.b16 %v4548, %v4540
        %v5085 = vpack.c.b16 %v4549, %v4541
        %v5086 = vpack.c.b16 %v4558, %v4550
        %v5087 = vpack.c.b16 %v4559, %v4551
        %v5088 = vpack.c.b16 %v4560, %v4552
        %v5089 = vpack.c.b16 %v4561, %v4553
        %v5090 = vpack.c.b16 %v4562, %v4554
        %v5091 = vpack.c.b16 %v4563, %v4555
        %v5092 = vpack.c.b16 %v4564, %v4556
        %v5093 = vpack.c.b16 %v4565, %v4557
        %v5094 = vpack.c.b16 %v4574, %v4566
        %v5095 = vpack.c.b16 %v4575, %v4567
        %v5096 = vpack.c.b16 %v4576, %v4568
        %v5097 = vpack.c.b16 %v4577, %v4569
        %v5098 = vpack.c.b16 %v4578, %v4570
        %v5099 = vpack.c.b16 %v4579, %v4571
        %v5100 = vpack.c.b16 %v4580, %v4572
        %v5101 = vpack.c.b16 %v4581, %v4573
        %v5102 = vpack.c.b16 %v4590, %v4582
        %v5103 = vpack.c.b16 %v4591, %v4583
        %v5104 = vpack.c.b16 %v4592, %v4584
        %v5105 = vpack.c.b16 %v4593, %v4585
        %v5106 = vpack.c.b16 %v4594, %v4586
        %v5107 = vpack.c.b16 %v4595, %v4587
        %v5108 = vpack.c.b16 %v4596, %v4588
        %v5109 = vpack.c.b16 %v4597, %v4589
        %v5623 = vlaneseq
        %v5624 = vshrl.u32 %v5623, 7
        %v5625 = vsub.s32 0, %v5624
        %v5626 = vrot.slane %v3061, %v5625
        %v5627 = vlaneseq
        %v5628 = vshrl.u32 %v5627, 7
        %v5629 = vsub.s32 1, %v5628
        %v5630 = vrot.slane %v3061, %v5629
        %v5631 = vlaneseq
        %v5632 = vshrl.u32 %v5631, 7
        %v5633 = vsub.s32 2, %v5632
        %v5634 = vrot.slane %v3061, %v5633
        %v5635 = vlaneseq
        %v5636 = vshrl.u32 %v5635, 7
        %v5637 = vsub.s32 3, %v5636
        %v5638 = vrot.slane %v3061, %v5637
        %v5639 = vlaneseq
        %v5640 = vshrl.u32 %v5639, 7
        %v5641 = vsub.s32 4, %v5640
        %v5642 = vrot.slane %v3061, %v5641
        %v5643 = vlaneseq
        %v5644 = vshrl.u32 %v5643, 7
        %v5645 = vsub.s32 5, %v5644
        %v5646 = vrot.slane %v3061, %v5645
        %v5647 = vlaneseq
        %v5648 = vshrl.u32 %v5647, 7
        %v5649 = vsub.s32 6, %v5648
        %v5650 = vrot.slane %v3061, %v5649
        %v5651 = vlaneseq
        %v5652 = vshrl.u32 %v5651, 7
        %v5653 = vsub.s32 7, %v5652
        %v5654 = vrot.slane %v3061, %v5653
        %5663 = vmatprep.subr.bf16.mxu0 %v4599
        %5664 = vmatpush1.bf16.msra.mxu0 %v4598
        %5665 = vmatprep.subr.bf16.mxu0 %v4607
        %5666 = vmatpush1.bf16.msra.mxu0 %v4606
        %5667 = vmatprep.subr.bf16.mxu0 %v4615
        %5668 = vmatpush1.bf16.msra.mxu0 %v4614
        %5669 = vmatprep.subr.bf16.mxu0 %v4623
        %5670 = vmatpush1.bf16.msra.mxu0 %v4622
        %5671 = vmatprep.subr.bf16.mxu0 %v4631
        %5672 = vmatpush1.bf16.msra.mxu0 %v4630
        %5673 = vmatprep.subr.bf16.mxu0 %v4639
        %5674 = vmatpush1.bf16.msra.mxu0 %v4638
        %5675 = vmatprep.subr.bf16.mxu0 %v4647
        %5676 = vmatpush1.bf16.msra.mxu0 %v4646
        %5677 = vmatprep.subr.bf16.mxu0 %v4655
        %5678 = vmatpush1.bf16.msra.mxu0 %v4654
        %5679 = vmatprep.subr.bf16.mxu0 %v4663
        %5680 = vmatpush1.bf16.msra.mxu0 %v4662
        %5681 = vmatprep.subr.bf16.mxu0 %v4671
        %5682 = vmatpush1.bf16.msra.mxu0 %v4670
        %5683 = vmatprep.subr.bf16.mxu0 %v4679
        %5684 = vmatpush1.bf16.msra.mxu0 %v4678
        %5685 = vmatprep.subr.bf16.mxu0 %v4687
        %5686 = vmatpush1.bf16.msra.mxu0 %v4686
        %5687 = vmatprep.subr.bf16.mxu0 %v4695
        %5688 = vmatpush1.bf16.msra.mxu0 %v4694
        %5689 = vmatprep.subr.bf16.mxu0 %v4703
        %5690 = vmatpush1.bf16.msra.mxu0 %v4702
        %5691 = vmatprep.subr.bf16.mxu0 %v4711
        %5692 = vmatpush1.bf16.msra.mxu0 %v4710
        %5693 = vmatprep.subr.bf16.mxu0 %v4719
        %5694 = vmatpush1.bf16.msra.mxu0 %v4718
        %5695 = vmatprep.mubr.bf16.mxu0 %v2542
        %5696 = vmatmul.mubr.bf16.gmra.mrb[0].mxu0 %v2541
        %v5697 = vpop.f32.mrb[0].mxu0
        %v5698 = vadd.f32 %v5626, %v5697
        %v5699 = vpop.f32.mrb[0].mxu0
        %v5700 = vadd.f32 %v5630, %v5699
        %v5701 = vpop.f32.mrb[0].mxu0
        %v5702 = vpop.f32.mrb[0].mxu0
        %5703 = vdwg.mxu0
        %5704 = vmatprep.subr.bf16.mxu0 %v4727
        %5705 = vmatpush1.bf16.msra.mxu0 %v4726
        %5706 = vmatprep.subr.bf16.mxu0 %v4735
        %5707 = vmatpush1.bf16.msra.mxu0 %v4734
        %5708 = vmatprep.subr.bf16.mxu0 %v4743
        %5709 = vmatpush1.bf16.msra.mxu0 %v4742
        %5710 = vmatprep.subr.bf16.mxu0 %v4751
        %5711 = vmatpush1.bf16.msra.mxu0 %v4750
        %5712 = vmatprep.subr.bf16.mxu0 %v4759
        %5713 = vmatpush1.bf16.msra.mxu0 %v4758
        %5714 = vmatprep.subr.bf16.mxu0 %v4767
        %5715 = vmatpush1.bf16.msra.mxu0 %v4766
        %5716 = vmatprep.subr.bf16.mxu0 %v4775
        %5717 = vmatpush1.bf16.msra.mxu0 %v4774
        %5718 = vmatprep.subr.bf16.mxu0 %v4783
        %5719 = vmatpush1.bf16.msra.mxu0 %v4782
        %5720 = vmatprep.subr.bf16.mxu0 %v4791
        %5721 = vmatpush1.bf16.msra.mxu0 %v4790
        %5722 = vmatprep.subr.bf16.mxu0 %v4799
        %5723 = vmatpush1.bf16.msra.mxu0 %v4798
        %5724 = vmatprep.subr.bf16.mxu0 %v4807
        %5725 = vmatpush1.bf16.msra.mxu0 %v4806
        %5726 = vmatprep.subr.bf16.mxu0 %v4815
        %5727 = vmatpush1.bf16.msra.mxu0 %v4814
        %5728 = vmatprep.subr.bf16.mxu0 %v4823
        %5729 = vmatpush1.bf16.msra.mxu0 %v4822
        %5730 = vmatprep.subr.bf16.mxu0 %v4831
        %5731 = vmatpush1.bf16.msra.mxu0 %v4830
        %5732 = vmatprep.subr.bf16.mxu0 %v4839
        %5733 = vmatpush1.bf16.msra.mxu0 %v4838
        %5734 = vmatprep.subr.bf16.mxu0 %v4847
        %5735 = vmatpush1.bf16.msra.mxu0 %v4846
        %5736 = vmatprep.mubr.bf16.mxu0 %v2544
        %5737 = vmatmul.mubr.bf16.gmra.mrb[0].mxu0 %v2543
        %v5738 = vpop.f32.mrb[0].mxu0
        %v5739 = vadd.f32 %v5698, %v5738
        %v5740 = vpop.f32.mrb[0].mxu0
        %v5741 = vadd.f32 %v5700, %v5740
        %v5742 = vpop.f32.mrb[0].mxu0
        %v5743 = vpop.f32.mrb[0].mxu0
        %5744 = vdwg.mxu0
        %5745 = vmatprep.subr.bf16.mxu0 %v4855
        %5746 = vmatpush1.bf16.msra.mxu0 %v4854
        %5747 = vmatprep.subr.bf16.mxu0 %v4863
        %5748 = vmatpush1.bf16.msra.mxu0 %v4862
        %5749 = vmatprep.subr.bf16.mxu0 %v4871
        %5750 = vmatpush1.bf16.msra.mxu0 %v4870
        %5751 = vmatprep.subr.bf16.mxu0 %v4879
        %5752 = vmatpush1.bf16.msra.mxu0 %v4878
        %5753 = vmatprep.subr.bf16.mxu0 %v4887
        %5754 = vmatpush1.bf16.msra.mxu0 %v4886
        %5755 = vmatprep.subr.bf16.mxu0 %v4895
        %5756 = vmatpush1.bf16.msra.mxu0 %v4894
        %5757 = vmatprep.subr.bf16.mxu0 %v4903
        %5758 = vmatpush1.bf16.msra.mxu0 %v4902
        %5759 = vmatprep.subr.bf16.mxu0 %v4911
        %5760 = vmatpush1.bf16.msra.mxu0 %v4910
        %5761 = vmatprep.subr.bf16.mxu0 %v4919
        %5762 = vmatpush1.bf16.msra.mxu0 %v4918
        %5763 = vmatprep.subr.bf16.mxu0 %v4927
        %5764 = vmatpush1.bf16.msra.mxu0 %v4926
        %5765 = vmatprep.subr.bf16.mxu0 %v4935
        %5766 = vmatpush1.bf16.msra.mxu0 %v4934
        %5767 = vmatprep.subr.bf16.mxu0 %v4943
        %5768 = vmatpush1.bf16.msra.mxu0 %v4942
        %5769 = vmatprep.subr.bf16.mxu0 %v4951
        %5770 = vmatpush1.bf16.msra.mxu0 %v4950
        %5771 = vmatprep.subr.bf16.mxu0 %v4959
        %5772 = vmatpush1.bf16.msra.mxu0 %v4958
        %5773 = vmatprep.subr.bf16.mxu0 %v4967
        %5774 = vmatpush1.bf16.msra.mxu0 %v4966
        %5775 = vmatprep.subr.bf16.mxu0 %v4975
        %5776 = vmatpush1.bf16.msra.mxu0 %v4974
        %5777 = vmatprep.mubr.bf16.mxu0 %v2546
        %5778 = vmatmul.mubr.bf16.gmra.mrb[0].mxu0 %v2545
        %v5779 = vpop.f32.mrb[0].mxu0
        %v5780 = vadd.f32 %v5739, %v5779
        %v5781 = vpop.f32.mrb[0].mxu0
        %v5782 = vadd.f32 %v5741, %v5781
        %v5783 = vpop.f32.mrb[0].mxu0
        %v5784 = vpop.f32.mrb[0].mxu0
        %5785 = vdwg.mxu0
        %5786 = vmatprep.subr.bf16.mxu0 %v4983
        %5787 = vmatpush1.bf16.msra.mxu0 %v4982
        %5788 = vmatprep.subr.bf16.mxu0 %v4991
        %5789 = vmatpush1.bf16.msra.mxu0 %v4990
        %5790 = vmatprep.subr.bf16.mxu0 %v4999
        %5791 = vmatpush1.bf16.msra.mxu0 %v4998
        %5792 = vmatprep.subr.bf16.mxu0 %v5007
        %5793 = vmatpush1.bf16.msra.mxu0 %v5006
        %5794 = vmatprep.subr.bf16.mxu0 %v5015
        %5795 = vmatpush1.bf16.msra.mxu0 %v5014
        %5796 = vmatprep.subr.bf16.mxu0 %v5023
        %5797 = vmatpush1.bf16.msra.mxu0 %v5022
        %5798 = vmatprep.subr.bf16.mxu0 %v5031
        %5799 = vmatpush1.bf16.msra.mxu0 %v5030
        %5800 = vmatprep.subr.bf16.mxu0 %v5039
        %5801 = vmatpush1.bf16.msra.mxu0 %v5038
        %5802 = vmatprep.subr.bf16.mxu0 %v5047
        %5803 = vmatpush1.bf16.msra.mxu0 %v5046
        %5804 = vmatprep.subr.bf16.mxu0 %v5055
        %5805 = vmatpush1.bf16.msra.mxu0 %v5054
        %5806 = vmatprep.subr.bf16.mxu0 %v5063
        %5807 = vmatpush1.bf16.msra.mxu0 %v5062
        %5808 = vmatprep.subr.bf16.mxu0 %v5071
        %5809 = vmatpush1.bf16.msra.mxu0 %v5070
        %5810 = vmatprep.subr.bf16.mxu0 %v5079
        %5811 = vmatpush1.bf16.msra.mxu0 %v5078
        %5812 = vmatprep.subr.bf16.mxu0 %v5087
        %5813 = vmatpush1.bf16.msra.mxu0 %v5086
        %5814 = vmatprep.subr.bf16.mxu0 %v5095
        %5815 = vmatpush1.bf16.msra.mxu0 %v5094
        %5816 = vmatprep.subr.bf16.mxu0 %v5103
        %5817 = vmatpush1.bf16.msra.mxu0 %v5102
        %5818 = vmatprep.mubr.bf16.mxu0 %v2548
        %5819 = vmatmul.mubr.bf16.gmra.mrb[0].mxu0 %v2547
        %v5820 = vpop.f32.mrb[0].mxu0
        %v5821 = vadd.f32 %v5780, %v5820
        %v5822 = vpop.f32.mrb[0].mxu0
        %v5823 = vadd.f32 %v5782, %v5822
        %v5824 = vpop.f32.mrb[0].mxu0
        %v5825 = vpop.f32.mrb[0].mxu0
        %5826 = vdwg.mxu0
        %5827 = vmatprep.subr.bf16.mxu0 %v4601
        %5828 = vmatpush1.bf16.msra.mxu0 %v4600
        %5829 = vmatprep.subr.bf16.mxu0 %v4609
        %5830 = vmatpush1.bf16.msra.mxu0 %v4608
        %5831 = vmatprep.subr.bf16.mxu0 %v4617
        %5832 = vmatpush1.bf16.msra.mxu0 %v4616
        %5833 = vmatprep.subr.bf16.mxu0 %v4625
        %5834 = vmatpush1.bf16.msra.mxu0 %v4624
        %5835 = vmatprep.subr.bf16.mxu0 %v4633
        %5836 = vmatpush1.bf16.msra.mxu0 %v4632
        %5837 = vmatprep.subr.bf16.mxu0 %v4641
        %5838 = vmatpush1.bf16.msra.mxu0 %v4640
        %5839 = vmatprep.subr.bf16.mxu0 %v4649
        %5840 = vmatpush1.bf16.msra.mxu0 %v4648
        %5841 = vmatprep.subr.bf16.mxu0 %v4657
        %5842 = vmatpush1.bf16.msra.mxu0 %v4656
        %5843 = vmatprep.subr.bf16.mxu0 %v4665
        %5844 = vmatpush1.bf16.msra.mxu0 %v4664
        %5845 = vmatprep.subr.bf16.mxu0 %v4673
        %5846 = vmatpush1.bf16.msra.mxu0 %v4672
        %5847 = vmatprep.subr.bf16.mxu0 %v4681
        %5848 = vmatpush1.bf16.msra.mxu0 %v4680
        %5849 = vmatprep.subr.bf16.mxu0 %v4689
        %5850 = vmatpush1.bf16.msra.mxu0 %v4688
        %5851 = vmatprep.subr.bf16.mxu0 %v4697
        %5852 = vmatpush1.bf16.msra.mxu0 %v4696
        %5853 = vmatprep.subr.bf16.mxu0 %v4705
        %5854 = vmatpush1.bf16.msra.mxu0 %v4704
        %5855 = vmatprep.subr.bf16.mxu0 %v4713
        %5856 = vmatpush1.bf16.msra.mxu0 %v4712
        %5857 = vmatprep.subr.bf16.mxu0 %v4721
        %5858 = vmatpush1.bf16.msra.mxu0 %v4720
        %5859 = vmatprep.mubr.bf16.mxu0 %v2542
        %5860 = vmatmul.mubr.bf16.gmra.mrb[0].mxu0 %v2541
        %v5861 = vpop.f32.mrb[0].mxu0
        %v5862 = vadd.f32 %v5634, %v5861
        %v5863 = vpop.f32.mrb[0].mxu0
        %v5864 = vadd.f32 %v5638, %v5863
        %v5865 = vpop.f32.mrb[0].mxu0
        %v5866 = vpop.f32.mrb[0].mxu0
        %5867 = vdwg.mxu0
        %5868 = vmatprep.subr.bf16.mxu0 %v4729
        %5869 = vmatpush1.bf16.msra.mxu0 %v4728
        %5870 = vmatprep.subr.bf16.mxu0 %v4737
        %5871 = vmatpush1.bf16.msra.mxu0 %v4736
        %5872 = vmatprep.subr.bf16.mxu0 %v4745
        %5873 = vmatpush1.bf16.msra.mxu0 %v4744
        %5874 = vmatprep.subr.bf16.mxu0 %v4753
        %5875 = vmatpush1.bf16.msra.mxu0 %v4752
        %5876 = vmatprep.subr.bf16.mxu0 %v4761
        %5877 = vmatpush1.bf16.msra.mxu0 %v4760
        %5878 = vmatprep.subr.bf16.mxu0 %v4769
        %5879 = vmatpush1.bf16.msra.mxu0 %v4768
        %5880 = vmatprep.subr.bf16.mxu0 %v4777
        %5881 = vmatpush1.bf16.msra.mxu0 %v4776
        %5882 = vmatprep.subr.bf16.mxu0 %v4785
        %5883 = vmatpush1.bf16.msra.mxu0 %v4784
        %5884 = vmatprep.subr.bf16.mxu0 %v4793
        %5885 = vmatpush1.bf16.msra.mxu0 %v4792
        %5886 = vmatprep.subr.bf16.mxu0 %v4801
        %5887 = vmatpush1.bf16.msra.mxu0 %v4800
        %5888 = vmatprep.subr.bf16.mxu0 %v4809
        %5889 = vmatpush1.bf16.msra.mxu0 %v4808
        %5890 = vmatprep.subr.bf16.mxu0 %v4817
        %5891 = vmatpush1.bf16.msra.mxu0 %v4816
        %5892 = vmatprep.subr.bf16.mxu0 %v4825
        %5893 = vmatpush1.bf16.msra.mxu0 %v4824
        %5894 = vmatprep.subr.bf16.mxu0 %v4833
        %5895 = vmatpush1.bf16.msra.mxu0 %v4832
        %5896 = vmatprep.subr.bf16.mxu0 %v4841
        %5897 = vmatpush1.bf16.msra.mxu0 %v4840
        %5898 = vmatprep.subr.bf16.mxu0 %v4849
        %5899 = vmatpush1.bf16.msra.mxu0 %v4848
        %5900 = vmatprep.mubr.bf16.mxu0 %v2544
        %5901 = vmatmul.mubr.bf16.gmra.mrb[0].mxu0 %v2543
        %v5902 = vpop.f32.mrb[0].mxu0
        %v5903 = vadd.f32 %v5862, %v5902
        %v5904 = vpop.f32.mrb[0].mxu0
        %v5905 = vadd.f32 %v5864, %v5904
        %v5906 = vpop.f32.mrb[0].mxu0
        %v5907 = vpop.f32.mrb[0].mxu0
        %5908 = vdwg.mxu0
        %5909 = vmatprep.subr.bf16.mxu0 %v4857
        %5910 = vmatpush1.bf16.msra.mxu0 %v4856
        %5911 = vmatprep.subr.bf16.mxu0 %v4865
        %5912 = vmatpush1.bf16.msra.mxu0 %v4864
        %5913 = vmatprep.subr.bf16.mxu0 %v4873
        %5914 = vmatpush1.bf16.msra.mxu0 %v4872
        %5915 = vmatprep.subr.bf16.mxu0 %v4881
        %5916 = vmatpush1.bf16.msra.mxu0 %v4880
        %5917 = vmatprep.subr.bf16.mxu0 %v4889
        %5918 = vmatpush1.bf16.msra.mxu0 %v4888
        %5919 = vmatprep.subr.bf16.mxu0 %v4897
        %5920 = vmatpush1.bf16.msra.mxu0 %v4896
        %5921 = vmatprep.subr.bf16.mxu0 %v4905
        %5922 = vmatpush1.bf16.msra.mxu0 %v4904
        %5923 = vmatprep.subr.bf16.mxu0 %v4913
        %5924 = vmatpush1.bf16.msra.mxu0 %v4912
        %5925 = vmatprep.subr.bf16.mxu0 %v4921
        %5926 = vmatpush1.bf16.msra.mxu0 %v4920
        %5927 = vmatprep.subr.bf16.mxu0 %v4929
        %5928 = vmatpush1.bf16.msra.mxu0 %v4928
        %5929 = vmatprep.subr.bf16.mxu0 %v4937
        %5930 = vmatpush1.bf16.msra.mxu0 %v4936
        %5931 = vmatprep.subr.bf16.mxu0 %v4945
        %5932 = vmatpush1.bf16.msra.mxu0 %v4944
        %5933 = vmatprep.subr.bf16.mxu0 %v4953
        %5934 = vmatpush1.bf16.msra.mxu0 %v4952
        %5935 = vmatprep.subr.bf16.mxu0 %v4961
        %5936 = vmatpush1.bf16.msra.mxu0 %v4960
        %5937 = vmatprep.subr.bf16.mxu0 %v4969
        %5938 = vmatpush1.bf16.msra.mxu0 %v4968
        %5939 = vmatprep.subr.bf16.mxu0 %v4977
        %5940 = vmatpush1.bf16.msra.mxu0 %v4976
        %5941 = vmatprep.mubr.bf16.mxu0 %v2546
        %5942 = vmatmul.mubr.bf16.gmra.mrb[0].mxu0 %v2545
        %v5943 = vpop.f32.mrb[0].mxu0
        %v5944 = vadd.f32 %v5903, %v5943
        %v5945 = vpop.f32.mrb[0].mxu0
        %v5946 = vadd.f32 %v5905, %v5945
        %v5947 = vpop.f32.mrb[0].mxu0
        %v5948 = vpop.f32.mrb[0].mxu0
        %5949 = vdwg.mxu0
        %5950 = vmatprep.subr.bf16.mxu0 %v4985
        %5951 = vmatpush1.bf16.msra.mxu0 %v4984
        %5952 = vmatprep.subr.bf16.mxu0 %v4993
        %5953 = vmatpush1.bf16.msra.mxu0 %v4992
        %5954 = vmatprep.subr.bf16.mxu0 %v5001
        %5955 = vmatpush1.bf16.msra.mxu0 %v5000
        %5956 = vmatprep.subr.bf16.mxu0 %v5009
        %5957 = vmatpush1.bf16.msra.mxu0 %v5008
        %5958 = vmatprep.subr.bf16.mxu0 %v5017
        %5959 = vmatpush1.bf16.msra.mxu0 %v5016
        %5960 = vmatprep.subr.bf16.mxu0 %v5025
        %5961 = vmatpush1.bf16.msra.mxu0 %v5024
        %5962 = vmatprep.subr.bf16.mxu0 %v5033
        %5963 = vmatpush1.bf16.msra.mxu0 %v5032
        %5964 = vmatprep.subr.bf16.mxu0 %v5041
        %5965 = vmatpush1.bf16.msra.mxu0 %v5040
        %5966 = vmatprep.subr.bf16.mxu0 %v5049
        %5967 = vmatpush1.bf16.msra.mxu0 %v5048
        %5968 = vmatprep.subr.bf16.mxu0 %v5057
        %5969 = vmatpush1.bf16.msra.mxu0 %v5056
        %5970 = vmatprep.subr.bf16.mxu0 %v5065
        %5971 = vmatpush1.bf16.msra.mxu0 %v5064
        %5972 = vmatprep.subr.bf16.mxu0 %v5073
        %5973 = vmatpush1.bf16.msra.mxu0 %v5072
        %5974 = vmatprep.subr.bf16.mxu0 %v5081
        %5975 = vmatpush1.bf16.msra.mxu0 %v5080
        %5976 = vmatprep.subr.bf16.mxu0 %v5089
        %5977 = vmatpush1.bf16.msra.mxu0 %v5088
        %5978 = vmatprep.subr.bf16.mxu0 %v5097
        %5979 = vmatpush1.bf16.msra.mxu0 %v5096
        %5980 = vmatprep.subr.bf16.mxu0 %v5105
        %5981 = vmatpush1.bf16.msra.mxu0 %v5104
        %5982 = vmatprep.mubr.bf16.mxu0 %v2548
        %5983 = vmatmul.mubr.bf16.gmra.mrb[0].mxu0 %v2547
        %v5984 = vpop.f32.mrb[0].mxu0
        %v5985 = vadd.f32 %v5944, %v5984
        %v5986 = vpop.f32.mrb[0].mxu0
        %v5987 = vadd.f32 %v5946, %v5986
        %v5988 = vpop.f32.mrb[0].mxu0
        %v5989 = vpop.f32.mrb[0].mxu0
        %5990 = vdwg.mxu0
        %5991 = vmatprep.subr.bf16.mxu0 %v4603
        %5992 = vmatpush1.bf16.msra.mxu0 %v4602
        %5993 = vmatprep.subr.bf16.mxu0 %v4611
        %5994 = vmatpush1.bf16.msra.mxu0 %v4610
        %5995 = vmatprep.subr.bf16.mxu0 %v4619
        %5996 = vmatpush1.bf16.msra.mxu0 %v4618
        %5997 = vmatprep.subr.bf16.mxu0 %v4627
        %5998 = vmatpush1.bf16.msra.mxu0 %v4626
        %5999 = vmatprep.subr.bf16.mxu0 %v4635
        %6000 = vmatpush1.bf16.msra.mxu0 %v4634
        %6001 = vmatprep.subr.bf16.mxu0 %v4643
        %6002 = vmatpush1.bf16.msra.mxu0 %v4642
        %6003 = vmatprep.subr.bf16.mxu0 %v4651
        %6004 = vmatpush1.bf16.msra.mxu0 %v4650
        %6005 = vmatprep.subr.bf16.mxu0 %v4659
        %6006 = vmatpush1.bf16.msra.mxu0 %v4658
        %6007 = vmatprep.subr.bf16.mxu0 %v4667
        %6008 = vmatpush1.bf16.msra.mxu0 %v4666
        %6009 = vmatprep.subr.bf16.mxu0 %v4675
        %6010 = vmatpush1.bf16.msra.mxu0 %v4674
        %6011 = vmatprep.subr.bf16.mxu0 %v4683
        %6012 = vmatpush1.bf16.msra.mxu0 %v4682
        %6013 = vmatprep.subr.bf16.mxu0 %v4691
        %6014 = vmatpush1.bf16.msra.mxu0 %v4690
        %6015 = vmatprep.subr.bf16.mxu0 %v4699
        %6016 = vmatpush1.bf16.msra.mxu0 %v4698
        %6017 = vmatprep.subr.bf16.mxu0 %v4707
        %6018 = vmatpush1.bf16.msra.mxu0 %v4706
        %6019 = vmatprep.subr.bf16.mxu0 %v4715
        %6020 = vmatpush1.bf16.msra.mxu0 %v4714
        %6021 = vmatprep.subr.bf16.mxu0 %v4723
        %6022 = vmatpush1.bf16.msra.mxu0 %v4722
        %6023 = vmatprep.mubr.bf16.mxu0 %v2542
        %6024 = vmatmul.mubr.bf16.gmra.mrb[0].mxu0 %v2541
        %v6025 = vpop.f32.mrb[0].mxu0
        %v6026 = vadd.f32 %v5642, %v6025
        %v6027 = vpop.f32.mrb[0].mxu0
        %v6028 = vadd.f32 %v5646, %v6027
        %v6029 = vpop.f32.mrb[0].mxu0
        %v6030 = vpop.f32.mrb[0].mxu0
        %6031 = vdwg.mxu0
        %6032 = vmatprep.subr.bf16.mxu0 %v4731
        %6033 = vmatpush1.bf16.msra.mxu0 %v4730
        %6034 = vmatprep.subr.bf16.mxu0 %v4739
        %6035 = vmatpush1.bf16.msra.mxu0 %v4738
        %6036 = vmatprep.subr.bf16.mxu0 %v4747
        %6037 = vmatpush1.bf16.msra.mxu0 %v4746
        %6038 = vmatprep.subr.bf16.mxu0 %v4755
        %6039 = vmatpush1.bf16.msra.mxu0 %v4754
        %6040 = vmatprep.subr.bf16.mxu0 %v4763
        %6041 = vmatpush1.bf16.msra.mxu0 %v4762
        %6042 = vmatprep.subr.bf16.mxu0 %v4771
        %6043 = vmatpush1.bf16.msra.mxu0 %v4770
        %6044 = vmatprep.subr.bf16.mxu0 %v4779
        %6045 = vmatpush1.bf16.msra.mxu0 %v4778
        %6046 = vmatprep.subr.bf16.mxu0 %v4787
        %6047 = vmatpush1.bf16.msra.mxu0 %v4786
        %6048 = vmatprep.subr.bf16.mxu0 %v4795
        %6049 = vmatpush1.bf16.msra.mxu0 %v4794
        %6050 = vmatprep.subr.bf16.mxu0 %v4803
        %6051 = vmatpush1.bf16.msra.mxu0 %v4802
        %6052 = vmatprep.subr.bf16.mxu0 %v4811
        %6053 = vmatpush1.bf16.msra.mxu0 %v4810
        %6054 = vmatprep.subr.bf16.mxu0 %v4819
        %6055 = vmatpush1.bf16.msra.mxu0 %v4818
        %6056 = vmatprep.subr.bf16.mxu0 %v4827
        %6057 = vmatpush1.bf16.msra.mxu0 %v4826
        %6058 = vmatprep.subr.bf16.mxu0 %v4835
        %6059 = vmatpush1.bf16.msra.mxu0 %v4834
        %6060 = vmatprep.subr.bf16.mxu0 %v4843
        %6061 = vmatpush1.bf16.msra.mxu0 %v4842
        %6062 = vmatprep.subr.bf16.mxu0 %v4851
        %6063 = vmatpush1.bf16.msra.mxu0 %v4850
        %6064 = vmatprep.mubr.bf16.mxu0 %v2544
        %6065 = vmatmul.mubr.bf16.gmra.mrb[0].mxu0 %v2543
        %v6066 = vpop.f32.mrb[0].mxu0
        %v6067 = vadd.f32 %v6026, %v6066
        %v6068 = vpop.f32.mrb[0].mxu0
        %v6069 = vadd.f32 %v6028, %v6068
        %v6070 = vpop.f32.mrb[0].mxu0
        %v6071 = vpop.f32.mrb[0].mxu0
        %6072 = vdwg.mxu0
        %6073 = vmatprep.subr.bf16.mxu0 %v4859
        %6074 = vmatpush1.bf16.msra.mxu0 %v4858
        %6075 = vmatprep.subr.bf16.mxu0 %v4867
        %6076 = vmatpush1.bf16.msra.mxu0 %v4866
        %6077 = vmatprep.subr.bf16.mxu0 %v4875
        %6078 = vmatpush1.bf16.msra.mxu0 %v4874
        %6079 = vmatprep.subr.bf16.mxu0 %v4883
        %6080 = vmatpush1.bf16.msra.mxu0 %v4882
        %6081 = vmatprep.subr.bf16.mxu0 %v4891
        %6082 = vmatpush1.bf16.msra.mxu0 %v4890
        %6083 = vmatprep.subr.bf16.mxu0 %v4899
        %6084 = vmatpush1.bf16.msra.mxu0 %v4898
        %6085 = vmatprep.subr.bf16.mxu0 %v4907
        %6086 = vmatpush1.bf16.msra.mxu0 %v4906
        %6087 = vmatprep.subr.bf16.mxu0 %v4915
        %6088 = vmatpush1.bf16.msra.mxu0 %v4914
        %6089 = vmatprep.subr.bf16.mxu0 %v4923
        %6090 = vmatpush1.bf16.msra.mxu0 %v4922
        %6091 = vmatprep.subr.bf16.mxu0 %v4931
        %6092 = vmatpush1.bf16.msra.mxu0 %v4930
        %6093 = vmatprep.subr.bf16.mxu0 %v4939
        %6094 = vmatpush1.bf16.msra.mxu0 %v4938
        %6095 = vmatprep.subr.bf16.mxu0 %v4947
        %6096 = vmatpush1.bf16.msra.mxu0 %v4946
        %6097 = vmatprep.subr.bf16.mxu0 %v4955
        %6098 = vmatpush1.bf16.msra.mxu0 %v4954
        %6099 = vmatprep.subr.bf16.mxu0 %v4963
        %6100 = vmatpush1.bf16.msra.mxu0 %v4962
        %6101 = vmatprep.subr.bf16.mxu0 %v4971
        %6102 = vmatpush1.bf16.msra.mxu0 %v4970
        %6103 = vmatprep.subr.bf16.mxu0 %v4979
        %6104 = vmatpush1.bf16.msra.mxu0 %v4978
        %6105 = vmatprep.mubr.bf16.mxu0 %v2546
        %6106 = vmatmul.mubr.bf16.gmra.mrb[0].mxu0 %v2545
        %v6107 = vpop.f32.mrb[0].mxu0
        %v6108 = vadd.f32 %v6067, %v6107
        %v6109 = vpop.f32.mrb[0].mxu0
        %v6110 = vadd.f32 %v6069, %v6109
        %v6111 = vpop.f32.mrb[0].mxu0
        %v6112 = vpop.f32.mrb[0].mxu0
        %6113 = vdwg.mxu0
        %6114 = vmatprep.subr.bf16.mxu0 %v4987
        %6115 = vmatpush1.bf16.msra.mxu0 %v4986
        %6116 = vmatprep.subr.bf16.mxu0 %v4995
        %6117 = vmatpush1.bf16.msra.mxu0 %v4994
        %6118 = vmatprep.subr.bf16.mxu0 %v5003
        %6119 = vmatpush1.bf16.msra.mxu0 %v5002
        %6120 = vmatprep.subr.bf16.mxu0 %v5011
        %6121 = vmatpush1.bf16.msra.mxu0 %v5010
        %6122 = vmatprep.subr.bf16.mxu0 %v5019
        %6123 = vmatpush1.bf16.msra.mxu0 %v5018
        %6124 = vmatprep.subr.bf16.mxu0 %v5027
        %6125 = vmatpush1.bf16.msra.mxu0 %v5026
        %6126 = vmatprep.subr.bf16.mxu0 %v5035
        %6127 = vmatpush1.bf16.msra.mxu0 %v5034
        %6128 = vmatprep.subr.bf16.mxu0 %v5043
        %6129 = vmatpush1.bf16.msra.mxu0 %v5042
        %6130 = vmatprep.subr.bf16.mxu0 %v5051
        %6131 = vmatpush1.bf16.msra.mxu0 %v5050
        %6132 = vmatprep.subr.bf16.mxu0 %v5059
        %6133 = vmatpush1.bf16.msra.mxu0 %v5058
        %6134 = vmatprep.subr.bf16.mxu0 %v5067
        %6135 = vmatpush1.bf16.msra.mxu0 %v5066
        %6136 = vmatprep.subr.bf16.mxu0 %v5075
        %6137 = vmatpush1.bf16.msra.mxu0 %v5074
        %6138 = vmatprep.subr.bf16.mxu0 %v5083
        %6139 = vmatpush1.bf16.msra.mxu0 %v5082
        %6140 = vmatprep.subr.bf16.mxu0 %v5091
        %6141 = vmatpush1.bf16.msra.mxu0 %v5090
        %6142 = vmatprep.subr.bf16.mxu0 %v5099
        %6143 = vmatpush1.bf16.msra.mxu0 %v5098
        %6144 = vmatprep.subr.bf16.mxu0 %v5107
        %6145 = vmatpush1.bf16.msra.mxu0 %v5106
        %6146 = vmatprep.mubr.bf16.mxu0 %v2548
        %6147 = vmatmul.mubr.bf16.gmra.mrb[0].mxu0 %v2547
        %v6148 = vpop.f32.mrb[0].mxu0
        %v6149 = vadd.f32 %v6108, %v6148
        %v6150 = vpop.f32.mrb[0].mxu0
        %v6151 = vadd.f32 %v6110, %v6150
        %v6152 = vpop.f32.mrb[0].mxu0
        %v6153 = vpop.f32.mrb[0].mxu0
        %6154 = vdwg.mxu0
        %6155 = vmatprep.subr.bf16.mxu0 %v4605
        %6156 = vmatpush1.bf16.msra.mxu0 %v4604
        %6157 = vmatprep.subr.bf16.mxu0 %v4613
        %6158 = vmatpush1.bf16.msra.mxu0 %v4612
        %6159 = vmatprep.subr.bf16.mxu0 %v4621
        %6160 = vmatpush1.bf16.msra.mxu0 %v4620
        %6161 = vmatprep.subr.bf16.mxu0 %v4629
        %6162 = vmatpush1.bf16.msra.mxu0 %v4628
        %6163 = vmatprep.subr.bf16.mxu0 %v4637
        %6164 = vmatpush1.bf16.msra.mxu0 %v4636
        %6165 = vmatprep.subr.bf16.mxu0 %v4645
        %6166 = vmatpush1.bf16.msra.mxu0 %v4644
        %6167 = vmatprep.subr.bf16.mxu0 %v4653
        %6168 = vmatpush1.bf16.msra.mxu0 %v4652
        %6169 = vmatprep.subr.bf16.mxu0 %v4661
        %6170 = vmatpush1.bf16.msra.mxu0 %v4660
        %6171 = vmatprep.subr.bf16.mxu0 %v4669
        %6172 = vmatpush1.bf16.msra.mxu0 %v4668
        %6173 = vmatprep.subr.bf16.mxu0 %v4677
        %6174 = vmatpush1.bf16.msra.mxu0 %v4676
        %6175 = vmatprep.subr.bf16.mxu0 %v4685
        %6176 = vmatpush1.bf16.msra.mxu0 %v4684
        %6177 = vmatprep.subr.bf16.mxu0 %v4693
        %6178 = vmatpush1.bf16.msra.mxu0 %v4692
        %6179 = vmatprep.subr.bf16.mxu0 %v4701
        %6180 = vmatpush1.bf16.msra.mxu0 %v4700
        %6181 = vmatprep.subr.bf16.mxu0 %v4709
        %6182 = vmatpush1.bf16.msra.mxu0 %v4708
        %6183 = vmatprep.subr.bf16.mxu0 %v4717
        %6184 = vmatpush1.bf16.msra.mxu0 %v4716
        %6185 = vmatprep.subr.bf16.mxu0 %v4725
        %6186 = vmatpush1.bf16.msra.mxu0 %v4724
        %6187 = vmatprep.mubr.bf16.mxu0 %v2542
        %6188 = vmatmul.mubr.bf16.gmra.mrb[0].mxu0 %v2541
        %v6189 = vpop.f32.mrb[0].mxu0
        %v6190 = vadd.f32 %v5650, %v6189
        %v6191 = vpop.f32.mrb[0].mxu0
        %v6192 = vadd.f32 %v5654, %v6191
        %v6193 = vpop.f32.mrb[0].mxu0
        %v6194 = vpop.f32.mrb[0].mxu0
        %6195 = vdwg.mxu0
        %6196 = vmatprep.subr.bf16.mxu0 %v4733
        %6197 = vmatpush1.bf16.msra.mxu0 %v4732
        %6198 = vmatprep.subr.bf16.mxu0 %v4741
        %6199 = vmatpush1.bf16.msra.mxu0 %v4740
        %6200 = vmatprep.subr.bf16.mxu0 %v4749
        %6201 = vmatpush1.bf16.msra.mxu0 %v4748
        %6202 = vmatprep.subr.bf16.mxu0 %v4757
        %6203 = vmatpush1.bf16.msra.mxu0 %v4756
        %6204 = vmatprep.subr.bf16.mxu0 %v4765
        %6205 = vmatpush1.bf16.msra.mxu0 %v4764
        %6206 = vmatprep.subr.bf16.mxu0 %v4773
        %6207 = vmatpush1.bf16.msra.mxu0 %v4772
        %6208 = vmatprep.subr.bf16.mxu0 %v4781
        %6209 = vmatpush1.bf16.msra.mxu0 %v4780
        %6210 = vmatprep.subr.bf16.mxu0 %v4789
        %6211 = vmatpush1.bf16.msra.mxu0 %v4788
        %6212 = vmatprep.subr.bf16.mxu0 %v4797
        %6213 = vmatpush1.bf16.msra.mxu0 %v4796
        %6214 = vmatprep.subr.bf16.mxu0 %v4805
        %6215 = vmatpush1.bf16.msra.mxu0 %v4804
        %6216 = vmatprep.subr.bf16.mxu0 %v4813
        %6217 = vmatpush1.bf16.msra.mxu0 %v4812
        %6218 = vmatprep.subr.bf16.mxu0 %v4821
        %6219 = vmatpush1.bf16.msra.mxu0 %v4820
        %6220 = vmatprep.subr.bf16.mxu0 %v4829
        %6221 = vmatpush1.bf16.msra.mxu0 %v4828
        %6222 = vmatprep.subr.bf16.mxu0 %v4837
        %6223 = vmatpush1.bf16.msra.mxu0 %v4836
        %6224 = vmatprep.subr.bf16.mxu0 %v4845
        %6225 = vmatpush1.bf16.msra.mxu0 %v4844
        %6226 = vmatprep.subr.bf16.mxu0 %v4853
        %6227 = vmatpush1.bf16.msra.mxu0 %v4852
        %6228 = vmatprep.mubr.bf16.mxu0 %v2544
        %6229 = vmatmul.mubr.bf16.gmra.mrb[0].mxu0 %v2543
        %v6230 = vpop.f32.mrb[0].mxu0
        %v6231 = vadd.f32 %v6190, %v6230
        %v6232 = vpop.f32.mrb[0].mxu0
        %v6233 = vadd.f32 %v6192, %v6232
        %v6234 = vpop.f32.mrb[0].mxu0
        %v6235 = vpop.f32.mrb[0].mxu0
        %6236 = vdwg.mxu0
        %6237 = vmatprep.subr.bf16.mxu0 %v4861
        %6238 = vmatpush1.bf16.msra.mxu0 %v4860
        %6239 = vmatprep.subr.bf16.mxu0 %v4869
        %6240 = vmatpush1.bf16.msra.mxu0 %v4868
        %6241 = vmatprep.subr.bf16.mxu0 %v4877
        %6242 = vmatpush1.bf16.msra.mxu0 %v4876
        %6243 = vmatprep.subr.bf16.mxu0 %v4885
        %6244 = vmatpush1.bf16.msra.mxu0 %v4884
        %6245 = vmatprep.subr.bf16.mxu0 %v4893
        %6246 = vmatpush1.bf16.msra.mxu0 %v4892
        %6247 = vmatprep.subr.bf16.mxu0 %v4901
        %6248 = vmatpush1.bf16.msra.mxu0 %v4900
        %6249 = vmatprep.subr.bf16.mxu0 %v4909
        %6250 = vmatpush1.bf16.msra.mxu0 %v4908
        %6251 = vmatprep.subr.bf16.mxu0 %v4917
        %6252 = vmatpush1.bf16.msra.mxu0 %v4916
        %6253 = vmatprep.subr.bf16.mxu0 %v4925
        %6254 = vmatpush1.bf16.msra.mxu0 %v4924
        %6255 = vmatprep.subr.bf16.mxu0 %v4933
        %6256 = vmatpush1.bf16.msra.mxu0 %v4932
        %6257 = vmatprep.subr.bf16.mxu0 %v4941
        %6258 = vmatpush1.bf16.msra.mxu0 %v4940
        %6259 = vmatprep.subr.bf16.mxu0 %v4949
        %6260 = vmatpush1.bf16.msra.mxu0 %v4948
        %6261 = vmatprep.subr.bf16.mxu0 %v4957
        %6262 = vmatpush1.bf16.msra.mxu0 %v4956
        %6263 = vmatprep.subr.bf16.mxu0 %v4965
        %6264 = vmatpush1.bf16.msra.mxu0 %v4964
        %6265 = vmatprep.subr.bf16.mxu0 %v4973
        %6266 = vmatpush1.bf16.msra.mxu0 %v4972
        %6267 = vmatprep.subr.bf16.mxu0 %v4981
        %6268 = vmatpush1.bf16.msra.mxu0 %v4980
        %6269 = vmatprep.mubr.bf16.mxu0 %v2546
        %6270 = vmatmul.mubr.bf16.gmra.mrb[0].mxu0 %v2545
        %v6271 = vpop.f32.mrb[0].mxu0
        %v6272 = vadd.f32 %v6231, %v6271
        %v6273 = vpop.f32.mrb[0].mxu0
        %v6274 = vadd.f32 %v6233, %v6273
        %v6275 = vpop.f32.mrb[0].mxu0
        %v6276 = vpop.f32.mrb[0].mxu0
        %6277 = vdwg.mxu0
        %6278 = vmatprep.subr.bf16.mxu0 %v4989
        %6279 = vmatpush1.bf16.msra.mxu0 %v4988
        %6280 = vmatprep.subr.bf16.mxu0 %v4997
        %6281 = vmatpush1.bf16.msra.mxu0 %v4996
        %6282 = vmatprep.subr.bf16.mxu0 %v5005
        %6283 = vmatpush1.bf16.msra.mxu0 %v5004
        %6284 = vmatprep.subr.bf16.mxu0 %v5013
        %6285 = vmatpush1.bf16.msra.mxu0 %v5012
        %6286 = vmatprep.subr.bf16.mxu0 %v5021
        %6287 = vmatpush1.bf16.msra.mxu0 %v5020
        %6288 = vmatprep.subr.bf16.mxu0 %v5029
        %6289 = vmatpush1.bf16.msra.mxu0 %v5028
        %6290 = vmatprep.subr.bf16.mxu0 %v5037
        %6291 = vmatpush1.bf16.msra.mxu0 %v5036
        %6292 = vmatprep.subr.bf16.mxu0 %v5045
        %6293 = vmatpush1.bf16.msra.mxu0 %v5044
        %6294 = vmatprep.subr.bf16.mxu0 %v5053
        %6295 = vmatpush1.bf16.msra.mxu0 %v5052
        %6296 = vmatprep.subr.bf16.mxu0 %v5061
        %6297 = vmatpush1.bf16.msra.mxu0 %v5060
        %6298 = vmatprep.subr.bf16.mxu0 %v5069
        %6299 = vmatpush1.bf16.msra.mxu0 %v5068
        %6300 = vmatprep.subr.bf16.mxu0 %v5077
        %6301 = vmatpush1.bf16.msra.mxu0 %v5076
        %6302 = vmatprep.subr.bf16.mxu0 %v5085
        %6303 = vmatpush1.bf16.msra.mxu0 %v5084
        %6304 = vmatprep.subr.bf16.mxu0 %v5093
        %6305 = vmatpush1.bf16.msra.mxu0 %v5092
        %6306 = vmatprep.subr.bf16.mxu0 %v5101
        %6307 = vmatpush1.bf16.msra.mxu0 %v5100
        %6308 = vmatprep.subr.bf16.mxu0 %v5109
        %6309 = vmatpush1.bf16.msra.mxu0 %v5108
        %6310 = vmatprep.mubr.bf16.mxu0 %v2548
        %6311 = vmatmul.mubr.bf16.gmra.mrb[0].mxu0 %v2547
        %v6312 = vpop.f32.mrb[0].mxu0
        %v6313 = vadd.f32 %v6272, %v6312
        %v6314 = vpop.f32.mrb[0].mxu0
        %v6315 = vadd.f32 %v6274, %v6314
        %v6316 = vpop.f32.mrb[0].mxu0
        %v6317 = vpop.f32.mrb[0].mxu0
        %6318 = vdwg.mxu0
        %v6319 = vmax.f32 %v5821, 0.0
        %v6320 = vmax.f32 %v5823, 0.0
        %v6321 = vmax.f32 %v5985, 0.0
        %v6322 = vmax.f32 %v5987, 0.0
        %v6323 = vmax.f32 %v6149, 0.0
        %v6324 = vmax.f32 %v6151, 0.0
        %v6325 = vmax.f32 %v6313, 0.0
        %v6326 = vmax.f32 %v6315, 0.0
        %v6327 = vpack.c.bf16 %v6319, %v6319
        %v6328 = vpack.c.bf16 %v6320, %v6320
        %v6329 = vpack.c.bf16 %v6321, %v6321
        %v6330 = vpack.c.bf16 %v6322, %v6322
        %v6331 = vpack.c.bf16 %v6323, %v6323
        %v6332 = vpack.c.bf16 %v6324, %v6324
        %v6333 = vpack.c.bf16 %v6325, %v6325
        %v6334 = vpack.c.bf16 %v6326, %v6326
        %v6335 = vld [vmem:[#allocation34] sm:$0xff]
        %v6336 = vld [vmem:[#allocation34 + $0x8] sm:$0xff]
        %v6337 = vld [vmem:[#allocation34 + $0x10] sm:$0xff]
        %v6338 = vld [vmem:[#allocation34 + $0x18] sm:$0xff]
        %v6339 = vld [vmem:[#allocation34 + $0x20] sm:$0xff]
        %v6340 = vld [vmem:[#allocation34 + $0x28] sm:$0xff]
        %v6341 = vld [vmem:[#allocation34 + $0x30] sm:$0xff]
        %v6342 = vld [vmem:[#allocation34 + $0x38] sm:$0xff]
        %v6343 = vld [vmem:[#allocation34 + $0x40] sm:$0xff]
        %v6344 = vld [vmem:[#allocation34 + $0x48] sm:$0xff]
        %v6345 = vld [vmem:[#allocation34 + $0x50] sm:$0xff]
        %v6346 = vld [vmem:[#allocation34 + $0x58] sm:$0xff]
        %v6347 = vld [vmem:[#allocation34 + $0x60] sm:$0xff]
        %v6348 = vld [vmem:[#allocation34 + $0x68] sm:$0xff]
        %v6349 = vld [vmem:[#allocation34 + $0x70] sm:$0xff]
        %v6350 = vld [vmem:[#allocation34 + $0x78] sm:$0xff]
        %v6351 = vld [vmem:[#allocation34 + $0x80] sm:$0xff]
        %v6352 = vld [vmem:[#allocation34 + $0x88] sm:$0xff]
        %v6353 = vld [vmem:[#allocation34 + $0x90] sm:$0xff]
        %v6354 = vld [vmem:[#allocation34 + $0x98] sm:$0xff]
        %v6355 = vld [vmem:[#allocation34 + $0xa0] sm:$0xff]
        %v6356 = vld [vmem:[#allocation34 + $0xa8] sm:$0xff]
        %v6357 = vld [vmem:[#allocation34 + $0xb0] sm:$0xff]
        %v6358 = vld [vmem:[#allocation34 + $0xb8] sm:$0xff]
        %v6359 = vld [vmem:[#allocation34 + $0xc0] sm:$0xff]
        %v6360 = vld [vmem:[#allocation34 + $0xc8] sm:$0xff]
        %v6361 = vld [vmem:[#allocation34 + $0xd0] sm:$0xff]
        %v6362 = vld [vmem:[#allocation34 + $0xd8] sm:$0xff]
        %v6363 = vld [vmem:[#allocation34 + $0xe0] sm:$0xff]
        %v6364 = vld [vmem:[#allocation34 + $0xe8] sm:$0xff]
        %v6365 = vld [vmem:[#allocation34 + $0xf0] sm:$0xff]
        %v6366 = vld [vmem:[#allocation34 + $0xf8] sm:$0xff]
        %v6367 = vld [vmem:[#allocation34 + $0x100] sm:$0xff]
        %v6368 = vld [vmem:[#allocation34 + $0x108] sm:$0xff]
        %v6369 = vld [vmem:[#allocation34 + $0x110] sm:$0xff]
        %v6370 = vld [vmem:[#allocation34 + $0x118] sm:$0xff]
        %v6371 = vld [vmem:[#allocation34 + $0x120] sm:$0xff]
        %v6372 = vld [vmem:[#allocation34 + $0x128] sm:$0xff]
        %v6373 = vld [vmem:[#allocation34 + $0x130] sm:$0xff]
        %v6374 = vld [vmem:[#allocation34 + $0x138] sm:$0xff]
        %v6375 = vld [vmem:[#allocation34 + $0x140] sm:$0xff]
        %v6376 = vld [vmem:[#allocation34 + $0x148] sm:$0xff]
        %v6377 = vld [vmem:[#allocation34 + $0x150] sm:$0xff]
        %v6378 = vld [vmem:[#allocation34 + $0x158] sm:$0xff]
        %v6379 = vld [vmem:[#allocation34 + $0x160] sm:$0xff]
        %v6380 = vld [vmem:[#allocation34 + $0x168] sm:$0xff]
        %v6381 = vld [vmem:[#allocation34 + $0x170] sm:$0xff]
        %v6382 = vld [vmem:[#allocation34 + $0x178] sm:$0xff]
        %v6383 = vld [vmem:[#allocation34 + $0x180] sm:$0xff]
        %v6384 = vld [vmem:[#allocation34 + $0x188] sm:$0xff]
        %v6385 = vld [vmem:[#allocation34 + $0x190] sm:$0xff]
        %v6386 = vld [vmem:[#allocation34 + $0x198] sm:$0xff]
        %v6387 = vld [vmem:[#allocation34 + $0x1a0] sm:$0xff]
        %v6388 = vld [vmem:[#allocation34 + $0x1a8] sm:$0xff]
        %v6389 = vld [vmem:[#allocation34 + $0x1b0] sm:$0xff]
        %v6390 = vld [vmem:[#allocation34 + $0x1b8] sm:$0xff]
        %v6391 = vld [vmem:[#allocation34 + $0x1c0] sm:$0xff]
        %v6392 = vld [vmem:[#allocation34 + $0x1c8] sm:$0xff]
        %v6393 = vld [vmem:[#allocation34 + $0x1d0] sm:$0xff]
        %v6394 = vld [vmem:[#allocation34 + $0x1d8] sm:$0xff]
        %v6395 = vld [vmem:[#allocation34 + $0x1e0] sm:$0xff]
        %v6396 = vld [vmem:[#allocation34 + $0x1e8] sm:$0xff]
        %v6397 = vld [vmem:[#allocation34 + $0x1f0] sm:$0xff]
        %v6398 = vld [vmem:[#allocation34 + $0x1f8] sm:$0xff]
        %v6399 = vld [vmem:[#allocation34 + $0x200] sm:$0xff]
        %v6400 = vld [vmem:[#allocation34 + $0x208] sm:$0xff]
        %v6401 = vld [vmem:[#allocation34 + $0x210] sm:$0xff]
        %v6402 = vld [vmem:[#allocation34 + $0x218] sm:$0xff]
        %v6403 = vld [vmem:[#allocation34 + $0x220] sm:$0xff]
        %v6404 = vld [vmem:[#allocation34 + $0x228] sm:$0xff]
        %v6405 = vld [vmem:[#allocation34 + $0x230] sm:$0xff]
        %v6406 = vld [vmem:[#allocation34 + $0x238] sm:$0xff]
        %v6407 = vld [vmem:[#allocation34 + $0x240] sm:$0xff]
        %v6408 = vld [vmem:[#allocation34 + $0x248] sm:$0xff]
        %v6409 = vld [vmem:[#allocation34 + $0x250] sm:$0xff]
        %v6410 = vld [vmem:[#allocation34 + $0x258] sm:$0xff]
        %v6411 = vld [vmem:[#allocation34 + $0x260] sm:$0xff]
        %v6412 = vld [vmem:[#allocation34 + $0x268] sm:$0xff]
        %v6413 = vld [vmem:[#allocation34 + $0x270] sm:$0xff]
        %v6414 = vld [vmem:[#allocation34 + $0x278] sm:$0xff]
        %v6415 = vld [vmem:[#allocation34 + $0x280] sm:$0xff]
        %v6416 = vld [vmem:[#allocation34 + $0x288] sm:$0xff]
        %v6417 = vld [vmem:[#allocation34 + $0x290] sm:$0xff]
        %v6418 = vld [vmem:[#allocation34 + $0x298] sm:$0xff]
        %v6419 = vld [vmem:[#allocation34 + $0x2a0] sm:$0xff]
        %v6420 = vld [vmem:[#allocation34 + $0x2a8] sm:$0xff]
        %v6421 = vld [vmem:[#allocation34 + $0x2b0] sm:$0xff]
        %v6422 = vld [vmem:[#allocation34 + $0x2b8] sm:$0xff]
        %v6423 = vld [vmem:[#allocation34 + $0x2c0] sm:$0xff]
        %v6424 = vld [vmem:[#allocation34 + $0x2c8] sm:$0xff]
        %v6425 = vld [vmem:[#allocation34 + $0x2d0] sm:$0xff]
        %v6426 = vld [vmem:[#allocation34 + $0x2d8] sm:$0xff]
        %v6427 = vld [vmem:[#allocation34 + $0x2e0] sm:$0xff]
        %v6428 = vld [vmem:[#allocation34 + $0x2e8] sm:$0xff]
        %v6429 = vld [vmem:[#allocation34 + $0x2f0] sm:$0xff]
        %v6430 = vld [vmem:[#allocation34 + $0x2f8] sm:$0xff]
        %v6431 = vld [vmem:[#allocation34 + $0x300] sm:$0xff]
        %v6432 = vld [vmem:[#allocation34 + $0x308] sm:$0xff]
        %v6433 = vld [vmem:[#allocation34 + $0x310] sm:$0xff]
        %v6434 = vld [vmem:[#allocation34 + $0x318] sm:$0xff]
        %v6435 = vld [vmem:[#allocation34 + $0x320] sm:$0xff]
        %v6436 = vld [vmem:[#allocation34 + $0x328] sm:$0xff]
        %v6437 = vld [vmem:[#allocation34 + $0x330] sm:$0xff]
        %v6438 = vld [vmem:[#allocation34 + $0x338] sm:$0xff]
        %v6439 = vld [vmem:[#allocation34 + $0x340] sm:$0xff]
        %v6440 = vld [vmem:[#allocation34 + $0x348] sm:$0xff]
        %v6441 = vld [vmem:[#allocation34 + $0x350] sm:$0xff]
        %v6442 = vld [vmem:[#allocation34 + $0x358] sm:$0xff]
        %v6443 = vld [vmem:[#allocation34 + $0x360] sm:$0xff]
        %v6444 = vld [vmem:[#allocation34 + $0x368] sm:$0xff]
        %v6445 = vld [vmem:[#allocation34 + $0x370] sm:$0xff]
        %v6446 = vld [vmem:[#allocation34 + $0x378] sm:$0xff]
        %v6447 = vld [vmem:[#allocation34 + $0x380] sm:$0xff]
        %v6448 = vld [vmem:[#allocation34 + $0x388] sm:$0xff]
        %v6449 = vld [vmem:[#allocation34 + $0x390] sm:$0xff]
        %v6450 = vld [vmem:[#allocation34 + $0x398] sm:$0xff]
        %v6451 = vld [vmem:[#allocation34 + $0x3a0] sm:$0xff]
        %v6452 = vld [vmem:[#allocation34 + $0x3a8] sm:$0xff]
        %v6453 = vld [vmem:[#allocation34 + $0x3b0] sm:$0xff]
        %v6454 = vld [vmem:[#allocation34 + $0x3b8] sm:$0xff]
        %v6455 = vld [vmem:[#allocation34 + $0x3c0] sm:$0xff]
        %v6456 = vld [vmem:[#allocation34 + $0x3c8] sm:$0xff]
        %v6457 = vld [vmem:[#allocation34 + $0x3d0] sm:$0xff]
        %v6458 = vld [vmem:[#allocation34 + $0x3d8] sm:$0xff]
        %v6459 = vld [vmem:[#allocation34 + $0x3e0] sm:$0xff]
        %v6460 = vld [vmem:[#allocation34 + $0x3e8] sm:$0xff]
        %v6461 = vld [vmem:[#allocation34 + $0x3f0] sm:$0xff]
        %v6462 = vld [vmem:[#allocation34 + $0x3f8] sm:$0xff]
        %v6463 = vld [vmem:[#allocation34 + $0x400] sm:$0xff]
        %v6464 = vld [vmem:[#allocation34 + $0x408] sm:$0xff]
        %v6465 = vld [vmem:[#allocation34 + $0x410] sm:$0xff]
        %v6466 = vld [vmem:[#allocation34 + $0x418] sm:$0xff]
        %v6467 = vld [vmem:[#allocation34 + $0x420] sm:$0xff]
        %v6468 = vld [vmem:[#allocation34 + $0x428] sm:$0xff]
        %v6469 = vld [vmem:[#allocation34 + $0x430] sm:$0xff]
        %v6470 = vld [vmem:[#allocation34 + $0x438] sm:$0xff]
        %v6471 = vld [vmem:[#allocation34 + $0x440] sm:$0xff]
        %v6472 = vld [vmem:[#allocation34 + $0x448] sm:$0xff]
        %v6473 = vld [vmem:[#allocation34 + $0x450] sm:$0xff]
        %v6474 = vld [vmem:[#allocation34 + $0x458] sm:$0xff]
        %v6475 = vld [vmem:[#allocation34 + $0x460] sm:$0xff]
        %v6476 = vld [vmem:[#allocation34 + $0x468] sm:$0xff]
        %v6477 = vld [vmem:[#allocation34 + $0x470] sm:$0xff]
        %v6478 = vld [vmem:[#allocation34 + $0x478] sm:$0xff]
        %v6479 = vld [vmem:[#allocation34 + $0x480] sm:$0xff]
        %v6480 = vld [vmem:[#allocation34 + $0x488] sm:$0xff]
        %v6481 = vld [vmem:[#allocation34 + $0x490] sm:$0xff]
        %v6482 = vld [vmem:[#allocation34 + $0x498] sm:$0xff]
        %v6483 = vld [vmem:[#allocation34 + $0x4a0] sm:$0xff]
        %v6484 = vld [vmem:[#allocation34 + $0x4a8] sm:$0xff]
        %v6485 = vld [vmem:[#allocation34 + $0x4b0] sm:$0xff]
        %v6486 = vld [vmem:[#allocation34 + $0x4b8] sm:$0xff]
        %v6487 = vld [vmem:[#allocation34 + $0x4c0] sm:$0xff]
        %v6488 = vld [vmem:[#allocation34 + $0x4c8] sm:$0xff]
        %v6489 = vld [vmem:[#allocation34 + $0x4d0] sm:$0xff]
        %v6490 = vld [vmem:[#allocation34 + $0x4d8] sm:$0xff]
        %v6491 = vld [vmem:[#allocation34 + $0x4e0] sm:$0xff]
        %v6492 = vld [vmem:[#allocation34 + $0x4e8] sm:$0xff]
        %v6493 = vld [vmem:[#allocation34 + $0x4f0] sm:$0xff]
        %v6494 = vld [vmem:[#allocation34 + $0x4f8] sm:$0xff]
        %v6495 = vld [vmem:[#allocation34 + $0x500] sm:$0xff]
        %v6496 = vld [vmem:[#allocation34 + $0x508] sm:$0xff]
        %v6497 = vld [vmem:[#allocation34 + $0x510] sm:$0xff]
        %v6498 = vld [vmem:[#allocation34 + $0x518] sm:$0xff]
        %v6499 = vld [vmem:[#allocation34 + $0x520] sm:$0xff]
        %v6500 = vld [vmem:[#allocation34 + $0x528] sm:$0xff]
        %v6501 = vld [vmem:[#allocation34 + $0x530] sm:$0xff]
        %v6502 = vld [vmem:[#allocation34 + $0x538] sm:$0xff]
        %v6503 = vld [vmem:[#allocation34 + $0x540] sm:$0xff]
        %v6504 = vld [vmem:[#allocation34 + $0x548] sm:$0xff]
        %v6505 = vld [vmem:[#allocation34 + $0x550] sm:$0xff]
        %v6506 = vld [vmem:[#allocation34 + $0x558] sm:$0xff]
        %v6507 = vld [vmem:[#allocation34 + $0x560] sm:$0xff]
        %v6508 = vld [vmem:[#allocation34 + $0x568] sm:$0xff]
        %v6509 = vld [vmem:[#allocation34 + $0x570] sm:$0xff]
        %v6510 = vld [vmem:[#allocation34 + $0x578] sm:$0xff]
        %v6511 = vld [vmem:[#allocation34 + $0x580] sm:$0xff]
        %v6512 = vld [vmem:[#allocation34 + $0x588] sm:$0xff]
        %v6513 = vld [vmem:[#allocation34 + $0x590] sm:$0xff]
        %v6514 = vld [vmem:[#allocation34 + $0x598] sm:$0xff]
        %v6515 = vld [vmem:[#allocation34 + $0x5a0] sm:$0xff]
        %v6516 = vld [vmem:[#allocation34 + $0x5a8] sm:$0xff]
        %v6517 = vld [vmem:[#allocation34 + $0x5b0] sm:$0xff]
        %v6518 = vld [vmem:[#allocation34 + $0x5b8] sm:$0xff]
        %v6519 = vld [vmem:[#allocation34 + $0x5c0] sm:$0xff]
        %v6520 = vld [vmem:[#allocation34 + $0x5c8] sm:$0xff]
        %v6521 = vld [vmem:[#allocation34 + $0x5d0] sm:$0xff]
        %v6522 = vld [vmem:[#allocation34 + $0x5d8] sm:$0xff]
        %v6523 = vld [vmem:[#allocation34 + $0x5e0] sm:$0xff]
        %v6524 = vld [vmem:[#allocation34 + $0x5e8] sm:$0xff]
        %v6525 = vld [vmem:[#allocation34 + $0x5f0] sm:$0xff]
        %v6526 = vld [vmem:[#allocation34 + $0x5f8] sm:$0xff]
        %v6527 = vld [vmem:[#allocation34 + $0x600] sm:$0xff]
        %v6528 = vld [vmem:[#allocation34 + $0x608] sm:$0xff]
        %v6529 = vld [vmem:[#allocation34 + $0x610] sm:$0xff]
        %v6530 = vld [vmem:[#allocation34 + $0x618] sm:$0xff]
        %v6531 = vld [vmem:[#allocation34 + $0x620] sm:$0xff]
        %v6532 = vld [vmem:[#allocation34 + $0x628] sm:$0xff]
        %v6533 = vld [vmem:[#allocation34 + $0x630] sm:$0xff]
        %v6534 = vld [vmem:[#allocation34 + $0x638] sm:$0xff]
        %v6535 = vld [vmem:[#allocation34 + $0x640] sm:$0xff]
        %v6536 = vld [vmem:[#allocation34 + $0x648] sm:$0xff]
        %v6537 = vld [vmem:[#allocation34 + $0x650] sm:$0xff]
        %v6538 = vld [vmem:[#allocation34 + $0x658] sm:$0xff]
        %v6539 = vld [vmem:[#allocation34 + $0x660] sm:$0xff]
        %v6540 = vld [vmem:[#allocation34 + $0x668] sm:$0xff]
        %v6541 = vld [vmem:[#allocation34 + $0x670] sm:$0xff]
        %v6542 = vld [vmem:[#allocation34 + $0x678] sm:$0xff]
        %v6543 = vld [vmem:[#allocation34 + $0x680] sm:$0xff]
        %v6544 = vld [vmem:[#allocation34 + $0x688] sm:$0xff]
        %v6545 = vld [vmem:[#allocation34 + $0x690] sm:$0xff]
        %v6546 = vld [vmem:[#allocation34 + $0x698] sm:$0xff]
        %v6547 = vld [vmem:[#allocation34 + $0x6a0] sm:$0xff]
        %v6548 = vld [vmem:[#allocation34 + $0x6a8] sm:$0xff]
        %v6549 = vld [vmem:[#allocation34 + $0x6b0] sm:$0xff]
        %v6550 = vld [vmem:[#allocation34 + $0x6b8] sm:$0xff]
        %v6551 = vld [vmem:[#allocation34 + $0x6c0] sm:$0xff]
        %v6552 = vld [vmem:[#allocation34 + $0x6c8] sm:$0xff]
        %v6553 = vld [vmem:[#allocation34 + $0x6d0] sm:$0xff]
        %v6554 = vld [vmem:[#allocation34 + $0x6d8] sm:$0xff]
        %v6555 = vld [vmem:[#allocation34 + $0x6e0] sm:$0xff]
        %v6556 = vld [vmem:[#allocation34 + $0x6e8] sm:$0xff]
        %v6557 = vld [vmem:[#allocation34 + $0x6f0] sm:$0xff]
        %v6558 = vld [vmem:[#allocation34 + $0x6f8] sm:$0xff]
        %v6559 = vld [vmem:[#allocation34 + $0x700] sm:$0xff]
        %v6560 = vld [vmem:[#allocation34 + $0x708] sm:$0xff]
        %v6561 = vld [vmem:[#allocation34 + $0x710] sm:$0xff]
        %v6562 = vld [vmem:[#allocation34 + $0x718] sm:$0xff]
        %v6563 = vld [vmem:[#allocation34 + $0x720] sm:$0xff]
        %v6564 = vld [vmem:[#allocation34 + $0x728] sm:$0xff]
        %v6565 = vld [vmem:[#allocation34 + $0x730] sm:$0xff]
        %v6566 = vld [vmem:[#allocation34 + $0x738] sm:$0xff]
        %v6567 = vld [vmem:[#allocation34 + $0x740] sm:$0xff]
        %v6568 = vld [vmem:[#allocation34 + $0x748] sm:$0xff]
        %v6569 = vld [vmem:[#allocation34 + $0x750] sm:$0xff]
        %v6570 = vld [vmem:[#allocation34 + $0x758] sm:$0xff]
        %v6571 = vld [vmem:[#allocation34 + $0x760] sm:$0xff]
        %v6572 = vld [vmem:[#allocation34 + $0x768] sm:$0xff]
        %v6573 = vld [vmem:[#allocation34 + $0x770] sm:$0xff]
        %v6574 = vld [vmem:[#allocation34 + $0x778] sm:$0xff]
        %v6575 = vld [vmem:[#allocation34 + $0x780] sm:$0xff]
        %v6576 = vld [vmem:[#allocation34 + $0x788] sm:$0xff]
        %v6577 = vld [vmem:[#allocation34 + $0x790] sm:$0xff]
        %v6578 = vld [vmem:[#allocation34 + $0x798] sm:$0xff]
        %v6579 = vld [vmem:[#allocation34 + $0x7a0] sm:$0xff]
        %v6580 = vld [vmem:[#allocation34 + $0x7a8] sm:$0xff]
        %v6581 = vld [vmem:[#allocation34 + $0x7b0] sm:$0xff]
        %v6582 = vld [vmem:[#allocation34 + $0x7b8] sm:$0xff]
        %v6583 = vld [vmem:[#allocation34 + $0x7c0] sm:$0xff]
        %v6584 = vld [vmem:[#allocation34 + $0x7c8] sm:$0xff]
        %v6585 = vld [vmem:[#allocation34 + $0x7d0] sm:$0xff]
        %v6586 = vld [vmem:[#allocation34 + $0x7d8] sm:$0xff]
        %v6587 = vld [vmem:[#allocation34 + $0x7e0] sm:$0xff]
        %v6588 = vld [vmem:[#allocation34 + $0x7e8] sm:$0xff]
        %v6589 = vld [vmem:[#allocation34 + $0x7f0] sm:$0xff]
        %v6590 = vld [vmem:[#allocation34 + $0x7f8] sm:$0xff]
        %v6591 = vld [vmem:[#allocation35] sm:$0xf]
        %v6848 = vunpack.c.l.b16 %v6335
        %v6849 = vunpack.c.h.b16 %v6335
        %v6850 = vunpack.c.l.b16 %v6336
        %v6851 = vunpack.c.h.b16 %v6336
        %v6852 = vunpack.c.l.b16 %v6337
        %v6853 = vunpack.c.h.b16 %v6337
        %v6854 = vunpack.c.l.b16 %v6338
        %v6855 = vunpack.c.h.b16 %v6338
        %v6856 = vunpack.c.l.b16 %v6339
        %v6857 = vunpack.c.h.b16 %v6339
        %v6858 = vunpack.c.l.b16 %v6340
        %v6859 = vunpack.c.h.b16 %v6340
        %v6860 = vunpack.c.l.b16 %v6341
        %v6861 = vunpack.c.h.b16 %v6341
        %v6862 = vunpack.c.l.b16 %v6342
        %v6863 = vunpack.c.h.b16 %v6342
        %v6864 = vunpack.c.l.b16 %v6343
        %v6865 = vunpack.c.h.b16 %v6343
        %v6866 = vunpack.c.l.b16 %v6344
        %v6867 = vunpack.c.h.b16 %v6344
        %v6868 = vunpack.c.l.b16 %v6345
        %v6869 = vunpack.c.h.b16 %v6345
        %v6870 = vunpack.c.l.b16 %v6346
        %v6871 = vunpack.c.h.b16 %v6346
        %v6872 = vunpack.c.l.b16 %v6347
        %v6873 = vunpack.c.h.b16 %v6347
        %v6874 = vunpack.c.l.b16 %v6348
        %v6875 = vunpack.c.h.b16 %v6348
        %v6876 = vunpack.c.l.b16 %v6349
        %v6877 = vunpack.c.h.b16 %v6349
        %v6878 = vunpack.c.l.b16 %v6350
        %v6879 = vunpack.c.h.b16 %v6350
        %v6880 = vunpack.c.l.b16 %v6351
        %v6881 = vunpack.c.h.b16 %v6351
        %v6882 = vunpack.c.l.b16 %v6352
        %v6883 = vunpack.c.h.b16 %v6352
        %v6884 = vunpack.c.l.b16 %v6353
        %v6885 = vunpack.c.h.b16 %v6353
        %v6886 = vunpack.c.l.b16 %v6354
        %v6887 = vunpack.c.h.b16 %v6354
        %v6888 = vunpack.c.l.b16 %v6355
        %v6889 = vunpack.c.h.b16 %v6355
        %v6890 = vunpack.c.l.b16 %v6356
        %v6891 = vunpack.c.h.b16 %v6356
        %v6892 = vunpack.c.l.b16 %v6357
        %v6893 = vunpack.c.h.b16 %v6357
        %v6894 = vunpack.c.l.b16 %v6358
        %v6895 = vunpack.c.h.b16 %v6358
        %v6896 = vunpack.c.l.b16 %v6359
        %v6897 = vunpack.c.h.b16 %v6359
        %v6898 = vunpack.c.l.b16 %v6360
        %v6899 = vunpack.c.h.b16 %v6360
        %v6900 = vunpack.c.l.b16 %v6361
        %v6901 = vunpack.c.h.b16 %v6361
        %v6902 = vunpack.c.l.b16 %v6362
        %v6903 = vunpack.c.h.b16 %v6362
        %v6904 = vunpack.c.l.b16 %v6363
        %v6905 = vunpack.c.h.b16 %v6363
        %v6906 = vunpack.c.l.b16 %v6364
        %v6907 = vunpack.c.h.b16 %v6364
        %v6908 = vunpack.c.l.b16 %v6365
        %v6909 = vunpack.c.h.b16 %v6365
        %v6910 = vunpack.c.l.b16 %v6366
        %v6911 = vunpack.c.h.b16 %v6366
        %v6912 = vunpack.c.l.b16 %v6367
        %v6913 = vunpack.c.h.b16 %v6367
        %v6914 = vunpack.c.l.b16 %v6368
        %v6915 = vunpack.c.h.b16 %v6368
        %v6916 = vunpack.c.l.b16 %v6369
        %v6917 = vunpack.c.h.b16 %v6369
        %v6918 = vunpack.c.l.b16 %v6370
        %v6919 = vunpack.c.h.b16 %v6370
        %v6920 = vunpack.c.l.b16 %v6371
        %v6921 = vunpack.c.h.b16 %v6371
        %v6922 = vunpack.c.l.b16 %v6372
        %v6923 = vunpack.c.h.b16 %v6372
        %v6924 = vunpack.c.l.b16 %v6373
        %v6925 = vunpack.c.h.b16 %v6373
        %v6926 = vunpack.c.l.b16 %v6374
        %v6927 = vunpack.c.h.b16 %v6374
        %v6928 = vunpack.c.l.b16 %v6375
        %v6929 = vunpack.c.h.b16 %v6375
        %v6930 = vunpack.c.l.b16 %v6376
        %v6931 = vunpack.c.h.b16 %v6376
        %v6932 = vunpack.c.l.b16 %v6377
        %v6933 = vunpack.c.h.b16 %v6377
        %v6934 = vunpack.c.l.b16 %v6378
        %v6935 = vunpack.c.h.b16 %v6378
        %v6936 = vunpack.c.l.b16 %v6379
        %v6937 = vunpack.c.h.b16 %v6379
        %v6938 = vunpack.c.l.b16 %v6380
        %v6939 = vunpack.c.h.b16 %v6380
        %v6940 = vunpack.c.l.b16 %v6381
        %v6941 = vunpack.c.h.b16 %v6381
        %v6942 = vunpack.c.l.b16 %v6382
        %v6943 = vunpack.c.h.b16 %v6382
        %v6944 = vunpack.c.l.b16 %v6383
        %v6945 = vunpack.c.h.b16 %v6383
        %v6946 = vunpack.c.l.b16 %v6384
        %v6947 = vunpack.c.h.b16 %v6384
        %v6948 = vunpack.c.l.b16 %v6385
        %v6949 = vunpack.c.h.b16 %v6385
        %v6950 = vunpack.c.l.b16 %v6386
        %v6951 = vunpack.c.h.b16 %v6386
        %v6952 = vunpack.c.l.b16 %v6387
        %v6953 = vunpack.c.h.b16 %v6387
        %v6954 = vunpack.c.l.b16 %v6388
        %v6955 = vunpack.c.h.b16 %v6388
        %v6956 = vunpack.c.l.b16 %v6389
        %v6957 = vunpack.c.h.b16 %v6389
        %v6958 = vunpack.c.l.b16 %v6390
        %v6959 = vunpack.c.h.b16 %v6390
        %v6960 = vunpack.c.l.b16 %v6391
        %v6961 = vunpack.c.h.b16 %v6391
        %v6962 = vunpack.c.l.b16 %v6392
        %v6963 = vunpack.c.h.b16 %v6392
        %v6964 = vunpack.c.l.b16 %v6393
        %v6965 = vunpack.c.h.b16 %v6393
        %v6966 = vunpack.c.l.b16 %v6394
        %v6967 = vunpack.c.h.b16 %v6394
        %v6968 = vunpack.c.l.b16 %v6395
        %v6969 = vunpack.c.h.b16 %v6395
        %v6970 = vunpack.c.l.b16 %v6396
        %v6971 = vunpack.c.h.b16 %v6396
        %v6972 = vunpack.c.l.b16 %v6397
        %v6973 = vunpack.c.h.b16 %v6397
        %v6974 = vunpack.c.l.b16 %v6398
        %v6975 = vunpack.c.h.b16 %v6398
        %v6976 = vunpack.c.l.b16 %v6399
        %v6977 = vunpack.c.h.b16 %v6399
        %v6978 = vunpack.c.l.b16 %v6400
        %v6979 = vunpack.c.h.b16 %v6400
        %v6980 = vunpack.c.l.b16 %v6401
        %v6981 = vunpack.c.h.b16 %v6401
        %v6982 = vunpack.c.l.b16 %v6402
        %v6983 = vunpack.c.h.b16 %v6402
        %v6984 = vunpack.c.l.b16 %v6403
        %v6985 = vunpack.c.h.b16 %v6403
        %v6986 = vunpack.c.l.b16 %v6404
        %v6987 = vunpack.c.h.b16 %v6404
        %v6988 = vunpack.c.l.b16 %v6405
        %v6989 = vunpack.c.h.b16 %v6405
        %v6990 = vunpack.c.l.b16 %v6406
        %v6991 = vunpack.c.h.b16 %v6406
        %v6992 = vunpack.c.l.b16 %v6407
        %v6993 = vunpack.c.h.b16 %v6407
        %v6994 = vunpack.c.l.b16 %v6408
        %v6995 = vunpack.c.h.b16 %v6408
        %v6996 = vunpack.c.l.b16 %v6409
        %v6997 = vunpack.c.h.b16 %v6409
        %v6998 = vunpack.c.l.b16 %v6410
        %v6999 = vunpack.c.h.b16 %v6410
        %v7000 = vunpack.c.l.b16 %v6411
        %v7001 = vunpack.c.h.b16 %v6411
        %v7002 = vunpack.c.l.b16 %v6412
        %v7003 = vunpack.c.h.b16 %v6412
        %v7004 = vunpack.c.l.b16 %v6413
        %v7005 = vunpack.c.h.b16 %v6413
        %v7006 = vunpack.c.l.b16 %v6414
        %v7007 = vunpack.c.h.b16 %v6414
        %v7008 = vunpack.c.l.b16 %v6415
        %v7009 = vunpack.c.h.b16 %v6415
        %v7010 = vunpack.c.l.b16 %v6416
        %v7011 = vunpack.c.h.b16 %v6416
        %v7012 = vunpack.c.l.b16 %v6417
        %v7013 = vunpack.c.h.b16 %v6417
        %v7014 = vunpack.c.l.b16 %v6418
        %v7015 = vunpack.c.h.b16 %v6418
        %v7016 = vunpack.c.l.b16 %v6419
        %v7017 = vunpack.c.h.b16 %v6419
        %v7018 = vunpack.c.l.b16 %v6420
        %v7019 = vunpack.c.h.b16 %v6420
        %v7020 = vunpack.c.l.b16 %v6421
        %v7021 = vunpack.c.h.b16 %v6421
        %v7022 = vunpack.c.l.b16 %v6422
        %v7023 = vunpack.c.h.b16 %v6422
        %v7024 = vunpack.c.l.b16 %v6423
        %v7025 = vunpack.c.h.b16 %v6423
        %v7026 = vunpack.c.l.b16 %v6424
        %v7027 = vunpack.c.h.b16 %v6424
        %v7028 = vunpack.c.l.b16 %v6425
        %v7029 = vunpack.c.h.b16 %v6425
        %v7030 = vunpack.c.l.b16 %v6426
        %v7031 = vunpack.c.h.b16 %v6426
        %v7032 = vunpack.c.l.b16 %v6427
        %v7033 = vunpack.c.h.b16 %v6427
        %v7034 = vunpack.c.l.b16 %v6428
        %v7035 = vunpack.c.h.b16 %v6428
        %v7036 = vunpack.c.l.b16 %v6429
        %v7037 = vunpack.c.h.b16 %v6429
        %v7038 = vunpack.c.l.b16 %v6430
        %v7039 = vunpack.c.h.b16 %v6430
        %v7040 = vunpack.c.l.b16 %v6431
        %v7041 = vunpack.c.h.b16 %v6431
        %v7042 = vunpack.c.l.b16 %v6432
        %v7043 = vunpack.c.h.b16 %v6432
        %v7044 = vunpack.c.l.b16 %v6433
        %v7045 = vunpack.c.h.b16 %v6433
        %v7046 = vunpack.c.l.b16 %v6434
        %v7047 = vunpack.c.h.b16 %v6434
        %v7048 = vunpack.c.l.b16 %v6435
        %v7049 = vunpack.c.h.b16 %v6435
        %v7050 = vunpack.c.l.b16 %v6436
        %v7051 = vunpack.c.h.b16 %v6436
        %v7052 = vunpack.c.l.b16 %v6437
        %v7053 = vunpack.c.h.b16 %v6437
        %v7054 = vunpack.c.l.b16 %v6438
        %v7055 = vunpack.c.h.b16 %v6438
        %v7056 = vunpack.c.l.b16 %v6439
        %v7057 = vunpack.c.h.b16 %v6439
        %v7058 = vunpack.c.l.b16 %v6440
        %v7059 = vunpack.c.h.b16 %v6440
        %v7060 = vunpack.c.l.b16 %v6441
        %v7061 = vunpack.c.h.b16 %v6441
        %v7062 = vunpack.c.l.b16 %v6442
        %v7063 = vunpack.c.h.b16 %v6442
        %v7064 = vunpack.c.l.b16 %v6443
        %v7065 = vunpack.c.h.b16 %v6443
        %v7066 = vunpack.c.l.b16 %v6444
        %v7067 = vunpack.c.h.b16 %v6444
        %v7068 = vunpack.c.l.b16 %v6445
        %v7069 = vunpack.c.h.b16 %v6445
        %v7070 = vunpack.c.l.b16 %v6446
        %v7071 = vunpack.c.h.b16 %v6446
        %v7072 = vunpack.c.l.b16 %v6447
        %v7073 = vunpack.c.h.b16 %v6447
        %v7074 = vunpack.c.l.b16 %v6448
        %v7075 = vunpack.c.h.b16 %v6448
        %v7076 = vunpack.c.l.b16 %v6449
        %v7077 = vunpack.c.h.b16 %v6449
        %v7078 = vunpack.c.l.b16 %v6450
        %v7079 = vunpack.c.h.b16 %v6450
        %v7080 = vunpack.c.l.b16 %v6451
        %v7081 = vunpack.c.h.b16 %v6451
        %v7082 = vunpack.c.l.b16 %v6452
        %v7083 = vunpack.c.h.b16 %v6452
        %v7084 = vunpack.c.l.b16 %v6453
        %v7085 = vunpack.c.h.b16 %v6453
        %v7086 = vunpack.c.l.b16 %v6454
        %v7087 = vunpack.c.h.b16 %v6454
        %v7088 = vunpack.c.l.b16 %v6455
        %v7089 = vunpack.c.h.b16 %v6455
        %v7090 = vunpack.c.l.b16 %v6456
        %v7091 = vunpack.c.h.b16 %v6456
        %v7092 = vunpack.c.l.b16 %v6457
        %v7093 = vunpack.c.h.b16 %v6457
        %v7094 = vunpack.c.l.b16 %v6458
        %v7095 = vunpack.c.h.b16 %v6458
        %v7096 = vunpack.c.l.b16 %v6459
        %v7097 = vunpack.c.h.b16 %v6459
        %v7098 = vunpack.c.l.b16 %v6460
        %v7099 = vunpack.c.h.b16 %v6460
        %v7100 = vunpack.c.l.b16 %v6461
        %v7101 = vunpack.c.h.b16 %v6461
        %v7102 = vunpack.c.l.b16 %v6462
        %v7103 = vunpack.c.h.b16 %v6462
        %v7104 = vunpack.c.l.b16 %v6463
        %v7105 = vunpack.c.h.b16 %v6463
        %v7106 = vunpack.c.l.b16 %v6464
        %v7107 = vunpack.c.h.b16 %v6464
        %v7108 = vunpack.c.l.b16 %v6465
        %v7109 = vunpack.c.h.b16 %v6465
        %v7110 = vunpack.c.l.b16 %v6466
        %v7111 = vunpack.c.h.b16 %v6466
        %v7112 = vunpack.c.l.b16 %v6467
        %v7113 = vunpack.c.h.b16 %v6467
        %v7114 = vunpack.c.l.b16 %v6468
        %v7115 = vunpack.c.h.b16 %v6468
        %v7116 = vunpack.c.l.b16 %v6469
        %v7117 = vunpack.c.h.b16 %v6469
        %v7118 = vunpack.c.l.b16 %v6470
        %v7119 = vunpack.c.h.b16 %v6470
        %v7120 = vunpack.c.l.b16 %v6471
        %v7121 = vunpack.c.h.b16 %v6471
        %v7122 = vunpack.c.l.b16 %v6472
        %v7123 = vunpack.c.h.b16 %v6472
        %v7124 = vunpack.c.l.b16 %v6473
        %v7125 = vunpack.c.h.b16 %v6473
        %v7126 = vunpack.c.l.b16 %v6474
        %v7127 = vunpack.c.h.b16 %v6474
        %v7128 = vunpack.c.l.b16 %v6475
        %v7129 = vunpack.c.h.b16 %v6475
        %v7130 = vunpack.c.l.b16 %v6476
        %v7131 = vunpack.c.h.b16 %v6476
        %v7132 = vunpack.c.l.b16 %v6477
        %v7133 = vunpack.c.h.b16 %v6477
        %v7134 = vunpack.c.l.b16 %v6478
        %v7135 = vunpack.c.h.b16 %v6478
        %v7136 = vunpack.c.l.b16 %v6479
        %v7137 = vunpack.c.h.b16 %v6479
        %v7138 = vunpack.c.l.b16 %v6480
        %v7139 = vunpack.c.h.b16 %v6480
        %v7140 = vunpack.c.l.b16 %v6481
        %v7141 = vunpack.c.h.b16 %v6481
        %v7142 = vunpack.c.l.b16 %v6482
        %v7143 = vunpack.c.h.b16 %v6482
        %v7144 = vunpack.c.l.b16 %v6483
        %v7145 = vunpack.c.h.b16 %v6483
        %v7146 = vunpack.c.l.b16 %v6484
        %v7147 = vunpack.c.h.b16 %v6484
        %v7148 = vunpack.c.l.b16 %v6485
        %v7149 = vunpack.c.h.b16 %v6485
        %v7150 = vunpack.c.l.b16 %v6486
        %v7151 = vunpack.c.h.b16 %v6486
        %v7152 = vunpack.c.l.b16 %v6487
        %v7153 = vunpack.c.h.b16 %v6487
        %v7154 = vunpack.c.l.b16 %v6488
        %v7155 = vunpack.c.h.b16 %v6488
        %v7156 = vunpack.c.l.b16 %v6489
        %v7157 = vunpack.c.h.b16 %v6489
        %v7158 = vunpack.c.l.b16 %v6490
        %v7159 = vunpack.c.h.b16 %v6490
        %v7160 = vunpack.c.l.b16 %v6491
        %v7161 = vunpack.c.h.b16 %v6491
        %v7162 = vunpack.c.l.b16 %v6492
        %v7163 = vunpack.c.h.b16 %v6492
        %v7164 = vunpack.c.l.b16 %v6493
        %v7165 = vunpack.c.h.b16 %v6493
        %v7166 = vunpack.c.l.b16 %v6494
        %v7167 = vunpack.c.h.b16 %v6494
        %v7168 = vunpack.c.l.b16 %v6495
        %v7169 = vunpack.c.h.b16 %v6495
        %v7170 = vunpack.c.l.b16 %v6496
        %v7171 = vunpack.c.h.b16 %v6496
        %v7172 = vunpack.c.l.b16 %v6497
        %v7173 = vunpack.c.h.b16 %v6497
        %v7174 = vunpack.c.l.b16 %v6498
        %v7175 = vunpack.c.h.b16 %v6498
        %v7176 = vunpack.c.l.b16 %v6499
        %v7177 = vunpack.c.h.b16 %v6499
        %v7178 = vunpack.c.l.b16 %v6500
        %v7179 = vunpack.c.h.b16 %v6500
        %v7180 = vunpack.c.l.b16 %v6501
        %v7181 = vunpack.c.h.b16 %v6501
        %v7182 = vunpack.c.l.b16 %v6502
        %v7183 = vunpack.c.h.b16 %v6502
        %v7184 = vunpack.c.l.b16 %v6503
        %v7185 = vunpack.c.h.b16 %v6503
        %v7186 = vunpack.c.l.b16 %v6504
        %v7187 = vunpack.c.h.b16 %v6504
        %v7188 = vunpack.c.l.b16 %v6505
        %v7189 = vunpack.c.h.b16 %v6505
        %v7190 = vunpack.c.l.b16 %v6506
        %v7191 = vunpack.c.h.b16 %v6506
        %v7192 = vunpack.c.l.b16 %v6507
        %v7193 = vunpack.c.h.b16 %v6507
        %v7194 = vunpack.c.l.b16 %v6508
        %v7195 = vunpack.c.h.b16 %v6508
        %v7196 = vunpack.c.l.b16 %v6509
        %v7197 = vunpack.c.h.b16 %v6509
        %v7198 = vunpack.c.l.b16 %v6510
        %v7199 = vunpack.c.h.b16 %v6510
        %v7200 = vunpack.c.l.b16 %v6511
        %v7201 = vunpack.c.h.b16 %v6511
        %v7202 = vunpack.c.l.b16 %v6512
        %v7203 = vunpack.c.h.b16 %v6512
        %v7204 = vunpack.c.l.b16 %v6513
        %v7205 = vunpack.c.h.b16 %v6513
        %v7206 = vunpack.c.l.b16 %v6514
        %v7207 = vunpack.c.h.b16 %v6514
        %v7208 = vunpack.c.l.b16 %v6515
        %v7209 = vunpack.c.h.b16 %v6515
        %v7210 = vunpack.c.l.b16 %v6516
        %v7211 = vunpack.c.h.b16 %v6516
        %v7212 = vunpack.c.l.b16 %v6517
        %v7213 = vunpack.c.h.b16 %v6517
        %v7214 = vunpack.c.l.b16 %v6518
        %v7215 = vunpack.c.h.b16 %v6518
        %v7216 = vunpack.c.l.b16 %v6519
        %v7217 = vunpack.c.h.b16 %v6519
        %v7218 = vunpack.c.l.b16 %v6520
        %v7219 = vunpack.c.h.b16 %v6520
        %v7220 = vunpack.c.l.b16 %v6521
        %v7221 = vunpack.c.h.b16 %v6521
        %v7222 = vunpack.c.l.b16 %v6522
        %v7223 = vunpack.c.h.b16 %v6522
        %v7224 = vunpack.c.l.b16 %v6523
        %v7225 = vunpack.c.h.b16 %v6523
        %v7226 = vunpack.c.l.b16 %v6524
        %v7227 = vunpack.c.h.b16 %v6524
        %v7228 = vunpack.c.l.b16 %v6525
        %v7229 = vunpack.c.h.b16 %v6525
        %v7230 = vunpack.c.l.b16 %v6526
        %v7231 = vunpack.c.h.b16 %v6526
        %v7232 = vunpack.c.l.b16 %v6527
        %v7233 = vunpack.c.h.b16 %v6527
        %v7234 = vunpack.c.l.b16 %v6528
        %v7235 = vunpack.c.h.b16 %v6528
        %v7236 = vunpack.c.l.b16 %v6529
        %v7237 = vunpack.c.h.b16 %v6529
        %v7238 = vunpack.c.l.b16 %v6530
        %v7239 = vunpack.c.h.b16 %v6530
        %v7240 = vunpack.c.l.b16 %v6531
        %v7241 = vunpack.c.h.b16 %v6531
        %v7242 = vunpack.c.l.b16 %v6532
        %v7243 = vunpack.c.h.b16 %v6532
        %v7244 = vunpack.c.l.b16 %v6533
        %v7245 = vunpack.c.h.b16 %v6533
        %v7246 = vunpack.c.l.b16 %v6534
        %v7247 = vunpack.c.h.b16 %v6534
        %v7248 = vunpack.c.l.b16 %v6535
        %v7249 = vunpack.c.h.b16 %v6535
        %v7250 = vunpack.c.l.b16 %v6536
        %v7251 = vunpack.c.h.b16 %v6536
        %v7252 = vunpack.c.l.b16 %v6537
        %v7253 = vunpack.c.h.b16 %v6537
        %v7254 = vunpack.c.l.b16 %v6538
        %v7255 = vunpack.c.h.b16 %v6538
        %v7256 = vunpack.c.l.b16 %v6539
        %v7257 = vunpack.c.h.b16 %v6539
        %v7258 = vunpack.c.l.b16 %v6540
        %v7259 = vunpack.c.h.b16 %v6540
        %v7260 = vunpack.c.l.b16 %v6541
        %v7261 = vunpack.c.h.b16 %v6541
        %v7262 = vunpack.c.l.b16 %v6542
        %v7263 = vunpack.c.h.b16 %v6542
        %v7264 = vunpack.c.l.b16 %v6543
        %v7265 = vunpack.c.h.b16 %v6543
        %v7266 = vunpack.c.l.b16 %v6544
        %v7267 = vunpack.c.h.b16 %v6544
        %v7268 = vunpack.c.l.b16 %v6545
        %v7269 = vunpack.c.h.b16 %v6545
        %v7270 = vunpack.c.l.b16 %v6546
        %v7271 = vunpack.c.h.b16 %v6546
        %v7272 = vunpack.c.l.b16 %v6547
        %v7273 = vunpack.c.h.b16 %v6547
        %v7274 = vunpack.c.l.b16 %v6548
        %v7275 = vunpack.c.h.b16 %v6548
        %v7276 = vunpack.c.l.b16 %v6549
        %v7277 = vunpack.c.h.b16 %v6549
        %v7278 = vunpack.c.l.b16 %v6550
        %v7279 = vunpack.c.h.b16 %v6550
        %v7280 = vunpack.c.l.b16 %v6551
        %v7281 = vunpack.c.h.b16 %v6551
        %v7282 = vunpack.c.l.b16 %v6552
        %v7283 = vunpack.c.h.b16 %v6552
        %v7284 = vunpack.c.l.b16 %v6553
        %v7285 = vunpack.c.h.b16 %v6553
        %v7286 = vunpack.c.l.b16 %v6554
        %v7287 = vunpack.c.h.b16 %v6554
        %v7288 = vunpack.c.l.b16 %v6555
        %v7289 = vunpack.c.h.b16 %v6555
        %v7290 = vunpack.c.l.b16 %v6556
        %v7291 = vunpack.c.h.b16 %v6556
        %v7292 = vunpack.c.l.b16 %v6557
        %v7293 = vunpack.c.h.b16 %v6557
        %v7294 = vunpack.c.l.b16 %v6558
        %v7295 = vunpack.c.h.b16 %v6558
        %v7296 = vunpack.c.l.b16 %v6559
        %v7297 = vunpack.c.h.b16 %v6559
        %v7298 = vunpack.c.l.b16 %v6560
        %v7299 = vunpack.c.h.b16 %v6560
        %v7300 = vunpack.c.l.b16 %v6561
        %v7301 = vunpack.c.h.b16 %v6561
        %v7302 = vunpack.c.l.b16 %v6562
        %v7303 = vunpack.c.h.b16 %v6562
        %v7304 = vunpack.c.l.b16 %v6563
        %v7305 = vunpack.c.h.b16 %v6563
        %v7306 = vunpack.c.l.b16 %v6564
        %v7307 = vunpack.c.h.b16 %v6564
        %v7308 = vunpack.c.l.b16 %v6565
        %v7309 = vunpack.c.h.b16 %v6565
        %v7310 = vunpack.c.l.b16 %v6566
        %v7311 = vunpack.c.h.b16 %v6566
        %v7312 = vunpack.c.l.b16 %v6567
        %v7313 = vunpack.c.h.b16 %v6567
        %v7314 = vunpack.c.l.b16 %v6568
        %v7315 = vunpack.c.h.b16 %v6568
        %v7316 = vunpack.c.l.b16 %v6569
        %v7317 = vunpack.c.h.b16 %v6569
        %v7318 = vunpack.c.l.b16 %v6570
        %v7319 = vunpack.c.h.b16 %v6570
        %v7320 = vunpack.c.l.b16 %v6571
        %v7321 = vunpack.c.h.b16 %v6571
        %v7322 = vunpack.c.l.b16 %v6572
        %v7323 = vunpack.c.h.b16 %v6572
        %v7324 = vunpack.c.l.b16 %v6573
        %v7325 = vunpack.c.h.b16 %v6573
        %v7326 = vunpack.c.l.b16 %v6574
        %v7327 = vunpack.c.h.b16 %v6574
        %v7328 = vunpack.c.l.b16 %v6575
        %v7329 = vunpack.c.h.b16 %v6575
        %v7330 = vunpack.c.l.b16 %v6576
        %v7331 = vunpack.c.h.b16 %v6576
        %v7332 = vunpack.c.l.b16 %v6577
        %v7333 = vunpack.c.h.b16 %v6577
        %v7334 = vunpack.c.l.b16 %v6578
        %v7335 = vunpack.c.h.b16 %v6578
        %v7336 = vunpack.c.l.b16 %v6579
        %v7337 = vunpack.c.h.b16 %v6579
        %v7338 = vunpack.c.l.b16 %v6580
        %v7339 = vunpack.c.h.b16 %v6580
        %v7340 = vunpack.c.l.b16 %v6581
        %v7341 = vunpack.c.h.b16 %v6581
        %v7342 = vunpack.c.l.b16 %v6582
        %v7343 = vunpack.c.h.b16 %v6582
        %v7344 = vunpack.c.l.b16 %v6583
        %v7345 = vunpack.c.h.b16 %v6583
        %v7346 = vunpack.c.l.b16 %v6584
        %v7347 = vunpack.c.h.b16 %v6584
        %v7348 = vunpack.c.l.b16 %v6585
        %v7349 = vunpack.c.h.b16 %v6585
        %v7350 = vunpack.c.l.b16 %v6586
        %v7351 = vunpack.c.h.b16 %v6586
        %v7352 = vunpack.c.l.b16 %v6587
        %v7353 = vunpack.c.h.b16 %v6587
        %v7354 = vunpack.c.l.b16 %v6588
        %v7355 = vunpack.c.h.b16 %v6588
        %v7356 = vunpack.c.l.b16 %v6589
        %v7357 = vunpack.c.h.b16 %v6589
        %v7358 = vunpack.c.l.b16 %v6590
        %v7359 = vunpack.c.h.b16 %v6590
        %v7360 = vpack.c.b16 %v6852, %v6848
        %v7361 = vpack.c.b16 %v6853, %v6849
        %v7362 = vpack.c.b16 %v6854, %v6850
        %v7363 = vpack.c.b16 %v6855, %v6851
        %v7364 = vpack.c.b16 %v6860, %v6856
        %v7365 = vpack.c.b16 %v6861, %v6857
        %v7366 = vpack.c.b16 %v6862, %v6858
        %v7367 = vpack.c.b16 %v6863, %v6859
        %v7368 = vpack.c.b16 %v6868, %v6864
        %v7369 = vpack.c.b16 %v6869, %v6865
        %v7370 = vpack.c.b16 %v6870, %v6866
        %v7371 = vpack.c.b16 %v6871, %v6867
        %v7372 = vpack.c.b16 %v6876, %v6872
        %v7373 = vpack.c.b16 %v6877, %v6873
        %v7374 = vpack.c.b16 %v6878, %v6874
        %v7375 = vpack.c.b16 %v6879, %v6875
        %v7376 = vpack.c.b16 %v6884, %v6880
        %v7377 = vpack.c.b16 %v6885, %v6881
        %v7378 = vpack.c.b16 %v6886, %v6882
        %v7379 = vpack.c.b16 %v6887, %v6883
        %v7380 = vpack.c.b16 %v6892, %v6888
        %v7381 = vpack.c.b16 %v6893, %v6889
        %v7382 = vpack.c.b16 %v6894, %v6890
        %v7383 = vpack.c.b16 %v6895, %v6891
        %v7384 = vpack.c.b16 %v6900, %v6896
        %v7385 = vpack.c.b16 %v6901, %v6897
        %v7386 = vpack.c.b16 %v6902, %v6898
        %v7387 = vpack.c.b16 %v6903, %v6899
        %v7388 = vpack.c.b16 %v6908, %v6904
        %v7389 = vpack.c.b16 %v6909, %v6905
        %v7390 = vpack.c.b16 %v6910, %v6906
        %v7391 = vpack.c.b16 %v6911, %v6907
        %v7392 = vpack.c.b16 %v6916, %v6912
        %v7393 = vpack.c.b16 %v6917, %v6913
        %v7394 = vpack.c.b16 %v6918, %v6914
        %v7395 = vpack.c.b16 %v6919, %v6915
        %v7396 = vpack.c.b16 %v6924, %v6920
        %v7397 = vpack.c.b16 %v6925, %v6921
        %v7398 = vpack.c.b16 %v6926, %v6922
        %v7399 = vpack.c.b16 %v6927, %v6923
        %v7400 = vpack.c.b16 %v6932, %v6928
        %v7401 = vpack.c.b16 %v6933, %v6929
        %v7402 = vpack.c.b16 %v6934, %v6930
        %v7403 = vpack.c.b16 %v6935, %v6931
        %v7404 = vpack.c.b16 %v6940, %v6936
        %v7405 = vpack.c.b16 %v6941, %v6937
        %v7406 = vpack.c.b16 %v6942, %v6938
        %v7407 = vpack.c.b16 %v6943, %v6939
        %v7408 = vpack.c.b16 %v6948, %v6944
        %v7409 = vpack.c.b16 %v6949, %v6945
        %v7410 = vpack.c.b16 %v6950, %v6946
        %v7411 = vpack.c.b16 %v6951, %v6947
        %v7412 = vpack.c.b16 %v6956, %v6952
        %v7413 = vpack.c.b16 %v6957, %v6953
        %v7414 = vpack.c.b16 %v6958, %v6954
        %v7415 = vpack.c.b16 %v6959, %v6955
        %v7416 = vpack.c.b16 %v6964, %v6960
        %v7417 = vpack.c.b16 %v6965, %v6961
        %v7418 = vpack.c.b16 %v6966, %v6962
        %v7419 = vpack.c.b16 %v6967, %v6963
        %v7420 = vpack.c.b16 %v6972, %v6968
        %v7421 = vpack.c.b16 %v6973, %v6969
        %v7422 = vpack.c.b16 %v6974, %v6970
        %v7423 = vpack.c.b16 %v6975, %v6971
        %v7424 = vpack.c.b16 %v6980, %v6976
        %v7425 = vpack.c.b16 %v6981, %v6977
        %v7426 = vpack.c.b16 %v6982, %v6978
        %v7427 = vpack.c.b16 %v6983, %v6979
        %v7428 = vpack.c.b16 %v6988, %v6984
        %v7429 = vpack.c.b16 %v6989, %v6985
        %v7430 = vpack.c.b16 %v6990, %v6986
        %v7431 = vpack.c.b16 %v6991, %v6987
        %v7432 = vpack.c.b16 %v6996, %v6992
        %v7433 = vpack.c.b16 %v6997, %v6993
        %v7434 = vpack.c.b16 %v6998, %v6994
        %v7435 = vpack.c.b16 %v6999, %v6995
        %v7436 = vpack.c.b16 %v7004, %v7000
        %v7437 = vpack.c.b16 %v7005, %v7001
        %v7438 = vpack.c.b16 %v7006, %v7002
        %v7439 = vpack.c.b16 %v7007, %v7003
        %v7440 = vpack.c.b16 %v7012, %v7008
        %v7441 = vpack.c.b16 %v7013, %v7009
        %v7442 = vpack.c.b16 %v7014, %v7010
        %v7443 = vpack.c.b16 %v7015, %v7011
        %v7444 = vpack.c.b16 %v7020, %v7016
        %v7445 = vpack.c.b16 %v7021, %v7017
        %v7446 = vpack.c.b16 %v7022, %v7018
        %v7447 = vpack.c.b16 %v7023, %v7019
        %v7448 = vpack.c.b16 %v7028, %v7024
        %v7449 = vpack.c.b16 %v7029, %v7025
        %v7450 = vpack.c.b16 %v7030, %v7026
        %v7451 = vpack.c.b16 %v7031, %v7027
        %v7452 = vpack.c.b16 %v7036, %v7032
        %v7453 = vpack.c.b16 %v7037, %v7033
        %v7454 = vpack.c.b16 %v7038, %v7034
        %v7455 = vpack.c.b16 %v7039, %v7035
        %v7456 = vpack.c.b16 %v7044, %v7040
        %v7457 = vpack.c.b16 %v7045, %v7041
        %v7458 = vpack.c.b16 %v7046, %v7042
        %v7459 = vpack.c.b16 %v7047, %v7043
        %v7460 = vpack.c.b16 %v7052, %v7048
        %v7461 = vpack.c.b16 %v7053, %v7049
        %v7462 = vpack.c.b16 %v7054, %v7050
        %v7463 = vpack.c.b16 %v7055, %v7051
        %v7464 = vpack.c.b16 %v7060, %v7056
        %v7465 = vpack.c.b16 %v7061, %v7057
        %v7466 = vpack.c.b16 %v7062, %v7058
        %v7467 = vpack.c.b16 %v7063, %v7059
        %v7468 = vpack.c.b16 %v7068, %v7064
        %v7469 = vpack.c.b16 %v7069, %v7065
        %v7470 = vpack.c.b16 %v7070, %v7066
        %v7471 = vpack.c.b16 %v7071, %v7067
        %v7472 = vpack.c.b16 %v7076, %v7072
        %v7473 = vpack.c.b16 %v7077, %v7073
        %v7474 = vpack.c.b16 %v7078, %v7074
        %v7475 = vpack.c.b16 %v7079, %v7075
        %v7476 = vpack.c.b16 %v7084, %v7080
        %v7477 = vpack.c.b16 %v7085, %v7081
        %v7478 = vpack.c.b16 %v7086, %v7082
        %v7479 = vpack.c.b16 %v7087, %v7083
        %v7480 = vpack.c.b16 %v7092, %v7088
        %v7481 = vpack.c.b16 %v7093, %v7089
        %v7482 = vpack.c.b16 %v7094, %v7090
        %v7483 = vpack.c.b16 %v7095, %v7091
        %v7484 = vpack.c.b16 %v7100, %v7096
        %v7485 = vpack.c.b16 %v7101, %v7097
        %v7486 = vpack.c.b16 %v7102, %v7098
        %v7487 = vpack.c.b16 %v7103, %v7099
        %v7488 = vpack.c.b16 %v7108, %v7104
        %v7489 = vpack.c.b16 %v7109, %v7105
        %v7490 = vpack.c.b16 %v7110, %v7106
        %v7491 = vpack.c.b16 %v7111, %v7107
        %v7492 = vpack.c.b16 %v7116, %v7112
        %v7493 = vpack.c.b16 %v7117, %v7113
        %v7494 = vpack.c.b16 %v7118, %v7114
        %v7495 = vpack.c.b16 %v7119, %v7115
        %v7496 = vpack.c.b16 %v7124, %v7120
        %v7497 = vpack.c.b16 %v7125, %v7121
        %v7498 = vpack.c.b16 %v7126, %v7122
        %v7499 = vpack.c.b16 %v7127, %v7123
        %v7500 = vpack.c.b16 %v7132, %v7128
        %v7501 = vpack.c.b16 %v7133, %v7129
        %v7502 = vpack.c.b16 %v7134, %v7130
        %v7503 = vpack.c.b16 %v7135, %v7131
        %v7504 = vpack.c.b16 %v7140, %v7136
        %v7505 = vpack.c.b16 %v7141, %v7137
        %v7506 = vpack.c.b16 %v7142, %v7138
        %v7507 = vpack.c.b16 %v7143, %v7139
        %v7508 = vpack.c.b16 %v7148, %v7144
        %v7509 = vpack.c.b16 %v7149, %v7145
        %v7510 = vpack.c.b16 %v7150, %v7146
        %v7511 = vpack.c.b16 %v7151, %v7147
        %v7512 = vpack.c.b16 %v7156, %v7152
        %v7513 = vpack.c.b16 %v7157, %v7153
        %v7514 = vpack.c.b16 %v7158, %v7154
        %v7515 = vpack.c.b16 %v7159, %v7155
        %v7516 = vpack.c.b16 %v7164, %v7160
        %v7517 = vpack.c.b16 %v7165, %v7161
        %v7518 = vpack.c.b16 %v7166, %v7162
        %v7519 = vpack.c.b16 %v7167, %v7163
        %v7520 = vpack.c.b16 %v7172, %v7168
        %v7521 = vpack.c.b16 %v7173, %v7169
        %v7522 = vpack.c.b16 %v7174, %v7170
        %v7523 = vpack.c.b16 %v7175, %v7171
        %v7524 = vpack.c.b16 %v7180, %v7176
        %v7525 = vpack.c.b16 %v7181, %v7177
        %v7526 = vpack.c.b16 %v7182, %v7178
        %v7527 = vpack.c.b16 %v7183, %v7179
        %v7528 = vpack.c.b16 %v7188, %v7184
        %v7529 = vpack.c.b16 %v7189, %v7185
        %v7530 = vpack.c.b16 %v7190, %v7186
        %v7531 = vpack.c.b16 %v7191, %v7187
        %v7532 = vpack.c.b16 %v7196, %v7192
        %v7533 = vpack.c.b16 %v7197, %v7193
        %v7534 = vpack.c.b16 %v7198, %v7194
        %v7535 = vpack.c.b16 %v7199, %v7195
        %v7536 = vpack.c.b16 %v7204, %v7200
        %v7537 = vpack.c.b16 %v7205, %v7201
        %v7538 = vpack.c.b16 %v7206, %v7202
        %v7539 = vpack.c.b16 %v7207, %v7203
        %v7540 = vpack.c.b16 %v7212, %v7208
        %v7541 = vpack.c.b16 %v7213, %v7209
        %v7542 = vpack.c.b16 %v7214, %v7210
        %v7543 = vpack.c.b16 %v7215, %v7211
        %v7544 = vpack.c.b16 %v7220, %v7216
        %v7545 = vpack.c.b16 %v7221, %v7217
        %v7546 = vpack.c.b16 %v7222, %v7218
        %v7547 = vpack.c.b16 %v7223, %v7219
        %v7548 = vpack.c.b16 %v7228, %v7224
        %v7549 = vpack.c.b16 %v7229, %v7225
        %v7550 = vpack.c.b16 %v7230, %v7226
        %v7551 = vpack.c.b16 %v7231, %v7227
        %v7552 = vpack.c.b16 %v7236, %v7232
        %v7553 = vpack.c.b16 %v7237, %v7233
        %v7554 = vpack.c.b16 %v7238, %v7234
        %v7555 = vpack.c.b16 %v7239, %v7235
        %v7556 = vpack.c.b16 %v7244, %v7240
        %v7557 = vpack.c.b16 %v7245, %v7241
        %v7558 = vpack.c.b16 %v7246, %v7242
        %v7559 = vpack.c.b16 %v7247, %v7243
        %v7560 = vpack.c.b16 %v7252, %v7248
        %v7561 = vpack.c.b16 %v7253, %v7249
        %v7562 = vpack.c.b16 %v7254, %v7250
        %v7563 = vpack.c.b16 %v7255, %v7251
        %v7564 = vpack.c.b16 %v7260, %v7256
        %v7565 = vpack.c.b16 %v7261, %v7257
        %v7566 = vpack.c.b16 %v7262, %v7258
        %v7567 = vpack.c.b16 %v7263, %v7259
        %v7568 = vpack.c.b16 %v7268, %v7264
        %v7569 = vpack.c.b16 %v7269, %v7265
        %v7570 = vpack.c.b16 %v7270, %v7266
        %v7571 = vpack.c.b16 %v7271, %v7267
        %v7572 = vpack.c.b16 %v7276, %v7272
        %v7573 = vpack.c.b16 %v7277, %v7273
        %v7574 = vpack.c.b16 %v7278, %v7274
        %v7575 = vpack.c.b16 %v7279, %v7275
        %v7576 = vpack.c.b16 %v7284, %v7280
        %v7577 = vpack.c.b16 %v7285, %v7281
        %v7578 = vpack.c.b16 %v7286, %v7282
        %v7579 = vpack.c.b16 %v7287, %v7283
        %v7580 = vpack.c.b16 %v7292, %v7288
        %v7581 = vpack.c.b16 %v7293, %v7289
        %v7582 = vpack.c.b16 %v7294, %v7290
        %v7583 = vpack.c.b16 %v7295, %v7291
        %v7584 = vpack.c.b16 %v7300, %v7296
        %v7585 = vpack.c.b16 %v7301, %v7297
        %v7586 = vpack.c.b16 %v7302, %v7298
        %v7587 = vpack.c.b16 %v7303, %v7299
        %v7588 = vpack.c.b16 %v7308, %v7304
        %v7589 = vpack.c.b16 %v7309, %v7305
        %v7590 = vpack.c.b16 %v7310, %v7306
        %v7591 = vpack.c.b16 %v7311, %v7307
        %v7592 = vpack.c.b16 %v7316, %v7312
        %v7593 = vpack.c.b16 %v7317, %v7313
        %v7594 = vpack.c.b16 %v7318, %v7314
        %v7595 = vpack.c.b16 %v7319, %v7315
        %v7596 = vpack.c.b16 %v7324, %v7320
        %v7597 = vpack.c.b16 %v7325, %v7321
        %v7598 = vpack.c.b16 %v7326, %v7322
        %v7599 = vpack.c.b16 %v7327, %v7323
        %v7600 = vpack.c.b16 %v7332, %v7328
        %v7601 = vpack.c.b16 %v7333, %v7329
        %v7602 = vpack.c.b16 %v7334, %v7330
        %v7603 = vpack.c.b16 %v7335, %v7331
        %v7604 = vpack.c.b16 %v7340, %v7336
        %v7605 = vpack.c.b16 %v7341, %v7337
        %v7606 = vpack.c.b16 %v7342, %v7338
        %v7607 = vpack.c.b16 %v7343, %v7339
        %v7608 = vpack.c.b16 %v7348, %v7344
        %v7609 = vpack.c.b16 %v7349, %v7345
        %v7610 = vpack.c.b16 %v7350, %v7346
        %v7611 = vpack.c.b16 %v7351, %v7347
        %v7612 = vpack.c.b16 %v7356, %v7352
        %v7613 = vpack.c.b16 %v7357, %v7353
        %v7614 = vpack.c.b16 %v7358, %v7354
        %v7615 = vpack.c.b16 %v7359, %v7355
        %v7873 = vlaneseq
        %v7874 = vshrl.u32 %v7873, 7
        %v7875 = vsub.s32 0, %v7874
        %v7876 = vrot.slane %v6591, %v7875
        %v7877 = vlaneseq
        %v7878 = vshrl.u32 %v7877, 7
        %v7879 = vsub.s32 1, %v7878
        %v7880 = vrot.slane %v6591, %v7879
        %v7881 = vlaneseq
        %v7882 = vshrl.u32 %v7881, 7
        %v7883 = vsub.s32 2, %v7882
        %v7884 = vrot.slane %v6591, %v7883
        %v7885 = vlaneseq
        %v7886 = vshrl.u32 %v7885, 7
        %v7887 = vsub.s32 3, %v7886
        %v7888 = vrot.slane %v6591, %v7887
        %7893 = vmatprep.subr.bf16.mxu0 %v7361
        %7894 = vmatpush1.bf16.msra.mxu0 %v7360
        %7895 = vmatprep.subr.bf16.mxu0 %v7365
        %7896 = vmatpush1.bf16.msra.mxu0 %v7364
        %7897 = vmatprep.subr.bf16.mxu0 %v7369
        %7898 = vmatpush1.bf16.msra.mxu0 %v7368
        %7899 = vmatprep.subr.bf16.mxu0 %v7373
        %7900 = vmatpush1.bf16.msra.mxu0 %v7372
        %7901 = vmatprep.subr.bf16.mxu0 %v7377
        %7902 = vmatpush1.bf16.msra.mxu0 %v7376
        %7903 = vmatprep.subr.bf16.mxu0 %v7381
        %7904 = vmatpush1.bf16.msra.mxu0 %v7380
        %7905 = vmatprep.subr.bf16.mxu0 %v7385
        %7906 = vmatpush1.bf16.msra.mxu0 %v7384
        %7907 = vmatprep.subr.bf16.mxu0 %v7389
        %7908 = vmatpush1.bf16.msra.mxu0 %v7388
        %7909 = vmatprep.subr.bf16.mxu0 %v7393
        %7910 = vmatpush1.bf16.msra.mxu0 %v7392
        %7911 = vmatprep.subr.bf16.mxu0 %v7397
        %7912 = vmatpush1.bf16.msra.mxu0 %v7396
        %7913 = vmatprep.subr.bf16.mxu0 %v7401
        %7914 = vmatpush1.bf16.msra.mxu0 %v7400
        %7915 = vmatprep.subr.bf16.mxu0 %v7405
        %7916 = vmatpush1.bf16.msra.mxu0 %v7404
        %7917 = vmatprep.subr.bf16.mxu0 %v7409
        %7918 = vmatpush1.bf16.msra.mxu0 %v7408
        %7919 = vmatprep.subr.bf16.mxu0 %v7413
        %7920 = vmatpush1.bf16.msra.mxu0 %v7412
        %7921 = vmatprep.subr.bf16.mxu0 %v7417
        %7922 = vmatpush1.bf16.msra.mxu0 %v7416
        %7923 = vmatprep.subr.bf16.mxu0 %v7421
        %7924 = vmatpush1.bf16.msra.mxu0 %v7420
        %7925 = vmatprep.mubr.bf16.mxu0 %v6328
        %7926 = vmatmul.mubr.bf16.gmra.mrb[0].mxu0 %v6327
        %v7927 = vpop.f32.mrb[0].mxu0
        %v7928 = vadd.f32 %v7876, %v7927
        %v7929 = vpop.f32.mrb[0].mxu0
        %v7930 = vadd.f32 %v7880, %v7929
        %v7931 = vpop.f32.mrb[0].mxu0
        %v7932 = vpop.f32.mrb[0].mxu0
        %7933 = vdwg.mxu0
        %7934 = vmatprep.subr.bf16.mxu0 %v7425
        %7935 = vmatpush1.bf16.msra.mxu0 %v7424
        %7936 = vmatprep.subr.bf16.mxu0 %v7429
        %7937 = vmatpush1.bf16.msra.mxu0 %v7428
        %7938 = vmatprep.subr.bf16.mxu0 %v7433
        %7939 = vmatpush1.bf16.msra.mxu0 %v7432
        %7940 = vmatprep.subr.bf16.mxu0 %v7437
        %7941 = vmatpush1.bf16.msra.mxu0 %v7436
        %7942 = vmatprep.subr.bf16.mxu0 %v7441
        %7943 = vmatpush1.bf16.msra.mxu0 %v7440
        %7944 = vmatprep.subr.bf16.mxu0 %v7445
        %7945 = vmatpush1.bf16.msra.mxu0 %v7444
        %7946 = vmatprep.subr.bf16.mxu0 %v7449
        %7947 = vmatpush1.bf16.msra.mxu0 %v7448
        %7948 = vmatprep.subr.bf16.mxu0 %v7453
        %7949 = vmatpush1.bf16.msra.mxu0 %v7452
        %7950 = vmatprep.subr.bf16.mxu0 %v7457
        %7951 = vmatpush1.bf16.msra.mxu0 %v7456
        %7952 = vmatprep.subr.bf16.mxu0 %v7461
        %7953 = vmatpush1.bf16.msra.mxu0 %v7460
        %7954 = vmatprep.subr.bf16.mxu0 %v7465
        %7955 = vmatpush1.bf16.msra.mxu0 %v7464
        %7956 = vmatprep.subr.bf16.mxu0 %v7469
        %7957 = vmatpush1.bf16.msra.mxu0 %v7468
        %7958 = vmatprep.subr.bf16.mxu0 %v7473
        %7959 = vmatpush1.bf16.msra.mxu0 %v7472
        %7960 = vmatprep.subr.bf16.mxu0 %v7477
        %7961 = vmatpush1.bf16.msra.mxu0 %v7476
        %7962 = vmatprep.subr.bf16.mxu0 %v7481
        %7963 = vmatpush1.bf16.msra.mxu0 %v7480
        %7964 = vmatprep.subr.bf16.mxu0 %v7485
        %7965 = vmatpush1.bf16.msra.mxu0 %v7484
        %7966 = vmatprep.mubr.bf16.mxu0 %v6330
        %7967 = vmatmul.mubr.bf16.gmra.mrb[0].mxu0 %v6329
        %v7968 = vpop.f32.mrb[0].mxu0
        %v7969 = vadd.f32 %v7928, %v7968
        %v7970 = vpop.f32.mrb[0].mxu0
        %v7971 = vadd.f32 %v7930, %v7970
        %v7972 = vpop.f32.mrb[0].mxu0
        %v7973 = vpop.f32.mrb[0].mxu0
        %7974 = vdwg.mxu0
        %7975 = vmatprep.subr.bf16.mxu0 %v7489
        %7976 = vmatpush1.bf16.msra.mxu0 %v7488
        %7977 = vmatprep.subr.bf16.mxu0 %v7493
        %7978 = vmatpush1.bf16.msra.mxu0 %v7492
        %7979 = vmatprep.subr.bf16.mxu0 %v7497
        %7980 = vmatpush1.bf16.msra.mxu0 %v7496
        %7981 = vmatprep.subr.bf16.mxu0 %v7501
        %7982 = vmatpush1.bf16.msra.mxu0 %v7500
        %7983 = vmatprep.subr.bf16.mxu0 %v7505
        %7984 = vmatpush1.bf16.msra.mxu0 %v7504
        %7985 = vmatprep.subr.bf16.mxu0 %v7509
        %7986 = vmatpush1.bf16.msra.mxu0 %v7508
        %7987 = vmatprep.subr.bf16.mxu0 %v7513
        %7988 = vmatpush1.bf16.msra.mxu0 %v7512
        %7989 = vmatprep.subr.bf16.mxu0 %v7517
        %7990 = vmatpush1.bf16.msra.mxu0 %v7516
        %7991 = vmatprep.subr.bf16.mxu0 %v7521
        %7992 = vmatpush1.bf16.msra.mxu0 %v7520
        %7993 = vmatprep.subr.bf16.mxu0 %v7525
        %7994 = vmatpush1.bf16.msra.mxu0 %v7524
        %7995 = vmatprep.subr.bf16.mxu0 %v7529
        %7996 = vmatpush1.bf16.msra.mxu0 %v7528
        %7997 = vmatprep.subr.bf16.mxu0 %v7533
        %7998 = vmatpush1.bf16.msra.mxu0 %v7532
        %7999 = vmatprep.subr.bf16.mxu0 %v7537
        %8000 = vmatpush1.bf16.msra.mxu0 %v7536
        %8001 = vmatprep.subr.bf16.mxu0 %v7541
        %8002 = vmatpush1.bf16.msra.mxu0 %v7540
        %8003 = vmatprep.subr.bf16.mxu0 %v7545
        %8004 = vmatpush1.bf16.msra.mxu0 %v7544
        %8005 = vmatprep.subr.bf16.mxu0 %v7549
        %8006 = vmatpush1.bf16.msra.mxu0 %v7548
        %8007 = vmatprep.mubr.bf16.mxu0 %v6332
        %8008 = vmatmul.mubr.bf16.gmra.mrb[0].mxu0 %v6331
        %v8009 = vpop.f32.mrb[0].mxu0
        %v8010 = vadd.f32 %v7969, %v8009
        %v8011 = vpop.f32.mrb[0].mxu0
        %v8012 = vadd.f32 %v7971, %v8011
        %v8013 = vpop.f32.mrb[0].mxu0
        %v8014 = vpop.f32.mrb[0].mxu0
        %8015 = vdwg.mxu0
        %8016 = vmatprep.subr.bf16.mxu0 %v7553
        %8017 = vmatpush1.bf16.msra.mxu0 %v7552
        %8018 = vmatprep.subr.bf16.mxu0 %v7557
        %8019 = vmatpush1.bf16.msra.mxu0 %v7556
        %8020 = vmatprep.subr.bf16.mxu0 %v7561
        %8021 = vmatpush1.bf16.msra.mxu0 %v7560
        %8022 = vmatprep.subr.bf16.mxu0 %v7565
        %8023 = vmatpush1.bf16.msra.mxu0 %v7564
        %8024 = vmatprep.subr.bf16.mxu0 %v7569
        %8025 = vmatpush1.bf16.msra.mxu0 %v7568
        %8026 = vmatprep.subr.bf16.mxu0 %v7573
        %8027 = vmatpush1.bf16.msra.mxu0 %v7572
        %8028 = vmatprep.subr.bf16.mxu0 %v7577
        %8029 = vmatpush1.bf16.msra.mxu0 %v7576
        %8030 = vmatprep.subr.bf16.mxu0 %v7581
        %8031 = vmatpush1.bf16.msra.mxu0 %v7580
        %8032 = vmatprep.subr.bf16.mxu0 %v7585
        %8033 = vmatpush1.bf16.msra.mxu0 %v7584
        %8034 = vmatprep.subr.bf16.mxu0 %v7589
        %8035 = vmatpush1.bf16.msra.mxu0 %v7588
        %8036 = vmatprep.subr.bf16.mxu0 %v7593
        %8037 = vmatpush1.bf16.msra.mxu0 %v7592
        %8038 = vmatprep.subr.bf16.mxu0 %v7597
        %8039 = vmatpush1.bf16.msra.mxu0 %v7596
        %8040 = vmatprep.subr.bf16.mxu0 %v7601
        %8041 = vmatpush1.bf16.msra.mxu0 %v7600
        %8042 = vmatprep.subr.bf16.mxu0 %v7605
        %8043 = vmatpush1.bf16.msra.mxu0 %v7604
        %8044 = vmatprep.subr.bf16.mxu0 %v7609
        %8045 = vmatpush1.bf16.msra.mxu0 %v7608
        %8046 = vmatprep.subr.bf16.mxu0 %v7613
        %8047 = vmatpush1.bf16.msra.mxu0 %v7612
        %8048 = vmatprep.mubr.bf16.mxu0 %v6334
        %8049 = vmatmul.mubr.bf16.gmra.mrb[0].mxu0 %v6333
        %v8050 = vpop.f32.mrb[0].mxu0
        %v8051 = vadd.f32 %v8010, %v8050
        %v8052 = vpop.f32.mrb[0].mxu0
        %v8053 = vadd.f32 %v8012, %v8052
        %v8054 = vpop.f32.mrb[0].mxu0
        %v8055 = vpop.f32.mrb[0].mxu0
        %8056 = vdwg.mxu0
        %8057 = vmatprep.subr.bf16.mxu0 %v7363
        %8058 = vmatpush1.bf16.msra.mxu0 %v7362
        %8059 = vmatprep.subr.bf16.mxu0 %v7367
        %8060 = vmatpush1.bf16.msra.mxu0 %v7366
        %8061 = vmatprep.subr.bf16.mxu0 %v7371
        %8062 = vmatpush1.bf16.msra.mxu0 %v7370
        %8063 = vmatprep.subr.bf16.mxu0 %v7375
        %8064 = vmatpush1.bf16.msra.mxu0 %v7374
        %8065 = vmatprep.subr.bf16.mxu0 %v7379
        %8066 = vmatpush1.bf16.msra.mxu0 %v7378
        %8067 = vmatprep.subr.bf16.mxu0 %v7383
        %8068 = vmatpush1.bf16.msra.mxu0 %v7382
        %8069 = vmatprep.subr.bf16.mxu0 %v7387
        %8070 = vmatpush1.bf16.msra.mxu0 %v7386
        %8071 = vmatprep.subr.bf16.mxu0 %v7391
        %8072 = vmatpush1.bf16.msra.mxu0 %v7390
        %8073 = vmatprep.subr.bf16.mxu0 %v7395
        %8074 = vmatpush1.bf16.msra.mxu0 %v7394
        %8075 = vmatprep.subr.bf16.mxu0 %v7399
        %8076 = vmatpush1.bf16.msra.mxu0 %v7398
        %8077 = vmatprep.subr.bf16.mxu0 %v7403
        %8078 = vmatpush1.bf16.msra.mxu0 %v7402
        %8079 = vmatprep.subr.bf16.mxu0 %v7407
        %8080 = vmatpush1.bf16.msra.mxu0 %v7406
        %8081 = vmatprep.subr.bf16.mxu0 %v7411
        %8082 = vmatpush1.bf16.msra.mxu0 %v7410
        %8083 = vmatprep.subr.bf16.mxu0 %v7415
        %8084 = vmatpush1.bf16.msra.mxu0 %v7414
        %8085 = vmatprep.subr.bf16.mxu0 %v7419
        %8086 = vmatpush1.bf16.msra.mxu0 %v7418
        %8087 = vmatprep.subr.bf16.mxu0 %v7423
        %8088 = vmatpush1.bf16.msra.mxu0 %v7422
        %8089 = vmatprep.mubr.bf16.mxu0 %v6328
        %8090 = vmatmul.mubr.bf16.gmra.mrb[0].mxu0 %v6327
        %v8091 = vpop.f32.mrb[0].mxu0
        %v8092 = vadd.f32 %v7884, %v8091
        %v8093 = vpop.f32.mrb[0].mxu0
        %v8094 = vadd.f32 %v7888, %v8093
        %v8095 = vpop.f32.mrb[0].mxu0
        %v8096 = vpop.f32.mrb[0].mxu0
        %8097 = vdwg.mxu0
        %8098 = vmatprep.subr.bf16.mxu0 %v7427
        %8099 = vmatpush1.bf16.msra.mxu0 %v7426
        %8100 = vmatprep.subr.bf16.mxu0 %v7431
        %8101 = vmatpush1.bf16.msra.mxu0 %v7430
        %8102 = vmatprep.subr.bf16.mxu0 %v7435
        %8103 = vmatpush1.bf16.msra.mxu0 %v7434
        %8104 = vmatprep.subr.bf16.mxu0 %v7439
        %8105 = vmatpush1.bf16.msra.mxu0 %v7438
        %8106 = vmatprep.subr.bf16.mxu0 %v7443
        %8107 = vmatpush1.bf16.msra.mxu0 %v7442
        %8108 = vmatprep.subr.bf16.mxu0 %v7447
        %8109 = vmatpush1.bf16.msra.mxu0 %v7446
        %8110 = vmatprep.subr.bf16.mxu0 %v7451
        %8111 = vmatpush1.bf16.msra.mxu0 %v7450
        %8112 = vmatprep.subr.bf16.mxu0 %v7455
        %8113 = vmatpush1.bf16.msra.mxu0 %v7454
        %8114 = vmatprep.subr.bf16.mxu0 %v7459
        %8115 = vmatpush1.bf16.msra.mxu0 %v7458
        %8116 = vmatprep.subr.bf16.mxu0 %v7463
        %8117 = vmatpush1.bf16.msra.mxu0 %v7462
        %8118 = vmatprep.subr.bf16.mxu0 %v7467
        %8119 = vmatpush1.bf16.msra.mxu0 %v7466
        %8120 = vmatprep.subr.bf16.mxu0 %v7471
        %8121 = vmatpush1.bf16.msra.mxu0 %v7470
        %8122 = vmatprep.subr.bf16.mxu0 %v7475
        %8123 = vmatpush1.bf16.msra.mxu0 %v7474
        %8124 = vmatprep.subr.bf16.mxu0 %v7479
        %8125 = vmatpush1.bf16.msra.mxu0 %v7478
        %8126 = vmatprep.subr.bf16.mxu0 %v7483
        %8127 = vmatpush1.bf16.msra.mxu0 %v7482
        %8128 = vmatprep.subr.bf16.mxu0 %v7487
        %8129 = vmatpush1.bf16.msra.mxu0 %v7486
        %8130 = vmatprep.mubr.bf16.mxu0 %v6330
        %8131 = vmatmul.mubr.bf16.gmra.mrb[0].mxu0 %v6329
        %v8132 = vpop.f32.mrb[0].mxu0
        %v8133 = vadd.f32 %v8092, %v8132
        %v8134 = vpop.f32.mrb[0].mxu0
        %v8135 = vadd.f32 %v8094, %v8134
        %v8136 = vpop.f32.mrb[0].mxu0
        %v8137 = vpop.f32.mrb[0].mxu0
        %8138 = vdwg.mxu0
        %8139 = vmatprep.subr.bf16.mxu0 %v7491
        %8140 = vmatpush1.bf16.msra.mxu0 %v7490
        %8141 = vmatprep.subr.bf16.mxu0 %v7495
        %8142 = vmatpush1.bf16.msra.mxu0 %v7494
        %8143 = vmatprep.subr.bf16.mxu0 %v7499
        %8144 = vmatpush1.bf16.msra.mxu0 %v7498
        %8145 = vmatprep.subr.bf16.mxu0 %v7503
        %8146 = vmatpush1.bf16.msra.mxu0 %v7502
        %8147 = vmatprep.subr.bf16.mxu0 %v7507
        %8148 = vmatpush1.bf16.msra.mxu0 %v7506
        %8149 = vmatprep.subr.bf16.mxu0 %v7511
        %8150 = vmatpush1.bf16.msra.mxu0 %v7510
        %8151 = vmatprep.subr.bf16.mxu0 %v7515
        %8152 = vmatpush1.bf16.msra.mxu0 %v7514
        %8153 = vmatprep.subr.bf16.mxu0 %v7519
        %8154 = vmatpush1.bf16.msra.mxu0 %v7518
        %8155 = vmatprep.subr.bf16.mxu0 %v7523
        %8156 = vmatpush1.bf16.msra.mxu0 %v7522
        %8157 = vmatprep.subr.bf16.mxu0 %v7527
        %8158 = vmatpush1.bf16.msra.mxu0 %v7526
        %8159 = vmatprep.subr.bf16.mxu0 %v7531
        %8160 = vmatpush1.bf16.msra.mxu0 %v7530
        %8161 = vmatprep.subr.bf16.mxu0 %v7535
        %8162 = vmatpush1.bf16.msra.mxu0 %v7534
        %8163 = vmatprep.subr.bf16.mxu0 %v7539
        %8164 = vmatpush1.bf16.msra.mxu0 %v7538
        %8165 = vmatprep.subr.bf16.mxu0 %v7543
        %8166 = vmatpush1.bf16.msra.mxu0 %v7542
        %8167 = vmatprep.subr.bf16.mxu0 %v7547
        %8168 = vmatpush1.bf16.msra.mxu0 %v7546
        %8169 = vmatprep.subr.bf16.mxu0 %v7551
        %8170 = vmatpush1.bf16.msra.mxu0 %v7550
        %8171 = vmatprep.mubr.bf16.mxu0 %v6332
        %8172 = vmatmul.mubr.bf16.gmra.mrb[0].mxu0 %v6331
        %v8173 = vpop.f32.mrb[0].mxu0
        %v8174 = vadd.f32 %v8133, %v8173
        %v8175 = vpop.f32.mrb[0].mxu0
        %v8176 = vadd.f32 %v8135, %v8175
        %v8177 = vpop.f32.mrb[0].mxu0
        %v8178 = vpop.f32.mrb[0].mxu0
        %8179 = vdwg.mxu0
        %8180 = vmatprep.subr.bf16.mxu0 %v7555
        %8181 = vmatpush1.bf16.msra.mxu0 %v7554
        %8182 = vmatprep.subr.bf16.mxu0 %v7559
        %8183 = vmatpush1.bf16.msra.mxu0 %v7558
        %8184 = vmatprep.subr.bf16.mxu0 %v7563
        %8185 = vmatpush1.bf16.msra.mxu0 %v7562
        %8186 = vmatprep.subr.bf16.mxu0 %v7567
        %8187 = vmatpush1.bf16.msra.mxu0 %v7566
        %8188 = vmatprep.subr.bf16.mxu0 %v7571
        %8189 = vmatpush1.bf16.msra.mxu0 %v7570
        %8190 = vmatprep.subr.bf16.mxu0 %v7575
        %8191 = vmatpush1.bf16.msra.mxu0 %v7574
        %8192 = vmatprep.subr.bf16.mxu0 %v7579
        %8193 = vmatpush1.bf16.msra.mxu0 %v7578
        %8194 = vmatprep.subr.bf16.mxu0 %v7583
        %8195 = vmatpush1.bf16.msra.mxu0 %v7582
        %8196 = vmatprep.subr.bf16.mxu0 %v7587
        %8197 = vmatpush1.bf16.msra.mxu0 %v7586
        %8198 = vmatprep.subr.bf16.mxu0 %v7591
        %8199 = vmatpush1.bf16.msra.mxu0 %v7590
        %8200 = vmatprep.subr.bf16.mxu0 %v7595
        %8201 = vmatpush1.bf16.msra.mxu0 %v7594
        %8202 = vmatprep.subr.bf16.mxu0 %v7599
        %8203 = vmatpush1.bf16.msra.mxu0 %v7598
        %8204 = vmatprep.subr.bf16.mxu0 %v7603
        %8205 = vmatpush1.bf16.msra.mxu0 %v7602
        %8206 = vmatprep.subr.bf16.mxu0 %v7607
        %8207 = vmatpush1.bf16.msra.mxu0 %v7606
        %8208 = vmatprep.subr.bf16.mxu0 %v7611
        %8209 = vmatpush1.bf16.msra.mxu0 %v7610
        %8210 = vmatprep.subr.bf16.mxu0 %v7615
        %8211 = vmatpush1.bf16.msra.mxu0 %v7614
        %8212 = vmatprep.mubr.bf16.mxu0 %v6334
        %8213 = vmatmul.mubr.bf16.gmra.mrb[0].mxu0 %v6333
        %v8214 = vpop.f32.mrb[0].mxu0
        %v8215 = vadd.f32 %v8174, %v8214
        %v8216 = vpop.f32.mrb[0].mxu0
        %v8217 = vadd.f32 %v8176, %v8216
        %v8218 = vpop.f32.mrb[0].mxu0
        %v8219 = vpop.f32.mrb[0].mxu0
        %8220 = vdwg.mxu0
        %v8221 = vmax.f32 %v8051, 0.0
        %v8222 = vmax.f32 %v8053, 0.0
        %v8223 = vmax.f32 %v8215, 0.0
        %v8224 = vmax.f32 %v8217, 0.0
        %v8225 = vpack.c.bf16 %v8221, %v8221
        %v8226 = vpack.c.bf16 %v8222, %v8222
        %v8227 = vpack.c.bf16 %v8223, %v8223
        %v8228 = vpack.c.bf16 %v8224, %v8224
        %v8229 = vld [vmem:[#allocation37] sm:$0xf]
        %v8230 = vld [vmem:[#allocation37 + $0x4] sm:$0xf]
        %v8231 = vld [vmem:[#allocation37 + $0x8] sm:$0xf]
        %v8232 = vld [vmem:[#allocation37 + $0xc] sm:$0xf]
        %v8233 = vld [vmem:[#allocation37 + $0x10] sm:$0xf]
        %v8234 = vld [vmem:[#allocation37 + $0x14] sm:$0xf]
        %v8235 = vld [vmem:[#allocation37 + $0x18] sm:$0xf]
        %v8236 = vld [vmem:[#allocation37 + $0x1c] sm:$0xf]
        %v8237 = vld [vmem:[#allocation37 + $0x20] sm:$0xf]
        %v8238 = vld [vmem:[#allocation37 + $0x24] sm:$0xf]
        %v8239 = vld [vmem:[#allocation37 + $0x28] sm:$0xf]
        %v8240 = vld [vmem:[#allocation37 + $0x2c] sm:$0xf]
        %v8241 = vld [vmem:[#allocation37 + $0x30] sm:$0xf]
        %v8242 = vld [vmem:[#allocation37 + $0x34] sm:$0xf]
        %v8243 = vld [vmem:[#allocation37 + $0x38] sm:$0xf]
        %v8244 = vld [vmem:[#allocation37 + $0x3c] sm:$0xf]
        %v8245 = vld [vmem:[#allocation37 + $0x40] sm:$0xf]
        %v8246 = vld [vmem:[#allocation37 + $0x44] sm:$0xf]
        %v8247 = vld [vmem:[#allocation37 + $0x48] sm:$0xf]
        %v8248 = vld [vmem:[#allocation37 + $0x4c] sm:$0xf]
        %v8249 = vld [vmem:[#allocation37 + $0x50] sm:$0xf]
        %v8250 = vld [vmem:[#allocation37 + $0x54] sm:$0xf]
        %v8251 = vld [vmem:[#allocation37 + $0x58] sm:$0xf]
        %v8252 = vld [vmem:[#allocation37 + $0x5c] sm:$0xf]
        %v8253 = vld [vmem:[#allocation37 + $0x60] sm:$0xf]
        %v8254 = vld [vmem:[#allocation37 + $0x64] sm:$0xf]
        %v8255 = vld [vmem:[#allocation37 + $0x68] sm:$0xf]
        %v8256 = vld [vmem:[#allocation37 + $0x6c] sm:$0xf]
        %v8257 = vld [vmem:[#allocation37 + $0x70] sm:$0xf]
        %v8258 = vld [vmem:[#allocation37 + $0x74] sm:$0xf]
        %v8259 = vld [vmem:[#allocation37 + $0x78] sm:$0xf]
        %v8260 = vld [vmem:[#allocation37 + $0x7c] sm:$0xf]
        %v8261 = vld [vmem:[#allocation37 + $0x80] sm:$0xf]
        %v8262 = vld [vmem:[#allocation37 + $0x84] sm:$0xf]
        %v8263 = vld [vmem:[#allocation37 + $0x88] sm:$0xf]
        %v8264 = vld [vmem:[#allocation37 + $0x8c] sm:$0xf]
        %v8265 = vld [vmem:[#allocation37 + $0x90] sm:$0xf]
        %v8266 = vld [vmem:[#allocation37 + $0x94] sm:$0xf]
        %v8267 = vld [vmem:[#allocation37 + $0x98] sm:$0xf]
        %v8268 = vld [vmem:[#allocation37 + $0x9c] sm:$0xf]
        %v8269 = vld [vmem:[#allocation37 + $0xa0] sm:$0xf]
        %v8270 = vld [vmem:[#allocation37 + $0xa4] sm:$0xf]
        %v8271 = vld [vmem:[#allocation37 + $0xa8] sm:$0xf]
        %v8272 = vld [vmem:[#allocation37 + $0xac] sm:$0xf]
        %v8273 = vld [vmem:[#allocation37 + $0xb0] sm:$0xf]
        %v8274 = vld [vmem:[#allocation37 + $0xb4] sm:$0xf]
        %v8275 = vld [vmem:[#allocation37 + $0xb8] sm:$0xf]
        %v8276 = vld [vmem:[#allocation37 + $0xbc] sm:$0xf]
        %v8277 = vld [vmem:[#allocation37 + $0xc0] sm:$0xf]
        %v8278 = vld [vmem:[#allocation37 + $0xc4] sm:$0xf]
        %v8279 = vld [vmem:[#allocation37 + $0xc8] sm:$0xf]
        %v8280 = vld [vmem:[#allocation37 + $0xcc] sm:$0xf]
        %v8281 = vld [vmem:[#allocation37 + $0xd0] sm:$0xf]
        %v8282 = vld [vmem:[#allocation37 + $0xd4] sm:$0xf]
        %v8283 = vld [vmem:[#allocation37 + $0xd8] sm:$0xf]
        %v8284 = vld [vmem:[#allocation37 + $0xdc] sm:$0xf]
        %v8285 = vld [vmem:[#allocation37 + $0xe0] sm:$0xf]
        %v8286 = vld [vmem:[#allocation37 + $0xe4] sm:$0xf]
        %v8287 = vld [vmem:[#allocation37 + $0xe8] sm:$0xf]
        %v8288 = vld [vmem:[#allocation37 + $0xec] sm:$0xf]
        %v8289 = vld [vmem:[#allocation37 + $0xf0] sm:$0xf]
        %v8290 = vld [vmem:[#allocation37 + $0xf4] sm:$0xf]
        %v8291 = vld [vmem:[#allocation37 + $0xf8] sm:$0xf]
        %v8292 = vld [vmem:[#allocation37 + $0xfc] sm:$0xf]
        %v8293 = vld [vmem:[#allocation38] sm:$0x1]
        %v8358 = vunpack.c.l.b16 %v8229
        %v8359 = vunpack.c.l.b16 %v8230
        %v8360 = vunpack.c.l.b16 %v8231
        %v8361 = vunpack.c.l.b16 %v8232
        %v8362 = vunpack.c.l.b16 %v8233
        %v8363 = vunpack.c.l.b16 %v8234
        %v8364 = vunpack.c.l.b16 %v8235
        %v8365 = vunpack.c.l.b16 %v8236
        %v8366 = vunpack.c.l.b16 %v8237
        %v8367 = vunpack.c.l.b16 %v8238
        %v8368 = vunpack.c.l.b16 %v8239
        %v8369 = vunpack.c.l.b16 %v8240
        %v8370 = vunpack.c.l.b16 %v8241
        %v8371 = vunpack.c.l.b16 %v8242
        %v8372 = vunpack.c.l.b16 %v8243
        %v8373 = vunpack.c.l.b16 %v8244
        %v8374 = vunpack.c.l.b16 %v8245
        %v8375 = vunpack.c.l.b16 %v8246
        %v8376 = vunpack.c.l.b16 %v8247
        %v8377 = vunpack.c.l.b16 %v8248
        %v8378 = vunpack.c.l.b16 %v8249
        %v8379 = vunpack.c.l.b16 %v8250
        %v8380 = vunpack.c.l.b16 %v8251
        %v8381 = vunpack.c.l.b16 %v8252
        %v8382 = vunpack.c.l.b16 %v8253
        %v8383 = vunpack.c.l.b16 %v8254
        %v8384 = vunpack.c.l.b16 %v8255
        %v8385 = vunpack.c.l.b16 %v8256
        %v8386 = vunpack.c.l.b16 %v8257
        %v8387 = vunpack.c.l.b16 %v8258
        %v8388 = vunpack.c.l.b16 %v8259
        %v8389 = vunpack.c.l.b16 %v8260
        %v8390 = vunpack.c.l.b16 %v8261
        %v8391 = vunpack.c.l.b16 %v8262
        %v8392 = vunpack.c.l.b16 %v8263
        %v8393 = vunpack.c.l.b16 %v8264
        %v8394 = vunpack.c.l.b16 %v8265
        %v8395 = vunpack.c.l.b16 %v8266
        %v8396 = vunpack.c.l.b16 %v8267
        %v8397 = vunpack.c.l.b16 %v8268
        %v8398 = vunpack.c.l.b16 %v8269
        %v8399 = vunpack.c.l.b16 %v8270
        %v8400 = vunpack.c.l.b16 %v8271
        %v8401 = vunpack.c.l.b16 %v8272
        %v8402 = vunpack.c.l.b16 %v8273
        %v8403 = vunpack.c.l.b16 %v8274
        %v8404 = vunpack.c.l.b16 %v8275
        %v8405 = vunpack.c.l.b16 %v8276
        %v8406 = vunpack.c.l.b16 %v8277
        %v8407 = vunpack.c.l.b16 %v8278
        %v8408 = vunpack.c.l.b16 %v8279
        %v8409 = vunpack.c.l.b16 %v8280
        %v8410 = vunpack.c.l.b16 %v8281
        %v8411 = vunpack.c.l.b16 %v8282
        %v8412 = vunpack.c.l.b16 %v8283
        %v8413 = vunpack.c.l.b16 %v8284
        %v8414 = vunpack.c.l.b16 %v8285
        %v8415 = vunpack.c.l.b16 %v8286
        %v8416 = vunpack.c.l.b16 %v8287
        %v8417 = vunpack.c.l.b16 %v8288
        %v8418 = vunpack.c.l.b16 %v8289
        %v8419 = vunpack.c.l.b16 %v8290
        %v8420 = vunpack.c.l.b16 %v8291
        %v8421 = vunpack.c.l.b16 %v8292
        %v8422 = vpack.c.b16 %v8359, %v8358
        %v8423 = vpack.c.b16 %v8361, %v8360
        %v8424 = vpack.c.b16 %v8363, %v8362
        %v8425 = vpack.c.b16 %v8365, %v8364
        %v8426 = vpack.c.b16 %v8367, %v8366
        %v8427 = vpack.c.b16 %v8369, %v8368
        %v8428 = vpack.c.b16 %v8371, %v8370
        %v8429 = vpack.c.b16 %v8373, %v8372
        %v8430 = vpack.c.b16 %v8375, %v8374
        %v8431 = vpack.c.b16 %v8377, %v8376
        %v8432 = vpack.c.b16 %v8379, %v8378
        %v8433 = vpack.c.b16 %v8381, %v8380
        %v8434 = vpack.c.b16 %v8383, %v8382
        %v8435 = vpack.c.b16 %v8385, %v8384
        %v8436 = vpack.c.b16 %v8387, %v8386
        %v8437 = vpack.c.b16 %v8389, %v8388
        %v8438 = vpack.c.b16 %v8391, %v8390
        %v8439 = vpack.c.b16 %v8393, %v8392
        %v8440 = vpack.c.b16 %v8395, %v8394
        %v8441 = vpack.c.b16 %v8397, %v8396
        %v8442 = vpack.c.b16 %v8399, %v8398
        %v8443 = vpack.c.b16 %v8401, %v8400
        %v8444 = vpack.c.b16 %v8403, %v8402
        %v8445 = vpack.c.b16 %v8405, %v8404
        %v8446 = vpack.c.b16 %v8407, %v8406
        %v8447 = vpack.c.b16 %v8409, %v8408
        %v8448 = vpack.c.b16 %v8411, %v8410
        %v8449 = vpack.c.b16 %v8413, %v8412
        %v8450 = vpack.c.b16 %v8415, %v8414
        %v8451 = vpack.c.b16 %v8417, %v8416
        %v8452 = vpack.c.b16 %v8419, %v8418
        %v8453 = vpack.c.b16 %v8421, %v8420
        %8486 = vmatprep.subr.bf16.mxu0 0
        %8487 = vmatpush1.bf16.msra.mxu0 %v8422
        %8488 = vmatprep.subr.bf16.mxu0 0
        %8489 = vmatpush1.bf16.msra.mxu0 %v8423
        %8490 = vmatprep.subr.bf16.mxu0 0
        %8491 = vmatpush1.bf16.msra.mxu0 %v8424
        %8492 = vmatprep.subr.bf16.mxu0 0
        %8493 = vmatpush1.bf16.msra.mxu0 %v8425
        %8494 = vmatprep.subr.bf16.mxu0 0
        %8495 = vmatpush1.bf16.msra.mxu0 %v8426
        %8496 = vmatprep.subr.bf16.mxu0 0
        %8497 = vmatpush1.bf16.msra.mxu0 %v8427
        %8498 = vmatprep.subr.bf16.mxu0 0
        %8499 = vmatpush1.bf16.msra.mxu0 %v8428
        %8500 = vmatprep.subr.bf16.mxu0 0
        %8501 = vmatpush1.bf16.msra.mxu0 %v8429
        %8502 = vmatprep.subr.bf16.mxu0 0
        %8503 = vmatpush1.bf16.msra.mxu0 %v8430
        %8504 = vmatprep.subr.bf16.mxu0 0
        %8505 = vmatpush1.bf16.msra.mxu0 %v8431
        %8506 = vmatprep.subr.bf16.mxu0 0
        %8507 = vmatpush1.bf16.msra.mxu0 %v8432
        %8508 = vmatprep.subr.bf16.mxu0 0
        %8509 = vmatpush1.bf16.msra.mxu0 %v8433
        %8510 = vmatprep.subr.bf16.mxu0 0
        %8511 = vmatpush1.bf16.msra.mxu0 %v8434
        %8512 = vmatprep.subr.bf16.mxu0 0
        %8513 = vmatpush1.bf16.msra.mxu0 %v8435
        %8514 = vmatprep.subr.bf16.mxu0 0
        %8515 = vmatpush1.bf16.msra.mxu0 %v8436
        %8516 = vmatprep.subr.bf16.mxu0 0
        %8517 = vmatpush1.bf16.msra.mxu0 %v8437
        %8518 = vmatprep.mubr.bf16.mxu0 %v8226
        %8519 = vmatmul.mubr.bf16.gmra.mrb[0].mxu0 %v8225
        %v8520 = vpop.f32.mrb[0].mxu0
        %v8521 = vadd.f32 %v8293, %v8520
        %v8522 = vpop.f32.mrb[0].mxu0
        %v8523 = vpop.f32.mrb[0].mxu0
        %v8524 = vpop.f32.mrb[0].mxu0
        %8525 = vdwg.mxu0
        %8526 = vmatprep.subr.bf16.mxu0 0
        %8527 = vmatpush1.bf16.msra.mxu0 %v8438
        %8528 = vmatprep.subr.bf16.mxu0 0
        %8529 = vmatpush1.bf16.msra.mxu0 %v8439
        %8530 = vmatprep.subr.bf16.mxu0 0
        %8531 = vmatpush1.bf16.msra.mxu0 %v8440
        %8532 = vmatprep.subr.bf16.mxu0 0
        %8533 = vmatpush1.bf16.msra.mxu0 %v8441
        %8534 = vmatprep.subr.bf16.mxu0 0
        %8535 = vmatpush1.bf16.msra.mxu0 %v8442
        %8536 = vmatprep.subr.bf16.mxu0 0
        %8537 = vmatpush1.bf16.msra.mxu0 %v8443
        %8538 = vmatprep.subr.bf16.mxu0 0
        %8539 = vmatpush1.bf16.msra.mxu0 %v8444
        %8540 = vmatprep.subr.bf16.mxu0 0
        %8541 = vmatpush1.bf16.msra.mxu0 %v8445
        %8542 = vmatprep.subr.bf16.mxu0 0
        %8543 = vmatpush1.bf16.msra.mxu0 %v8446
        %8544 = vmatprep.subr.bf16.mxu0 0
        %8545 = vmatpush1.bf16.msra.mxu0 %v8447
        %8546 = vmatprep.subr.bf16.mxu0 0
        %8547 = vmatpush1.bf16.msra.mxu0 %v8448
        %8548 = vmatprep.subr.bf16.mxu0 0
        %8549 = vmatpush1.bf16.msra.mxu0 %v8449
        %8550 = vmatprep.subr.bf16.mxu0 0
        %8551 = vmatpush1.bf16.msra.mxu0 %v8450
        %8552 = vmatprep.subr.bf16.mxu0 0
        %8553 = vmatpush1.bf16.msra.mxu0 %v8451
        %8554 = vmatprep.subr.bf16.mxu0 0
        %8555 = vmatpush1.bf16.msra.mxu0 %v8452
        %8556 = vmatprep.subr.bf16.mxu0 0
        %8557 = vmatpush1.bf16.msra.mxu0 %v8453
        %8558 = vmatprep.mubr.bf16.mxu0 %v8228
        %8559 = vmatmul.mubr.bf16.gmra.mrb[0].mxu0 %v8227
        %v8560 = vpop.f32.mrb[0].mxu0
        %v8561 = vadd.f32 %v8521, %v8560
        %v8562 = vpop.f32.mrb[0].mxu0
        %v8563 = vpop.f32.mrb[0].mxu0
        %v8564 = vpop.f32.mrb[0].mxu0
        %8565 = vdwg.mxu0
        %8566 = vst [vmem:[%s1105] sm:$0x1] %v8561
        %s8567 = sand.u32 %s612, 1
        %s8568 = scalar_lea.sflag [#allocation4], %s8567
        %s8569 = sand.u32 %s612, 1
        %s8570 = scalar_lea.vmem [#allocation40], %s8569
        // Predicated region
        $region221: #{forward.1} parent=123 // pred_check
          %p8571 = pneg %p622
        $region222: #{forward.1} parent=123 // pred_check_branch
          %8573 = sbr.rel (%p8571) target = $region224
        $region223: #{forward.1} parent=123 // pred_region
          %s8575 = ssub.s32 16, 16
          %8576 = vsyncadd %s8568, %s8575
          %s8577 = smul.addr %s53, 16
          %s8578 = scalar_lea.hbm %s26, %s8577
          %s8580 = sshll.u32 %s8570, 4
          %s8581 = int_to_ptr.vmem [resolvable:$true] %s8580
          %8583 = dma.vmem_to_hbm [thread:$0]  %s8581, 16, %s8578, %s8568
        $region224: #{forward.1} parent=123 // pred_fallthru
          _
      $region124: #{forward.1} parent=5 // pred_fallthru
        _
      %p8584 = scmp.le.s32.totalorder 2, %s48
      // Predicated region
      $region225: #{forward.1} parent=5 // pred_check
        %p8585 = pneg %p8584
      $region226: #{forward.1} parent=5 // pred_check_branch
        %8587 = sbr.rel (%p8585) target = $region228
      $region227: #{forward.1} parent=5 // pred_region
        %s8588 = ssub.s32 %s48, 2
        // Predicated region
        $region229: #{forward.1} parent=227 // pred_check
          %p8589 = pneg %p628
        $region230: #{forward.1} parent=227 // pred_check_branch
          %8591 = sbr.rel (%p8589) target = $region232
        $region231: #{forward.1} parent=227 // pred_region
          %s8592 = sand.u32 %s613, 1
          %s8593 = scalar_lea.sflag [#allocation4], %s8592
          %s8594 = sand.u32 %s613, 1
          %s8595 = scalar_lea.vmem [#allocation40], %s8594
          %8596 = dma.done %s8593, 16
        $region232: #{forward.1} parent=227 // pred_fallthru
          _
      $region228: #{forward.1} parent=5 // pred_fallthru
        _
    $region6: #{forward.1} parent=1 // loop_footer
      %s52 = sadd.s32 1, %s48
    $region7: #{forward.1} parent=1 // loop_footer_branch
      %47 = sbr.rel target = $region3
    $region8: #{forward.1} parent=1 // loop_exit
      _
    %8597 = vsyncpa [#allocation3], 1
    %s8598 = scalar_lea.sflag [#allocation3], 1
    %8599 = vsyncpa %s8598, 1
    %8600 = vsyncpa [#allocation6], 1
    %8601 = vsyncpa [#allocation9], 1
    %8602 = vsyncpa [#allocation12], 1
    %8603 = vsyncpa [#allocation15], 1
    %8604 = vsyncpa [#allocation18], 1
    %8605 = vsyncpa [#allocation21], 1
    %8606 = vsyncpa [#allocation24], 1
    %8607 = vsyncpa [#allocation27], 1
    %8608 = vsyncpa [#allocation30], 1
    %8609 = vsyncpa [#allocation33], 1
    %8610 = vsyncpa [#allocation36], 1
    %8611 = vsyncpa [#allocation39], 1
    %8612 = vsyncpa [#allocation4], 1
    %s8613 = scalar_lea.sflag [#allocation4], 1
    %8614 = vsyncpa %s8613, 1

</llo_original>
